<compile_context>
chip_gen: v7x
topology: tpu7x:2x2x1
jax: 0.10.0
libtpu: 0.0.40
codegen_flags: <defaults>
</compile_context>

<pallas_src>
import functools

import jax
import jax.numpy as jnp
import numpy as np
from jax.experimental import pallas as pl
from jax.experimental.pallas import tpu as pltpu

EPS = 1e-5
LANE = 128


def _round_up(x, m):
    return (x + m - 1) // m * m


# ----------------------------- Pallas kernels ------------------------------ #

def _conv3x3(get_tap, w_ref, hw, cp):
    """9-tap 3x3 'SAME' conv as 9 bf16 MXU matmuls with f32 accumulation."""
    acc = None
    for t in range(9):                       # static unroll
        dh, dw = divmod(t, 3)
        a = get_tap(dh, dw).reshape(hw, cp)
        p = jnp.dot(a, w_ref[t], preferred_element_type=jnp.float32)
        acc = p if acc is None else acc + p
    return acc


def _partial_stats(acc):
    """[sum, sum-of-squares] over all pixels of this image -> (2, Cp) f32."""
    s = jnp.sum(acc, axis=0, keepdims=True)
    ss = jnp.sum(acc * acc, axis=0, keepdims=True)
    return jnp.concatenate([s, ss], axis=0)


def _conv_stats_kernel(h, w, x_ref, w_ref, y_ref, stat_ref):
    """conv1 of one image + per-image BN1 partial statistics.

    x_ref   : (1, h+2, w+2, Cp) bf16   spatially zero-padded input tile
    w_ref   : (9, Cp, Cp)       bf16   tap-major weights (t = 3*dh + dw)
    y_ref   : (1, h, w, Cp)     bf16   pre-BN conv1 output
    stat_ref: (1, 2, Cp)        f32    [sum(y), sum(y*y)] for this image
    """
    cp = w_ref.shape[-1]
    acc = _conv3x3(lambda dh, dw: x_ref[0, dh:dh + h, dw:dw + w, :],
                   w_ref, h * w, cp)
    y_ref[0] = acc.reshape(h, w, cp).astype(y_ref.dtype)
    stat_ref[0] = _partial_stats(acc)


def _bn_relu_conv_stats_kernel(h, w, y1_ref, sc_ref, sh_ref, w_ref,
                               y2_ref, stat_ref, pad_ref):
    """Fused BN1 affine + ReLU + conv2 + per-image BN2 partial statistics.

    y1_ref : (1, h, w, Cp) bf16    pre-BN conv1 output
    sc_ref, sh_ref : (1, Cp) f32   folded BN1 scale / shift
    w_ref  : (9, Cp, Cp)  bf16     conv2 tap-major weights
    y2_ref : (1, h, w, Cp) bf16    pre-BN conv2 output
    stat_ref: (1, 2, Cp)  f32      [sum(y2), sum(y2*y2)] for this image
    pad_ref: (h+2, w+2, Cp) bf16   VMEM scratch: zero-padded out1 (no HBM trip)
    """
    cp = w_ref.shape[-1]
    out1 = jnp.maximum(
        y1_ref[0].astype(jnp.float32) * sc_ref[...] + sh_ref[...], 0.0)
    pad_ref[...] = jnp.zeros_like(pad_ref)
    pad_ref[1:h + 1, 1:w + 1, :] = out1.astype(pad_ref.dtype)

    acc = _conv3x3(lambda dh, dw: pad_ref[dh:dh + h, dw:dw + w, :],
                   w_ref, h * w, cp)
    y2_ref[0] = acc.reshape(h, w, cp).astype(y2_ref.dtype)
    stat_ref[0] = _partial_stats(acc)


def _bn_add_relu_kernel(y_ref, sc_ref, sh_ref, r_ref, o_ref):
    """Pointwise tail: out = relu(y*scale + shift + residual), lane-dense."""
    o_ref[...] = jnp.maximum(
        y_ref[...].astype(jnp.float32) * sc_ref[...] + sh_ref[...]
        + r_ref[...], 0.0)


# ------------------------------- JAX glue ---------------------------------- #

def _pack_conv_weights(w_hwio, cp):
    """(3,3,Ci,Co) HWIO -> (9, Cp, Cp) bf16, zero-padded, tap-major."""
    kh, kw, ci, co = w_hwio.shape
    wt = jnp.zeros((kh * kw, cp, cp), jnp.float32)
    wt = wt.at[:, :ci, :co].set(
        w_hwio.reshape(kh * kw, ci, co).astype(jnp.float32))
    return wt.astype(jnp.bfloat16)


def _pad_channel_vec(v, cp):
    # gamma/beta padded with ZEROS -> padded channels stay exactly 0 after BN.
    return jnp.pad(v.astype(jnp.float32), (0, cp - v.shape[0]))[None, :]


def _folded_bn_affine(stats, gamma, beta, count):
    """Fold BN into a single per-channel FMA: y_hat = y*scale + shift."""
    s = jnp.sum(stats[:, 0, :], axis=0, keepdims=True)      # (1, Cp)
    ss = jnp.sum(stats[:, 1, :], axis=0, keepdims=True)     # (1, Cp)
    mean = s / count
    var = jnp.maximum(ss / count - mean * mean, 0.0)         # biased (PyTorch)
    scale = gamma * jax.lax.rsqrt(var + EPS)
    shift = beta - mean * scale
    return scale, shift


def residual_block(x_nchw, w1, g1, b1, w2, g2, b2):
    """Forward of ResidualBlock(in_channels == out_channels, stride=1)."""
    n, c, h, w = x_nchw.shape
    cout = w1.shape[-1]
    assert c == cout, "downsample=None requires in_channels == out_channels"
    cp = _round_up(max(c, cout), LANE)       # lane-dense channel dimension
    count = float(n * h * w)

    x_nhwc = jnp.transpose(x_nchw, (0, 2, 3, 1)).astype(jnp.float32)
    x_res = jnp.pad(x_nhwc, ((0, 0), (0, 0), (0, 0), (0, cp - c)))         # f32
    x_pad = jnp.pad(x_res, ((0, 0), (1, 1), (1, 1), (0, 0))).astype(jnp.bfloat16)

    w1_p = _pack_conv_weights(w1, cp)
    w2_p = _pack_conv_weights(w2, cp)
    g1_p, b1_p = _pad_channel_vec(g1, cp), _pad_channel_vec(b1, cp)
    g2_p, b2_p = _pad_channel_vec(g2, cp), _pad_channel_vec(b2, cp)

    img_spec = pl.BlockSpec((1, h, w, cp), lambda i: (i, 0, 0, 0))
    stat_spec = pl.BlockSpec((1, 2, cp), lambda i: (i, 0, 0))
    bvec_spec = pl.BlockSpec((1, cp), lambda i: (0, 0))
    wgt_spec = pl.BlockSpec((9, cp, cp), lambda i: (0, 0, 0))
    stat_shape = jax.ShapeDtypeStruct((n, 2, cp), jnp.float32)
    y_shape = jax.ShapeDtypeStruct((n, h, w, cp), jnp.bfloat16)

    # --- Pass 1: conv1 + per-image BN1 partial statistics --------------------
    # One image per step; all grid steps independent -> 'parallel'.
    # TODO(synk): for very large H*W, tile rows with a 1-row halo instead of a
    # whole image per step so the per-step VMEM block stays bounded.
    y1, st1 = pl.pallas_call(
        functools.partial(_conv_stats_kernel, h, w),
        grid=(n,),
        in_specs=[
            pl.BlockSpec((1, h + 2, w + 2, cp), lambda i: (i, 0, 0, 0)),
            wgt_spec,
        ],
        out_specs=[img_spec, stat_spec],
        out_shape=[y_shape, stat_shape],
        compiler_params=pltpu.CompilerParams(
            dimension_semantics=("parallel",)),
    )(x_pad, w1_p)
    scale1, shift1 = _folded_bn_affine(st1, g1_p, b1_p, count)

    # --- Pass 2: BN1 affine + ReLU fused into conv2 (+ BN2 partial stats) ----
    # out1 lives only in a zero-padded bf16 VMEM scratch (never touches HBM).
    y2, st2 = pl.pallas_call(
        functools.partial(_bn_relu_conv_stats_kernel, h, w),
        grid=(n,),
        in_specs=[img_spec, bvec_spec, bvec_spec, wgt_spec],
        out_specs=[img_spec, stat_spec],
        out_shape=[y_shape, stat_shape],
        scratch_shapes=[pltpu.VMEM((h + 2, w + 2, cp), jnp.bfloat16)],
        compiler_params=pltpu.CompilerParams(
            dimension_semantics=("parallel",)),
    )(y1, scale1, shift1, w2_p)
    scale2, shift2 = _folded_bn_affine(st2, g2_p, b2_p, count)

    # --- Pass 3: BN2 affine + residual add + ReLU (pointwise, 'parallel') ----
    th = h
    for cand in (64, 32, 16, 8):             # keep per-operand tile <= ~2 MiB
        if h % cand == 0 and cand * w * cp * 4 <= (2 << 20):
            th = cand
            break
    tile_spec = pl.BlockSpec((1, th, w, cp), lambda i, j: (i, j, 0, 0))
    bcast_spec = pl.BlockSpec((1, cp), lambda i, j: (0, 0))
    out = pl.pallas_call(
        _bn_add_relu_kernel,
        grid=(n, h // th),
        in_specs=[tile_spec, bcast_spec, bcast_spec, tile_spec],
        out_specs=tile_spec,
        out_shape=jax.ShapeDtypeStruct((n, h, w, cp), jnp.float32),
        compiler_params=pltpu.CompilerParams(
            dimension_semantics=("parallel", "parallel")),
    )(y2, scale2, shift2, x_res)

    return jnp.transpose(out[..., :cout], (0, 3, 1, 2))


# Pure-JAX reference (verification only). matmul_dtype=bfloat16 mirrors the
# kernel's MXU precision (bf16 operands, f32 accumulation/statistics).
def _reference(x_nchw, w1, g1, b1, w2, g2, b2, matmul_dtype=jnp.float32):
    x = jnp.transpose(x_nchw, (0, 2, 3, 1)).astype(jnp.float32)

    def conv(v, wt):
        return jax.lax.conv_general_dilated(
            v.astype(matmul_dtype), wt.astype(matmul_dtype), (1, 1), "SAME",
            dimension_numbers=("NHWC", "HWIO", "NHWC"),
            preferred_element_type=jnp.float32)

    def bn(y, g, b):
        mean = jnp.mean(y, axis=(0, 1, 2), keepdims=True)
        var = jnp.mean(jnp.square(y - mean), axis=(0, 1, 2), keepdims=True)
        return (y - mean) * jax.lax.rsqrt(var + EPS) * g + b

    o = jax.nn.relu(bn(conv(x, w1), g1, b1))
    o = bn(conv(o, w2), g2, b2) + x
    return jnp.transpose(jax.nn.relu(o), (0, 3, 1, 2))


# --------------------------------- main ------------------------------------ #

if __name__ == "__main__":
    key = jax.random.PRNGKey(0)
    k = jax.random.split(key, 7)

    N, C, H, W = 2, 4, 16, 16          # in_channels == out_channels, stride=1
    x = jax.random.normal(k[0], (N, C, H, W), dtype=jnp.float32)

    # Conv weights stored HWIO: (3, 3, Cin, Cout) — no bias, like the module.
    w1 = 0.1 * jax.random.normal(k[1], (3, 3, C, C), dtype=jnp.float32)
    w2 = 0.1 * jax.random.normal(k[2], (3, 3, C, C), dtype=jnp.float32)
    g1 = 1.0 + 0.1 * jax.random.normal(k[3], (C,), dtype=jnp.float32)
    b1 = 0.1 * jax.random.normal(k[4], (C,), dtype=jnp.float32)
    g2 = 1.0 + 0.1 * jax.random.normal(k[5], (C,), dtype=jnp.float32)
    b2 = 0.1 * jax.random.normal(k[6], (C,), dtype=jnp.float32)

    out = jax.block_until_ready(
        jax.jit(residual_block)(x, w1, g1, b1, w2, g2, b2))

    # Precision-matched reference (bf16 MXU inputs, f32 accumulation).
    ref_bf16 = jax.block_until_ready(
        _reference(x, w1, g1, b1, w2, g2, b2, jnp.bfloat16))
    np.testing.assert_allclose(np.asarray(out), np.asarray(ref_bf16),
                               rtol=2e-2, atol=2e-2)
    # Full-f32 reference: agreement bounded by bf16 rounding of MXU operands
    # and bf16 storage of the inter-pass activations.
    ref_f32 = jax.block_until_ready(
        _reference(x, w1, g1, b1, w2, g2, b2, jnp.float32))
    np.testing.assert_allclose(np.asarray(out), np.asarray(ref_f32),
                               rtol=5e-2, atol=5e-2)

    print("KERNEL_OK")
</pallas_src>

<mosaic_0001>
module attributes {stable_mosaic.version = 11 : i64} {
  func.func @_conv_stats_kernel(%arg0: i32, %arg1: memref<1x18x18x128xbf16, #tpu.memory_space<vmem>>, %arg2: memref<9x128x128xbf16, #tpu.memory_space<vmem>>, %arg3: memref<1x16x16x128xbf16, #tpu.memory_space<vmem>>, %arg4: memref<1x2x128xf32, #tpu.memory_space<vmem>>) attributes {dimension_semantics = [#tpu.dimension_semantics<parallel>], iteration_bounds = array<i64: 2>, scalar_prefetch = 0 : i64, scratch_operands = 0 : i64, tpu.core_type = #tpu.core_type<tc>, window_params = [{transform_indices = @transform_0, window_bounds = array<i64: 1, 18, 18, 128>}, {pipeline_mode = #tpu.pipeline_mode<synchronous>, transform_indices = @transform_1, window_bounds = array<i64: 9, 128, 128>}, {transform_indices = @transform_2, window_bounds = array<i64: 1, 16, 16, 128>}, {transform_indices = @transform_3, window_bounds = array<i64: 1, 2, 128>}]} {
    %c0 = arith.constant 0 : index
    %c0_0 = arith.constant 0 : index
    %c0_1 = arith.constant 0 : index
    %c0_2 = arith.constant 0 : index
    %0 = vector.load %arg1[%c0, %c0_0, %c0_1, %c0_2] : memref<1x18x18x128xbf16, #tpu.memory_space<vmem>>, vector<1x16x16x128xbf16>
    %1 = vector.shape_cast %0 : vector<1x16x16x128xbf16> to vector<16x16x128xbf16>
    %2 = vector.shape_cast %1 : vector<16x16x128xbf16> to vector<256x128xbf16>
    %c0_3 = arith.constant 0 : index
    %c0_4 = arith.constant 0 : index
    %c0_5 = arith.constant 0 : index
    %3 = vector.load %arg2[%c0_3, %c0_4, %c0_5] : memref<9x128x128xbf16, #tpu.memory_space<vmem>>, vector<1x128x128xbf16>
    %4 = vector.shape_cast %3 : vector<1x128x128xbf16> to vector<128x128xbf16>
    %cst = arith.constant dense<0.000000e+00> : vector<256x128xf32>
    %5 = tpu.matmul %2, %4, %cst {dimension_numbers = #tpu.dot_dimension_numbers<[1], [0], [0], [1], [0, 0, 1, 1], [], []>} : vector<256x128xbf16>, vector<128x128xbf16>, vector<256x128xf32> -> vector<256x128xf32>
    %c0_6 = arith.constant 0 : index
    %c0_7 = arith.constant 0 : index
    %c1 = arith.constant 1 : index
    %c0_8 = arith.constant 0 : index
    %6 = vector.load %arg1[%c0_6, %c0_7, %c1, %c0_8] : memref<1x18x18x128xbf16, #tpu.memory_space<vmem>>, vector<1x16x16x128xbf16>
    %7 = vector.shape_cast %6 : vector<1x16x16x128xbf16> to vector<16x16x128xbf16>
    %8 = vector.shape_cast %7 : vector<16x16x128xbf16> to vector<256x128xbf16>
    %c1_9 = arith.constant 1 : index
    %c0_10 = arith.constant 0 : index
    %c0_11 = arith.constant 0 : index
    %9 = vector.load %arg2[%c1_9, %c0_10, %c0_11] : memref<9x128x128xbf16, #tpu.memory_space<vmem>>, vector<1x128x128xbf16>
    %10 = vector.shape_cast %9 : vector<1x128x128xbf16> to vector<128x128xbf16>
    %cst_12 = arith.constant dense<0.000000e+00> : vector<256x128xf32>
    %11 = tpu.matmul %8, %10, %cst_12 {dimension_numbers = #tpu.dot_dimension_numbers<[1], [0], [0], [1], [0, 0, 1, 1], [], []>} : vector<256x128xbf16>, vector<128x128xbf16>, vector<256x128xf32> -> vector<256x128xf32>
    %12 = arith.addf %5, %11 : vector<256x128xf32>
    %c0_13 = arith.constant 0 : index
    %c0_14 = arith.constant 0 : index
    %c2 = arith.constant 2 : index
    %c0_15 = arith.constant 0 : index
    %13 = vector.load %arg1[%c0_13, %c0_14, %c2, %c0_15] : memref<1x18x18x128xbf16, #tpu.memory_space<vmem>>, vector<1x16x16x128xbf16>
    %14 = vector.shape_cast %13 : vector<1x16x16x128xbf16> to vector<16x16x128xbf16>
    %15 = vector.shape_cast %14 : vector<16x16x128xbf16> to vector<256x128xbf16>
    %c2_16 = arith.constant 2 : index
    %c0_17 = arith.constant 0 : index
    %c0_18 = arith.constant 0 : index
    %16 = vector.load %arg2[%c2_16, %c0_17, %c0_18] : memref<9x128x128xbf16, #tpu.memory_space<vmem>>, vector<1x128x128xbf16>
    %17 = vector.shape_cast %16 : vector<1x128x128xbf16> to vector<128x128xbf16>
    %cst_19 = arith.constant dense<0.000000e+00> : vector<256x128xf32>
    %18 = tpu.matmul %15, %17, %cst_19 {dimension_numbers = #tpu.dot_dimension_numbers<[1], [0], [0], [1], [0, 0, 1, 1], [], []>} : vector<256x128xbf16>, vector<128x128xbf16>, vector<256x128xf32> -> vector<256x128xf32>
    %19 = arith.addf %12, %18 : vector<256x128xf32>
    %c0_20 = arith.constant 0 : index
    %c1_21 = arith.constant 1 : index
    %c0_22 = arith.constant 0 : index
    %c0_23 = arith.constant 0 : index
    %20 = vector.load %arg1[%c0_20, %c1_21, %c0_22, %c0_23] : memref<1x18x18x128xbf16, #tpu.memory_space<vmem>>, vector<1x16x16x128xbf16>
    %21 = vector.shape_cast %20 : vector<1x16x16x128xbf16> to vector<16x16x128xbf16>
    %22 = vector.shape_cast %21 : vector<16x16x128xbf16> to vector<256x128xbf16>
    %c3 = arith.constant 3 : index
    %c0_24 = arith.constant 0 : index
    %c0_25 = arith.constant 0 : index
    %23 = vector.load %arg2[%c3, %c0_24, %c0_25] : memref<9x128x128xbf16, #tpu.memory_space<vmem>>, vector<1x128x128xbf16>
    %24 = vector.shape_cast %23 : vector<1x128x128xbf16> to vector<128x128xbf16>
    %cst_26 = arith.constant dense<0.000000e+00> : vector<256x128xf32>
    %25 = tpu.matmul %22, %24, %cst_26 {dimension_numbers = #tpu.dot_dimension_numbers<[1], [0], [0], [1], [0, 0, 1, 1], [], []>} : vector<256x128xbf16>, vector<128x128xbf16>, vector<256x128xf32> -> vector<256x128xf32>
    %26 = arith.addf %19, %25 : vector<256x128xf32>
    %c0_27 = arith.constant 0 : index
    %c1_28 = arith.constant 1 : index
    %c1_29 = arith.constant 1 : index
    %c0_30 = arith.constant 0 : index
    %27 = vector.load %arg1[%c0_27, %c1_28, %c1_29, %c0_30] : memref<1x18x18x128xbf16, #tpu.memory_space<vmem>>, vector<1x16x16x128xbf16>
    %28 = vector.shape_cast %27 : vector<1x16x16x128xbf16> to vector<16x16x128xbf16>
    %29 = vector.shape_cast %28 : vector<16x16x128xbf16> to vector<256x128xbf16>
    %c4 = arith.constant 4 : index
    %c0_31 = arith.constant 0 : index
    %c0_32 = arith.constant 0 : index
    %30 = vector.load %arg2[%c4, %c0_31, %c0_32] : memref<9x128x128xbf16, #tpu.memory_space<vmem>>, vector<1x128x128xbf16>
    %31 = vector.shape_cast %30 : vector<1x128x128xbf16> to vector<128x128xbf16>
    %cst_33 = arith.constant dense<0.000000e+00> : vector<256x128xf32>
    %32 = tpu.matmul %29, %31, %cst_33 {dimension_numbers = #tpu.dot_dimension_numbers<[1], [0], [0], [1], [0, 0, 1, 1], [], []>} : vector<256x128xbf16>, vector<128x128xbf16>, vector<256x128xf32> -> vector<256x128xf32>
    %33 = arith.addf %26, %32 : vector<256x128xf32>
    %c0_34 = arith.constant 0 : index
    %c1_35 = arith.constant 1 : index
    %c2_36 = arith.constant 2 : index
    %c0_37 = arith.constant 0 : index
    %34 = vector.load %arg1[%c0_34, %c1_35, %c2_36, %c0_37] : memref<1x18x18x128xbf16, #tpu.memory_space<vmem>>, vector<1x16x16x128xbf16>
    %35 = vector.shape_cast %34 : vector<1x16x16x128xbf16> to vector<16x16x128xbf16>
    %36 = vector.shape_cast %35 : vector<16x16x128xbf16> to vector<256x128xbf16>
    %c5 = arith.constant 5 : index
    %c0_38 = arith.constant 0 : index
    %c0_39 = arith.constant 0 : index
    %37 = vector.load %arg2[%c5, %c0_38, %c0_39] : memref<9x128x128xbf16, #tpu.memory_space<vmem>>, vector<1x128x128xbf16>
    %38 = vector.shape_cast %37 : vector<1x128x128xbf16> to vector<128x128xbf16>
    %cst_40 = arith.constant dense<0.000000e+00> : vector<256x128xf32>
    %39 = tpu.matmul %36, %38, %cst_40 {dimension_numbers = #tpu.dot_dimension_numbers<[1], [0], [0], [1], [0, 0, 1, 1], [], []>} : vector<256x128xbf16>, vector<128x128xbf16>, vector<256x128xf32> -> vector<256x128xf32>
    %40 = arith.addf %33, %39 : vector<256x128xf32>
    %c0_41 = arith.constant 0 : index
    %c2_42 = arith.constant 2 : index
    %c0_43 = arith.constant 0 : index
    %c0_44 = arith.constant 0 : index
    %41 = vector.load %arg1[%c0_41, %c2_42, %c0_43, %c0_44] : memref<1x18x18x128xbf16, #tpu.memory_space<vmem>>, vector<1x16x16x128xbf16>
    %42 = vector.shape_cast %41 : vector<1x16x16x128xbf16> to vector<16x16x128xbf16>
    %43 = vector.shape_cast %42 : vector<16x16x128xbf16> to vector<256x128xbf16>
    %c6 = arith.constant 6 : index
    %c0_45 = arith.constant 0 : index
    %c0_46 = arith.constant 0 : index
    %44 = vector.load %arg2[%c6, %c0_45, %c0_46] : memref<9x128x128xbf16, #tpu.memory_space<vmem>>, vector<1x128x128xbf16>
    %45 = vector.shape_cast %44 : vector<1x128x128xbf16> to vector<128x128xbf16>
    %cst_47 = arith.constant dense<0.000000e+00> : vector<256x128xf32>
    %46 = tpu.matmul %43, %45, %cst_47 {dimension_numbers = #tpu.dot_dimension_numbers<[1], [0], [0], [1], [0, 0, 1, 1], [], []>} : vector<256x128xbf16>, vector<128x128xbf16>, vector<256x128xf32> -> vector<256x128xf32>
    %47 = arith.addf %40, %46 : vector<256x128xf32>
    %c0_48 = arith.constant 0 : index
    %c2_49 = arith.constant 2 : index
    %c1_50 = arith.constant 1 : index
    %c0_51 = arith.constant 0 : index
    %48 = vector.load %arg1[%c0_48, %c2_49, %c1_50, %c0_51] : memref<1x18x18x128xbf16, #tpu.memory_space<vmem>>, vector<1x16x16x128xbf16>
    %49 = vector.shape_cast %48 : vector<1x16x16x128xbf16> to vector<16x16x128xbf16>
    %50 = vector.shape_cast %49 : vector<16x16x128xbf16> to vector<256x128xbf16>
    %c7 = arith.constant 7 : index
    %c0_52 = arith.constant 0 : index
    %c0_53 = arith.constant 0 : index
    %51 = vector.load %arg2[%c7, %c0_52, %c0_53] : memref<9x128x128xbf16, #tpu.memory_space<vmem>>, vector<1x128x128xbf16>
    %52 = vector.shape_cast %51 : vector<1x128x128xbf16> to vector<128x128xbf16>
    %cst_54 = arith.constant dense<0.000000e+00> : vector<256x128xf32>
    %53 = tpu.matmul %50, %52, %cst_54 {dimension_numbers = #tpu.dot_dimension_numbers<[1], [0], [0], [1], [0, 0, 1, 1], [], []>} : vector<256x128xbf16>, vector<128x128xbf16>, vector<256x128xf32> -> vector<256x128xf32>
    %54 = arith.addf %47, %53 : vector<256x128xf32>
    %c0_55 = arith.constant 0 : index
    %c2_56 = arith.constant 2 : index
    %c2_57 = arith.constant 2 : index
    %c0_58 = arith.constant 0 : index
    %55 = vector.load %arg1[%c0_55, %c2_56, %c2_57, %c0_58] : memref<1x18x18x128xbf16, #tpu.memory_space<vmem>>, vector<1x16x16x128xbf16>
    %56 = vector.shape_cast %55 : vector<1x16x16x128xbf16> to vector<16x16x128xbf16>
    %57 = vector.shape_cast %56 : vector<16x16x128xbf16> to vector<256x128xbf16>
    %c8 = arith.constant 8 : index
    %c0_59 = arith.constant 0 : index
    %c0_60 = arith.constant 0 : index
    %58 = vector.load %arg2[%c8, %c0_59, %c0_60] : memref<9x128x128xbf16, #tpu.memory_space<vmem>>, vector<1x128x128xbf16>
    %59 = vector.shape_cast %58 : vector<1x128x128xbf16> to vector<128x128xbf16>
    %cst_61 = arith.constant dense<0.000000e+00> : vector<256x128xf32>
    %60 = tpu.matmul %57, %59, %cst_61 {dimension_numbers = #tpu.dot_dimension_numbers<[1], [0], [0], [1], [0, 0, 1, 1], [], []>} : vector<256x128xbf16>, vector<128x128xbf16>, vector<256x128xf32> -> vector<256x128xf32>
    %61 = arith.addf %54, %60 : vector<256x128xf32>
    %62 = vector.shape_cast %61 : vector<256x128xf32> to vector<16x16x128xf32>
    %63 = arith.truncf %62 : vector<16x16x128xf32> to vector<16x16x128xbf16>
    %c0_62 = arith.constant 0 : index
    %c0_63 = arith.constant 0 : index
    %c0_64 = arith.constant 0 : index
    %c0_65 = arith.constant 0 : index
    %64 = vector.load %arg3[%c0_62, %c0_63, %c0_64, %c0_65] : memref<1x16x16x128xbf16, #tpu.memory_space<vmem>>, vector<1x16x16x128xbf16>
    %65 = vector.shape_cast %64 : vector<1x16x16x128xbf16> to vector<16x16x128xbf16>
    %66 = vector.shape_cast %63 : vector<16x16x128xbf16> to vector<1x16x16x128xbf16>
    tpu.vector_store %arg3[%c0_62, %c0_63, %c0_64, %c0_65], %66 {strides = array<i32>} : memref<1x16x16x128xbf16, #tpu.memory_space<vmem>>, vector<1x16x16x128xbf16>,
    %cst_66 = arith.constant dense<0.000000e+00> : vector<128xf32>
    %67 = vector.multi_reduction <add>, %61, %cst_66 [0] : vector<256x128xf32> to vector<128xf32>
    %68 = vector.shape_cast %67 : vector<128xf32> to vector<1x128xf32>
    %69 = arith.mulf %61, %61 : vector<256x128xf32>
    %cst_67 = arith.constant dense<0.000000e+00> : vector<128xf32>
    %70 = vector.multi_reduction <add>, %69, %cst_67 [0] : vector<256x128xf32> to vector<128xf32>
    %71 = vector.shape_cast %70 : vector<128xf32> to vector<1x128xf32>
    %72 = tpu.concatenate %68, %71 in 0 : vector<1x128xf32>, vector<1x128xf32> -> vector<2x128xf32>
    %c0_68 = arith.constant 0 : index
    %c0_69 = arith.constant 0 : index
    %c0_70 = arith.constant 0 : index
    %73 = vector.load %arg4[%c0_68, %c0_69, %c0_70] : memref<1x2x128xf32, #tpu.memory_space<vmem>>, vector<1x2x128xf32>
    %74 = vector.shape_cast %73 : vector<1x2x128xf32> to vector<2x128xf32>
    %75 = vector.shape_cast %72 : vector<2x128xf32> to vector<1x2x128xf32>
    tpu.vector_store %arg4[%c0_68, %c0_69, %c0_70], %75 {strides = array<i32>} : memref<1x2x128xf32, #tpu.memory_space<vmem>>, vector<1x2x128xf32>,
    return
  }
  func.func @transform_0(%arg0: i32) -> (i32, i32, i32, i32) {
    %c0_i32 = arith.constant 0 : i32
    %c0_i32_0 = arith.constant 0 : i32
    %c0_i32_1 = arith.constant 0 : i32
    %c0_i32_2 = arith.constant 0 : i32
    return %arg0, %c0_i32, %c0_i32_0, %c0_i32_1 : i32, i32, i32, i32
  }
  func.func @transform_1(%arg0: i32) -> (i32, i32, i32) {
    %c0_i32 = arith.constant 0 : i32
    %c0_i32_0 = arith.constant 0 : i32
    %c0_i32_1 = arith.constant 0 : i32
    %c0_i32_2 = arith.constant 0 : i32
    return %c0_i32, %c0_i32_0, %c0_i32_1 : i32, i32, i32
  }
  func.func @transform_2(%arg0: i32) -> (i32, i32, i32, i32) {
    %c0_i32 = arith.constant 0 : i32
    %c0_i32_0 = arith.constant 0 : i32
    %c0_i32_1 = arith.constant 0 : i32
    %c0_i32_2 = arith.constant 0 : i32
    return %arg0, %c0_i32, %c0_i32_0, %c0_i32_1 : i32, i32, i32, i32
  }
  func.func @transform_3(%arg0: i32) -> (i32, i32, i32) {
    %c0_i32 = arith.constant 0 : i32
    %c0_i32_0 = arith.constant 0 : i32
    %c0_i32_1 = arith.constant 0 : i32
    return %arg0, %c0_i32, %c0_i32_0 : i32, i32, i32
  }
}

module attributes {stable_mosaic.version = 11 : i64} {
  func.func @_bn_relu_conv_stats_kernel(%arg0: i32, %arg1: memref<1x16x16x128xbf16, #tpu.memory_space<vmem>>, %arg2: memref<1x128xf32, #tpu.memory_space<vmem>>, %arg3: memref<1x128xf32, #tpu.memory_space<vmem>>, %arg4: memref<9x128x128xbf16, #tpu.memory_space<vmem>>, %arg5: memref<1x16x16x128xbf16, #tpu.memory_space<vmem>>, %arg6: memref<1x2x128xf32, #tpu.memory_space<vmem>>, %arg7: memref<18x18x128xbf16, #tpu.memory_space<vmem>>) attributes {dimension_semantics = [#tpu.dimension_semantics<parallel>], iteration_bounds = array<i64: 2>, scalar_prefetch = 0 : i64, scratch_operands = 1 : i64, tpu.core_type = #tpu.core_type<tc>, window_params = [{transform_indices = @transform_0, window_bounds = array<i64: 1, 16, 16, 128>}, {pipeline_mode = #tpu.pipeline_mode<synchronous>, transform_indices = @transform_1, window_bounds = array<i64: 1, 128>}, {pipeline_mode = #tpu.pipeline_mode<synchronous>, transform_indices = @transform_2, window_bounds = array<i64: 1, 128>}, {pipeline_mode = #tpu.pipeline_mode<synchronous>, transform_indices = @transform_3, window_bounds = array<i64: 9, 128, 128>}, {transform_indices = @transform_4, window_bounds = array<i64: 1, 16, 16, 128>}, {transform_indices = @transform_5, window_bounds = array<i64: 1, 2, 128>}]} {
    %c0 = arith.constant 0 : index
    %c0_0 = arith.constant 0 : index
    %c0_1 = arith.constant 0 : index
    %c0_2 = arith.constant 0 : index
    %0 = vector.load %arg1[%c0, %c0_0, %c0_1, %c0_2] : memref<1x16x16x128xbf16, #tpu.memory_space<vmem>>, vector<1x16x16x128xbf16>
    %1 = vector.shape_cast %0 : vector<1x16x16x128xbf16> to vector<16x16x128xbf16>
    %2 = arith.extf %1 : vector<16x16x128xbf16> to vector<16x16x128xf32>
    %c0_3 = arith.constant 0 : index
    %c0_4 = arith.constant 0 : index
    %3 = vector.load %arg2[%c0_3, %c0_4] : memref<1x128xf32, #tpu.memory_space<vmem>>, vector<1x128xf32>
    %4 = vector.shape_cast %3 : vector<1x128xf32> to vector<1x1x128xf32>
    %5 = vector.broadcast %4 : vector<1x1x128xf32> to vector<16x16x128xf32>
    %6 = arith.mulf %2, %5 : vector<16x16x128xf32>
    %c0_5 = arith.constant 0 : index
    %c0_6 = arith.constant 0 : index
    %7 = vector.load %arg3[%c0_5, %c0_6] : memref<1x128xf32, #tpu.memory_space<vmem>>, vector<1x128xf32>
    %8 = vector.shape_cast %7 : vector<1x128xf32> to vector<1x1x128xf32>
    %9 = vector.broadcast %8 : vector<1x1x128xf32> to vector<16x16x128xf32>
    %10 = arith.addf %6, %9 : vector<16x16x128xf32>
    %cst = arith.constant 0.000000e+00 : f32
    %11 = vector.broadcast %cst : f32 to vector<16x16x128xf32>
    %12 = arith.maximumf %10, %11 : vector<16x16x128xf32>
    %cst_7 = arith.constant 0.000000e+00 : bf16
    %13 = vector.broadcast %cst_7 : bf16 to vector<18x18x128xbf16>
    %c0_8 = arith.constant 0 : index
    %c0_9 = arith.constant 0 : index
    %c0_10 = arith.constant 0 : index
    %14 = vector.load %arg7[%c0_8, %c0_9, %c0_10] : memref<18x18x128xbf16, #tpu.memory_space<vmem>>, vector<18x18x128xbf16>
    tpu.vector_store %arg7[%c0_8, %c0_9, %c0_10], %13 {strides = array<i32>} : memref<18x18x128xbf16, #tpu.memory_space<vmem>>, vector<18x18x128xbf16>,
    %15 = arith.truncf %12 : vector<16x16x128xf32> to vector<16x16x128xbf16>
    %c1 = arith.constant 1 : index
    %c1_11 = arith.constant 1 : index
    %c0_12 = arith.constant 0 : index
    %16 = vector.load %arg7[%c1, %c1_11, %c0_12] : memref<18x18x128xbf16, #tpu.memory_space<vmem>>, vector<16x16x128xbf16>
    tpu.vector_store %arg7[%c1, %c1_11, %c0_12], %15 {strides = array<i32>} : memref<18x18x128xbf16, #tpu.memory_space<vmem>>, vector<16x16x128xbf16>,
    %c0_13 = arith.constant 0 : index
    %c0_14 = arith.constant 0 : index
    %c0_15 = arith.constant 0 : index
    %17 = vector.load %arg7[%c0_13, %c0_14, %c0_15] : memref<18x18x128xbf16, #tpu.memory_space<vmem>>, vector<16x16x128xbf16>
    %18 = vector.shape_cast %17 : vector<16x16x128xbf16> to vector<256x128xbf16>
    %c0_16 = arith.constant 0 : index
    %c0_17 = arith.constant 0 : index
    %c0_18 = arith.constant 0 : index
    %19 = vector.load %arg4[%c0_16, %c0_17, %c0_18] : memref<9x128x128xbf16, #tpu.memory_space<vmem>>, vector<1x128x128xbf16>
    %20 = vector.shape_cast %19 : vector<1x128x128xbf16> to vector<128x128xbf16>
    %cst_19 = arith.constant dense<0.000000e+00> : vector<256x128xf32>
    %21 = tpu.matmul %18, %20, %cst_19 {dimension_numbers = #tpu.dot_dimension_numbers<[1], [0], [0], [1], [0, 0, 1, 1], [], []>} : vector<256x128xbf16>, vector<128x128xbf16>, vector<256x128xf32> -> vector<256x128xf32>
    %c0_20 = arith.constant 0 : index
    %c1_21 = arith.constant 1 : index
    %c0_22 = arith.constant 0 : index
    %22 = vector.load %arg7[%c0_20, %c1_21, %c0_22] : memref<18x18x128xbf16, #tpu.memory_space<vmem>>, vector<16x16x128xbf16>
    %23 = vector.shape_cast %22 : vector<16x16x128xbf16> to vector<256x128xbf16>
    %c1_23 = arith.constant 1 : index
    %c0_24 = arith.constant 0 : index
    %c0_25 = arith.constant 0 : index
    %24 = vector.load %arg4[%c1_23, %c0_24, %c0_25] : memref<9x128x128xbf16, #tpu.memory_space<vmem>>, vector<1x128x128xbf16>
    %25 = vector.shape_cast %24 : vector<1x128x128xbf16> to vector<128x128xbf16>
    %cst_26 = arith.constant dense<0.000000e+00> : vector<256x128xf32>
    %26 = tpu.matmul %23, %25, %cst_26 {dimension_numbers = #tpu.dot_dimension_numbers<[1], [0], [0], [1], [0, 0, 1, 1], [], []>} : vector<256x128xbf16>, vector<128x128xbf16>, vector<256x128xf32> -> vector<256x128xf32>
    %27 = arith.addf %21, %26 : vector<256x128xf32>
    %c0_27 = arith.constant 0 : index
    %c2 = arith.constant 2 : index
    %c0_28 = arith.constant 0 : index
    %28 = vector.load %arg7[%c0_27, %c2, %c0_28] : memref<18x18x128xbf16, #tpu.memory_space<vmem>>, vector<16x16x128xbf16>
    %29 = vector.shape_cast %28 : vector<16x16x128xbf16> to vector<256x128xbf16>
    %c2_29 = arith.constant 2 : index
    %c0_30 = arith.constant 0 : index
    %c0_31 = arith.constant 0 : index
    %30 = vector.load %arg4[%c2_29, %c0_30, %c0_31] : memref<9x128x128xbf16, #tpu.memory_space<vmem>>, vector<1x128x128xbf16>
    %31 = vector.shape_cast %30 : vector<1x128x128xbf16> to vector<128x128xbf16>
    %cst_32 = arith.constant dense<0.000000e+00> : vector<256x128xf32>
    %32 = tpu.matmul %29, %31, %cst_32 {dimension_numbers = #tpu.dot_dimension_numbers<[1], [0], [0], [1], [0, 0, 1, 1], [], []>} : vector<256x128xbf16>, vector<128x128xbf16>, vector<256x128xf32> -> vector<256x128xf32>
    %33 = arith.addf %27, %32 : vector<256x128xf32>
    %c1_33 = arith.constant 1 : index
    %c0_34 = arith.constant 0 : index
    %c0_35 = arith.constant 0 : index
    %34 = vector.load %arg7[%c1_33, %c0_34, %c0_35] : memref<18x18x128xbf16, #tpu.memory_space<vmem>>, vector<16x16x128xbf16>
    %35 = vector.shape_cast %34 : vector<16x16x128xbf16> to vector<256x128xbf16>
    %c3 = arith.constant 3 : index
    %c0_36 = arith.constant 0 : index
    %c0_37 = arith.constant 0 : index
    %36 = vector.load %arg4[%c3, %c0_36, %c0_37] : memref<9x128x128xbf16, #tpu.memory_space<vmem>>, vector<1x128x128xbf16>
    %37 = vector.shape_cast %36 : vector<1x128x128xbf16> to vector<128x128xbf16>
    %cst_38 = arith.constant dense<0.000000e+00> : vector<256x128xf32>
    %38 = tpu.matmul %35, %37, %cst_38 {dimension_numbers = #tpu.dot_dimension_numbers<[1], [0], [0], [1], [0, 0, 1, 1], [], []>} : vector<256x128xbf16>, vector<128x128xbf16>, vector<256x128xf32> -> vector<256x128xf32>
    %39 = arith.addf %33, %38 : vector<256x128xf32>
    %c1_39 = arith.constant 1 : index
    %c1_40 = arith.constant 1 : index
    %c0_41 = arith.constant 0 : index
    %40 = vector.load %arg7[%c1_39, %c1_40, %c0_41] : memref<18x18x128xbf16, #tpu.memory_space<vmem>>, vector<16x16x128xbf16>
    %41 = vector.shape_cast %40 : vector<16x16x128xbf16> to vector<256x128xbf16>
    %c4 = arith.constant 4 : index
    %c0_42 = arith.constant 0 : index
    %c0_43 = arith.constant 0 : index
    %42 = vector.load %arg4[%c4, %c0_42, %c0_43] : memref<9x128x128xbf16, #tpu.memory_space<vmem>>, vector<1x128x128xbf16>
    %43 = vector.shape_cast %42 : vector<1x128x128xbf16> to vector<128x128xbf16>
    %cst_44 = arith.constant dense<0.000000e+00> : vector<256x128xf32>
    %44 = tpu.matmul %41, %43, %cst_44 {dimension_numbers = #tpu.dot_dimension_numbers<[1], [0], [0], [1], [0, 0, 1, 1], [], []>} : vector<256x128xbf16>, vector<128x128xbf16>, vector<256x128xf32> -> vector<256x128xf32>
    %45 = arith.addf %39, %44 : vector<256x128xf32>
    %c1_45 = arith.constant 1 : index
    %c2_46 = arith.constant 2 : index
    %c0_47 = arith.constant 0 : index
    %46 = vector.load %arg7[%c1_45, %c2_46, %c0_47] : memref<18x18x128xbf16, #tpu.memory_space<vmem>>, vector<16x16x128xbf16>
    %47 = vector.shape_cast %46 : vector<16x16x128xbf16> to vector<256x128xbf16>
    %c5 = arith.constant 5 : index
    %c0_48 = arith.constant 0 : index
    %c0_49 = arith.constant 0 : index
    %48 = vector.load %arg4[%c5, %c0_48, %c0_49] : memref<9x128x128xbf16, #tpu.memory_space<vmem>>, vector<1x128x128xbf16>
    %49 = vector.shape_cast %48 : vector<1x128x128xbf16> to vector<128x128xbf16>
    %cst_50 = arith.constant dense<0.000000e+00> : vector<256x128xf32>
    %50 = tpu.matmul %47, %49, %cst_50 {dimension_numbers = #tpu.dot_dimension_numbers<[1], [0], [0], [1], [0, 0, 1, 1], [], []>} : vector<256x128xbf16>, vector<128x128xbf16>, vector<256x128xf32> -> vector<256x128xf32>
    %51 = arith.addf %45, %50 : vector<256x128xf32>
    %c2_51 = arith.constant 2 : index
    %c0_52 = arith.constant 0 : index
    %c0_53 = arith.constant 0 : index
    %52 = vector.load %arg7[%c2_51, %c0_52, %c0_53] : memref<18x18x128xbf16, #tpu.memory_space<vmem>>, vector<16x16x128xbf16>
    %53 = vector.shape_cast %52 : vector<16x16x128xbf16> to vector<256x128xbf16>
    %c6 = arith.constant 6 : index
    %c0_54 = arith.constant 0 : index
    %c0_55 = arith.constant 0 : index
    %54 = vector.load %arg4[%c6, %c0_54, %c0_55] : memref<9x128x128xbf16, #tpu.memory_space<vmem>>, vector<1x128x128xbf16>
    %55 = vector.shape_cast %54 : vector<1x128x128xbf16> to vector<128x128xbf16>
    %cst_56 = arith.constant dense<0.000000e+00> : vector<256x128xf32>
    %56 = tpu.matmul %53, %55, %cst_56 {dimension_numbers = #tpu.dot_dimension_numbers<[1], [0], [0], [1], [0, 0, 1, 1], [], []>} : vector<256x128xbf16>, vector<128x128xbf16>, vector<256x128xf32> -> vector<256x128xf32>
    %57 = arith.addf %51, %56 : vector<256x128xf32>
    %c2_57 = arith.constant 2 : index
    %c1_58 = arith.constant 1 : index
    %c0_59 = arith.constant 0 : index
    %58 = vector.load %arg7[%c2_57, %c1_58, %c0_59] : memref<18x18x128xbf16, #tpu.memory_space<vmem>>, vector<16x16x128xbf16>
    %59 = vector.shape_cast %58 : vector<16x16x128xbf16> to vector<256x128xbf16>
    %c7 = arith.constant 7 : index
    %c0_60 = arith.constant 0 : index
    %c0_61 = arith.constant 0 : index
    %60 = vector.load %arg4[%c7, %c0_60, %c0_61] : memref<9x128x128xbf16, #tpu.memory_space<vmem>>, vector<1x128x128xbf16>
    %61 = vector.shape_cast %60 : vector<1x128x128xbf16> to vector<128x128xbf16>
    %cst_62 = arith.constant dense<0.000000e+00> : vector<256x128xf32>
    %62 = tpu.matmul %59, %61, %cst_62 {dimension_numbers = #tpu.dot_dimension_numbers<[1], [0], [0], [1], [0, 0, 1, 1], [], []>} : vector<256x128xbf16>, vector<128x128xbf16>, vector<256x128xf32> -> vector<256x128xf32>
    %63 = arith.addf %57, %62 : vector<256x128xf32>
    %c2_63 = arith.constant 2 : index
    %c2_64 = arith.constant 2 : index
    %c0_65 = arith.constant 0 : index
    %64 = vector.load %arg7[%c2_63, %c2_64, %c0_65] : memref<18x18x128xbf16, #tpu.memory_space<vmem>>, vector<16x16x128xbf16>
    %65 = vector.shape_cast %64 : vector<16x16x128xbf16> to vector<256x128xbf16>
    %c8 = arith.constant 8 : index
    %c0_66 = arith.constant 0 : index
    %c0_67 = arith.constant 0 : index
    %66 = vector.load %arg4[%c8, %c0_66, %c0_67] : memref<9x128x128xbf16, #tpu.memory_space<vmem>>, vector<1x128x128xbf16>
    %67 = vector.shape_cast %66 : vector<1x128x128xbf16> to vector<128x128xbf16>
    %cst_68 = arith.constant dense<0.000000e+00> : vector<256x128xf32>
    %68 = tpu.matmul %65, %67, %cst_68 {dimension_numbers = #tpu.dot_dimension_numbers<[1], [0], [0], [1], [0, 0, 1, 1], [], []>} : vector<256x128xbf16>, vector<128x128xbf16>, vector<256x128xf32> -> vector<256x128xf32>
    %69 = arith.addf %63, %68 : vector<256x128xf32>
    %70 = vector.shape_cast %69 : vector<256x128xf32> to vector<16x16x128xf32>
    %71 = arith.truncf %70 : vector<16x16x128xf32> to vector<16x16x128xbf16>
    %c0_69 = arith.constant 0 : index
    %c0_70 = arith.constant 0 : index
    %c0_71 = arith.constant 0 : index
    %c0_72 = arith.constant 0 : index
    %72 = vector.load %arg5[%c0_69, %c0_70, %c0_71, %c0_72] : memref<1x16x16x128xbf16, #tpu.memory_space<vmem>>, vector<1x16x16x128xbf16>
    %73 = vector.shape_cast %72 : vector<1x16x16x128xbf16> to vector<16x16x128xbf16>
    %74 = vector.shape_cast %71 : vector<16x16x128xbf16> to vector<1x16x16x128xbf16>
    tpu.vector_store %arg5[%c0_69, %c0_70, %c0_71, %c0_72], %74 {strides = array<i32>} : memref<1x16x16x128xbf16, #tpu.memory_space<vmem>>, vector<1x16x16x128xbf16>,
    %cst_73 = arith.constant dense<0.000000e+00> : vector<128xf32>
    %75 = vector.multi_reduction <add>, %69, %cst_73 [0] : vector<256x128xf32> to vector<128xf32>
    %76 = vector.shape_cast %75 : vector<128xf32> to vector<1x128xf32>
    %77 = arith.mulf %69, %69 : vector<256x128xf32>
    %cst_74 = arith.constant dense<0.000000e+00> : vector<128xf32>
    %78 = vector.multi_reduction <add>, %77, %cst_74 [0] : vector<256x128xf32> to vector<128xf32>
    %79 = vector.shape_cast %78 : vector<128xf32> to vector<1x128xf32>
    %80 = tpu.concatenate %76, %79 in 0 : vector<1x128xf32>, vector<1x128xf32> -> vector<2x128xf32>
    %c0_75 = arith.constant 0 : index
    %c0_76 = arith.constant 0 : index
    %c0_77 = arith.constant 0 : index
    %81 = vector.load %arg6[%c0_75, %c0_76, %c0_77] : memref<1x2x128xf32, #tpu.memory_space<vmem>>, vector<1x2x128xf32>
    %82 = vector.shape_cast %81 : vector<1x2x128xf32> to vector<2x128xf32>
    %83 = vector.shape_cast %80 : vector<2x128xf32> to vector<1x2x128xf32>
    tpu.vector_store %arg6[%c0_75, %c0_76, %c0_77], %83 {strides = array<i32>} : memref<1x2x128xf32, #tpu.memory_space<vmem>>, vector<1x2x128xf32>,
    return
  }
  func.func @transform_0(%arg0: i32) -> (i32, i32, i32, i32) {
    %c0_i32 = arith.constant 0 : i32
    %c0_i32_0 = arith.constant 0 : i32
    %c0_i32_1 = arith.constant 0 : i32
    %c0_i32_2 = arith.constant 0 : i32
    return %arg0, %c0_i32, %c0_i32_0, %c0_i32_1 : i32, i32, i32, i32
  }
  func.func @transform_1(%arg0: i32) -> (i32, i32) {
    %c0_i32 = arith.constant 0 : i32
    %c0_i32_0 = arith.constant 0 : i32
    %c0_i32_1 = arith.constant 0 : i32
    return %c0_i32, %c0_i32_0 : i32, i32
  }
  func.func @transform_2(%arg0: i32) -> (i32, i32) {
    %c0_i32 = arith.constant 0 : i32
    %c0_i32_0 = arith.constant 0 : i32
    %c0_i32_1 = arith.constant 0 : i32
    return %c0_i32, %c0_i32_0 : i32, i32
  }
  func.func @transform_3(%arg0: i32) -> (i32, i32, i32) {
    %c0_i32 = arith.constant 0 : i32
    %c0_i32_0 = arith.constant 0 : i32
    %c0_i32_1 = arith.constant 0 : i32
    %c0_i32_2 = arith.constant 0 : i32
    return %c0_i32, %c0_i32_0, %c0_i32_1 : i32, i32, i32
  }
  func.func @transform_4(%arg0: i32) -> (i32, i32, i32, i32) {
    %c0_i32 = arith.constant 0 : i32
    %c0_i32_0 = arith.constant 0 : i32
    %c0_i32_1 = arith.constant 0 : i32
    %c0_i32_2 = arith.constant 0 : i32
    return %arg0, %c0_i32, %c0_i32_0, %c0_i32_1 : i32, i32, i32, i32
  }
  func.func @transform_5(%arg0: i32) -> (i32, i32, i32) {
    %c0_i32 = arith.constant 0 : i32
    %c0_i32_0 = arith.constant 0 : i32
    %c0_i32_1 = arith.constant 0 : i32
    return %arg0, %c0_i32, %c0_i32_0 : i32, i32, i32
  }
}

module attributes {stable_mosaic.version = 11 : i64} {
  func.func @_bn_add_relu_kernel(%arg0: i32, %arg1: i32, %arg2: memref<1x16x16x128xbf16, #tpu.memory_space<vmem>>, %arg3: memref<1x128xf32, #tpu.memory_space<vmem>>, %arg4: memref<1x128xf32, #tpu.memory_space<vmem>>, %arg5: memref<1x16x16x128xf32, #tpu.memory_space<vmem>>, %arg6: memref<1x16x16x128xf32, #tpu.memory_space<vmem>>) attributes {dimension_semantics = [#tpu.dimension_semantics<parallel>, #tpu.dimension_semantics<parallel>], iteration_bounds = array<i64: 2, 1>, scalar_prefetch = 0 : i64, scratch_operands = 0 : i64, tpu.core_type = #tpu.core_type<tc>, window_params = [{transform_indices = @transform_0, window_bounds = array<i64: 1, 16, 16, 128>}, {pipeline_mode = #tpu.pipeline_mode<synchronous>, transform_indices = @transform_1, window_bounds = array<i64: 1, 128>}, {pipeline_mode = #tpu.pipeline_mode<synchronous>, transform_indices = @transform_2, window_bounds = array<i64: 1, 128>}, {transform_indices = @transform_3, window_bounds = array<i64: 1, 16, 16, 128>}, {transform_indices = @transform_4, window_bounds = array<i64: 1, 16, 16, 128>}]} {
    %c0 = arith.constant 0 : index
    %c0_0 = arith.constant 0 : index
    %c0_1 = arith.constant 0 : index
    %c0_2 = arith.constant 0 : index
    %0 = vector.load %arg2[%c0, %c0_0, %c0_1, %c0_2] : memref<1x16x16x128xbf16, #tpu.memory_space<vmem>>, vector<1x16x16x128xbf16>
    %1 = arith.extf %0 : vector<1x16x16x128xbf16> to vector<1x16x16x128xf32>
    %c0_3 = arith.constant 0 : index
    %c0_4 = arith.constant 0 : index
    %2 = vector.load %arg3[%c0_3, %c0_4] : memref<1x128xf32, #tpu.memory_space<vmem>>, vector<1x128xf32>
    %3 = vector.shape_cast %2 : vector<1x128xf32> to vector<1x1x1x128xf32>
    %4 = vector.broadcast %3 : vector<1x1x1x128xf32> to vector<1x16x16x128xf32>
    %5 = arith.mulf %1, %4 : vector<1x16x16x128xf32>
    %c0_5 = arith.constant 0 : index
    %c0_6 = arith.constant 0 : index
    %6 = vector.load %arg4[%c0_5, %c0_6] : memref<1x128xf32, #tpu.memory_space<vmem>>, vector<1x128xf32>
    %7 = vector.shape_cast %6 : vector<1x128xf32> to vector<1x1x1x128xf32>
    %8 = vector.broadcast %7 : vector<1x1x1x128xf32> to vector<1x16x16x128xf32>
    %9 = arith.addf %5, %8 : vector<1x16x16x128xf32>
    %c0_7 = arith.constant 0 : index
    %c0_8 = arith.constant 0 : index
    %c0_9 = arith.constant 0 : index
    %c0_10 = arith.constant 0 : index
    %10 = vector.load %arg5[%c0_7, %c0_8, %c0_9, %c0_10] : memref<1x16x16x128xf32, #tpu.memory_space<vmem>>, vector<1x16x16x128xf32>
    %11 = arith.addf %9, %10 : vector<1x16x16x128xf32>
    %cst = arith.constant 0.000000e+00 : f32
    %12 = vector.broadcast %cst : f32 to vector<1x16x16x128xf32>
    %13 = arith.maximumf %11, %12 : vector<1x16x16x128xf32>
    %c0_11 = arith.constant 0 : index
    %c0_12 = arith.constant 0 : index
    %c0_13 = arith.constant 0 : index
    %c0_14 = arith.constant 0 : index
    %14 = vector.load %arg6[%c0_11, %c0_12, %c0_13, %c0_14] : memref<1x16x16x128xf32, #tpu.memory_space<vmem>>, vector<1x16x16x128xf32>
    tpu.vector_store %arg6[%c0_11, %c0_12, %c0_13, %c0_14], %13 {strides = array<i32>} : memref<1x16x16x128xf32, #tpu.memory_space<vmem>>, vector<1x16x16x128xf32>,
    return
  }
  func.func @transform_0(%arg0: i32, %arg1: i32) -> (i32, i32, i32, i32) {
    %c0_i32 = arith.constant 0 : i32
    %c0_i32_0 = arith.constant 0 : i32
    %c0_i32_1 = arith.constant 0 : i32
    return %arg0, %arg1, %c0_i32, %c0_i32_0 : i32, i32, i32, i32
  }
  func.func @transform_1(%arg0: i32, %arg1: i32) -> (i32, i32) {
    %c0_i32 = arith.constant 0 : i32
    %c0_i32_0 = arith.constant 0 : i32
    %c0_i32_1 = arith.constant 0 : i32
    return %c0_i32, %c0_i32_0 : i32, i32
  }
  func.func @transform_2(%arg0: i32, %arg1: i32) -> (i32, i32) {
    %c0_i32 = arith.constant 0 : i32
    %c0_i32_0 = arith.constant 0 : i32
    %c0_i32_1 = arith.constant 0 : i32
    return %c0_i32, %c0_i32_0 : i32, i32
  }
  func.func @transform_3(%arg0: i32, %arg1: i32) -> (i32, i32, i32, i32) {
    %c0_i32 = arith.constant 0 : i32
    %c0_i32_0 = arith.constant 0 : i32
    %c0_i32_1 = arith.constant 0 : i32
    return %arg0, %arg1, %c0_i32, %c0_i32_0 : i32, i32, i32, i32
  }
  func.func @transform_4(%arg0: i32, %arg1: i32) -> (i32, i32, i32, i32) {
    %c0_i32 = arith.constant 0 : i32
    %c0_i32_0 = arith.constant 0 : i32
    %c0_i32_1 = arith.constant 0 : i32
    return %arg0, %arg1, %c0_i32, %c0_i32_0 : i32, i32, i32, i32
  }
}

</mosaic_0001>

<llo_original>
// kernel: residual_block.5
$region0: #{residual_block.5}
  #allocation0 [shape = 'u32[]', space=smem, size = 0x4, offset = 0x4, fixed_abs, tag = 'smem constant byte address 0x4 - core index']
  #allocation1 [shape = 'u32[144,128]{1,0:T(1,128)}', space=vmem, size = 0x12000, scoped, tag = 'internal scratch']
  %s0 = inlined_call_operand.vmem [shape: bf16[2,16,16,128], index: 0, kind: input, shape index: {}]
  %s1 = inlined_call_operand.vmem [shape: f32[1,128], index: 1, kind: input, shape index: {}]
  %s2 = inlined_call_operand.vmem [shape: f32[1,128], index: 2, kind: input, shape index: {}]
  %s3 = inlined_call_operand.vmem [shape: f32[2,16,16,128], index: 3, kind: input, shape index: {}]
  %s4 = inlined_call_operand.vmem [shape: f32[2,16,16,128], index: 4, kind: output, shape index: {}]
  %s5 = sld [smem:[#allocation0]]
  $region49: #{residual_block.5} parent=0
    _
  %s7 = ssub.s32 1, %s5
  %s8 = scalar_select 0, %s7, %s5
  loop: start=0, step=1, limit=4
  $region2: #{residual_block.5} parent=0 // loop_pre_header
    _
  $region3: #{residual_block.5} parent=0 // loop_header
    %s10 = sphi 0, %s14
    %p11 = scmp.ge.s32.totalorder %s10, 4
    %s17 = sphi 0, %s29
    %s18 = sphi 0, %s25
    %s19 = sphi 0, %s17
    %s20 = sphi 0, %s18
    %s21 = sphi 0, %s19
    %s22 = sphi 0, %s20
    %s34 = sphi 0, %s36
    %s37 = sphi 0, %s34
    %s38 = sphi 0, %s37
    %s54 = sphi 0, %s38
    %s58 = sphi 0, %s58
    %s60 = sphi 0, %s58
    %s61 = sphi 0, %s60
    %s75 = sphi 0, %s61
    %s79 = sphi 0, %s79
    %s81 = sphi 0, %s79
    %s82 = sphi 0, %s81
    %s96 = sphi 0, %s82
    %s104 = sphi 0, %s106
    %s107 = sphi 0, %s104
    %s108 = sphi 0, %s107
    %s124 = sphi 0, %s108
    %s132 = sphi 0, %s134
    %s135 = sphi 0, %s132
    %s136 = sphi 0, %s135
    %s152 = sphi 0, %s136
  $region4: #{residual_block.5} parent=0 // loop_header_branch
    %13 = sbr.rel (%p11) target = $region8
  $region5: #{residual_block.5} parent=0 // loop_body
    %s15 = ssub.s32 %s10, 1
    %s16 = ssub.s32 %s10, 2
    %s23 = sadd.s32 1, %s18
    %p24 = scmp.ge.s32.totalorder %s23, 1
    %s25 = scalar_select %p24, 0, %s23
    %s26 = sadd.s32 1, %s17
    %s27 = scalar_select %p24, %s26, %s17
    %p28 = scmp.ge.s32.totalorder %s27, 2
    %s29 = scalar_select %p28, 0, %s27
    %s30 = ssub.s32 %s17, %s29
    %s31 = ssub.s32 %s18, %s25
    %s32 = sor.u32 %s30, %s31
    %p33 = scmp.eq.s32.totalorder %s32, 0
    %s35 = sadd.s32 %s34, 1
    %s36 = scalar_select %p33, %s34, %s35
    %p39 = pneg %p33
    %p40 = scmp.eq.s32.totalorder %s10, 1
    %p41 = por %p39, %p40
    %p42 = scmp.ne.s32.totalorder %s34, %s37
    %p43 = scmp.eq.s32.totalorder %s10, 0
    %p44 = por %p42, %p43
    %p45 = scmp.ne.s32.totalorder %s34, %s37
    %p46 = scmp.eq.s32.totalorder %s15, 1
    %p47 = por %p45, %p46
    %p48 = scmp.ne.s32.totalorder %s37, %s38
    %p49 = scmp.eq.s32.totalorder %s15, 0
    %p50 = por %p48, %p49
    %p51 = scmp.ne.s32.totalorder %s37, %s38
    %p52 = scmp.eq.s32.totalorder %s16, 1
    %p53 = por %p51, %p52
    %p55 = scmp.ne.s32.totalorder %s38, %s54
    %p56 = scmp.eq.s32.totalorder %s16, 0
    %p57 = por %p55, %p56
    %s59 = sadd.s32 %s58, 1
    %p62 = scmp.eq.s32.totalorder %s10, 1
    %p63 = scmp.ne.s32.totalorder %s58, %s60
    %p64 = scmp.eq.s32.totalorder %s10, 0
    %p65 = por %p63, %p64
    %p66 = scmp.ne.s32.totalorder %s58, %s60
    %p67 = scmp.eq.s32.totalorder %s15, 1
    %p68 = por %p66, %p67
    %p69 = scmp.ne.s32.totalorder %s60, %s61
    %p70 = scmp.eq.s32.totalorder %s15, 0
    %p71 = por %p69, %p70
    %p72 = scmp.ne.s32.totalorder %s60, %s61
    %p73 = scmp.eq.s32.totalorder %s16, 1
    %p74 = por %p72, %p73
    %p76 = scmp.ne.s32.totalorder %s61, %s75
    %p77 = scmp.eq.s32.totalorder %s16, 0
    %p78 = por %p76, %p77
    %s80 = sadd.s32 %s79, 1
    %p83 = scmp.eq.s32.totalorder %s10, 1
    %p84 = scmp.ne.s32.totalorder %s79, %s81
    %p85 = scmp.eq.s32.totalorder %s10, 0
    %p86 = por %p84, %p85
    %p87 = scmp.ne.s32.totalorder %s79, %s81
    %p88 = scmp.eq.s32.totalorder %s15, 1
    %p89 = por %p87, %p88
    %p90 = scmp.ne.s32.totalorder %s81, %s82
    %p91 = scmp.eq.s32.totalorder %s15, 0
    %p92 = por %p90, %p91
    %p93 = scmp.ne.s32.totalorder %s81, %s82
    %p94 = scmp.eq.s32.totalorder %s16, 1
    %p95 = por %p93, %p94
    %p97 = scmp.ne.s32.totalorder %s82, %s96
    %p98 = scmp.eq.s32.totalorder %s16, 0
    %p99 = por %p97, %p98
    %s100 = ssub.s32 %s17, %s29
    %s101 = ssub.s32 %s18, %s25
    %s102 = sor.u32 %s100, %s101
    %p103 = scmp.eq.s32.totalorder %s102, 0
    %s105 = sadd.s32 %s104, 1
    %s106 = scalar_select %p103, %s104, %s105
    %p109 = pneg %p103
    %p110 = scmp.eq.s32.totalorder %s10, 1
    %p111 = por %p109, %p110
    %p112 = scmp.ne.s32.totalorder %s104, %s107
    %p113 = scmp.eq.s32.totalorder %s10, 0
    %p114 = por %p112, %p113
    %p115 = scmp.ne.s32.totalorder %s104, %s107
    %p116 = scmp.eq.s32.totalorder %s15, 1
    %p117 = por %p115, %p116
    %p118 = scmp.ne.s32.totalorder %s107, %s108
    %p119 = scmp.eq.s32.totalorder %s15, 0
    %p120 = por %p118, %p119
    %p121 = scmp.ne.s32.totalorder %s107, %s108
    %p122 = scmp.eq.s32.totalorder %s16, 1
    %p123 = por %p121, %p122
    %p125 = scmp.ne.s32.totalorder %s108, %s124
    %p126 = scmp.eq.s32.totalorder %s16, 0
    %p127 = por %p125, %p126
    %s128 = ssub.s32 %s17, %s29
    %s129 = ssub.s32 %s18, %s25
    %s130 = sor.u32 %s128, %s129
    %p131 = scmp.eq.s32.totalorder %s130, 0
    %s133 = sadd.s32 %s132, 1
    %s134 = scalar_select %p131, %s132, %s133
    %p137 = pneg %p131
    %p138 = scmp.eq.s32.totalorder %s10, 1
    %p139 = por %p137, %p138
    %p140 = scmp.ne.s32.totalorder %s132, %s135
    %p141 = scmp.eq.s32.totalorder %s10, 0
    %p142 = por %p140, %p141
    %p143 = scmp.ne.s32.totalorder %s132, %s135
    %p144 = scmp.eq.s32.totalorder %s15, 1
    %p145 = por %p143, %p144
    %p146 = scmp.ne.s32.totalorder %s135, %s136
    %p147 = scmp.eq.s32.totalorder %s15, 0
    %p148 = por %p146, %p147
    %p149 = scmp.ne.s32.totalorder %s135, %s136
    %p150 = scmp.eq.s32.totalorder %s16, 1
    %p151 = por %p149, %p150
    %p153 = scmp.ne.s32.totalorder %s136, %s152
    %p154 = scmp.eq.s32.totalorder %s16, 0
    %p155 = por %p153, %p154
    %p156 = scmp.le.s32.totalorder 1, %s10
    %p157 = scmp.lt.s32.totalorder %s10, 3
    %p158 = pnand %p156, %p157
    %p159 = pneg %p158
    // Predicated region
    $region9: #{residual_block.5} parent=5 // pred_check
      _
    $region10: #{residual_block.5} parent=5 // pred_check_branch
      %161 = sbr.rel (%p158) target = $region12
    $region11: #{residual_block.5} parent=5 // pred_region
      %s162 = ssub.s32 %s10, 1
      // Predicated region
      $region13: #{residual_block.5} parent=11 // pred_check
        %p163 = pneg %p71
      $region14: #{residual_block.5} parent=11 // pred_check_branch
        %165 = sbr.rel (%p163) target = $region16
      $region15: #{residual_block.5} parent=11 // pred_region
        _
      $region16: #{residual_block.5} parent=11 // pred_fallthru
        _
      // Predicated region
      $region17: #{residual_block.5} parent=11 // pred_check
        %p166 = pneg %p92
      $region18: #{residual_block.5} parent=11 // pred_check_branch
        %168 = sbr.rel (%p166) target = $region20
      $region19: #{residual_block.5} parent=11 // pred_region
        _
      $region20: #{residual_block.5} parent=11 // pred_fallthru
        _
    $region12: #{residual_block.5} parent=5 // pred_fallthru
      _
    %p169 = scmp.lt.s32.totalorder %s10, 2
    // Predicated region
    $region21: #{residual_block.5} parent=5 // pred_check
      %p170 = pneg %p169
    $region22: #{residual_block.5} parent=5 // pred_check_branch
      %172 = sbr.rel (%p170) target = $region24
    $region23: #{residual_block.5} parent=5 // pred_region
      // Predicated region
      $region25: #{residual_block.5} parent=23 // pred_check
        %p173 = pneg %p44
      $region26: #{residual_block.5} parent=23 // pred_check_branch
        %175 = sbr.rel (%p173) target = $region28
      $region27: #{residual_block.5} parent=23 // pred_region
        %s176 = smul.u32 16, %s18
        %p177 = scmp.lt.s32.totalorder %s17, 1
        %s178 = scalar_select %p177, %s17, 1
        %p179 = scmp.lt.s32.totalorder %s176, 15
        %s180 = scalar_select %p179, %s176, 15
        %s181 = smul.addr %s180, 2
        %s182 = smul.addr %s178, 32
        %s183 = sadd.s32 %s181, %s182
        %s184 = smul.addr %s183, 4
        %s185 = scalar_lea.vmem %s0, %s184
        %s186 = smul.u32 16, %s18
      $region28: #{residual_block.5} parent=23 // pred_fallthru
        _
      // Predicated region
      $region29: #{residual_block.5} parent=23 // pred_check
        %p187 = pneg %p114
      $region30: #{residual_block.5} parent=23 // pred_check_branch
        %189 = sbr.rel (%p187) target = $region32
      $region31: #{residual_block.5} parent=23 // pred_region
        %s190 = smul.u32 16, %s18
        %p191 = scmp.lt.s32.totalorder %s17, 1
        %s192 = scalar_select %p191, %s17, 1
        %p193 = scmp.lt.s32.totalorder %s190, 15
        %s194 = scalar_select %p193, %s190, 15
        %s195 = smul.addr %s194, 2
        %s196 = smul.addr %s192, 32
        %s197 = sadd.s32 %s195, %s196
        %s198 = smul.addr %s197, 8
        %s199 = scalar_lea.vmem %s3, %s198
        %s200 = smul.u32 16, %s18
      $region32: #{residual_block.5} parent=23 // pred_fallthru
        _
    $region24: #{residual_block.5} parent=5 // pred_fallthru
      _
    %p201 = scmp.le.s32.totalorder 1, %s10
    %p202 = scmp.lt.s32.totalorder %s10, 3
    %p203 = pnand %p201, %p202
    %p204 = pneg %p203
    // Predicated region
    $region33: #{residual_block.5} parent=5 // pred_check
      _
    $region34: #{residual_block.5} parent=5 // pred_check_branch
      %206 = sbr.rel (%p203) target = $region36
    $region35: #{residual_block.5} parent=5 // pred_region
      %s207 = ssub.s32 %s10, 1
      %s208 = smul.u32 16, %s20
      %p209 = scmp.lt.s32.totalorder %s19, 1
      %s210 = scalar_select %p209, %s19, 1
      %p211 = scmp.lt.s32.totalorder %s208, 15
      %s212 = scalar_select %p211, %s208, 15
      %s213 = smul.addr %s212, 2
      %s214 = smul.addr %s210, 32
      %s215 = sadd.s32 %s213, %s214
      %s216 = smul.addr %s215, 4
      %s217 = scalar_lea.vmem %s0, %s216
      %p218 = pneg %p50
      %p219 = pneg %p47
      %p220 = pneg %p71
      %p221 = pneg %p68
      %p222 = pneg %p92
      %p223 = pneg %p89
      %s224 = smul.u32 16, %s20
      %p225 = scmp.lt.s32.totalorder %s19, 1
      %s226 = scalar_select %p225, %s19, 1
      %p227 = scmp.lt.s32.totalorder %s224, 15
      %s228 = scalar_select %p227, %s224, 15
      %s229 = smul.addr %s228, 2
      %s230 = smul.addr %s226, 32
      %s231 = sadd.s32 %s229, %s230
      %s232 = smul.addr %s231, 8
      %s233 = scalar_lea.vmem %s3, %s232
      %p234 = pneg %p120
      %p235 = pneg %p117
      %p236 = pneg %p148
      %p237 = pneg %p145
      %s238 = smul.u32 16, %s20
      %p239 = scmp.lt.s32.totalorder %s19, 1
      %s240 = scalar_select %p239, %s19, 1
      %p241 = scmp.lt.s32.totalorder %s238, 15
      %s242 = scalar_select %p241, %s238, 15
      %s243 = smul.addr %s242, 2
      %s244 = smul.addr %s240, 32
      %s245 = sadd.s32 %s243, %s244
      %s246 = smul.addr %s245, 8
      %s247 = scalar_lea.vmem %s4, %s246
      %s248 = smul.u32 16, %s20
      %p249 = scmp.lt.s32.totalorder %s19, 1
      %s250 = scalar_select %p249, %s19, 1
      %p251 = scmp.lt.s32.totalorder %s248, 15
      %s252 = scalar_select %p251, %s248, 15
      %s253 = smul.addr %s252, 2
      %s254 = smul.addr %s250, 32
      %s255 = sadd.s32 %s253, %s254
      %s256 = smul.addr %s255, 4
      %s257 = scalar_lea.vmem %s0, %s256
      %s258 = smul.u32 16, %s20
      %s259 = smul.u32 16, %s20
      %p260 = scmp.lt.s32.totalorder %s19, 1
      %s261 = scalar_select %p260, %s19, 1
      %p262 = scmp.lt.s32.totalorder %s259, 15
      %s263 = scalar_select %p262, %s259, 15
      %s264 = smul.addr %s263, 2
      %s265 = smul.addr %s261, 32
      %s266 = sadd.s32 %s264, %s265
      %s267 = smul.addr %s266, 8
      %s268 = scalar_lea.vmem %s3, %s267
      %s269 = smul.u32 16, %s20
      %s270 = smul.u32 16, %s20
      %p271 = scmp.lt.s32.totalorder %s19, 1
      %s272 = scalar_select %p271, %s19, 1
      %p273 = scmp.lt.s32.totalorder %s270, 15
      %s274 = scalar_select %p273, %s270, 15
      %s275 = smul.addr %s274, 2
      %s276 = smul.addr %s272, 32
      %s277 = sadd.s32 %s275, %s276
      %s278 = smul.addr %s277, 8
      %s279 = scalar_lea.vmem %s4, %s278
      %s280 = smul.u32 16, %s20
      %v281 = vld [vmem:[%s257] sm:$0xf]
      %v282 = vld [vmem:[%s257 + $0x4] sm:$0xf]
      %v283 = vld [vmem:[%s257 + $0x8] sm:$0xf]
      %v284 = vld [vmem:[%s257 + $0xc] sm:$0xf]
      %v285 = vld [vmem:[%s257 + $0x10] sm:$0xf]
      %v286 = vld [vmem:[%s257 + $0x14] sm:$0xf]
      %v287 = vld [vmem:[%s257 + $0x18] sm:$0xf]
      %v288 = vld [vmem:[%s257 + $0x1c] sm:$0xf]
      %v289 = vld [vmem:[%s257 + $0x20] sm:$0xf]
      %v290 = vld [vmem:[%s257 + $0x24] sm:$0xf]
      %v291 = vld [vmem:[%s257 + $0x28] sm:$0xf]
      %v292 = vld [vmem:[%s257 + $0x2c] sm:$0xf]
      %v293 = vld [vmem:[%s257 + $0x30] sm:$0xf]
      %v294 = vld [vmem:[%s257 + $0x34] sm:$0xf]
      %v295 = vld [vmem:[%s257 + $0x38] sm:$0xf]
      %v296 = vld [vmem:[%s257 + $0x3c] sm:$0xf]
      %v297 = vld [vmem:[%s257 + $0x40] sm:$0xf]
      %v298 = vld [vmem:[%s257 + $0x44] sm:$0xf]
      %v299 = vld [vmem:[%s257 + $0x48] sm:$0xf]
      %v300 = vld [vmem:[%s257 + $0x4c] sm:$0xf]
      %v301 = vld [vmem:[%s257 + $0x50] sm:$0xf]
      %v302 = vld [vmem:[%s257 + $0x54] sm:$0xf]
      %v303 = vld [vmem:[%s257 + $0x58] sm:$0xf]
      %v304 = vld [vmem:[%s257 + $0x5c] sm:$0xf]
      %v305 = vld [vmem:[%s257 + $0x60] sm:$0xf]
      %v306 = vld [vmem:[%s257 + $0x64] sm:$0xf]
      %v307 = vld [vmem:[%s257 + $0x68] sm:$0xf]
      %v308 = vld [vmem:[%s257 + $0x6c] sm:$0xf]
      %v309 = vld [vmem:[%s257 + $0x70] sm:$0xf]
      %v310 = vld [vmem:[%s257 + $0x74] sm:$0xf]
      %v311 = vld [vmem:[%s257 + $0x78] sm:$0xf]
      %v312 = vld [vmem:[%s257 + $0x7c] sm:$0xf]
      %v313 = vunpack.c.l.bf16 %v281
      %v314 = vunpack.c.l.bf16 %v282
      %v315 = vunpack.c.l.bf16 %v283
      %v316 = vunpack.c.l.bf16 %v284
      %v317 = vunpack.c.l.bf16 %v285
      %v318 = vunpack.c.l.bf16 %v286
      %v319 = vunpack.c.l.bf16 %v287
      %v320 = vunpack.c.l.bf16 %v288
      %v321 = vunpack.c.l.bf16 %v289
      %v322 = vunpack.c.l.bf16 %v290
      %v323 = vunpack.c.l.bf16 %v291
      %v324 = vunpack.c.l.bf16 %v292
      %v325 = vunpack.c.l.bf16 %v293
      %v326 = vunpack.c.l.bf16 %v294
      %v327 = vunpack.c.l.bf16 %v295
      %v328 = vunpack.c.l.bf16 %v296
      %v329 = vunpack.c.l.bf16 %v297
      %v330 = vunpack.c.l.bf16 %v298
      %v331 = vunpack.c.l.bf16 %v299
      %v332 = vunpack.c.l.bf16 %v300
      %v333 = vunpack.c.l.bf16 %v301
      %v334 = vunpack.c.l.bf16 %v302
      %v335 = vunpack.c.l.bf16 %v303
      %v336 = vunpack.c.l.bf16 %v304
      %v337 = vunpack.c.l.bf16 %v305
      %v338 = vunpack.c.l.bf16 %v306
      %v339 = vunpack.c.l.bf16 %v307
      %v340 = vunpack.c.l.bf16 %v308
      %v341 = vunpack.c.l.bf16 %v309
      %v342 = vunpack.c.l.bf16 %v310
      %v343 = vunpack.c.l.bf16 %v311
      %v344 = vunpack.c.l.bf16 %v312
      %v345 = vld [vmem:[%s1] sm:$0x1]
      %v347 = vlaneseq
      %v348 = vshrl.u32 %v347, 7
      %v349 = vsub.s32 0, %v348
      %v350 = vrot.slane %v345, %v349
      %v352 = vmul.f32 %v313, %v350
      %v353 = vmul.f32 %v314, %v350
      %v354 = vmul.f32 %v315, %v350
      %v355 = vmul.f32 %v316, %v350
      %v356 = vmul.f32 %v317, %v350
      %v357 = vmul.f32 %v318, %v350
      %v358 = vmul.f32 %v319, %v350
      %v359 = vmul.f32 %v320, %v350
      %v360 = vmul.f32 %v321, %v350
      %v361 = vmul.f32 %v322, %v350
      %v362 = vmul.f32 %v323, %v350
      %v363 = vmul.f32 %v324, %v350
      %v364 = vmul.f32 %v325, %v350
      %v365 = vmul.f32 %v326, %v350
      %v366 = vmul.f32 %v327, %v350
      %v367 = vmul.f32 %v328, %v350
      %v368 = vmul.f32 %v329, %v350
      %v369 = vmul.f32 %v330, %v350
      %v370 = vmul.f32 %v331, %v350
      %v371 = vmul.f32 %v332, %v350
      %v372 = vmul.f32 %v333, %v350
      %v373 = vmul.f32 %v334, %v350
      %v374 = vmul.f32 %v335, %v350
      %v375 = vmul.f32 %v336, %v350
      %v376 = vmul.f32 %v337, %v350
      %v377 = vmul.f32 %v338, %v350
      %v378 = vmul.f32 %v339, %v350
      %v379 = vmul.f32 %v340, %v350
      %v380 = vmul.f32 %v341, %v350
      %v381 = vmul.f32 %v342, %v350
      %v382 = vmul.f32 %v343, %v350
      %v383 = vmul.f32 %v344, %v350
      %v384 = vld [vmem:[%s2] sm:$0x1]
      %v386 = vlaneseq
      %v387 = vshrl.u32 %v386, 7
      %v388 = vsub.s32 0, %v387
      %v389 = vrot.slane %v384, %v388
      %v391 = vadd.f32 %v352, %v389
      %v392 = vadd.f32 %v353, %v389
      %v393 = vadd.f32 %v354, %v389
      %v394 = vadd.f32 %v355, %v389
      %v395 = vadd.f32 %v356, %v389
      %v396 = vadd.f32 %v357, %v389
      %v397 = vadd.f32 %v358, %v389
      %v398 = vadd.f32 %v359, %v389
      %v399 = vadd.f32 %v360, %v389
      %v400 = vadd.f32 %v361, %v389
      %v401 = vadd.f32 %v362, %v389
      %v402 = vadd.f32 %v363, %v389
      %v403 = vadd.f32 %v364, %v389
      %v404 = vadd.f32 %v365, %v389
      %v405 = vadd.f32 %v366, %v389
      %v406 = vadd.f32 %v367, %v389
      %v407 = vadd.f32 %v368, %v389
      %v408 = vadd.f32 %v369, %v389
      %v409 = vadd.f32 %v370, %v389
      %v410 = vadd.f32 %v371, %v389
      %v411 = vadd.f32 %v372, %v389
      %v412 = vadd.f32 %v373, %v389
      %v413 = vadd.f32 %v374, %v389
      %v414 = vadd.f32 %v375, %v389
      %v415 = vadd.f32 %v376, %v389
      %v416 = vadd.f32 %v377, %v389
      %v417 = vadd.f32 %v378, %v389
      %v418 = vadd.f32 %v379, %v389
      %v419 = vadd.f32 %v380, %v389
      %v420 = vadd.f32 %v381, %v389
      %v421 = vadd.f32 %v382, %v389
      %v422 = vadd.f32 %v383, %v389
      %v423 = vld [vmem:[%s268] sm:$0xff]
      %v424 = vld [vmem:[%s268 + $0x8] sm:$0xff]
      %v425 = vld [vmem:[%s268 + $0x10] sm:$0xff]
      %v426 = vld [vmem:[%s268 + $0x18] sm:$0xff]
      %v427 = vld [vmem:[%s268 + $0x20] sm:$0xff]
      %v428 = vld [vmem:[%s268 + $0x28] sm:$0xff]
      %v429 = vld [vmem:[%s268 + $0x30] sm:$0xff]
      %v430 = vld [vmem:[%s268 + $0x38] sm:$0xff]
      %v431 = vld [vmem:[%s268 + $0x40] sm:$0xff]
      %v432 = vld [vmem:[%s268 + $0x48] sm:$0xff]
      %v433 = vld [vmem:[%s268 + $0x50] sm:$0xff]
      %v434 = vld [vmem:[%s268 + $0x58] sm:$0xff]
      %v435 = vld [vmem:[%s268 + $0x60] sm:$0xff]
      %v436 = vld [vmem:[%s268 + $0x68] sm:$0xff]
      %v437 = vld [vmem:[%s268 + $0x70] sm:$0xff]
      %v438 = vld [vmem:[%s268 + $0x78] sm:$0xff]
      %v439 = vld [vmem:[%s268 + $0x80] sm:$0xff]
      %v440 = vld [vmem:[%s268 + $0x88] sm:$0xff]
      %v441 = vld [vmem:[%s268 + $0x90] sm:$0xff]
      %v442 = vld [vmem:[%s268 + $0x98] sm:$0xff]
      %v443 = vld [vmem:[%s268 + $0xa0] sm:$0xff]
      %v444 = vld [vmem:[%s268 + $0xa8] sm:$0xff]
      %v445 = vld [vmem:[%s268 + $0xb0] sm:$0xff]
      %v446 = vld [vmem:[%s268 + $0xb8] sm:$0xff]
      %v447 = vld [vmem:[%s268 + $0xc0] sm:$0xff]
      %v448 = vld [vmem:[%s268 + $0xc8] sm:$0xff]
      %v449 = vld [vmem:[%s268 + $0xd0] sm:$0xff]
      %v450 = vld [vmem:[%s268 + $0xd8] sm:$0xff]
      %v451 = vld [vmem:[%s268 + $0xe0] sm:$0xff]
      %v452 = vld [vmem:[%s268 + $0xe8] sm:$0xff]
      %v453 = vld [vmem:[%s268 + $0xf0] sm:$0xff]
      %v454 = vld [vmem:[%s268 + $0xf8] sm:$0xff]
      %v455 = vadd.f32 %v391, %v423
      %v456 = vadd.f32 %v392, %v424
      %v457 = vadd.f32 %v393, %v425
      %v458 = vadd.f32 %v394, %v426
      %v459 = vadd.f32 %v395, %v427
      %v460 = vadd.f32 %v396, %v428
      %v461 = vadd.f32 %v397, %v429
      %v462 = vadd.f32 %v398, %v430
      %v463 = vadd.f32 %v399, %v431
      %v464 = vadd.f32 %v400, %v432
      %v465 = vadd.f32 %v401, %v433
      %v466 = vadd.f32 %v402, %v434
      %v467 = vadd.f32 %v403, %v435
      %v468 = vadd.f32 %v404, %v436
      %v469 = vadd.f32 %v405, %v437
      %v470 = vadd.f32 %v406, %v438
      %v471 = vadd.f32 %v407, %v439
      %v472 = vadd.f32 %v408, %v440
      %v473 = vadd.f32 %v409, %v441
      %v474 = vadd.f32 %v410, %v442
      %v475 = vadd.f32 %v411, %v443
      %v476 = vadd.f32 %v412, %v444
      %v477 = vadd.f32 %v413, %v445
      %v478 = vadd.f32 %v414, %v446
      %v479 = vadd.f32 %v415, %v447
      %v480 = vadd.f32 %v416, %v448
      %v481 = vadd.f32 %v417, %v449
      %v482 = vadd.f32 %v418, %v450
      %v483 = vadd.f32 %v419, %v451
      %v484 = vadd.f32 %v420, %v452
      %v485 = vadd.f32 %v421, %v453
      %v486 = vadd.f32 %v422, %v454
      %v487 = vmax.f32 %v455, 0.0
      %v488 = vmax.f32 %v456, 0.0
      %v489 = vmax.f32 %v457, 0.0
      %v490 = vmax.f32 %v458, 0.0
      %v491 = vmax.f32 %v459, 0.0
      %v492 = vmax.f32 %v460, 0.0
      %v493 = vmax.f32 %v461, 0.0
      %v494 = vmax.f32 %v462, 0.0
      %v495 = vmax.f32 %v463, 0.0
      %v496 = vmax.f32 %v464, 0.0
      %v497 = vmax.f32 %v465, 0.0
      %v498 = vmax.f32 %v466, 0.0
      %v499 = vmax.f32 %v467, 0.0
      %v500 = vmax.f32 %v468, 0.0
      %v501 = vmax.f32 %v469, 0.0
      %v502 = vmax.f32 %v470, 0.0
      %v503 = vmax.f32 %v471, 0.0
      %v504 = vmax.f32 %v472, 0.0
      %v505 = vmax.f32 %v473, 0.0
      %v506 = vmax.f32 %v474, 0.0
      %v507 = vmax.f32 %v475, 0.0
      %v508 = vmax.f32 %v476, 0.0
      %v509 = vmax.f32 %v477, 0.0
      %v510 = vmax.f32 %v478, 0.0
      %v511 = vmax.f32 %v479, 0.0
      %v512 = vmax.f32 %v480, 0.0
      %v513 = vmax.f32 %v481, 0.0
      %v514 = vmax.f32 %v482, 0.0
      %v515 = vmax.f32 %v483, 0.0
      %v516 = vmax.f32 %v484, 0.0
      %v517 = vmax.f32 %v485, 0.0
      %v518 = vmax.f32 %v486, 0.0
      %519 = vst [vmem:[%s279] sm:$0xff] %v487
      %520 = vst [vmem:[%s279 + $0x8] sm:$0xff] %v488
      %521 = vst [vmem:[%s279 + $0x10] sm:$0xff] %v489
      %522 = vst [vmem:[%s279 + $0x18] sm:$0xff] %v490
      %523 = vst [vmem:[%s279 + $0x20] sm:$0xff] %v491
      %524 = vst [vmem:[%s279 + $0x28] sm:$0xff] %v492
      %525 = vst [vmem:[%s279 + $0x30] sm:$0xff] %v493
      %526 = vst [vmem:[%s279 + $0x38] sm:$0xff] %v494
      %527 = vst [vmem:[%s279 + $0x40] sm:$0xff] %v495
      %528 = vst [vmem:[%s279 + $0x48] sm:$0xff] %v496
      %529 = vst [vmem:[%s279 + $0x50] sm:$0xff] %v497
      %530 = vst [vmem:[%s279 + $0x58] sm:$0xff] %v498
      %531 = vst [vmem:[%s279 + $0x60] sm:$0xff] %v499
      %532 = vst [vmem:[%s279 + $0x68] sm:$0xff] %v500
      %533 = vst [vmem:[%s279 + $0x70] sm:$0xff] %v501
      %534 = vst [vmem:[%s279 + $0x78] sm:$0xff] %v502
      %535 = vst [vmem:[%s279 + $0x80] sm:$0xff] %v503
      %536 = vst [vmem:[%s279 + $0x88] sm:$0xff] %v504
      %537 = vst [vmem:[%s279 + $0x90] sm:$0xff] %v505
      %538 = vst [vmem:[%s279 + $0x98] sm:$0xff] %v506
      %539 = vst [vmem:[%s279 + $0xa0] sm:$0xff] %v507
      %540 = vst [vmem:[%s279 + $0xa8] sm:$0xff] %v508
      %541 = vst [vmem:[%s279 + $0xb0] sm:$0xff] %v509
      %542 = vst [vmem:[%s279 + $0xb8] sm:$0xff] %v510
      %543 = vst [vmem:[%s279 + $0xc0] sm:$0xff] %v511
      %544 = vst [vmem:[%s279 + $0xc8] sm:$0xff] %v512
      %545 = vst [vmem:[%s279 + $0xd0] sm:$0xff] %v513
      %546 = vst [vmem:[%s279 + $0xd8] sm:$0xff] %v514
      %547 = vst [vmem:[%s279 + $0xe0] sm:$0xff] %v515
      %548 = vst [vmem:[%s279 + $0xe8] sm:$0xff] %v516
      %549 = vst [vmem:[%s279 + $0xf0] sm:$0xff] %v517
      %550 = vst [vmem:[%s279 + $0xf8] sm:$0xff] %v518
      %s551 = smul.u32 16, %s20
      %p552 = scmp.lt.s32.totalorder %s19, 1
      %s553 = scalar_select %p552, %s19, 1
      %p554 = scmp.lt.s32.totalorder %s551, 15
      %s555 = scalar_select %p554, %s551, 15
      %s556 = smul.addr %s555, 2
      %s557 = smul.addr %s553, 32
      %s558 = sadd.s32 %s556, %s557
      %s559 = smul.addr %s558, 8
      %s560 = scalar_lea.vmem %s4, %s559
      // Predicated region
      $region37: #{residual_block.5} parent=35 // pred_check
        %p561 = pneg %p145
      $region38: #{residual_block.5} parent=35 // pred_check_branch
        %563 = sbr.rel (%p561) target = $region40
      $region39: #{residual_block.5} parent=35 // pred_region
        %s564 = smul.u32 16, %s20
      $region40: #{residual_block.5} parent=35 // pred_fallthru
        _
    $region36: #{residual_block.5} parent=5 // pred_fallthru
      _
    %p565 = scmp.le.s32.totalorder 2, %s10
    // Predicated region
    $region41: #{residual_block.5} parent=5 // pred_check
      %p566 = pneg %p565
    $region42: #{residual_block.5} parent=5 // pred_check_branch
      %568 = sbr.rel (%p566) target = $region44
    $region43: #{residual_block.5} parent=5 // pred_region
      %s569 = ssub.s32 %s10, 2
      // Predicated region
      $region45: #{residual_block.5} parent=43 // pred_check
        %p570 = pneg %p151
      $region46: #{residual_block.5} parent=43 // pred_check_branch
        %572 = sbr.rel (%p570) target = $region48
      $region47: #{residual_block.5} parent=43 // pred_region
        %s573 = smul.u32 16, %s22
        %p574 = scmp.lt.s32.totalorder %s21, 1
        %s575 = scalar_select %p574, %s21, 1
        %p576 = scmp.lt.s32.totalorder %s573, 15
        %s577 = scalar_select %p576, %s573, 15
        %s578 = smul.addr %s577, 2
        %s579 = smul.addr %s575, 32
        %s580 = sadd.s32 %s578, %s579
        %s581 = smul.addr %s580, 8
        %s582 = scalar_lea.vmem %s4, %s581
      $region48: #{residual_block.5} parent=43 // pred_fallthru
        _
    $region44: #{residual_block.5} parent=5 // pred_fallthru
      _
  $region6: #{residual_block.5} parent=0 // loop_footer
    %s14 = sadd.s32 1, %s10
  $region7: #{residual_block.5} parent=0 // loop_footer_branch
    %9 = sbr.rel target = $region3
  $region8: #{residual_block.5} parent=0 // loop_exit
    _

// kernel: residual_block.3
$region0: #{residual_block.3}
  #allocation0 [shape = 'u32[]', space=smem, size = 0x4, offset = 0x4, fixed_abs, tag = 'smem constant byte address 0x4 - core index']
  #allocation1 [shape = 'u32[144,128]{1,0:T(1,128)}', space=vmem, size = 0x12000, scoped, tag = 'internal scratch']
  %s0 = inlined_call_operand.vmem [shape: bf16[2,18,18,128], index: 0, kind: input, shape index: {}]
  %s1 = inlined_call_operand.vmem [shape: bf16[9,128,128], index: 1, kind: input, shape index: {}]
  %s2 = inlined_call_operand.vmem [shape: bf16[2,16,16,128], index: 2, kind: output, shape index: {0}]
  %s3 = inlined_call_operand.vmem [shape: f32[2,2,128], index: 3, kind: output, shape index: {1}]
  %4 = xla_tuple %s2, %s3
  %s5 = sld [smem:[#allocation0]]
  $region49: #{residual_block.3} parent=0
    _
  %s7 = ssub.s32 1, %s5
  %s8 = scalar_select 0, %s7, %s5
  loop: start=0, step=1, limit=4
  $region2: #{residual_block.3} parent=0 // loop_pre_header
    _
  $region3: #{residual_block.3} parent=0 // loop_header
    %s10 = sphi 0, %s14
    %p11 = scmp.ge.s32.totalorder %s10, 4
    %s20 = sphi 0, %s22
    %s23 = sphi 0, %s20
    %s24 = sphi 0, %s23
    %s40 = sphi 0, %s24
    %s44 = sphi 0, %s44
    %s46 = sphi 0, %s44
    %s47 = sphi 0, %s46
    %s61 = sphi 0, %s47
    %s67 = sphi 0, %s69
    %s70 = sphi 0, %s67
    %s71 = sphi 0, %s70
    %s87 = sphi 0, %s71
    %s93 = sphi 0, %s95
    %s96 = sphi 0, %s93
    %s97 = sphi 0, %s96
    %s113 = sphi 0, %s97
  $region4: #{residual_block.3} parent=0 // loop_header_branch
    %13 = sbr.rel (%p11) target = $region8
  $region5: #{residual_block.3} parent=0 // loop_body
    %s15 = ssub.s32 %s10, 1
    %s16 = ssub.s32 %s10, 2
    %s17 = sadd.s32 %s10, 1
    %s18 = ssub.s32 %s10, %s17
    %p19 = scmp.eq.s32.totalorder %s18, 0
    %s21 = sadd.s32 %s20, 1
    %s22 = scalar_select %p19, %s20, %s21
    %p25 = pneg %p19
    %p26 = scmp.eq.s32.totalorder %s10, 1
    %p27 = por %p25, %p26
    %p28 = scmp.ne.s32.totalorder %s20, %s23
    %p29 = scmp.eq.s32.totalorder %s10, 0
    %p30 = por %p28, %p29
    %p31 = scmp.ne.s32.totalorder %s20, %s23
    %p32 = scmp.eq.s32.totalorder %s15, 1
    %p33 = por %p31, %p32
    %p34 = scmp.ne.s32.totalorder %s23, %s24
    %p35 = scmp.eq.s32.totalorder %s15, 0
    %p36 = por %p34, %p35
    %p37 = scmp.ne.s32.totalorder %s23, %s24
    %p38 = scmp.eq.s32.totalorder %s16, 1
    %p39 = por %p37, %p38
    %p41 = scmp.ne.s32.totalorder %s24, %s40
    %p42 = scmp.eq.s32.totalorder %s16, 0
    %p43 = por %p41, %p42
    %s45 = sadd.s32 %s44, 1
    %p48 = scmp.eq.s32.totalorder %s10, 1
    %p49 = scmp.ne.s32.totalorder %s44, %s46
    %p50 = scmp.eq.s32.totalorder %s10, 0
    %p51 = por %p49, %p50
    %p52 = scmp.ne.s32.totalorder %s44, %s46
    %p53 = scmp.eq.s32.totalorder %s15, 1
    %p54 = por %p52, %p53
    %p55 = scmp.ne.s32.totalorder %s46, %s47
    %p56 = scmp.eq.s32.totalorder %s15, 0
    %p57 = por %p55, %p56
    %p58 = scmp.ne.s32.totalorder %s46, %s47
    %p59 = scmp.eq.s32.totalorder %s16, 1
    %p60 = por %p58, %p59
    %p62 = scmp.ne.s32.totalorder %s47, %s61
    %p63 = scmp.eq.s32.totalorder %s16, 0
    %p64 = por %p62, %p63
    %s65 = ssub.s32 %s10, %s17
    %p66 = scmp.eq.s32.totalorder %s65, 0
    %s68 = sadd.s32 %s67, 1
    %s69 = scalar_select %p66, %s67, %s68
    %p72 = pneg %p66
    %p73 = scmp.eq.s32.totalorder %s10, 1
    %p74 = por %p72, %p73
    %p75 = scmp.ne.s32.totalorder %s67, %s70
    %p76 = scmp.eq.s32.totalorder %s10, 0
    %p77 = por %p75, %p76
    %p78 = scmp.ne.s32.totalorder %s67, %s70
    %p79 = scmp.eq.s32.totalorder %s15, 1
    %p80 = por %p78, %p79
    %p81 = scmp.ne.s32.totalorder %s70, %s71
    %p82 = scmp.eq.s32.totalorder %s15, 0
    %p83 = por %p81, %p82
    %p84 = scmp.ne.s32.totalorder %s70, %s71
    %p85 = scmp.eq.s32.totalorder %s16, 1
    %p86 = por %p84, %p85
    %p88 = scmp.ne.s32.totalorder %s71, %s87
    %p89 = scmp.eq.s32.totalorder %s16, 0
    %p90 = por %p88, %p89
    %s91 = ssub.s32 %s10, %s17
    %p92 = scmp.eq.s32.totalorder %s91, 0
    %s94 = sadd.s32 %s93, 1
    %s95 = scalar_select %p92, %s93, %s94
    %p98 = pneg %p92
    %p99 = scmp.eq.s32.totalorder %s10, 1
    %p100 = por %p98, %p99
    %p101 = scmp.ne.s32.totalorder %s93, %s96
    %p102 = scmp.eq.s32.totalorder %s10, 0
    %p103 = por %p101, %p102
    %p104 = scmp.ne.s32.totalorder %s93, %s96
    %p105 = scmp.eq.s32.totalorder %s15, 1
    %p106 = por %p104, %p105
    %p107 = scmp.ne.s32.totalorder %s96, %s97
    %p108 = scmp.eq.s32.totalorder %s15, 0
    %p109 = por %p107, %p108
    %p110 = scmp.ne.s32.totalorder %s96, %s97
    %p111 = scmp.eq.s32.totalorder %s16, 1
    %p112 = por %p110, %p111
    %p114 = scmp.ne.s32.totalorder %s97, %s113
    %p115 = scmp.eq.s32.totalorder %s16, 0
    %p116 = por %p114, %p115
    %p117 = scmp.le.s32.totalorder 1, %s10
    %p118 = scmp.lt.s32.totalorder %s10, 3
    %p119 = pnand %p117, %p118
    %p120 = pneg %p119
    // Predicated region
    $region9: #{residual_block.3} parent=5 // pred_check
      _
    $region10: #{residual_block.3} parent=5 // pred_check_branch
      %122 = sbr.rel (%p119) target = $region12
    $region11: #{residual_block.3} parent=5 // pred_region
      %s123 = ssub.s32 %s10, 1
      // Predicated region
      $region13: #{residual_block.3} parent=11 // pred_check
        %p124 = pneg %p57
      $region14: #{residual_block.3} parent=11 // pred_check_branch
        %126 = sbr.rel (%p124) target = $region16
      $region15: #{residual_block.3} parent=11 // pred_region
        _
      $region16: #{residual_block.3} parent=11 // pred_fallthru
        _
    $region12: #{residual_block.3} parent=5 // pred_fallthru
      _
    %p127 = scmp.lt.s32.totalorder %s10, 2
    // Predicated region
    $region17: #{residual_block.3} parent=5 // pred_check
      %p128 = pneg %p127
    $region18: #{residual_block.3} parent=5 // pred_check_branch
      %130 = sbr.rel (%p128) target = $region20
    $region19: #{residual_block.3} parent=5 // pred_region
      // Predicated region
      $region21: #{residual_block.3} parent=19 // pred_check
        %p131 = pneg %p30
      $region22: #{residual_block.3} parent=19 // pred_check_branch
        %133 = sbr.rel (%p131) target = $region24
      $region23: #{residual_block.3} parent=19 // pred_region
        %p134 = scmp.lt.s32.totalorder %s10, 1
        %s135 = scalar_select %p134, %s10, 1
        %s136 = smul.addr %s135, 54
        %s137 = smul.addr %s136, 4
        %s138 = scalar_lea.vmem %s0, %s137
      $region24: #{residual_block.3} parent=19 // pred_fallthru
        _
    $region20: #{residual_block.3} parent=5 // pred_fallthru
      _
    %p139 = scmp.le.s32.totalorder 1, %s10
    %p140 = scmp.lt.s32.totalorder %s10, 3
    %p141 = pnand %p139, %p140
    %p142 = pneg %p141
    // Predicated region
    $region25: #{residual_block.3} parent=5 // pred_check
      _
    $region26: #{residual_block.3} parent=5 // pred_check_branch
      %144 = sbr.rel (%p141) target = $region28
    $region27: #{residual_block.3} parent=5 // pred_region
      %s145 = ssub.s32 %s10, 1
      %p146 = scmp.lt.s32.totalorder %s15, 1
      %s147 = scalar_select %p146, %s15, 1
      %s148 = smul.addr %s147, 54
      %s149 = smul.addr %s148, 4
      %s150 = scalar_lea.vmem %s0, %s149
      %p151 = pneg %p36
      %p152 = pneg %p33
      %p153 = pneg %p57
      %p154 = pneg %p54
      %p155 = pneg %p83
      %p156 = pneg %p80
      %p157 = scmp.lt.s32.totalorder %s15, 1
      %s158 = scalar_select %p157, %s15, 1
      %s159 = smul.addr %s158, 32
      %s160 = smul.addr %s159, 4
      %s161 = scalar_lea.vmem %s2, %s160
      %p162 = pneg %p109
      %p163 = pneg %p106
      %p164 = scmp.lt.s32.totalorder %s15, 1
      %s165 = scalar_select %p164, %s15, 1
      %s166 = smul.addr %s165, 2
      %s167 = scalar_lea.vmem %s3, %s166
      %p168 = scmp.lt.s32.totalorder %s15, 1
      %s169 = scalar_select %p168, %s15, 1
      %s170 = smul.addr %s169, 54
      %s171 = smul.addr %s170, 4
      %s172 = scalar_lea.vmem %s0, %s171
      %p173 = scmp.lt.s32.totalorder %s15, 1
      %s174 = scalar_select %p173, %s15, 1
      %s175 = smul.addr %s174, 32
      %s176 = smul.addr %s175, 4
      %s177 = scalar_lea.vmem %s2, %s176
      %p178 = scmp.lt.s32.totalorder %s15, 1
      %s179 = scalar_select %p178, %s15, 1
      %s180 = smul.addr %s179, 2
      %s181 = scalar_lea.vmem %s3, %s180
      %v183 = vld [vmem:[%s172] sm:$0xf]
      %v184 = vld [vmem:[%s172 + $0x4] sm:$0xf]
      %v185 = vld [vmem:[%s172 + $0xc] sm:$0xf]
      %v186 = vld [vmem:[%s172 + $0x10] sm:$0xf]
      %v187 = vld [vmem:[%s172 + $0x18] sm:$0xf]
      %v188 = vld [vmem:[%s172 + $0x1c] sm:$0xf]
      %v189 = vld [vmem:[%s172 + $0x24] sm:$0xf]
      %v190 = vld [vmem:[%s172 + $0x28] sm:$0xf]
      %v191 = vld [vmem:[%s172 + $0x30] sm:$0xf]
      %v192 = vld [vmem:[%s172 + $0x34] sm:$0xf]
      %v193 = vld [vmem:[%s172 + $0x3c] sm:$0xf]
      %v194 = vld [vmem:[%s172 + $0x40] sm:$0xf]
      %v195 = vld [vmem:[%s172 + $0x48] sm:$0xf]
      %v196 = vld [vmem:[%s172 + $0x4c] sm:$0xf]
      %v197 = vld [vmem:[%s172 + $0x54] sm:$0xf]
      %v198 = vld [vmem:[%s172 + $0x58] sm:$0xf]
      %v199 = vld [vmem:[%s172 + $0x60] sm:$0xf]
      %v200 = vld [vmem:[%s172 + $0x64] sm:$0xf]
      %v201 = vld [vmem:[%s172 + $0x6c] sm:$0xf]
      %v202 = vld [vmem:[%s172 + $0x70] sm:$0xf]
      %v203 = vld [vmem:[%s172 + $0x78] sm:$0xf]
      %v204 = vld [vmem:[%s172 + $0x7c] sm:$0xf]
      %v205 = vld [vmem:[%s172 + $0x84] sm:$0xf]
      %v206 = vld [vmem:[%s172 + $0x88] sm:$0xf]
      %v207 = vld [vmem:[%s172 + $0x90] sm:$0xf]
      %v208 = vld [vmem:[%s172 + $0x94] sm:$0xf]
      %v209 = vld [vmem:[%s172 + $0x9c] sm:$0xf]
      %v210 = vld [vmem:[%s172 + $0xa0] sm:$0xf]
      %v211 = vld [vmem:[%s172 + $0xa8] sm:$0xf]
      %v212 = vld [vmem:[%s172 + $0xac] sm:$0xf]
      %v213 = vld [vmem:[%s172 + $0xb4] sm:$0xf]
      %v214 = vld [vmem:[%s172 + $0xb8] sm:$0xf]
      %v215 = vld [vmem:[%s1] sm:$0xf]
      %v216 = vld [vmem:[%s1 + $0x4] sm:$0xf]
      %v217 = vld [vmem:[%s1 + $0x8] sm:$0xf]
      %v218 = vld [vmem:[%s1 + $0xc] sm:$0xf]
      %v219 = vld [vmem:[%s1 + $0x10] sm:$0xf]
      %v220 = vld [vmem:[%s1 + $0x14] sm:$0xf]
      %v221 = vld [vmem:[%s1 + $0x18] sm:$0xf]
      %v222 = vld [vmem:[%s1 + $0x1c] sm:$0xf]
      %v223 = vld [vmem:[%s1 + $0x20] sm:$0xf]
      %v224 = vld [vmem:[%s1 + $0x24] sm:$0xf]
      %v225 = vld [vmem:[%s1 + $0x28] sm:$0xf]
      %v226 = vld [vmem:[%s1 + $0x2c] sm:$0xf]
      %v227 = vld [vmem:[%s1 + $0x30] sm:$0xf]
      %v228 = vld [vmem:[%s1 + $0x34] sm:$0xf]
      %v229 = vld [vmem:[%s1 + $0x38] sm:$0xf]
      %v230 = vld [vmem:[%s1 + $0x3c] sm:$0xf]
      %v231 = vld [vmem:[%s172 + $0x8] sm:$0x1]
      %v232 = vld [vmem:[%s172 + $0x14] sm:$0x1]
      %v233 = vld [vmem:[%s172 + $0x20] sm:$0x1]
      %v234 = vld [vmem:[%s172 + $0x2c] sm:$0x1]
      %v235 = vld [vmem:[%s172 + $0x38] sm:$0x1]
      %v236 = vld [vmem:[%s172 + $0x44] sm:$0x1]
      %v237 = vld [vmem:[%s172 + $0x50] sm:$0x1]
      %v238 = vld [vmem:[%s172 + $0x5c] sm:$0x1]
      %v239 = vld [vmem:[%s172 + $0x68] sm:$0x1]
      %v240 = vld [vmem:[%s172 + $0x74] sm:$0x1]
      %v241 = vld [vmem:[%s172 + $0x80] sm:$0x1]
      %v242 = vld [vmem:[%s172 + $0x8c] sm:$0x1]
      %v243 = vld [vmem:[%s172 + $0x98] sm:$0x1]
      %v244 = vld [vmem:[%s172 + $0xa4] sm:$0x1]
      %v245 = vld [vmem:[%s172 + $0xb0] sm:$0x1]
      %v246 = vld [vmem:[%s172 + $0xbc] sm:$0x1]
      %vm247 = vsmask.f32 3328
      %vm248 = vsmask.f32 7440
      %vm249 = vmor %vm247, %vm248
      %v251 = vshrl.u32 %v183, 16
      %v253 = vrot.slane %v251, 4
      %v254 = vshll.u32 %v183, 16
      %v256 = vrot.slane %v254, 5
      %v257 = vor.u32 %v253, %v256
      %v258 = vrot.slane %v257, 4
      %v260 = vshll.u32 %v184, 16
      %v262 = vrot.slane %v260, 5
      %v263 = vsel %vm249, %v258, %v262
      %v264 = vshrl.u32 %v184, 16
      %v266 = vrot.slane %v264, 4
      %v267 = vor.u32 %v266, %v262
      %v268 = vrot.slane %v267, 4
      %v270 = vshll.u32 %v231, 16
      %v272 = vrot.slane %v270, 5
      %v273 = vsel %vm249, %v268, %v272
      %v275 = vshrl.u32 %v185, 16
      %v277 = vrot.slane %v275, 4
      %v278 = vshll.u32 %v185, 16
      %v280 = vrot.slane %v278, 5
      %v281 = vor.u32 %v277, %v280
      %v282 = vrot.slane %v281, 4
      %v284 = vshll.u32 %v186, 16
      %v286 = vrot.slane %v284, 5
      %v287 = vsel %vm249, %v282, %v286
      %v288 = vshrl.u32 %v186, 16
      %v290 = vrot.slane %v288, 4
      %v291 = vor.u32 %v290, %v286
      %v292 = vrot.slane %v291, 4
      %v294 = vshll.u32 %v232, 16
      %v296 = vrot.slane %v294, 5
      %v297 = vsel %vm249, %v292, %v296
      %v299 = vshrl.u32 %v187, 16
      %v301 = vrot.slane %v299, 4
      %v302 = vshll.u32 %v187, 16
      %v304 = vrot.slane %v302, 5
      %v305 = vor.u32 %v301, %v304
      %v306 = vrot.slane %v305, 4
      %v308 = vshll.u32 %v188, 16
      %v310 = vrot.slane %v308, 5
      %v311 = vsel %vm249, %v306, %v310
      %v312 = vshrl.u32 %v188, 16
      %v314 = vrot.slane %v312, 4
      %v315 = vor.u32 %v314, %v310
      %v316 = vrot.slane %v315, 4
      %v318 = vshll.u32 %v233, 16
      %v320 = vrot.slane %v318, 5
      %v321 = vsel %vm249, %v316, %v320
      %v323 = vshrl.u32 %v189, 16
      %v325 = vrot.slane %v323, 4
      %v326 = vshll.u32 %v189, 16
      %v328 = vrot.slane %v326, 5
      %v329 = vor.u32 %v325, %v328
      %v330 = vrot.slane %v329, 4
      %v332 = vshll.u32 %v190, 16
      %v334 = vrot.slane %v332, 5
      %v335 = vsel %vm249, %v330, %v334
      %v336 = vshrl.u32 %v190, 16
      %v338 = vrot.slane %v336, 4
      %v339 = vor.u32 %v338, %v334
      %v340 = vrot.slane %v339, 4
      %v342 = vshll.u32 %v234, 16
      %v344 = vrot.slane %v342, 5
      %v345 = vsel %vm249, %v340, %v344
      %v347 = vshrl.u32 %v191, 16
      %v349 = vrot.slane %v347, 4
      %v350 = vshll.u32 %v191, 16
      %v352 = vrot.slane %v350, 5
      %v353 = vor.u32 %v349, %v352
      %v354 = vrot.slane %v353, 4
      %v356 = vshll.u32 %v192, 16
      %v358 = vrot.slane %v356, 5
      %v359 = vsel %vm249, %v354, %v358
      %v360 = vshrl.u32 %v192, 16
      %v362 = vrot.slane %v360, 4
      %v363 = vor.u32 %v362, %v358
      %v364 = vrot.slane %v363, 4
      %v366 = vshll.u32 %v235, 16
      %v368 = vrot.slane %v366, 5
      %v369 = vsel %vm249, %v364, %v368
      %v371 = vshrl.u32 %v193, 16
      %v373 = vrot.slane %v371, 4
      %v374 = vshll.u32 %v193, 16
      %v376 = vrot.slane %v374, 5
      %v377 = vor.u32 %v373, %v376
      %v378 = vrot.slane %v377, 4
      %v380 = vshll.u32 %v194, 16
      %v382 = vrot.slane %v380, 5
      %v383 = vsel %vm249, %v378, %v382
      %v384 = vshrl.u32 %v194, 16
      %v386 = vrot.slane %v384, 4
      %v387 = vor.u32 %v386, %v382
      %v388 = vrot.slane %v387, 4
      %v390 = vshll.u32 %v236, 16
      %v392 = vrot.slane %v390, 5
      %v393 = vsel %vm249, %v388, %v392
      %v395 = vshrl.u32 %v195, 16
      %v397 = vrot.slane %v395, 4
      %v398 = vshll.u32 %v195, 16
      %v400 = vrot.slane %v398, 5
      %v401 = vor.u32 %v397, %v400
      %v402 = vrot.slane %v401, 4
      %v404 = vshll.u32 %v196, 16
      %v406 = vrot.slane %v404, 5
      %v407 = vsel %vm249, %v402, %v406
      %v408 = vshrl.u32 %v196, 16
      %v410 = vrot.slane %v408, 4
      %v411 = vor.u32 %v410, %v406
      %v412 = vrot.slane %v411, 4
      %v414 = vshll.u32 %v237, 16
      %v416 = vrot.slane %v414, 5
      %v417 = vsel %vm249, %v412, %v416
      %v419 = vshrl.u32 %v197, 16
      %v421 = vrot.slane %v419, 4
      %v422 = vshll.u32 %v197, 16
      %v424 = vrot.slane %v422, 5
      %v425 = vor.u32 %v421, %v424
      %v426 = vrot.slane %v425, 4
      %v428 = vshll.u32 %v198, 16
      %v430 = vrot.slane %v428, 5
      %v431 = vsel %vm249, %v426, %v430
      %v432 = vshrl.u32 %v198, 16
      %v434 = vrot.slane %v432, 4
      %v435 = vor.u32 %v434, %v430
      %v436 = vrot.slane %v435, 4
      %v438 = vshll.u32 %v238, 16
      %v440 = vrot.slane %v438, 5
      %v441 = vsel %vm249, %v436, %v440
      %v443 = vshrl.u32 %v199, 16
      %v445 = vrot.slane %v443, 4
      %v446 = vshll.u32 %v199, 16
      %v448 = vrot.slane %v446, 5
      %v449 = vor.u32 %v445, %v448
      %v450 = vrot.slane %v449, 4
      %v452 = vshll.u32 %v200, 16
      %v454 = vrot.slane %v452, 5
      %v455 = vsel %vm249, %v450, %v454
      %v456 = vshrl.u32 %v200, 16
      %v458 = vrot.slane %v456, 4
      %v459 = vor.u32 %v458, %v454
      %v460 = vrot.slane %v459, 4
      %v462 = vshll.u32 %v239, 16
      %v464 = vrot.slane %v462, 5
      %v465 = vsel %vm249, %v460, %v464
      %v467 = vshrl.u32 %v201, 16
      %v469 = vrot.slane %v467, 4
      %v470 = vshll.u32 %v201, 16
      %v472 = vrot.slane %v470, 5
      %v473 = vor.u32 %v469, %v472
      %v474 = vrot.slane %v473, 4
      %v476 = vshll.u32 %v202, 16
      %v478 = vrot.slane %v476, 5
      %v479 = vsel %vm249, %v474, %v478
      %v480 = vshrl.u32 %v202, 16
      %v482 = vrot.slane %v480, 4
      %v483 = vor.u32 %v482, %v478
      %v484 = vrot.slane %v483, 4
      %v486 = vshll.u32 %v240, 16
      %v488 = vrot.slane %v486, 5
      %v489 = vsel %vm249, %v484, %v488
      %v491 = vshrl.u32 %v203, 16
      %v493 = vrot.slane %v491, 4
      %v494 = vshll.u32 %v203, 16
      %v496 = vrot.slane %v494, 5
      %v497 = vor.u32 %v493, %v496
      %v498 = vrot.slane %v497, 4
      %v500 = vshll.u32 %v204, 16
      %v502 = vrot.slane %v500, 5
      %v503 = vsel %vm249, %v498, %v502
      %v504 = vshrl.u32 %v204, 16
      %v506 = vrot.slane %v504, 4
      %v507 = vor.u32 %v506, %v502
      %v508 = vrot.slane %v507, 4
      %v510 = vshll.u32 %v241, 16
      %v512 = vrot.slane %v510, 5
      %v513 = vsel %vm249, %v508, %v512
      %v515 = vshrl.u32 %v205, 16
      %v517 = vrot.slane %v515, 4
      %v518 = vshll.u32 %v205, 16
      %v520 = vrot.slane %v518, 5
      %v521 = vor.u32 %v517, %v520
      %v522 = vrot.slane %v521, 4
      %v524 = vshll.u32 %v206, 16
      %v526 = vrot.slane %v524, 5
      %v527 = vsel %vm249, %v522, %v526
      %v528 = vshrl.u32 %v206, 16
      %v530 = vrot.slane %v528, 4
      %v531 = vor.u32 %v530, %v526
      %v532 = vrot.slane %v531, 4
      %v534 = vshll.u32 %v242, 16
      %v536 = vrot.slane %v534, 5
      %v537 = vsel %vm249, %v532, %v536
      %v539 = vshrl.u32 %v207, 16
      %v541 = vrot.slane %v539, 4
      %v542 = vshll.u32 %v207, 16
      %v544 = vrot.slane %v542, 5
      %v545 = vor.u32 %v541, %v544
      %v546 = vrot.slane %v545, 4
      %v548 = vshll.u32 %v208, 16
      %v550 = vrot.slane %v548, 5
      %v551 = vsel %vm249, %v546, %v550
      %v552 = vshrl.u32 %v208, 16
      %v554 = vrot.slane %v552, 4
      %v555 = vor.u32 %v554, %v550
      %v556 = vrot.slane %v555, 4
      %v558 = vshll.u32 %v243, 16
      %v560 = vrot.slane %v558, 5
      %v561 = vsel %vm249, %v556, %v560
      %v563 = vshrl.u32 %v209, 16
      %v565 = vrot.slane %v563, 4
      %v566 = vshll.u32 %v209, 16
      %v568 = vrot.slane %v566, 5
      %v569 = vor.u32 %v565, %v568
      %v570 = vrot.slane %v569, 4
      %v572 = vshll.u32 %v210, 16
      %v574 = vrot.slane %v572, 5
      %v575 = vsel %vm249, %v570, %v574
      %v576 = vshrl.u32 %v210, 16
      %v578 = vrot.slane %v576, 4
      %v579 = vor.u32 %v578, %v574
      %v580 = vrot.slane %v579, 4
      %v582 = vshll.u32 %v244, 16
      %v584 = vrot.slane %v582, 5
      %v585 = vsel %vm249, %v580, %v584
      %v587 = vshrl.u32 %v211, 16
      %v589 = vrot.slane %v587, 4
      %v590 = vshll.u32 %v211, 16
      %v592 = vrot.slane %v590, 5
      %v593 = vor.u32 %v589, %v592
      %v594 = vrot.slane %v593, 4
      %v596 = vshll.u32 %v212, 16
      %v598 = vrot.slane %v596, 5
      %v599 = vsel %vm249, %v594, %v598
      %v600 = vshrl.u32 %v212, 16
      %v602 = vrot.slane %v600, 4
      %v603 = vor.u32 %v602, %v598
      %v604 = vrot.slane %v603, 4
      %v606 = vshll.u32 %v245, 16
      %v608 = vrot.slane %v606, 5
      %v609 = vsel %vm249, %v604, %v608
      %v611 = vshrl.u32 %v213, 16
      %v613 = vrot.slane %v611, 4
      %v614 = vshll.u32 %v213, 16
      %v616 = vrot.slane %v614, 5
      %v617 = vor.u32 %v613, %v616
      %v618 = vrot.slane %v617, 4
      %v620 = vshll.u32 %v214, 16
      %v622 = vrot.slane %v620, 5
      %v623 = vsel %vm249, %v618, %v622
      %v624 = vshrl.u32 %v214, 16
      %v626 = vrot.slane %v624, 4
      %v627 = vor.u32 %v626, %v622
      %v628 = vrot.slane %v627, 4
      %v630 = vshll.u32 %v246, 16
      %v632 = vrot.slane %v630, 5
      %v633 = vsel %vm249, %v628, %v632
      %s634 = scalar_lea.vmem %s1, 64
      %v635 = vld [vmem:[%s634] sm:$0xf]
      %v636 = vld [vmem:[%s634 + $0x4] sm:$0xf]
      %v637 = vld [vmem:[%s634 + $0x8] sm:$0xf]
      %v638 = vld [vmem:[%s634 + $0xc] sm:$0xf]
      %v639 = vld [vmem:[%s634 + $0x10] sm:$0xf]
      %v640 = vld [vmem:[%s634 + $0x14] sm:$0xf]
      %v641 = vld [vmem:[%s634 + $0x18] sm:$0xf]
      %v642 = vld [vmem:[%s634 + $0x1c] sm:$0xf]
      %v643 = vld [vmem:[%s634 + $0x20] sm:$0xf]
      %v644 = vld [vmem:[%s634 + $0x24] sm:$0xf]
      %v645 = vld [vmem:[%s634 + $0x28] sm:$0xf]
      %v646 = vld [vmem:[%s634 + $0x2c] sm:$0xf]
      %v647 = vld [vmem:[%s634 + $0x30] sm:$0xf]
      %v648 = vld [vmem:[%s634 + $0x34] sm:$0xf]
      %v649 = vld [vmem:[%s634 + $0x38] sm:$0xf]
      %v650 = vld [vmem:[%s634 + $0x3c] sm:$0xf]
      %v651 = vunpack.c.l.b16 %v263
      %v652 = vunpack.c.l.b16 %v273
      %v653 = vunpack.c.l.b16 %v287
      %v654 = vunpack.c.l.b16 %v297
      %v655 = vunpack.c.l.b16 %v311
      %v656 = vunpack.c.l.b16 %v321
      %v657 = vunpack.c.l.b16 %v335
      %v658 = vunpack.c.l.b16 %v345
      %v659 = vunpack.c.l.b16 %v359
      %v660 = vunpack.c.l.b16 %v369
      %v661 = vunpack.c.l.b16 %v383
      %v662 = vunpack.c.l.b16 %v393
      %v663 = vunpack.c.l.b16 %v407
      %v664 = vunpack.c.l.b16 %v417
      %v665 = vunpack.c.l.b16 %v431
      %v666 = vunpack.c.l.b16 %v441
      %v667 = vunpack.c.l.b16 %v455
      %v668 = vunpack.c.l.b16 %v465
      %v669 = vunpack.c.l.b16 %v479
      %v670 = vunpack.c.l.b16 %v489
      %v671 = vunpack.c.l.b16 %v503
      %v672 = vunpack.c.l.b16 %v513
      %v673 = vunpack.c.l.b16 %v527
      %v674 = vunpack.c.l.b16 %v537
      %v675 = vunpack.c.l.b16 %v551
      %v676 = vunpack.c.l.b16 %v561
      %v677 = vunpack.c.l.b16 %v575
      %v678 = vunpack.c.l.b16 %v585
      %v679 = vunpack.c.l.b16 %v599
      %v680 = vunpack.c.l.b16 %v609
      %v681 = vunpack.c.l.b16 %v623
      %v682 = vunpack.c.l.b16 %v633
      %v683 = vpack.c.b16 %v652, %v651
      %v684 = vpack.c.b16 %v654, %v653
      %v685 = vpack.c.b16 %v656, %v655
      %v686 = vpack.c.b16 %v658, %v657
      %v687 = vpack.c.b16 %v660, %v659
      %v688 = vpack.c.b16 %v662, %v661
      %v689 = vpack.c.b16 %v664, %v663
      %v690 = vpack.c.b16 %v666, %v665
      %v691 = vpack.c.b16 %v668, %v667
      %v692 = vpack.c.b16 %v670, %v669
      %v693 = vpack.c.b16 %v672, %v671
      %v694 = vpack.c.b16 %v674, %v673
      %v695 = vpack.c.b16 %v676, %v675
      %v696 = vpack.c.b16 %v678, %v677
      %v697 = vpack.c.b16 %v680, %v679
      %v698 = vpack.c.b16 %v682, %v681
      %v731 = vunpack.c.l.b16 %v635
      %v732 = vunpack.c.l.b16 %v636
      %v733 = vunpack.c.l.b16 %v637
      %v734 = vunpack.c.l.b16 %v638
      %v735 = vunpack.c.l.b16 %v639
      %v736 = vunpack.c.l.b16 %v640
      %v737 = vunpack.c.l.b16 %v641
      %v738 = vunpack.c.l.b16 %v642
      %v739 = vunpack.c.l.b16 %v643
      %v740 = vunpack.c.l.b16 %v644
      %v741 = vunpack.c.l.b16 %v645
      %v742 = vunpack.c.l.b16 %v646
      %v743 = vunpack.c.l.b16 %v647
      %v744 = vunpack.c.l.b16 %v648
      %v745 = vunpack.c.l.b16 %v649
      %v746 = vunpack.c.l.b16 %v650
      %v747 = vpack.c.b16 %v732, %v731
      %v748 = vpack.c.b16 %v734, %v733
      %v749 = vpack.c.b16 %v736, %v735
      %v750 = vpack.c.b16 %v738, %v737
      %v751 = vpack.c.b16 %v740, %v739
      %v752 = vpack.c.b16 %v742, %v741
      %v753 = vpack.c.b16 %v744, %v743
      %v754 = vpack.c.b16 %v746, %v745
      %763 = vmatprep.subr.bf16.mxu0 0
      %764 = vmatpush1.bf16.msra.mxu0 %v747
      %765 = vmatprep.subr.bf16.mxu0 0
      %766 = vmatpush1.bf16.msra.mxu0 %v748
      %767 = vmatprep.subr.bf16.mxu0 0
      %768 = vmatpush1.bf16.msra.mxu0 %v749
      %769 = vmatprep.subr.bf16.mxu0 0
      %770 = vmatpush1.bf16.msra.mxu0 %v750
      %771 = vmatprep.subr.bf16.mxu0 0
      %772 = vmatpush1.bf16.msra.mxu0 %v751
      %773 = vmatprep.subr.bf16.mxu0 0
      %774 = vmatpush1.bf16.msra.mxu0 %v752
      %775 = vmatprep.subr.bf16.mxu0 0
      %776 = vmatpush1.bf16.msra.mxu0 %v753
      %777 = vmatprep.subr.bf16.mxu0 0
      %778 = vmatpush1.bf16.msra.mxu0 %v754
      %779 = vmatprep.subr.bf16.mxu0 0
      %780 = vmatpush1.bf16.msra.mxu0 0
      %781 = vmatprep.subr.bf16.mxu0 0
      %782 = vmatpush1.bf16.msra.mxu0 0
      %783 = vmatprep.subr.bf16.mxu0 0
      %784 = vmatpush1.bf16.msra.mxu0 0
      %785 = vmatprep.subr.bf16.mxu0 0
      %786 = vmatpush1.bf16.msra.mxu0 0
      %787 = vmatprep.subr.bf16.mxu0 0
      %788 = vmatpush1.bf16.msra.mxu0 0
      %789 = vmatprep.subr.bf16.mxu0 0
      %790 = vmatpush1.bf16.msra.mxu0 0
      %791 = vmatprep.subr.bf16.mxu0 0
      %792 = vmatpush1.bf16.msra.mxu0 0
      %793 = vmatprep.subr.bf16.mxu0 0
      %794 = vmatpush1.bf16.msra.mxu0 0
      %795 = vmatprep.mubr.bf16.mxu0 0
      %796 = vmatmul.mubr.bf16.gmra.mrb[0].mxu0 %v683
      %v797 = vpop.f32.mrb[0].mxu0
      %v798 = vadd.f32 0.0, %v797
      %v799 = vpop.f32.mrb[0].mxu0
      %v800 = vpop.f32.mrb[0].mxu0
      %v801 = vadd.f32 0.0, %v800
      %v802 = vpop.f32.mrb[0].mxu0
      %803 = vmatprep.mubr.bf16.mxu0 0
      %804 = vmatmul.mubr.bf16.gmra.mrb[0].mxu0 %v684
      %v805 = vpop.f32.mrb[0].mxu0
      %v806 = vadd.f32 0.0, %v805
      %v807 = vpop.f32.mrb[0].mxu0
      %v808 = vpop.f32.mrb[0].mxu0
      %v809 = vadd.f32 0.0, %v808
      %v810 = vpop.f32.mrb[0].mxu0
      %811 = vmatprep.mubr.bf16.mxu0 0
      %812 = vmatmul.mubr.bf16.gmra.mrb[0].mxu0 %v685
      %v813 = vpop.f32.mrb[0].mxu0
      %v814 = vadd.f32 0.0, %v813
      %v815 = vpop.f32.mrb[0].mxu0
      %v816 = vpop.f32.mrb[0].mxu0
      %v817 = vadd.f32 0.0, %v816
      %v818 = vpop.f32.mrb[0].mxu0
      %819 = vmatprep.mubr.bf16.mxu0 0
      %820 = vmatmul.mubr.bf16.gmra.mrb[0].mxu0 %v686
      %v821 = vpop.f32.mrb[0].mxu0
      %v822 = vadd.f32 0.0, %v821
      %v823 = vpop.f32.mrb[0].mxu0
      %v824 = vpop.f32.mrb[0].mxu0
      %v825 = vadd.f32 0.0, %v824
      %v826 = vpop.f32.mrb[0].mxu0
      %827 = vmatprep.mubr.bf16.mxu0 0
      %828 = vmatmul.mubr.bf16.gmra.mrb[0].mxu0 %v687
      %v829 = vpop.f32.mrb[0].mxu0
      %v830 = vadd.f32 0.0, %v829
      %v831 = vpop.f32.mrb[0].mxu0
      %v832 = vpop.f32.mrb[0].mxu0
      %v833 = vadd.f32 0.0, %v832
      %v834 = vpop.f32.mrb[0].mxu0
      %835 = vmatprep.mubr.bf16.mxu0 0
      %836 = vmatmul.mubr.bf16.gmra.mrb[0].mxu0 %v688
      %v837 = vpop.f32.mrb[0].mxu0
      %v838 = vadd.f32 0.0, %v837
      %v839 = vpop.f32.mrb[0].mxu0
      %v840 = vpop.f32.mrb[0].mxu0
      %v841 = vadd.f32 0.0, %v840
      %v842 = vpop.f32.mrb[0].mxu0
      %843 = vmatprep.mubr.bf16.mxu0 0
      %844 = vmatmul.mubr.bf16.gmra.mrb[0].mxu0 %v689
      %v845 = vpop.f32.mrb[0].mxu0
      %v846 = vadd.f32 0.0, %v845
      %v847 = vpop.f32.mrb[0].mxu0
      %v848 = vpop.f32.mrb[0].mxu0
      %v849 = vadd.f32 0.0, %v848
      %v850 = vpop.f32.mrb[0].mxu0
      %851 = vmatprep.mubr.bf16.mxu0 0
      %852 = vmatmul.mubr.bf16.gmra.mrb[0].mxu0 %v690
      %v853 = vpop.f32.mrb[0].mxu0
      %v854 = vadd.f32 0.0, %v853
      %v855 = vpop.f32.mrb[0].mxu0
      %v856 = vpop.f32.mrb[0].mxu0
      %v857 = vadd.f32 0.0, %v856
      %v858 = vpop.f32.mrb[0].mxu0
      %859 = vmatprep.mubr.bf16.mxu0 0
      %860 = vmatmul.mubr.bf16.gmra.mrb[0].mxu0 %v691
      %v861 = vpop.f32.mrb[0].mxu0
      %v862 = vadd.f32 0.0, %v861
      %v863 = vpop.f32.mrb[0].mxu0
      %v864 = vpop.f32.mrb[0].mxu0
      %v865 = vadd.f32 0.0, %v864
      %v866 = vpop.f32.mrb[0].mxu0
      %867 = vmatprep.mubr.bf16.mxu0 0
      %868 = vmatmul.mubr.bf16.gmra.mrb[0].mxu0 %v692
      %v869 = vpop.f32.mrb[0].mxu0
      %v870 = vadd.f32 0.0, %v869
      %v871 = vpop.f32.mrb[0].mxu0
      %v872 = vpop.f32.mrb[0].mxu0
      %v873 = vadd.f32 0.0, %v872
      %v874 = vpop.f32.mrb[0].mxu0
      %875 = vmatprep.mubr.bf16.mxu0 0
      %876 = vmatmul.mubr.bf16.gmra.mrb[0].mxu0 %v693
      %v877 = vpop.f32.mrb[0].mxu0
      %v878 = vadd.f32 0.0, %v877
      %v879 = vpop.f32.mrb[0].mxu0
      %v880 = vpop.f32.mrb[0].mxu0
      %v881 = vadd.f32 0.0, %v880
      %v882 = vpop.f32.mrb[0].mxu0
      %883 = vmatprep.mubr.bf16.mxu0 0
      %884 = vmatmul.mubr.bf16.gmra.mrb[0].mxu0 %v694
      %v885 = vpop.f32.mrb[0].mxu0
      %v886 = vadd.f32 0.0, %v885
      %v887 = vpop.f32.mrb[0].mxu0
      %v888 = vpop.f32.mrb[0].mxu0
      %v889 = vadd.f32 0.0, %v888
      %v890 = vpop.f32.mrb[0].mxu0
      %891 = vmatprep.mubr.bf16.mxu0 0
      %892 = vmatmul.mubr.bf16.gmra.mrb[0].mxu0 %v695
      %v893 = vpop.f32.mrb[0].mxu0
      %v894 = vadd.f32 0.0, %v893
      %v895 = vpop.f32.mrb[0].mxu0
      %v896 = vpop.f32.mrb[0].mxu0
      %v897 = vadd.f32 0.0, %v896
      %v898 = vpop.f32.mrb[0].mxu0
      %899 = vmatprep.mubr.bf16.mxu0 0
      %900 = vmatmul.mubr.bf16.gmra.mrb[0].mxu0 %v696
      %v901 = vpop.f32.mrb[0].mxu0
      %v902 = vadd.f32 0.0, %v901
      %v903 = vpop.f32.mrb[0].mxu0
      %v904 = vpop.f32.mrb[0].mxu0
      %v905 = vadd.f32 0.0, %v904
      %v906 = vpop.f32.mrb[0].mxu0
      %907 = vmatprep.mubr.bf16.mxu0 0
      %908 = vmatmul.mubr.bf16.gmra.mrb[0].mxu0 %v697
      %v909 = vpop.f32.mrb[0].mxu0
      %v910 = vadd.f32 0.0, %v909
      %v911 = vpop.f32.mrb[0].mxu0
      %v912 = vpop.f32.mrb[0].mxu0
      %v913 = vadd.f32 0.0, %v912
      %v914 = vpop.f32.mrb[0].mxu0
      %915 = vmatprep.mubr.bf16.mxu0 0
      %916 = vmatmul.mubr.bf16.gmra.mrb[0].mxu0 %v698
      %v917 = vpop.f32.mrb[0].mxu0
      %v918 = vadd.f32 0.0, %v917
      %v919 = vpop.f32.mrb[0].mxu0
      %v920 = vpop.f32.mrb[0].mxu0
      %v921 = vadd.f32 0.0, %v920
      %v922 = vpop.f32.mrb[0].mxu0
      %923 = vdwg.mxu0
      %v956 = vunpack.c.l.b16 %v183
      %v957 = vunpack.c.l.b16 %v184
      %v958 = vunpack.c.l.b16 %v185
      %v959 = vunpack.c.l.b16 %v186
      %v960 = vunpack.c.l.b16 %v187
      %v961 = vunpack.c.l.b16 %v188
      %v962 = vunpack.c.l.b16 %v189
      %v963 = vunpack.c.l.b16 %v190
      %v964 = vunpack.c.l.b16 %v191
      %v965 = vunpack.c.l.b16 %v192
      %v966 = vunpack.c.l.b16 %v193
      %v967 = vunpack.c.l.b16 %v194
      %v968 = vunpack.c.l.b16 %v195
      %v969 = vunpack.c.l.b16 %v196
      %v970 = vunpack.c.l.b16 %v197
      %v971 = vunpack.c.l.b16 %v198
      %v972 = vunpack.c.l.b16 %v199
      %v973 = vunpack.c.l.b16 %v200
      %v974 = vunpack.c.l.b16 %v201
      %v975 = vunpack.c.l.b16 %v202
      %v976 = vunpack.c.l.b16 %v203
      %v977 = vunpack.c.l.b16 %v204
      %v978 = vunpack.c.l.b16 %v205
      %v979 = vunpack.c.l.b16 %v206
      %v980 = vunpack.c.l.b16 %v207
      %v981 = vunpack.c.l.b16 %v208
      %v982 = vunpack.c.l.b16 %v209
      %v983 = vunpack.c.l.b16 %v210
      %v984 = vunpack.c.l.b16 %v211
      %v985 = vunpack.c.l.b16 %v212
      %v986 = vunpack.c.l.b16 %v213
      %v987 = vunpack.c.l.b16 %v214
      %v988 = vpack.c.b16 %v957, %v956
      %v989 = vpack.c.b16 %v959, %v958
      %v990 = vpack.c.b16 %v961, %v960
      %v991 = vpack.c.b16 %v963, %v962
      %v992 = vpack.c.b16 %v965, %v964
      %v993 = vpack.c.b16 %v967, %v966
      %v994 = vpack.c.b16 %v969, %v968
      %v995 = vpack.c.b16 %v971, %v970
      %v996 = vpack.c.b16 %v973, %v972
      %v997 = vpack.c.b16 %v975, %v974
      %v998 = vpack.c.b16 %v977, %v976
      %v999 = vpack.c.b16 %v979, %v978
      %v1000 = vpack.c.b16 %v981, %v980
      %v1001 = vpack.c.b16 %v983, %v982
      %v1002 = vpack.c.b16 %v985, %v984
      %v1003 = vpack.c.b16 %v987, %v986
      %v1036 = vunpack.c.l.b16 %v215
      %v1037 = vunpack.c.l.b16 %v216
      %v1038 = vunpack.c.l.b16 %v217
      %v1039 = vunpack.c.l.b16 %v218
      %v1040 = vunpack.c.l.b16 %v219
      %v1041 = vunpack.c.l.b16 %v220
      %v1042 = vunpack.c.l.b16 %v221
      %v1043 = vunpack.c.l.b16 %v222
      %v1044 = vunpack.c.l.b16 %v223
      %v1045 = vunpack.c.l.b16 %v224
      %v1046 = vunpack.c.l.b16 %v225
      %v1047 = vunpack.c.l.b16 %v226
      %v1048 = vunpack.c.l.b16 %v227
      %v1049 = vunpack.c.l.b16 %v228
      %v1050 = vunpack.c.l.b16 %v229
      %v1051 = vunpack.c.l.b16 %v230
      %v1052 = vpack.c.b16 %v1037, %v1036
      %v1053 = vpack.c.b16 %v1039, %v1038
      %v1054 = vpack.c.b16 %v1041, %v1040
      %v1055 = vpack.c.b16 %v1043, %v1042
      %v1056 = vpack.c.b16 %v1045, %v1044
      %v1057 = vpack.c.b16 %v1047, %v1046
      %v1058 = vpack.c.b16 %v1049, %v1048
      %v1059 = vpack.c.b16 %v1051, %v1050
      %1068 = vmatprep.subr.bf16.mxu0 0
      %1069 = vmatpush1.bf16.msra.mxu0 %v1052
      %1070 = vmatprep.subr.bf16.mxu0 0
      %1071 = vmatpush1.bf16.msra.mxu0 %v1053
      %1072 = vmatprep.subr.bf16.mxu0 0
      %1073 = vmatpush1.bf16.msra.mxu0 %v1054
      %1074 = vmatprep.subr.bf16.mxu0 0
      %1075 = vmatpush1.bf16.msra.mxu0 %v1055
      %1076 = vmatprep.subr.bf16.mxu0 0
      %1077 = vmatpush1.bf16.msra.mxu0 %v1056
      %1078 = vmatprep.subr.bf16.mxu0 0
      %1079 = vmatpush1.bf16.msra.mxu0 %v1057
      %1080 = vmatprep.subr.bf16.mxu0 0
      %1081 = vmatpush1.bf16.msra.mxu0 %v1058
      %1082 = vmatprep.subr.bf16.mxu0 0
      %1083 = vmatpush1.bf16.msra.mxu0 %v1059
      %1084 = vmatprep.subr.bf16.mxu0 0
      %1085 = vmatpush1.bf16.msra.mxu0 0
      %1086 = vmatprep.subr.bf16.mxu0 0
      %1087 = vmatpush1.bf16.msra.mxu0 0
      %1088 = vmatprep.subr.bf16.mxu0 0
      %1089 = vmatpush1.bf16.msra.mxu0 0
      %1090 = vmatprep.subr.bf16.mxu0 0
      %1091 = vmatpush1.bf16.msra.mxu0 0
      %1092 = vmatprep.subr.bf16.mxu0 0
      %1093 = vmatpush1.bf16.msra.mxu0 0
      %1094 = vmatprep.subr.bf16.mxu0 0
      %1095 = vmatpush1.bf16.msra.mxu0 0
      %1096 = vmatprep.subr.bf16.mxu0 0
      %1097 = vmatpush1.bf16.msra.mxu0 0
      %1098 = vmatprep.subr.bf16.mxu0 0
      %1099 = vmatpush1.bf16.msra.mxu0 0
      %1100 = vmatprep.mubr.bf16.mxu0 0
      %1101 = vmatmul.mubr.bf16.gmra.mrb[0].mxu0 %v988
      %v1102 = vpop.f32.mrb[0].mxu0
      %v1103 = vadd.f32 %v798, %v1102
      %v1104 = vpop.f32.mrb[0].mxu0
      %v1105 = vpop.f32.mrb[0].mxu0
      %v1106 = vadd.f32 %v801, %v1105
      %v1107 = vpop.f32.mrb[0].mxu0
      %1108 = vmatprep.mubr.bf16.mxu0 0
      %1109 = vmatmul.mubr.bf16.gmra.mrb[0].mxu0 %v989
      %v1110 = vpop.f32.mrb[0].mxu0
      %v1111 = vadd.f32 %v806, %v1110
      %v1112 = vpop.f32.mrb[0].mxu0
      %v1113 = vpop.f32.mrb[0].mxu0
      %v1114 = vadd.f32 %v809, %v1113
      %v1115 = vpop.f32.mrb[0].mxu0
      %1116 = vmatprep.mubr.bf16.mxu0 0
      %1117 = vmatmul.mubr.bf16.gmra.mrb[0].mxu0 %v990
      %v1118 = vpop.f32.mrb[0].mxu0
      %v1119 = vadd.f32 %v814, %v1118
      %v1120 = vpop.f32.mrb[0].mxu0
      %v1121 = vpop.f32.mrb[0].mxu0
      %v1122 = vadd.f32 %v817, %v1121
      %v1123 = vpop.f32.mrb[0].mxu0
      %1124 = vmatprep.mubr.bf16.mxu0 0
      %1125 = vmatmul.mubr.bf16.gmra.mrb[0].mxu0 %v991
      %v1126 = vpop.f32.mrb[0].mxu0
      %v1127 = vadd.f32 %v822, %v1126
      %v1128 = vpop.f32.mrb[0].mxu0
      %v1129 = vpop.f32.mrb[0].mxu0
      %v1130 = vadd.f32 %v825, %v1129
      %v1131 = vpop.f32.mrb[0].mxu0
      %1132 = vmatprep.mubr.bf16.mxu0 0
      %1133 = vmatmul.mubr.bf16.gmra.mrb[0].mxu0 %v992
      %v1134 = vpop.f32.mrb[0].mxu0
      %v1135 = vadd.f32 %v830, %v1134
      %v1136 = vpop.f32.mrb[0].mxu0
      %v1137 = vpop.f32.mrb[0].mxu0
      %v1138 = vadd.f32 %v833, %v1137
      %v1139 = vpop.f32.mrb[0].mxu0
      %1140 = vmatprep.mubr.bf16.mxu0 0
      %1141 = vmatmul.mubr.bf16.gmra.mrb[0].mxu0 %v993
      %v1142 = vpop.f32.mrb[0].mxu0
      %v1143 = vadd.f32 %v838, %v1142
      %v1144 = vpop.f32.mrb[0].mxu0
      %v1145 = vpop.f32.mrb[0].mxu0
      %v1146 = vadd.f32 %v841, %v1145
      %v1147 = vpop.f32.mrb[0].mxu0
      %1148 = vmatprep.mubr.bf16.mxu0 0
      %1149 = vmatmul.mubr.bf16.gmra.mrb[0].mxu0 %v994
      %v1150 = vpop.f32.mrb[0].mxu0
      %v1151 = vadd.f32 %v846, %v1150
      %v1152 = vpop.f32.mrb[0].mxu0
      %v1153 = vpop.f32.mrb[0].mxu0
      %v1154 = vadd.f32 %v849, %v1153
      %v1155 = vpop.f32.mrb[0].mxu0
      %1156 = vmatprep.mubr.bf16.mxu0 0
      %1157 = vmatmul.mubr.bf16.gmra.mrb[0].mxu0 %v995
      %v1158 = vpop.f32.mrb[0].mxu0
      %v1159 = vadd.f32 %v854, %v1158
      %v1160 = vpop.f32.mrb[0].mxu0
      %v1161 = vpop.f32.mrb[0].mxu0
      %v1162 = vadd.f32 %v857, %v1161
      %v1163 = vpop.f32.mrb[0].mxu0
      %1164 = vmatprep.mubr.bf16.mxu0 0
      %1165 = vmatmul.mubr.bf16.gmra.mrb[0].mxu0 %v996
      %v1166 = vpop.f32.mrb[0].mxu0
      %v1167 = vadd.f32 %v862, %v1166
      %v1168 = vpop.f32.mrb[0].mxu0
      %v1169 = vpop.f32.mrb[0].mxu0
      %v1170 = vadd.f32 %v865, %v1169
      %v1171 = vpop.f32.mrb[0].mxu0
      %1172 = vmatprep.mubr.bf16.mxu0 0
      %1173 = vmatmul.mubr.bf16.gmra.mrb[0].mxu0 %v997
      %v1174 = vpop.f32.mrb[0].mxu0
      %v1175 = vadd.f32 %v870, %v1174
      %v1176 = vpop.f32.mrb[0].mxu0
      %v1177 = vpop.f32.mrb[0].mxu0
      %v1178 = vadd.f32 %v873, %v1177
      %v1179 = vpop.f32.mrb[0].mxu0
      %1180 = vmatprep.mubr.bf16.mxu0 0
      %1181 = vmatmul.mubr.bf16.gmra.mrb[0].mxu0 %v998
      %v1182 = vpop.f32.mrb[0].mxu0
      %v1183 = vadd.f32 %v878, %v1182
      %v1184 = vpop.f32.mrb[0].mxu0
      %v1185 = vpop.f32.mrb[0].mxu0
      %v1186 = vadd.f32 %v881, %v1185
      %v1187 = vpop.f32.mrb[0].mxu0
      %1188 = vmatprep.mubr.bf16.mxu0 0
      %1189 = vmatmul.mubr.bf16.gmra.mrb[0].mxu0 %v999
      %v1190 = vpop.f32.mrb[0].mxu0
      %v1191 = vadd.f32 %v886, %v1190
      %v1192 = vpop.f32.mrb[0].mxu0
      %v1193 = vpop.f32.mrb[0].mxu0
      %v1194 = vadd.f32 %v889, %v1193
      %v1195 = vpop.f32.mrb[0].mxu0
      %1196 = vmatprep.mubr.bf16.mxu0 0
      %1197 = vmatmul.mubr.bf16.gmra.mrb[0].mxu0 %v1000
      %v1198 = vpop.f32.mrb[0].mxu0
      %v1199 = vadd.f32 %v894, %v1198
      %v1200 = vpop.f32.mrb[0].mxu0
      %v1201 = vpop.f32.mrb[0].mxu0
      %v1202 = vadd.f32 %v897, %v1201
      %v1203 = vpop.f32.mrb[0].mxu0
      %1204 = vmatprep.mubr.bf16.mxu0 0
      %1205 = vmatmul.mubr.bf16.gmra.mrb[0].mxu0 %v1001
      %v1206 = vpop.f32.mrb[0].mxu0
      %v1207 = vadd.f32 %v902, %v1206
      %v1208 = vpop.f32.mrb[0].mxu0
      %v1209 = vpop.f32.mrb[0].mxu0
      %v1210 = vadd.f32 %v905, %v1209
      %v1211 = vpop.f32.mrb[0].mxu0
      %1212 = vmatprep.mubr.bf16.mxu0 0
      %1213 = vmatmul.mubr.bf16.gmra.mrb[0].mxu0 %v1002
      %v1214 = vpop.f32.mrb[0].mxu0
      %v1215 = vadd.f32 %v910, %v1214
      %v1216 = vpop.f32.mrb[0].mxu0
      %v1217 = vpop.f32.mrb[0].mxu0
      %v1218 = vadd.f32 %v913, %v1217
      %v1219 = vpop.f32.mrb[0].mxu0
      %1220 = vmatprep.mubr.bf16.mxu0 0
      %1221 = vmatmul.mubr.bf16.gmra.mrb[0].mxu0 %v1003
      %v1222 = vpop.f32.mrb[0].mxu0
      %v1223 = vadd.f32 %v918, %v1222
      %v1224 = vpop.f32.mrb[0].mxu0
      %v1225 = vpop.f32.mrb[0].mxu0
      %v1226 = vadd.f32 %v921, %v1225
      %v1227 = vpop.f32.mrb[0].mxu0
      %1228 = vdwg.mxu0
      %v1229 = vld [vmem:[%s172] sm:$0xe]
      %v1230 = vld [vmem:[%s172 + $0xc] sm:$0xe]
      %v1231 = vld [vmem:[%s172 + $0x18] sm:$0xe]
      %v1232 = vld [vmem:[%s172 + $0x24] sm:$0xe]
      %v1233 = vld [vmem:[%s172 + $0x30] sm:$0xe]
      %v1234 = vld [vmem:[%s172 + $0x3c] sm:$0xe]
      %v1235 = vld [vmem:[%s172 + $0x48] sm:$0xe]
      %v1236 = vld [vmem:[%s172 + $0x54] sm:$0xe]
      %v1237 = vld [vmem:[%s172 + $0x60] sm:$0xe]
      %v1238 = vld [vmem:[%s172 + $0x6c] sm:$0xe]
      %v1239 = vld [vmem:[%s172 + $0x78] sm:$0xe]
      %v1240 = vld [vmem:[%s172 + $0x84] sm:$0xe]
      %v1241 = vld [vmem:[%s172 + $0x90] sm:$0xe]
      %v1242 = vld [vmem:[%s172 + $0x9c] sm:$0xe]
      %v1243 = vld [vmem:[%s172 + $0xa8] sm:$0xe]
      %v1244 = vld [vmem:[%s172 + $0xb4] sm:$0xe]
      %vm1277 = vcmask 1042432
      %vm1278 = vcmask 1046532
      %vm1279 = vmor %vm1277, %vm1278
      %v1280 = vrot.slane %v1229, 5
      %v1281 = vrot.slane %v1280, 4
      %v1282 = vrot.slane %v184, 5
      %v1283 = vsel %vm1279, %v1281, %v1282
      %v1284 = vrot.slane %v1282, 4
      %v1285 = vrot.slane %v231, 5
      %v1286 = vsel %vm1279, %v1284, %v1285
      %v1287 = vrot.slane %v1230, 5
      %v1288 = vrot.slane %v1287, 4
      %v1289 = vrot.slane %v186, 5
      %v1290 = vsel %vm1279, %v1288, %v1289
      %v1291 = vrot.slane %v1289, 4
      %v1292 = vrot.slane %v232, 5
      %v1293 = vsel %vm1279, %v1291, %v1292
      %v1294 = vrot.slane %v1231, 5
      %v1295 = vrot.slane %v1294, 4
      %v1296 = vrot.slane %v188, 5
      %v1297 = vsel %vm1279, %v1295, %v1296
      %v1298 = vrot.slane %v1296, 4
      %v1299 = vrot.slane %v233, 5
      %v1300 = vsel %vm1279, %v1298, %v1299
      %v1301 = vrot.slane %v1232, 5
      %v1302 = vrot.slane %v1301, 4
      %v1303 = vrot.slane %v190, 5
      %v1304 = vsel %vm1279, %v1302, %v1303
      %v1305 = vrot.slane %v1303, 4
      %v1306 = vrot.slane %v234, 5
      %v1307 = vsel %vm1279, %v1305, %v1306
      %v1308 = vrot.slane %v1233, 5
      %v1309 = vrot.slane %v1308, 4
      %v1310 = vrot.slane %v192, 5
      %v1311 = vsel %vm1279, %v1309, %v1310
      %v1312 = vrot.slane %v1310, 4
      %v1313 = vrot.slane %v235, 5
      %v1314 = vsel %vm1279, %v1312, %v1313
      %v1315 = vrot.slane %v1234, 5
      %v1316 = vrot.slane %v1315, 4
      %v1317 = vrot.slane %v194, 5
      %v1318 = vsel %vm1279, %v1316, %v1317
      %v1319 = vrot.slane %v1317, 4
      %v1320 = vrot.slane %v236, 5
      %v1321 = vsel %vm1279, %v1319, %v1320
      %v1322 = vrot.slane %v1235, 5
      %v1323 = vrot.slane %v1322, 4
      %v1324 = vrot.slane %v196, 5
      %v1325 = vsel %vm1279, %v1323, %v1324
      %v1326 = vrot.slane %v1324, 4
      %v1327 = vrot.slane %v237, 5
      %v1328 = vsel %vm1279, %v1326, %v1327
      %v1329 = vrot.slane %v1236, 5
      %v1330 = vrot.slane %v1329, 4
      %v1331 = vrot.slane %v198, 5
      %v1332 = vsel %vm1279, %v1330, %v1331
      %v1333 = vrot.slane %v1331, 4
      %v1334 = vrot.slane %v238, 5
      %v1335 = vsel %vm1279, %v1333, %v1334
      %v1336 = vrot.slane %v1237, 5
      %v1337 = vrot.slane %v1336, 4
      %v1338 = vrot.slane %v200, 5
      %v1339 = vsel %vm1279, %v1337, %v1338
      %v1340 = vrot.slane %v1338, 4
      %v1341 = vrot.slane %v239, 5
      %v1342 = vsel %vm1279, %v1340, %v1341
      %v1343 = vrot.slane %v1238, 5
      %v1344 = vrot.slane %v1343, 4
      %v1345 = vrot.slane %v202, 5
      %v1346 = vsel %vm1279, %v1344, %v1345
      %v1347 = vrot.slane %v1345, 4
      %v1348 = vrot.slane %v240, 5
      %v1349 = vsel %vm1279, %v1347, %v1348
      %v1350 = vrot.slane %v1239, 5
      %v1351 = vrot.slane %v1350, 4
      %v1352 = vrot.slane %v204, 5
      %v1353 = vsel %vm1279, %v1351, %v1352
      %v1354 = vrot.slane %v1352, 4
      %v1355 = vrot.slane %v241, 5
      %v1356 = vsel %vm1279, %v1354, %v1355
      %v1357 = vrot.slane %v1240, 5
      %v1358 = vrot.slane %v1357, 4
      %v1359 = vrot.slane %v206, 5
      %v1360 = vsel %vm1279, %v1358, %v1359
      %v1361 = vrot.slane %v1359, 4
      %v1362 = vrot.slane %v242, 5
      %v1363 = vsel %vm1279, %v1361, %v1362
      %v1364 = vrot.slane %v1241, 5
      %v1365 = vrot.slane %v1364, 4
      %v1366 = vrot.slane %v208, 5
      %v1367 = vsel %vm1279, %v1365, %v1366
      %v1368 = vrot.slane %v1366, 4
      %v1369 = vrot.slane %v243, 5
      %v1370 = vsel %vm1279, %v1368, %v1369
      %v1371 = vrot.slane %v1242, 5
      %v1372 = vrot.slane %v1371, 4
      %v1373 = vrot.slane %v210, 5
      %v1374 = vsel %vm1279, %v1372, %v1373
      %v1375 = vrot.slane %v1373, 4
      %v1376 = vrot.slane %v244, 5
      %v1377 = vsel %vm1279, %v1375, %v1376
      %v1378 = vrot.slane %v1243, 5
      %v1379 = vrot.slane %v1378, 4
      %v1380 = vrot.slane %v212, 5
      %v1381 = vsel %vm1279, %v1379, %v1380
      %v1382 = vrot.slane %v1380, 4
      %v1383 = vrot.slane %v245, 5
      %v1384 = vsel %vm1279, %v1382, %v1383
      %v1385 = vrot.slane %v1244, 5
      %v1386 = vrot.slane %v1385, 4
      %v1387 = vrot.slane %v214, 5
      %v1388 = vsel %vm1279, %v1386, %v1387
      %v1389 = vrot.slane %v1387, 4
      %v1390 = vrot.slane %v246, 5
      %v1391 = vsel %vm1279, %v1389, %v1390
      %s1392 = scalar_lea.vmem %s1, 128
      %v1393 = vld [vmem:[%s1392] sm:$0xf]
      %v1394 = vld [vmem:[%s1392 + $0x4] sm:$0xf]
      %v1395 = vld [vmem:[%s1392 + $0x8] sm:$0xf]
      %v1396 = vld [vmem:[%s1392 + $0xc] sm:$0xf]
      %v1397 = vld [vmem:[%s1392 + $0x10] sm:$0xf]
      %v1398 = vld [vmem:[%s1392 + $0x14] sm:$0xf]
      %v1399 = vld [vmem:[%s1392 + $0x18] sm:$0xf]
      %v1400 = vld [vmem:[%s1392 + $0x1c] sm:$0xf]
      %v1401 = vld [vmem:[%s1392 + $0x20] sm:$0xf]
      %v1402 = vld [vmem:[%s1392 + $0x24] sm:$0xf]
      %v1403 = vld [vmem:[%s1392 + $0x28] sm:$0xf]
      %v1404 = vld [vmem:[%s1392 + $0x2c] sm:$0xf]
      %v1405 = vld [vmem:[%s1392 + $0x30] sm:$0xf]
      %v1406 = vld [vmem:[%s1392 + $0x34] sm:$0xf]
      %v1407 = vld [vmem:[%s1392 + $0x38] sm:$0xf]
      %v1408 = vld [vmem:[%s1392 + $0x3c] sm:$0xf]
      %v1409 = vunpack.c.l.b16 %v1283
      %v1410 = vunpack.c.l.b16 %v1286
      %v1411 = vunpack.c.l.b16 %v1290
      %v1412 = vunpack.c.l.b16 %v1293
      %v1413 = vunpack.c.l.b16 %v1297
      %v1414 = vunpack.c.l.b16 %v1300
      %v1415 = vunpack.c.l.b16 %v1304
      %v1416 = vunpack.c.l.b16 %v1307
      %v1417 = vunpack.c.l.b16 %v1311
      %v1418 = vunpack.c.l.b16 %v1314
      %v1419 = vunpack.c.l.b16 %v1318
      %v1420 = vunpack.c.l.b16 %v1321
      %v1421 = vunpack.c.l.b16 %v1325
      %v1422 = vunpack.c.l.b16 %v1328
      %v1423 = vunpack.c.l.b16 %v1332
      %v1424 = vunpack.c.l.b16 %v1335
      %v1425 = vunpack.c.l.b16 %v1339
      %v1426 = vunpack.c.l.b16 %v1342
      %v1427 = vunpack.c.l.b16 %v1346
      %v1428 = vunpack.c.l.b16 %v1349
      %v1429 = vunpack.c.l.b16 %v1353
      %v1430 = vunpack.c.l.b16 %v1356
      %v1431 = vunpack.c.l.b16 %v1360
      %v1432 = vunpack.c.l.b16 %v1363
      %v1433 = vunpack.c.l.b16 %v1367
      %v1434 = vunpack.c.l.b16 %v1370
      %v1435 = vunpack.c.l.b16 %v1374
      %v1436 = vunpack.c.l.b16 %v1377
      %v1437 = vunpack.c.l.b16 %v1381
      %v1438 = vunpack.c.l.b16 %v1384
      %v1439 = vunpack.c.l.b16 %v1388
      %v1440 = vunpack.c.l.b16 %v1391
      %v1441 = vpack.c.b16 %v1410, %v1409
      %v1442 = vpack.c.b16 %v1412, %v1411
      %v1443 = vpack.c.b16 %v1414, %v1413
      %v1444 = vpack.c.b16 %v1416, %v1415
      %v1445 = vpack.c.b16 %v1418, %v1417
      %v1446 = vpack.c.b16 %v1420, %v1419
      %v1447 = vpack.c.b16 %v1422, %v1421
      %v1448 = vpack.c.b16 %v1424, %v1423
      %v1449 = vpack.c.b16 %v1426, %v1425
      %v1450 = vpack.c.b16 %v1428, %v1427
      %v1451 = vpack.c.b16 %v1430, %v1429
      %v1452 = vpack.c.b16 %v1432, %v1431
      %v1453 = vpack.c.b16 %v1434, %v1433
      %v1454 = vpack.c.b16 %v1436, %v1435
      %v1455 = vpack.c.b16 %v1438, %v1437
      %v1456 = vpack.c.b16 %v1440, %v1439
      %v1489 = vunpack.c.l.b16 %v1393
      %v1490 = vunpack.c.l.b16 %v1394
      %v1491 = vunpack.c.l.b16 %v1395
      %v1492 = vunpack.c.l.b16 %v1396
      %v1493 = vunpack.c.l.b16 %v1397
      %v1494 = vunpack.c.l.b16 %v1398
      %v1495 = vunpack.c.l.b16 %v1399
      %v1496 = vunpack.c.l.b16 %v1400
      %v1497 = vunpack.c.l.b16 %v1401
      %v1498 = vunpack.c.l.b16 %v1402
      %v1499 = vunpack.c.l.b16 %v1403
      %v1500 = vunpack.c.l.b16 %v1404
      %v1501 = vunpack.c.l.b16 %v1405
      %v1502 = vunpack.c.l.b16 %v1406
      %v1503 = vunpack.c.l.b16 %v1407
      %v1504 = vunpack.c.l.b16 %v1408
      %v1505 = vpack.c.b16 %v1490, %v1489
      %v1506 = vpack.c.b16 %v1492, %v1491
      %v1507 = vpack.c.b16 %v1494, %v1493
      %v1508 = vpack.c.b16 %v1496, %v1495
      %v1509 = vpack.c.b16 %v1498, %v1497
      %v1510 = vpack.c.b16 %v1500, %v1499
      %v1511 = vpack.c.b16 %v1502, %v1501
      %v1512 = vpack.c.b16 %v1504, %v1503
      %1521 = vmatprep.subr.bf16.mxu0 0
      %1522 = vmatpush1.bf16.msra.mxu0 %v1505
      %1523 = vmatprep.subr.bf16.mxu0 0
      %1524 = vmatpush1.bf16.msra.mxu0 %v1506
      %1525 = vmatprep.subr.bf16.mxu0 0
      %1526 = vmatpush1.bf16.msra.mxu0 %v1507
      %1527 = vmatprep.subr.bf16.mxu0 0
      %1528 = vmatpush1.bf16.msra.mxu0 %v1508
      %1529 = vmatprep.subr.bf16.mxu0 0
      %1530 = vmatpush1.bf16.msra.mxu0 %v1509
      %1531 = vmatprep.subr.bf16.mxu0 0
      %1532 = vmatpush1.bf16.msra.mxu0 %v1510
      %1533 = vmatprep.subr.bf16.mxu0 0
      %1534 = vmatpush1.bf16.msra.mxu0 %v1511
      %1535 = vmatprep.subr.bf16.mxu0 0
      %1536 = vmatpush1.bf16.msra.mxu0 %v1512
      %1537 = vmatprep.subr.bf16.mxu0 0
      %1538 = vmatpush1.bf16.msra.mxu0 0
      %1539 = vmatprep.subr.bf16.mxu0 0
      %1540 = vmatpush1.bf16.msra.mxu0 0
      %1541 = vmatprep.subr.bf16.mxu0 0
      %1542 = vmatpush1.bf16.msra.mxu0 0
      %1543 = vmatprep.subr.bf16.mxu0 0
      %1544 = vmatpush1.bf16.msra.mxu0 0
      %1545 = vmatprep.subr.bf16.mxu0 0
      %1546 = vmatpush1.bf16.msra.mxu0 0
      %1547 = vmatprep.subr.bf16.mxu0 0
      %1548 = vmatpush1.bf16.msra.mxu0 0
      %1549 = vmatprep.subr.bf16.mxu0 0
      %1550 = vmatpush1.bf16.msra.mxu0 0
      %1551 = vmatprep.subr.bf16.mxu0 0
      %1552 = vmatpush1.bf16.msra.mxu0 0
      %1553 = vmatprep.mubr.bf16.mxu0 0
      %1554 = vmatmul.mubr.bf16.gmra.mrb[0].mxu0 %v1441
      %v1555 = vpop.f32.mrb[0].mxu0
      %v1556 = vadd.f32 0.0, %v1555
      %v1557 = vpop.f32.mrb[0].mxu0
      %v1558 = vpop.f32.mrb[0].mxu0
      %v1559 = vadd.f32 0.0, %v1558
      %v1560 = vpop.f32.mrb[0].mxu0
      %1561 = vmatprep.mubr.bf16.mxu0 0
      %1562 = vmatmul.mubr.bf16.gmra.mrb[0].mxu0 %v1442
      %v1563 = vpop.f32.mrb[0].mxu0
      %v1564 = vadd.f32 0.0, %v1563
      %v1565 = vpop.f32.mrb[0].mxu0
      %v1566 = vpop.f32.mrb[0].mxu0
      %v1567 = vadd.f32 0.0, %v1566
      %v1568 = vpop.f32.mrb[0].mxu0
      %1569 = vmatprep.mubr.bf16.mxu0 0
      %1570 = vmatmul.mubr.bf16.gmra.mrb[0].mxu0 %v1443
      %v1571 = vpop.f32.mrb[0].mxu0
      %v1572 = vadd.f32 0.0, %v1571
      %v1573 = vpop.f32.mrb[0].mxu0
      %v1574 = vpop.f32.mrb[0].mxu0
      %v1575 = vadd.f32 0.0, %v1574
      %v1576 = vpop.f32.mrb[0].mxu0
      %1577 = vmatprep.mubr.bf16.mxu0 0
      %1578 = vmatmul.mubr.bf16.gmra.mrb[0].mxu0 %v1444
      %v1579 = vpop.f32.mrb[0].mxu0
      %v1580 = vadd.f32 0.0, %v1579
      %v1581 = vpop.f32.mrb[0].mxu0
      %v1582 = vpop.f32.mrb[0].mxu0
      %v1583 = vadd.f32 0.0, %v1582
      %v1584 = vpop.f32.mrb[0].mxu0
      %1585 = vmatprep.mubr.bf16.mxu0 0
      %1586 = vmatmul.mubr.bf16.gmra.mrb[0].mxu0 %v1445
      %v1587 = vpop.f32.mrb[0].mxu0
      %v1588 = vadd.f32 0.0, %v1587
      %v1589 = vpop.f32.mrb[0].mxu0
      %v1590 = vpop.f32.mrb[0].mxu0
      %v1591 = vadd.f32 0.0, %v1590
      %v1592 = vpop.f32.mrb[0].mxu0
      %1593 = vmatprep.mubr.bf16.mxu0 0
      %1594 = vmatmul.mubr.bf16.gmra.mrb[0].mxu0 %v1446
      %v1595 = vpop.f32.mrb[0].mxu0
      %v1596 = vadd.f32 0.0, %v1595
      %v1597 = vpop.f32.mrb[0].mxu0
      %v1598 = vpop.f32.mrb[0].mxu0
      %v1599 = vadd.f32 0.0, %v1598
      %v1600 = vpop.f32.mrb[0].mxu0
      %1601 = vmatprep.mubr.bf16.mxu0 0
      %1602 = vmatmul.mubr.bf16.gmra.mrb[0].mxu0 %v1447
      %v1603 = vpop.f32.mrb[0].mxu0
      %v1604 = vadd.f32 0.0, %v1603
      %v1605 = vpop.f32.mrb[0].mxu0
      %v1606 = vpop.f32.mrb[0].mxu0
      %v1607 = vadd.f32 0.0, %v1606
      %v1608 = vpop.f32.mrb[0].mxu0
      %1609 = vmatprep.mubr.bf16.mxu0 0
      %1610 = vmatmul.mubr.bf16.gmra.mrb[0].mxu0 %v1448
      %v1611 = vpop.f32.mrb[0].mxu0
      %v1612 = vadd.f32 0.0, %v1611
      %v1613 = vpop.f32.mrb[0].mxu0
      %v1614 = vpop.f32.mrb[0].mxu0
      %v1615 = vadd.f32 0.0, %v1614
      %v1616 = vpop.f32.mrb[0].mxu0
      %1617 = vmatprep.mubr.bf16.mxu0 0
      %1618 = vmatmul.mubr.bf16.gmra.mrb[0].mxu0 %v1449
      %v1619 = vpop.f32.mrb[0].mxu0
      %v1620 = vadd.f32 0.0, %v1619
      %v1621 = vpop.f32.mrb[0].mxu0
      %v1622 = vpop.f32.mrb[0].mxu0
      %v1623 = vadd.f32 0.0, %v1622
      %v1624 = vpop.f32.mrb[0].mxu0
      %1625 = vmatprep.mubr.bf16.mxu0 0
      %1626 = vmatmul.mubr.bf16.gmra.mrb[0].mxu0 %v1450
      %v1627 = vpop.f32.mrb[0].mxu0
      %v1628 = vadd.f32 0.0, %v1627
      %v1629 = vpop.f32.mrb[0].mxu0
      %v1630 = vpop.f32.mrb[0].mxu0
      %v1631 = vadd.f32 0.0, %v1630
      %v1632 = vpop.f32.mrb[0].mxu0
      %1633 = vmatprep.mubr.bf16.mxu0 0
      %1634 = vmatmul.mubr.bf16.gmra.mrb[0].mxu0 %v1451
      %v1635 = vpop.f32.mrb[0].mxu0
      %v1636 = vadd.f32 0.0, %v1635
      %v1637 = vpop.f32.mrb[0].mxu0
      %v1638 = vpop.f32.mrb[0].mxu0
      %v1639 = vadd.f32 0.0, %v1638
      %v1640 = vpop.f32.mrb[0].mxu0
      %1641 = vmatprep.mubr.bf16.mxu0 0
      %1642 = vmatmul.mubr.bf16.gmra.mrb[0].mxu0 %v1452
      %v1643 = vpop.f32.mrb[0].mxu0
      %v1644 = vadd.f32 0.0, %v1643
      %v1645 = vpop.f32.mrb[0].mxu0
      %v1646 = vpop.f32.mrb[0].mxu0
      %v1647 = vadd.f32 0.0, %v1646
      %v1648 = vpop.f32.mrb[0].mxu0
      %1649 = vmatprep.mubr.bf16.mxu0 0
      %1650 = vmatmul.mubr.bf16.gmra.mrb[0].mxu0 %v1453
      %v1651 = vpop.f32.mrb[0].mxu0
      %v1652 = vadd.f32 0.0, %v1651
      %v1653 = vpop.f32.mrb[0].mxu0
      %v1654 = vpop.f32.mrb[0].mxu0
      %v1655 = vadd.f32 0.0, %v1654
      %v1656 = vpop.f32.mrb[0].mxu0
      %1657 = vmatprep.mubr.bf16.mxu0 0
      %1658 = vmatmul.mubr.bf16.gmra.mrb[0].mxu0 %v1454
      %v1659 = vpop.f32.mrb[0].mxu0
      %v1660 = vadd.f32 0.0, %v1659
      %v1661 = vpop.f32.mrb[0].mxu0
      %v1662 = vpop.f32.mrb[0].mxu0
      %v1663 = vadd.f32 0.0, %v1662
      %v1664 = vpop.f32.mrb[0].mxu0
      %1665 = vmatprep.mubr.bf16.mxu0 0
      %1666 = vmatmul.mubr.bf16.gmra.mrb[0].mxu0 %v1455
      %v1667 = vpop.f32.mrb[0].mxu0
      %v1668 = vadd.f32 0.0, %v1667
      %v1669 = vpop.f32.mrb[0].mxu0
      %v1670 = vpop.f32.mrb[0].mxu0
      %v1671 = vadd.f32 0.0, %v1670
      %v1672 = vpop.f32.mrb[0].mxu0
      %1673 = vmatprep.mubr.bf16.mxu0 0
      %1674 = vmatmul.mubr.bf16.gmra.mrb[0].mxu0 %v1456
      %v1675 = vpop.f32.mrb[0].mxu0
      %v1676 = vadd.f32 0.0, %v1675
      %v1677 = vpop.f32.mrb[0].mxu0
      %v1678 = vpop.f32.mrb[0].mxu0
      %v1679 = vadd.f32 0.0, %v1678
      %v1680 = vpop.f32.mrb[0].mxu0
      %1681 = vdwg.mxu0
      %v1682 = vadd.f32 %v1103, %v1556
      %v1683 = vadd.f32 %v1106, %v1559
      %v1684 = vadd.f32 %v1111, %v1564
      %v1685 = vadd.f32 %v1114, %v1567
      %v1686 = vadd.f32 %v1119, %v1572
      %v1687 = vadd.f32 %v1122, %v1575
      %v1688 = vadd.f32 %v1127, %v1580
      %v1689 = vadd.f32 %v1130, %v1583
      %v1690 = vadd.f32 %v1135, %v1588
      %v1691 = vadd.f32 %v1138, %v1591
      %v1692 = vadd.f32 %v1143, %v1596
      %v1693 = vadd.f32 %v1146, %v1599
      %v1694 = vadd.f32 %v1151, %v1604
      %v1695 = vadd.f32 %v1154, %v1607
      %v1696 = vadd.f32 %v1159, %v1612
      %v1697 = vadd.f32 %v1162, %v1615
      %v1698 = vadd.f32 %v1167, %v1620
      %v1699 = vadd.f32 %v1170, %v1623
      %v1700 = vadd.f32 %v1175, %v1628
      %v1701 = vadd.f32 %v1178, %v1631
      %v1702 = vadd.f32 %v1183, %v1636
      %v1703 = vadd.f32 %v1186, %v1639
      %v1704 = vadd.f32 %v1191, %v1644
      %v1705 = vadd.f32 %v1194, %v1647
      %v1706 = vadd.f32 %v1199, %v1652
      %v1707 = vadd.f32 %v1202, %v1655
      %v1708 = vadd.f32 %v1207, %v1660
      %v1709 = vadd.f32 %v1210, %v1663
      %v1710 = vadd.f32 %v1215, %v1668
      %v1711 = vadd.f32 %v1218, %v1671
      %v1712 = vadd.f32 %v1223, %v1676
      %v1713 = vadd.f32 %v1226, %v1679
      %s1714 = scalar_lea.vmem %s172, 12
      %v1715 = vld [vmem:[%s1714] sm:$0xf]
      %v1716 = vld [vmem:[%s1714 + $0x4] sm:$0xf]
      %v1717 = vld [vmem:[%s1714 + $0xc] sm:$0xf]
      %v1718 = vld [vmem:[%s1714 + $0x10] sm:$0xf]
      %v1719 = vld [vmem:[%s1714 + $0x18] sm:$0xf]
      %v1720 = vld [vmem:[%s1714 + $0x1c] sm:$0xf]
      %v1721 = vld [vmem:[%s1714 + $0x24] sm:$0xf]
      %v1722 = vld [vmem:[%s1714 + $0x28] sm:$0xf]
      %v1723 = vld [vmem:[%s1714 + $0x30] sm:$0xf]
      %v1724 = vld [vmem:[%s1714 + $0x34] sm:$0xf]
      %v1725 = vld [vmem:[%s1714 + $0x3c] sm:$0xf]
      %v1726 = vld [vmem:[%s1714 + $0x40] sm:$0xf]
      %v1727 = vld [vmem:[%s1714 + $0x48] sm:$0xf]
      %v1728 = vld [vmem:[%s1714 + $0x4c] sm:$0xf]
      %v1729 = vld [vmem:[%s1714 + $0x54] sm:$0xf]
      %v1730 = vld [vmem:[%s1714 + $0x58] sm:$0xf]
      %v1731 = vld [vmem:[%s1714 + $0x60] sm:$0xf]
      %v1732 = vld [vmem:[%s1714 + $0x64] sm:$0xf]
      %v1733 = vld [vmem:[%s1714 + $0x6c] sm:$0xf]
      %v1734 = vld [vmem:[%s1714 + $0x70] sm:$0xf]
      %v1735 = vld [vmem:[%s1714 + $0x78] sm:$0xf]
      %v1736 = vld [vmem:[%s1714 + $0x7c] sm:$0xf]
      %v1737 = vld [vmem:[%s1714 + $0x84] sm:$0xf]
      %v1738 = vld [vmem:[%s1714 + $0x88] sm:$0xf]
      %v1739 = vld [vmem:[%s1714 + $0x90] sm:$0xf]
      %v1740 = vld [vmem:[%s1714 + $0x94] sm:$0xf]
      %v1741 = vld [vmem:[%s1714 + $0x9c] sm:$0xf]
      %v1742 = vld [vmem:[%s1714 + $0xa0] sm:$0xf]
      %v1743 = vld [vmem:[%s1714 + $0xa8] sm:$0xf]
      %v1744 = vld [vmem:[%s1714 + $0xac] sm:$0xf]
      %v1745 = vld [vmem:[%s1714 + $0xb4] sm:$0xf]
      %v1746 = vld [vmem:[%s1714 + $0xb8] sm:$0xf]
      %s1747 = scalar_lea.vmem %s1, 192
      %v1748 = vld [vmem:[%s1747] sm:$0xf]
      %v1749 = vld [vmem:[%s1747 + $0x4] sm:$0xf]
      %v1750 = vld [vmem:[%s1747 + $0x8] sm:$0xf]
      %v1751 = vld [vmem:[%s1747 + $0xc] sm:$0xf]
      %v1752 = vld [vmem:[%s1747 + $0x10] sm:$0xf]
      %v1753 = vld [vmem:[%s1747 + $0x14] sm:$0xf]
      %v1754 = vld [vmem:[%s1747 + $0x18] sm:$0xf]
      %v1755 = vld [vmem:[%s1747 + $0x1c] sm:$0xf]
      %v1756 = vld [vmem:[%s1747 + $0x20] sm:$0xf]
      %v1757 = vld [vmem:[%s1747 + $0x24] sm:$0xf]
      %v1758 = vld [vmem:[%s1747 + $0x28] sm:$0xf]
      %v1759 = vld [vmem:[%s1747 + $0x2c] sm:$0xf]
      %v1760 = vld [vmem:[%s1747 + $0x30] sm:$0xf]
      %v1761 = vld [vmem:[%s1747 + $0x34] sm:$0xf]
      %v1762 = vld [vmem:[%s1747 + $0x38] sm:$0xf]
      %v1763 = vld [vmem:[%s1747 + $0x3c] sm:$0xf]
      %v1796 = vunpack.c.l.b16 %v1715
      %v1797 = vunpack.c.l.b16 %v1716
      %v1798 = vunpack.c.l.b16 %v1717
      %v1799 = vunpack.c.l.b16 %v1718
      %v1800 = vunpack.c.l.b16 %v1719
      %v1801 = vunpack.c.l.b16 %v1720
      %v1802 = vunpack.c.l.b16 %v1721
      %v1803 = vunpack.c.l.b16 %v1722
      %v1804 = vunpack.c.l.b16 %v1723
      %v1805 = vunpack.c.l.b16 %v1724
      %v1806 = vunpack.c.l.b16 %v1725
      %v1807 = vunpack.c.l.b16 %v1726
      %v1808 = vunpack.c.l.b16 %v1727
      %v1809 = vunpack.c.l.b16 %v1728
      %v1810 = vunpack.c.l.b16 %v1729
      %v1811 = vunpack.c.l.b16 %v1730
      %v1812 = vunpack.c.l.b16 %v1731
      %v1813 = vunpack.c.l.b16 %v1732
      %v1814 = vunpack.c.l.b16 %v1733
      %v1815 = vunpack.c.l.b16 %v1734
      %v1816 = vunpack.c.l.b16 %v1735
      %v1817 = vunpack.c.l.b16 %v1736
      %v1818 = vunpack.c.l.b16 %v1737
      %v1819 = vunpack.c.l.b16 %v1738
      %v1820 = vunpack.c.l.b16 %v1739
      %v1821 = vunpack.c.l.b16 %v1740
      %v1822 = vunpack.c.l.b16 %v1741
      %v1823 = vunpack.c.l.b16 %v1742
      %v1824 = vunpack.c.l.b16 %v1743
      %v1825 = vunpack.c.l.b16 %v1744
      %v1826 = vunpack.c.l.b16 %v1745
      %v1827 = vunpack.c.l.b16 %v1746
      %v1828 = vpack.c.b16 %v1797, %v1796
      %v1829 = vpack.c.b16 %v1799, %v1798
      %v1830 = vpack.c.b16 %v1801, %v1800
      %v1831 = vpack.c.b16 %v1803, %v1802
      %v1832 = vpack.c.b16 %v1805, %v1804
      %v1833 = vpack.c.b16 %v1807, %v1806
      %v1834 = vpack.c.b16 %v1809, %v1808
      %v1835 = vpack.c.b16 %v1811, %v1810
      %v1836 = vpack.c.b16 %v1813, %v1812
      %v1837 = vpack.c.b16 %v1815, %v1814
      %v1838 = vpack.c.b16 %v1817, %v1816
      %v1839 = vpack.c.b16 %v1819, %v1818
      %v1840 = vpack.c.b16 %v1821, %v1820
      %v1841 = vpack.c.b16 %v1823, %v1822
      %v1842 = vpack.c.b16 %v1825, %v1824
      %v1843 = vpack.c.b16 %v1827, %v1826
      %v1876 = vunpack.c.l.b16 %v1748
      %v1877 = vunpack.c.l.b16 %v1749
      %v1878 = vunpack.c.l.b16 %v1750
      %v1879 = vunpack.c.l.b16 %v1751
      %v1880 = vunpack.c.l.b16 %v1752
      %v1881 = vunpack.c.l.b16 %v1753
      %v1882 = vunpack.c.l.b16 %v1754
      %v1883 = vunpack.c.l.b16 %v1755
      %v1884 = vunpack.c.l.b16 %v1756
      %v1885 = vunpack.c.l.b16 %v1757
      %v1886 = vunpack.c.l.b16 %v1758
      %v1887 = vunpack.c.l.b16 %v1759
      %v1888 = vunpack.c.l.b16 %v1760
      %v1889 = vunpack.c.l.b16 %v1761
      %v1890 = vunpack.c.l.b16 %v1762
      %v1891 = vunpack.c.l.b16 %v1763
      %v1892 = vpack.c.b16 %v1877, %v1876
      %v1893 = vpack.c.b16 %v1879, %v1878
      %v1894 = vpack.c.b16 %v1881, %v1880
      %v1895 = vpack.c.b16 %v1883, %v1882
      %v1896 = vpack.c.b16 %v1885, %v1884
      %v1897 = vpack.c.b16 %v1887, %v1886
      %v1898 = vpack.c.b16 %v1889, %v1888
      %v1899 = vpack.c.b16 %v1891, %v1890
      %1908 = vmatprep.subr.bf16.mxu0 0
      %1909 = vmatpush1.bf16.msra.mxu0 %v1892
      %1910 = vmatprep.subr.bf16.mxu0 0
      %1911 = vmatpush1.bf16.msra.mxu0 %v1893
      %1912 = vmatprep.subr.bf16.mxu0 0
      %1913 = vmatpush1.bf16.msra.mxu0 %v1894
      %1914 = vmatprep.subr.bf16.mxu0 0
      %1915 = vmatpush1.bf16.msra.mxu0 %v1895
      %1916 = vmatprep.subr.bf16.mxu0 0
      %1917 = vmatpush1.bf16.msra.mxu0 %v1896
      %1918 = vmatprep.subr.bf16.mxu0 0
      %1919 = vmatpush1.bf16.msra.mxu0 %v1897
      %1920 = vmatprep.subr.bf16.mxu0 0
      %1921 = vmatpush1.bf16.msra.mxu0 %v1898
      %1922 = vmatprep.subr.bf16.mxu0 0
      %1923 = vmatpush1.bf16.msra.mxu0 %v1899
      %1924 = vmatprep.subr.bf16.mxu0 0
      %1925 = vmatpush1.bf16.msra.mxu0 0
      %1926 = vmatprep.subr.bf16.mxu0 0
      %1927 = vmatpush1.bf16.msra.mxu0 0
      %1928 = vmatprep.subr.bf16.mxu0 0
      %1929 = vmatpush1.bf16.msra.mxu0 0
      %1930 = vmatprep.subr.bf16.mxu0 0
      %1931 = vmatpush1.bf16.msra.mxu0 0
      %1932 = vmatprep.subr.bf16.mxu0 0
      %1933 = vmatpush1.bf16.msra.mxu0 0
      %1934 = vmatprep.subr.bf16.mxu0 0
      %1935 = vmatpush1.bf16.msra.mxu0 0
      %1936 = vmatprep.subr.bf16.mxu0 0
      %1937 = vmatpush1.bf16.msra.mxu0 0
      %1938 = vmatprep.subr.bf16.mxu0 0
      %1939 = vmatpush1.bf16.msra.mxu0 0
      %1940 = vmatprep.mubr.bf16.mxu0 0
      %1941 = vmatmul.mubr.bf16.gmra.mrb[0].mxu0 %v1828
      %v1942 = vpop.f32.mrb[0].mxu0
      %v1943 = vadd.f32 0.0, %v1942
      %v1944 = vpop.f32.mrb[0].mxu0
      %v1945 = vpop.f32.mrb[0].mxu0
      %v1946 = vadd.f32 0.0, %v1945
      %v1947 = vpop.f32.mrb[0].mxu0
      %1948 = vmatprep.mubr.bf16.mxu0 0
      %1949 = vmatmul.mubr.bf16.gmra.mrb[0].mxu0 %v1829
      %v1950 = vpop.f32.mrb[0].mxu0
      %v1951 = vadd.f32 0.0, %v1950
      %v1952 = vpop.f32.mrb[0].mxu0
      %v1953 = vpop.f32.mrb[0].mxu0
      %v1954 = vadd.f32 0.0, %v1953
      %v1955 = vpop.f32.mrb[0].mxu0
      %1956 = vmatprep.mubr.bf16.mxu0 0
      %1957 = vmatmul.mubr.bf16.gmra.mrb[0].mxu0 %v1830
      %v1958 = vpop.f32.mrb[0].mxu0
      %v1959 = vadd.f32 0.0, %v1958
      %v1960 = vpop.f32.mrb[0].mxu0
      %v1961 = vpop.f32.mrb[0].mxu0
      %v1962 = vadd.f32 0.0, %v1961
      %v1963 = vpop.f32.mrb[0].mxu0
      %1964 = vmatprep.mubr.bf16.mxu0 0
      %1965 = vmatmul.mubr.bf16.gmra.mrb[0].mxu0 %v1831
      %v1966 = vpop.f32.mrb[0].mxu0
      %v1967 = vadd.f32 0.0, %v1966
      %v1968 = vpop.f32.mrb[0].mxu0
      %v1969 = vpop.f32.mrb[0].mxu0
      %v1970 = vadd.f32 0.0, %v1969
      %v1971 = vpop.f32.mrb[0].mxu0
      %1972 = vmatprep.mubr.bf16.mxu0 0
      %1973 = vmatmul.mubr.bf16.gmra.mrb[0].mxu0 %v1832
      %v1974 = vpop.f32.mrb[0].mxu0
      %v1975 = vadd.f32 0.0, %v1974
      %v1976 = vpop.f32.mrb[0].mxu0
      %v1977 = vpop.f32.mrb[0].mxu0
      %v1978 = vadd.f32 0.0, %v1977
      %v1979 = vpop.f32.mrb[0].mxu0
      %1980 = vmatprep.mubr.bf16.mxu0 0
      %1981 = vmatmul.mubr.bf16.gmra.mrb[0].mxu0 %v1833
      %v1982 = vpop.f32.mrb[0].mxu0
      %v1983 = vadd.f32 0.0, %v1982
      %v1984 = vpop.f32.mrb[0].mxu0
      %v1985 = vpop.f32.mrb[0].mxu0
      %v1986 = vadd.f32 0.0, %v1985
      %v1987 = vpop.f32.mrb[0].mxu0
      %1988 = vmatprep.mubr.bf16.mxu0 0
      %1989 = vmatmul.mubr.bf16.gmra.mrb[0].mxu0 %v1834
      %v1990 = vpop.f32.mrb[0].mxu0
      %v1991 = vadd.f32 0.0, %v1990
      %v1992 = vpop.f32.mrb[0].mxu0
      %v1993 = vpop.f32.mrb[0].mxu0
      %v1994 = vadd.f32 0.0, %v1993
      %v1995 = vpop.f32.mrb[0].mxu0
      %1996 = vmatprep.mubr.bf16.mxu0 0
      %1997 = vmatmul.mubr.bf16.gmra.mrb[0].mxu0 %v1835
      %v1998 = vpop.f32.mrb[0].mxu0
      %v1999 = vadd.f32 0.0, %v1998
      %v2000 = vpop.f32.mrb[0].mxu0
      %v2001 = vpop.f32.mrb[0].mxu0
      %v2002 = vadd.f32 0.0, %v2001
      %v2003 = vpop.f32.mrb[0].mxu0
      %2004 = vmatprep.mubr.bf16.mxu0 0
      %2005 = vmatmul.mubr.bf16.gmra.mrb[0].mxu0 %v1836
      %v2006 = vpop.f32.mrb[0].mxu0
      %v2007 = vadd.f32 0.0, %v2006
      %v2008 = vpop.f32.mrb[0].mxu0
      %v2009 = vpop.f32.mrb[0].mxu0
      %v2010 = vadd.f32 0.0, %v2009
      %v2011 = vpop.f32.mrb[0].mxu0
      %2012 = vmatprep.mubr.bf16.mxu0 0
      %2013 = vmatmul.mubr.bf16.gmra.mrb[0].mxu0 %v1837
      %v2014 = vpop.f32.mrb[0].mxu0
      %v2015 = vadd.f32 0.0, %v2014
      %v2016 = vpop.f32.mrb[0].mxu0
      %v2017 = vpop.f32.mrb[0].mxu0
      %v2018 = vadd.f32 0.0, %v2017
      %v2019 = vpop.f32.mrb[0].mxu0
      %2020 = vmatprep.mubr.bf16.mxu0 0
      %2021 = vmatmul.mubr.bf16.gmra.mrb[0].mxu0 %v1838
      %v2022 = vpop.f32.mrb[0].mxu0
      %v2023 = vadd.f32 0.0, %v2022
      %v2024 = vpop.f32.mrb[0].mxu0
      %v2025 = vpop.f32.mrb[0].mxu0
      %v2026 = vadd.f32 0.0, %v2025
      %v2027 = vpop.f32.mrb[0].mxu0
      %2028 = vmatprep.mubr.bf16.mxu0 0
      %2029 = vmatmul.mubr.bf16.gmra.mrb[0].mxu0 %v1839
      %v2030 = vpop.f32.mrb[0].mxu0
      %v2031 = vadd.f32 0.0, %v2030
      %v2032 = vpop.f32.mrb[0].mxu0
      %v2033 = vpop.f32.mrb[0].mxu0
      %v2034 = vadd.f32 0.0, %v2033
      %v2035 = vpop.f32.mrb[0].mxu0
      %2036 = vmatprep.mubr.bf16.mxu0 0
      %2037 = vmatmul.mubr.bf16.gmra.mrb[0].mxu0 %v1840
      %v2038 = vpop.f32.mrb[0].mxu0
      %v2039 = vadd.f32 0.0, %v2038
      %v2040 = vpop.f32.mrb[0].mxu0
      %v2041 = vpop.f32.mrb[0].mxu0
      %v2042 = vadd.f32 0.0, %v2041
      %v2043 = vpop.f32.mrb[0].mxu0
      %2044 = vmatprep.mubr.bf16.mxu0 0
      %2045 = vmatmul.mubr.bf16.gmra.mrb[0].mxu0 %v1841
      %v2046 = vpop.f32.mrb[0].mxu0
      %v2047 = vadd.f32 0.0, %v2046
      %v2048 = vpop.f32.mrb[0].mxu0
      %v2049 = vpop.f32.mrb[0].mxu0
      %v2050 = vadd.f32 0.0, %v2049
      %v2051 = vpop.f32.mrb[0].mxu0
      %2052 = vmatprep.mubr.bf16.mxu0 0
      %2053 = vmatmul.mubr.bf16.gmra.mrb[0].mxu0 %v1842
      %v2054 = vpop.f32.mrb[0].mxu0
      %v2055 = vadd.f32 0.0, %v2054
      %v2056 = vpop.f32.mrb[0].mxu0
      %v2057 = vpop.f32.mrb[0].mxu0
      %v2058 = vadd.f32 0.0, %v2057
      %v2059 = vpop.f32.mrb[0].mxu0
      %2060 = vmatprep.mubr.bf16.mxu0 0
      %2061 = vmatmul.mubr.bf16.gmra.mrb[0].mxu0 %v1843
      %v2062 = vpop.f32.mrb[0].mxu0
      %v2063 = vadd.f32 0.0, %v2062
      %v2064 = vpop.f32.mrb[0].mxu0
      %v2065 = vpop.f32.mrb[0].mxu0
      %v2066 = vadd.f32 0.0, %v2065
      %v2067 = vpop.f32.mrb[0].mxu0
      %2068 = vdwg.mxu0
      %v2069 = vadd.f32 %v1682, %v1943
      %v2070 = vadd.f32 %v1683, %v1946
      %v2071 = vadd.f32 %v1684, %v1951
      %v2072 = vadd.f32 %v1685, %v1954
      %v2073 = vadd.f32 %v1686, %v1959
      %v2074 = vadd.f32 %v1687, %v1962
      %v2075 = vadd.f32 %v1688, %v1967
      %v2076 = vadd.f32 %v1689, %v1970
      %v2077 = vadd.f32 %v1690, %v1975
      %v2078 = vadd.f32 %v1691, %v1978
      %v2079 = vadd.f32 %v1692, %v1983
      %v2080 = vadd.f32 %v1693, %v1986
      %v2081 = vadd.f32 %v1694, %v1991
      %v2082 = vadd.f32 %v1695, %v1994
      %v2083 = vadd.f32 %v1696, %v1999
      %v2084 = vadd.f32 %v1697, %v2002
      %v2085 = vadd.f32 %v1698, %v2007
      %v2086 = vadd.f32 %v1699, %v2010
      %v2087 = vadd.f32 %v1700, %v2015
      %v2088 = vadd.f32 %v1701, %v2018
      %v2089 = vadd.f32 %v1702, %v2023
      %v2090 = vadd.f32 %v1703, %v2026
      %v2091 = vadd.f32 %v1704, %v2031
      %v2092 = vadd.f32 %v1705, %v2034
      %v2093 = vadd.f32 %v1706, %v2039
      %v2094 = vadd.f32 %v1707, %v2042
      %v2095 = vadd.f32 %v1708, %v2047
      %v2096 = vadd.f32 %v1709, %v2050
      %v2097 = vadd.f32 %v1710, %v2055
      %v2098 = vadd.f32 %v1711, %v2058
      %v2099 = vadd.f32 %v1712, %v2063
      %v2100 = vadd.f32 %v1713, %v2066
      %v2101 = vld [vmem:[%s1714] sm:$0xf]
      %v2102 = vld [vmem:[%s1714 + $0x4] sm:$0xf]
      %v2103 = vld [vmem:[%s1714 + $0x8] sm:$0x1]
      %v2104 = vld [vmem:[%s1714 + $0xc] sm:$0xf]
      %v2105 = vld [vmem:[%s1714 + $0x10] sm:$0xf]
      %v2106 = vld [vmem:[%s1714 + $0x14] sm:$0x1]
      %v2107 = vld [vmem:[%s1714 + $0x18] sm:$0xf]
      %v2108 = vld [vmem:[%s1714 + $0x1c] sm:$0xf]
      %v2109 = vld [vmem:[%s1714 + $0x20] sm:$0x1]
      %v2110 = vld [vmem:[%s1714 + $0x24] sm:$0xf]
      %v2111 = vld [vmem:[%s1714 + $0x28] sm:$0xf]
      %v2112 = vld [vmem:[%s1714 + $0x2c] sm:$0x1]
      %v2113 = vld [vmem:[%s1714 + $0x30] sm:$0xf]
      %v2114 = vld [vmem:[%s1714 + $0x34] sm:$0xf]
      %v2115 = vld [vmem:[%s1714 + $0x38] sm:$0x1]
      %v2116 = vld [vmem:[%s1714 + $0x3c] sm:$0xf]
      %v2117 = vld [vmem:[%s1714 + $0x40] sm:$0xf]
      %v2118 = vld [vmem:[%s1714 + $0x44] sm:$0x1]
      %v2119 = vld [vmem:[%s1714 + $0x48] sm:$0xf]
      %v2120 = vld [vmem:[%s1714 + $0x4c] sm:$0xf]
      %v2121 = vld [vmem:[%s1714 + $0x50] sm:$0x1]
      %v2122 = vld [vmem:[%s1714 + $0x54] sm:$0xf]
      %v2123 = vld [vmem:[%s1714 + $0x58] sm:$0xf]
      %v2124 = vld [vmem:[%s1714 + $0x5c] sm:$0x1]
      %v2125 = vld [vmem:[%s1714 + $0x60] sm:$0xf]
      %v2126 = vld [vmem:[%s1714 + $0x64] sm:$0xf]
      %v2127 = vld [vmem:[%s1714 + $0x68] sm:$0x1]
      %v2128 = vld [vmem:[%s1714 + $0x6c] sm:$0xf]
      %v2129 = vld [vmem:[%s1714 + $0x70] sm:$0xf]
      %v2130 = vld [vmem:[%s1714 + $0x74] sm:$0x1]
      %v2131 = vld [vmem:[%s1714 + $0x78] sm:$0xf]
      %v2132 = vld [vmem:[%s1714 + $0x7c] sm:$0xf]
      %v2133 = vld [vmem:[%s1714 + $0x80] sm:$0x1]
      %v2134 = vld [vmem:[%s1714 + $0x84] sm:$0xf]
      %v2135 = vld [vmem:[%s1714 + $0x88] sm:$0xf]
      %v2136 = vld [vmem:[%s1714 + $0x8c] sm:$0x1]
      %v2137 = vld [vmem:[%s1714 + $0x90] sm:$0xf]
      %v2138 = vld [vmem:[%s1714 + $0x94] sm:$0xf]
      %v2139 = vld [vmem:[%s1714 + $0x98] sm:$0x1]
      %v2140 = vld [vmem:[%s1714 + $0x9c] sm:$0xf]
      %v2141 = vld [vmem:[%s1714 + $0xa0] sm:$0xf]
      %v2142 = vld [vmem:[%s1714 + $0xa4] sm:$0x1]
      %v2143 = vld [vmem:[%s1714 + $0xa8] sm:$0xf]
      %v2144 = vld [vmem:[%s1714 + $0xac] sm:$0xf]
      %v2145 = vld [vmem:[%s1714 + $0xb0] sm:$0x1]
      %v2146 = vld [vmem:[%s1714 + $0xb4] sm:$0xf]
      %v2147 = vld [vmem:[%s1714 + $0xb8] sm:$0xf]
      %v2148 = vld [vmem:[%s1714 + $0xbc] sm:$0x1]
      %v2150 = vshrl.u32 %v2101, 16
      %v2152 = vrot.slane %v2150, 4
      %v2153 = vshll.u32 %v2101, 16
      %v2155 = vrot.slane %v2153, 5
      %v2156 = vor.u32 %v2152, %v2155
      %v2157 = vrot.slane %v2156, 4
      %v2159 = vshll.u32 %v2102, 16
      %v2161 = vrot.slane %v2159, 5
      %v2162 = vsel %vm249, %v2157, %v2161
      %v2163 = vshrl.u32 %v2102, 16
      %v2165 = vrot.slane %v2163, 4
      %v2166 = vor.u32 %v2165, %v2161
      %v2167 = vrot.slane %v2166, 4
      %v2169 = vshll.u32 %v2103, 16
      %v2171 = vrot.slane %v2169, 5
      %v2172 = vsel %vm249, %v2167, %v2171
      %v2174 = vshrl.u32 %v2104, 16
      %v2176 = vrot.slane %v2174, 4
      %v2177 = vshll.u32 %v2104, 16
      %v2179 = vrot.slane %v2177, 5
      %v2180 = vor.u32 %v2176, %v2179
      %v2181 = vrot.slane %v2180, 4
      %v2183 = vshll.u32 %v2105, 16
      %v2185 = vrot.slane %v2183, 5
      %v2186 = vsel %vm249, %v2181, %v2185
      %v2187 = vshrl.u32 %v2105, 16
      %v2189 = vrot.slane %v2187, 4
      %v2190 = vor.u32 %v2189, %v2185
      %v2191 = vrot.slane %v2190, 4
      %v2193 = vshll.u32 %v2106, 16
      %v2195 = vrot.slane %v2193, 5
      %v2196 = vsel %vm249, %v2191, %v2195
      %v2198 = vshrl.u32 %v2107, 16
      %v2200 = vrot.slane %v2198, 4
      %v2201 = vshll.u32 %v2107, 16
      %v2203 = vrot.slane %v2201, 5
      %v2204 = vor.u32 %v2200, %v2203
      %v2205 = vrot.slane %v2204, 4
      %v2207 = vshll.u32 %v2108, 16
      %v2209 = vrot.slane %v2207, 5
      %v2210 = vsel %vm249, %v2205, %v2209
      %v2211 = vshrl.u32 %v2108, 16
      %v2213 = vrot.slane %v2211, 4
      %v2214 = vor.u32 %v2213, %v2209
      %v2215 = vrot.slane %v2214, 4
      %v2217 = vshll.u32 %v2109, 16
      %v2219 = vrot.slane %v2217, 5
      %v2220 = vsel %vm249, %v2215, %v2219
      %v2222 = vshrl.u32 %v2110, 16
      %v2224 = vrot.slane %v2222, 4
      %v2225 = vshll.u32 %v2110, 16
      %v2227 = vrot.slane %v2225, 5
      %v2228 = vor.u32 %v2224, %v2227
      %v2229 = vrot.slane %v2228, 4
      %v2231 = vshll.u32 %v2111, 16
      %v2233 = vrot.slane %v2231, 5
      %v2234 = vsel %vm249, %v2229, %v2233
      %v2235 = vshrl.u32 %v2111, 16
      %v2237 = vrot.slane %v2235, 4
      %v2238 = vor.u32 %v2237, %v2233
      %v2239 = vrot.slane %v2238, 4
      %v2241 = vshll.u32 %v2112, 16
      %v2243 = vrot.slane %v2241, 5
      %v2244 = vsel %vm249, %v2239, %v2243
      %v2246 = vshrl.u32 %v2113, 16
      %v2248 = vrot.slane %v2246, 4
      %v2249 = vshll.u32 %v2113, 16
      %v2251 = vrot.slane %v2249, 5
      %v2252 = vor.u32 %v2248, %v2251
      %v2253 = vrot.slane %v2252, 4
      %v2255 = vshll.u32 %v2114, 16
      %v2257 = vrot.slane %v2255, 5
      %v2258 = vsel %vm249, %v2253, %v2257
      %v2259 = vshrl.u32 %v2114, 16
      %v2261 = vrot.slane %v2259, 4
      %v2262 = vor.u32 %v2261, %v2257
      %v2263 = vrot.slane %v2262, 4
      %v2265 = vshll.u32 %v2115, 16
      %v2267 = vrot.slane %v2265, 5
      %v2268 = vsel %vm249, %v2263, %v2267
      %v2270 = vshrl.u32 %v2116, 16
      %v2272 = vrot.slane %v2270, 4
      %v2273 = vshll.u32 %v2116, 16
      %v2275 = vrot.slane %v2273, 5
      %v2276 = vor.u32 %v2272, %v2275
      %v2277 = vrot.slane %v2276, 4
      %v2279 = vshll.u32 %v2117, 16
      %v2281 = vrot.slane %v2279, 5
      %v2282 = vsel %vm249, %v2277, %v2281
      %v2283 = vshrl.u32 %v2117, 16
      %v2285 = vrot.slane %v2283, 4
      %v2286 = vor.u32 %v2285, %v2281
      %v2287 = vrot.slane %v2286, 4
      %v2289 = vshll.u32 %v2118, 16
      %v2291 = vrot.slane %v2289, 5
      %v2292 = vsel %vm249, %v2287, %v2291
      %v2294 = vshrl.u32 %v2119, 16
      %v2296 = vrot.slane %v2294, 4
      %v2297 = vshll.u32 %v2119, 16
      %v2299 = vrot.slane %v2297, 5
      %v2300 = vor.u32 %v2296, %v2299
      %v2301 = vrot.slane %v2300, 4
      %v2303 = vshll.u32 %v2120, 16
      %v2305 = vrot.slane %v2303, 5
      %v2306 = vsel %vm249, %v2301, %v2305
      %v2307 = vshrl.u32 %v2120, 16
      %v2309 = vrot.slane %v2307, 4
      %v2310 = vor.u32 %v2309, %v2305
      %v2311 = vrot.slane %v2310, 4
      %v2313 = vshll.u32 %v2121, 16
      %v2315 = vrot.slane %v2313, 5
      %v2316 = vsel %vm249, %v2311, %v2315
      %v2318 = vshrl.u32 %v2122, 16
      %v2320 = vrot.slane %v2318, 4
      %v2321 = vshll.u32 %v2122, 16
      %v2323 = vrot.slane %v2321, 5
      %v2324 = vor.u32 %v2320, %v2323
      %v2325 = vrot.slane %v2324, 4
      %v2327 = vshll.u32 %v2123, 16
      %v2329 = vrot.slane %v2327, 5
      %v2330 = vsel %vm249, %v2325, %v2329
      %v2331 = vshrl.u32 %v2123, 16
      %v2333 = vrot.slane %v2331, 4
      %v2334 = vor.u32 %v2333, %v2329
      %v2335 = vrot.slane %v2334, 4
      %v2337 = vshll.u32 %v2124, 16
      %v2339 = vrot.slane %v2337, 5
      %v2340 = vsel %vm249, %v2335, %v2339
      %v2342 = vshrl.u32 %v2125, 16
      %v2344 = vrot.slane %v2342, 4
      %v2345 = vshll.u32 %v2125, 16
      %v2347 = vrot.slane %v2345, 5
      %v2348 = vor.u32 %v2344, %v2347
      %v2349 = vrot.slane %v2348, 4
      %v2351 = vshll.u32 %v2126, 16
      %v2353 = vrot.slane %v2351, 5
      %v2354 = vsel %vm249, %v2349, %v2353
      %v2355 = vshrl.u32 %v2126, 16
      %v2357 = vrot.slane %v2355, 4
      %v2358 = vor.u32 %v2357, %v2353
      %v2359 = vrot.slane %v2358, 4
      %v2361 = vshll.u32 %v2127, 16
      %v2363 = vrot.slane %v2361, 5
      %v2364 = vsel %vm249, %v2359, %v2363
      %v2366 = vshrl.u32 %v2128, 16
      %v2368 = vrot.slane %v2366, 4
      %v2369 = vshll.u32 %v2128, 16
      %v2371 = vrot.slane %v2369, 5
      %v2372 = vor.u32 %v2368, %v2371
      %v2373 = vrot.slane %v2372, 4
      %v2375 = vshll.u32 %v2129, 16
      %v2377 = vrot.slane %v2375, 5
      %v2378 = vsel %vm249, %v2373, %v2377
      %v2379 = vshrl.u32 %v2129, 16
      %v2381 = vrot.slane %v2379, 4
      %v2382 = vor.u32 %v2381, %v2377
      %v2383 = vrot.slane %v2382, 4
      %v2385 = vshll.u32 %v2130, 16
      %v2387 = vrot.slane %v2385, 5
      %v2388 = vsel %vm249, %v2383, %v2387
      %v2390 = vshrl.u32 %v2131, 16
      %v2392 = vrot.slane %v2390, 4
      %v2393 = vshll.u32 %v2131, 16
      %v2395 = vrot.slane %v2393, 5
      %v2396 = vor.u32 %v2392, %v2395
      %v2397 = vrot.slane %v2396, 4
      %v2399 = vshll.u32 %v2132, 16
      %v2401 = vrot.slane %v2399, 5
      %v2402 = vsel %vm249, %v2397, %v2401
      %v2403 = vshrl.u32 %v2132, 16
      %v2405 = vrot.slane %v2403, 4
      %v2406 = vor.u32 %v2405, %v2401
      %v2407 = vrot.slane %v2406, 4
      %v2409 = vshll.u32 %v2133, 16
      %v2411 = vrot.slane %v2409, 5
      %v2412 = vsel %vm249, %v2407, %v2411
      %v2414 = vshrl.u32 %v2134, 16
      %v2416 = vrot.slane %v2414, 4
      %v2417 = vshll.u32 %v2134, 16
      %v2419 = vrot.slane %v2417, 5
      %v2420 = vor.u32 %v2416, %v2419
      %v2421 = vrot.slane %v2420, 4
      %v2423 = vshll.u32 %v2135, 16
      %v2425 = vrot.slane %v2423, 5
      %v2426 = vsel %vm249, %v2421, %v2425
      %v2427 = vshrl.u32 %v2135, 16
      %v2429 = vrot.slane %v2427, 4
      %v2430 = vor.u32 %v2429, %v2425
      %v2431 = vrot.slane %v2430, 4
      %v2433 = vshll.u32 %v2136, 16
      %v2435 = vrot.slane %v2433, 5
      %v2436 = vsel %vm249, %v2431, %v2435
      %v2438 = vshrl.u32 %v2137, 16
      %v2440 = vrot.slane %v2438, 4
      %v2441 = vshll.u32 %v2137, 16
      %v2443 = vrot.slane %v2441, 5
      %v2444 = vor.u32 %v2440, %v2443
      %v2445 = vrot.slane %v2444, 4
      %v2447 = vshll.u32 %v2138, 16
      %v2449 = vrot.slane %v2447, 5
      %v2450 = vsel %vm249, %v2445, %v2449
      %v2451 = vshrl.u32 %v2138, 16
      %v2453 = vrot.slane %v2451, 4
      %v2454 = vor.u32 %v2453, %v2449
      %v2455 = vrot.slane %v2454, 4
      %v2457 = vshll.u32 %v2139, 16
      %v2459 = vrot.slane %v2457, 5
      %v2460 = vsel %vm249, %v2455, %v2459
      %v2462 = vshrl.u32 %v2140, 16
      %v2464 = vrot.slane %v2462, 4
      %v2465 = vshll.u32 %v2140, 16
      %v2467 = vrot.slane %v2465, 5
      %v2468 = vor.u32 %v2464, %v2467
      %v2469 = vrot.slane %v2468, 4
      %v2471 = vshll.u32 %v2141, 16
      %v2473 = vrot.slane %v2471, 5
      %v2474 = vsel %vm249, %v2469, %v2473
      %v2475 = vshrl.u32 %v2141, 16
      %v2477 = vrot.slane %v2475, 4
      %v2478 = vor.u32 %v2477, %v2473
      %v2479 = vrot.slane %v2478, 4
      %v2481 = vshll.u32 %v2142, 16
      %v2483 = vrot.slane %v2481, 5
      %v2484 = vsel %vm249, %v2479, %v2483
      %v2486 = vshrl.u32 %v2143, 16
      %v2488 = vrot.slane %v2486, 4
      %v2489 = vshll.u32 %v2143, 16
      %v2491 = vrot.slane %v2489, 5
      %v2492 = vor.u32 %v2488, %v2491
      %v2493 = vrot.slane %v2492, 4
      %v2495 = vshll.u32 %v2144, 16
      %v2497 = vrot.slane %v2495, 5
      %v2498 = vsel %vm249, %v2493, %v2497
      %v2499 = vshrl.u32 %v2144, 16
      %v2501 = vrot.slane %v2499, 4
      %v2502 = vor.u32 %v2501, %v2497
      %v2503 = vrot.slane %v2502, 4
      %v2505 = vshll.u32 %v2145, 16
      %v2507 = vrot.slane %v2505, 5
      %v2508 = vsel %vm249, %v2503, %v2507
      %v2510 = vshrl.u32 %v2146, 16
      %v2512 = vrot.slane %v2510, 4
      %v2513 = vshll.u32 %v2146, 16
      %v2515 = vrot.slane %v2513, 5
      %v2516 = vor.u32 %v2512, %v2515
      %v2517 = vrot.slane %v2516, 4
      %v2519 = vshll.u32 %v2147, 16
      %v2521 = vrot.slane %v2519, 5
      %v2522 = vsel %vm249, %v2517, %v2521
      %v2523 = vshrl.u32 %v2147, 16
      %v2525 = vrot.slane %v2523, 4
      %v2526 = vor.u32 %v2525, %v2521
      %v2527 = vrot.slane %v2526, 4
      %v2529 = vshll.u32 %v2148, 16
      %v2531 = vrot.slane %v2529, 5
      %v2532 = vsel %vm249, %v2527, %v2531
      %s2533 = scalar_lea.vmem %s1, 256
      %v2534 = vld [vmem:[%s2533] sm:$0xf]
      %v2535 = vld [vmem:[%s2533 + $0x4] sm:$0xf]
      %v2536 = vld [vmem:[%s2533 + $0x8] sm:$0xf]
      %v2537 = vld [vmem:[%s2533 + $0xc] sm:$0xf]
      %v2538 = vld [vmem:[%s2533 + $0x10] sm:$0xf]
      %v2539 = vld [vmem:[%s2533 + $0x14] sm:$0xf]
      %v2540 = vld [vmem:[%s2533 + $0x18] sm:$0xf]
      %v2541 = vld [vmem:[%s2533 + $0x1c] sm:$0xf]
      %v2542 = vld [vmem:[%s2533 + $0x20] sm:$0xf]
      %v2543 = vld [vmem:[%s2533 + $0x24] sm:$0xf]
      %v2544 = vld [vmem:[%s2533 + $0x28] sm:$0xf]
      %v2545 = vld [vmem:[%s2533 + $0x2c] sm:$0xf]
      %v2546 = vld [vmem:[%s2533 + $0x30] sm:$0xf]
      %v2547 = vld [vmem:[%s2533 + $0x34] sm:$0xf]
      %v2548 = vld [vmem:[%s2533 + $0x38] sm:$0xf]
      %v2549 = vld [vmem:[%s2533 + $0x3c] sm:$0xf]
      %v2550 = vunpack.c.l.b16 %v2162
      %v2551 = vunpack.c.l.b16 %v2172
      %v2552 = vunpack.c.l.b16 %v2186
      %v2553 = vunpack.c.l.b16 %v2196
      %v2554 = vunpack.c.l.b16 %v2210
      %v2555 = vunpack.c.l.b16 %v2220
      %v2556 = vunpack.c.l.b16 %v2234
      %v2557 = vunpack.c.l.b16 %v2244
      %v2558 = vunpack.c.l.b16 %v2258
      %v2559 = vunpack.c.l.b16 %v2268
      %v2560 = vunpack.c.l.b16 %v2282
      %v2561 = vunpack.c.l.b16 %v2292
      %v2562 = vunpack.c.l.b16 %v2306
      %v2563 = vunpack.c.l.b16 %v2316
      %v2564 = vunpack.c.l.b16 %v2330
      %v2565 = vunpack.c.l.b16 %v2340
      %v2566 = vunpack.c.l.b16 %v2354
      %v2567 = vunpack.c.l.b16 %v2364
      %v2568 = vunpack.c.l.b16 %v2378
      %v2569 = vunpack.c.l.b16 %v2388
      %v2570 = vunpack.c.l.b16 %v2402
      %v2571 = vunpack.c.l.b16 %v2412
      %v2572 = vunpack.c.l.b16 %v2426
      %v2573 = vunpack.c.l.b16 %v2436
      %v2574 = vunpack.c.l.b16 %v2450
      %v2575 = vunpack.c.l.b16 %v2460
      %v2576 = vunpack.c.l.b16 %v2474
      %v2577 = vunpack.c.l.b16 %v2484
      %v2578 = vunpack.c.l.b16 %v2498
      %v2579 = vunpack.c.l.b16 %v2508
      %v2580 = vunpack.c.l.b16 %v2522
      %v2581 = vunpack.c.l.b16 %v2532
      %v2582 = vpack.c.b16 %v2551, %v2550
      %v2583 = vpack.c.b16 %v2553, %v2552
      %v2584 = vpack.c.b16 %v2555, %v2554
      %v2585 = vpack.c.b16 %v2557, %v2556
      %v2586 = vpack.c.b16 %v2559, %v2558
      %v2587 = vpack.c.b16 %v2561, %v2560
      %v2588 = vpack.c.b16 %v2563, %v2562
      %v2589 = vpack.c.b16 %v2565, %v2564
      %v2590 = vpack.c.b16 %v2567, %v2566
      %v2591 = vpack.c.b16 %v2569, %v2568
      %v2592 = vpack.c.b16 %v2571, %v2570
      %v2593 = vpack.c.b16 %v2573, %v2572
      %v2594 = vpack.c.b16 %v2575, %v2574
      %v2595 = vpack.c.b16 %v2577, %v2576
      %v2596 = vpack.c.b16 %v2579, %v2578
      %v2597 = vpack.c.b16 %v2581, %v2580
      %v2630 = vunpack.c.l.b16 %v2534
      %v2631 = vunpack.c.l.b16 %v2535
      %v2632 = vunpack.c.l.b16 %v2536
      %v2633 = vunpack.c.l.b16 %v2537
      %v2634 = vunpack.c.l.b16 %v2538
      %v2635 = vunpack.c.l.b16 %v2539
      %v2636 = vunpack.c.l.b16 %v2540
      %v2637 = vunpack.c.l.b16 %v2541
      %v2638 = vunpack.c.l.b16 %v2542
      %v2639 = vunpack.c.l.b16 %v2543
      %v2640 = vunpack.c.l.b16 %v2544
      %v2641 = vunpack.c.l.b16 %v2545
      %v2642 = vunpack.c.l.b16 %v2546
      %v2643 = vunpack.c.l.b16 %v2547
      %v2644 = vunpack.c.l.b16 %v2548
      %v2645 = vunpack.c.l.b16 %v2549
      %v2646 = vpack.c.b16 %v2631, %v2630
      %v2647 = vpack.c.b16 %v2633, %v2632
      %v2648 = vpack.c.b16 %v2635, %v2634
      %v2649 = vpack.c.b16 %v2637, %v2636
      %v2650 = vpack.c.b16 %v2639, %v2638
      %v2651 = vpack.c.b16 %v2641, %v2640
      %v2652 = vpack.c.b16 %v2643, %v2642
      %v2653 = vpack.c.b16 %v2645, %v2644
      %2662 = vmatprep.subr.bf16.mxu0 0
      %2663 = vmatpush1.bf16.msra.mxu0 %v2646
      %2664 = vmatprep.subr.bf16.mxu0 0
      %2665 = vmatpush1.bf16.msra.mxu0 %v2647
      %2666 = vmatprep.subr.bf16.mxu0 0
      %2667 = vmatpush1.bf16.msra.mxu0 %v2648
      %2668 = vmatprep.subr.bf16.mxu0 0
      %2669 = vmatpush1.bf16.msra.mxu0 %v2649
      %2670 = vmatprep.subr.bf16.mxu0 0
      %2671 = vmatpush1.bf16.msra.mxu0 %v2650
      %2672 = vmatprep.subr.bf16.mxu0 0
      %2673 = vmatpush1.bf16.msra.mxu0 %v2651
      %2674 = vmatprep.subr.bf16.mxu0 0
      %2675 = vmatpush1.bf16.msra.mxu0 %v2652
      %2676 = vmatprep.subr.bf16.mxu0 0
      %2677 = vmatpush1.bf16.msra.mxu0 %v2653
      %2678 = vmatprep.subr.bf16.mxu0 0
      %2679 = vmatpush1.bf16.msra.mxu0 0
      %2680 = vmatprep.subr.bf16.mxu0 0
      %2681 = vmatpush1.bf16.msra.mxu0 0
      %2682 = vmatprep.subr.bf16.mxu0 0
      %2683 = vmatpush1.bf16.msra.mxu0 0
      %2684 = vmatprep.subr.bf16.mxu0 0
      %2685 = vmatpush1.bf16.msra.mxu0 0
      %2686 = vmatprep.subr.bf16.mxu0 0
      %2687 = vmatpush1.bf16.msra.mxu0 0
      %2688 = vmatprep.subr.bf16.mxu0 0
      %2689 = vmatpush1.bf16.msra.mxu0 0
      %2690 = vmatprep.subr.bf16.mxu0 0
      %2691 = vmatpush1.bf16.msra.mxu0 0
      %2692 = vmatprep.subr.bf16.mxu0 0
      %2693 = vmatpush1.bf16.msra.mxu0 0
      %2694 = vmatprep.mubr.bf16.mxu0 0
      %2695 = vmatmul.mubr.bf16.gmra.mrb[0].mxu0 %v2582
      %v2696 = vpop.f32.mrb[0].mxu0
      %v2697 = vadd.f32 0.0, %v2696
      %v2698 = vpop.f32.mrb[0].mxu0
      %v2699 = vpop.f32.mrb[0].mxu0
      %v2700 = vadd.f32 0.0, %v2699
      %v2701 = vpop.f32.mrb[0].mxu0
      %2702 = vmatprep.mubr.bf16.mxu0 0
      %2703 = vmatmul.mubr.bf16.gmra.mrb[0].mxu0 %v2583
      %v2704 = vpop.f32.mrb[0].mxu0
      %v2705 = vadd.f32 0.0, %v2704
      %v2706 = vpop.f32.mrb[0].mxu0
      %v2707 = vpop.f32.mrb[0].mxu0
      %v2708 = vadd.f32 0.0, %v2707
      %v2709 = vpop.f32.mrb[0].mxu0
      %2710 = vmatprep.mubr.bf16.mxu0 0
      %2711 = vmatmul.mubr.bf16.gmra.mrb[0].mxu0 %v2584
      %v2712 = vpop.f32.mrb[0].mxu0
      %v2713 = vadd.f32 0.0, %v2712
      %v2714 = vpop.f32.mrb[0].mxu0
      %v2715 = vpop.f32.mrb[0].mxu0
      %v2716 = vadd.f32 0.0, %v2715
      %v2717 = vpop.f32.mrb[0].mxu0
      %2718 = vmatprep.mubr.bf16.mxu0 0
      %2719 = vmatmul.mubr.bf16.gmra.mrb[0].mxu0 %v2585
      %v2720 = vpop.f32.mrb[0].mxu0
      %v2721 = vadd.f32 0.0, %v2720
      %v2722 = vpop.f32.mrb[0].mxu0
      %v2723 = vpop.f32.mrb[0].mxu0
      %v2724 = vadd.f32 0.0, %v2723
      %v2725 = vpop.f32.mrb[0].mxu0
      %2726 = vmatprep.mubr.bf16.mxu0 0
      %2727 = vmatmul.mubr.bf16.gmra.mrb[0].mxu0 %v2586
      %v2728 = vpop.f32.mrb[0].mxu0
      %v2729 = vadd.f32 0.0, %v2728
      %v2730 = vpop.f32.mrb[0].mxu0
      %v2731 = vpop.f32.mrb[0].mxu0
      %v2732 = vadd.f32 0.0, %v2731
      %v2733 = vpop.f32.mrb[0].mxu0
      %2734 = vmatprep.mubr.bf16.mxu0 0
      %2735 = vmatmul.mubr.bf16.gmra.mrb[0].mxu0 %v2587
      %v2736 = vpop.f32.mrb[0].mxu0
      %v2737 = vadd.f32 0.0, %v2736
      %v2738 = vpop.f32.mrb[0].mxu0
      %v2739 = vpop.f32.mrb[0].mxu0
      %v2740 = vadd.f32 0.0, %v2739
      %v2741 = vpop.f32.mrb[0].mxu0
      %2742 = vmatprep.mubr.bf16.mxu0 0
      %2743 = vmatmul.mubr.bf16.gmra.mrb[0].mxu0 %v2588
      %v2744 = vpop.f32.mrb[0].mxu0
      %v2745 = vadd.f32 0.0, %v2744
      %v2746 = vpop.f32.mrb[0].mxu0
      %v2747 = vpop.f32.mrb[0].mxu0
      %v2748 = vadd.f32 0.0, %v2747
      %v2749 = vpop.f32.mrb[0].mxu0
      %2750 = vmatprep.mubr.bf16.mxu0 0
      %2751 = vmatmul.mubr.bf16.gmra.mrb[0].mxu0 %v2589
      %v2752 = vpop.f32.mrb[0].mxu0
      %v2753 = vadd.f32 0.0, %v2752
      %v2754 = vpop.f32.mrb[0].mxu0
      %v2755 = vpop.f32.mrb[0].mxu0
      %v2756 = vadd.f32 0.0, %v2755
      %v2757 = vpop.f32.mrb[0].mxu0
      %2758 = vmatprep.mubr.bf16.mxu0 0
      %2759 = vmatmul.mubr.bf16.gmra.mrb[0].mxu0 %v2590
      %v2760 = vpop.f32.mrb[0].mxu0
      %v2761 = vadd.f32 0.0, %v2760
      %v2762 = vpop.f32.mrb[0].mxu0
      %v2763 = vpop.f32.mrb[0].mxu0
      %v2764 = vadd.f32 0.0, %v2763
      %v2765 = vpop.f32.mrb[0].mxu0
      %2766 = vmatprep.mubr.bf16.mxu0 0
      %2767 = vmatmul.mubr.bf16.gmra.mrb[0].mxu0 %v2591
      %v2768 = vpop.f32.mrb[0].mxu0
      %v2769 = vadd.f32 0.0, %v2768
      %v2770 = vpop.f32.mrb[0].mxu0
      %v2771 = vpop.f32.mrb[0].mxu0
      %v2772 = vadd.f32 0.0, %v2771
      %v2773 = vpop.f32.mrb[0].mxu0
      %2774 = vmatprep.mubr.bf16.mxu0 0
      %2775 = vmatmul.mubr.bf16.gmra.mrb[0].mxu0 %v2592
      %v2776 = vpop.f32.mrb[0].mxu0
      %v2777 = vadd.f32 0.0, %v2776
      %v2778 = vpop.f32.mrb[0].mxu0
      %v2779 = vpop.f32.mrb[0].mxu0
      %v2780 = vadd.f32 0.0, %v2779
      %v2781 = vpop.f32.mrb[0].mxu0
      %2782 = vmatprep.mubr.bf16.mxu0 0
      %2783 = vmatmul.mubr.bf16.gmra.mrb[0].mxu0 %v2593
      %v2784 = vpop.f32.mrb[0].mxu0
      %v2785 = vadd.f32 0.0, %v2784
      %v2786 = vpop.f32.mrb[0].mxu0
      %v2787 = vpop.f32.mrb[0].mxu0
      %v2788 = vadd.f32 0.0, %v2787
      %v2789 = vpop.f32.mrb[0].mxu0
      %2790 = vmatprep.mubr.bf16.mxu0 0
      %2791 = vmatmul.mubr.bf16.gmra.mrb[0].mxu0 %v2594
      %v2792 = vpop.f32.mrb[0].mxu0
      %v2793 = vadd.f32 0.0, %v2792
      %v2794 = vpop.f32.mrb[0].mxu0
      %v2795 = vpop.f32.mrb[0].mxu0
      %v2796 = vadd.f32 0.0, %v2795
      %v2797 = vpop.f32.mrb[0].mxu0
      %2798 = vmatprep.mubr.bf16.mxu0 0
      %2799 = vmatmul.mubr.bf16.gmra.mrb[0].mxu0 %v2595
      %v2800 = vpop.f32.mrb[0].mxu0
      %v2801 = vadd.f32 0.0, %v2800
      %v2802 = vpop.f32.mrb[0].mxu0
      %v2803 = vpop.f32.mrb[0].mxu0
      %v2804 = vadd.f32 0.0, %v2803
      %v2805 = vpop.f32.mrb[0].mxu0
      %2806 = vmatprep.mubr.bf16.mxu0 0
      %2807 = vmatmul.mubr.bf16.gmra.mrb[0].mxu0 %v2596
      %v2808 = vpop.f32.mrb[0].mxu0
      %v2809 = vadd.f32 0.0, %v2808
      %v2810 = vpop.f32.mrb[0].mxu0
      %v2811 = vpop.f32.mrb[0].mxu0
      %v2812 = vadd.f32 0.0, %v2811
      %v2813 = vpop.f32.mrb[0].mxu0
      %2814 = vmatprep.mubr.bf16.mxu0 0
      %2815 = vmatmul.mubr.bf16.gmra.mrb[0].mxu0 %v2597
      %v2816 = vpop.f32.mrb[0].mxu0
      %v2817 = vadd.f32 0.0, %v2816
      %v2818 = vpop.f32.mrb[0].mxu0
      %v2819 = vpop.f32.mrb[0].mxu0
      %v2820 = vadd.f32 0.0, %v2819
      %v2821 = vpop.f32.mrb[0].mxu0
      %2822 = vdwg.mxu0
      %v2823 = vadd.f32 %v2069, %v2697
      %v2824 = vadd.f32 %v2070, %v2700
      %v2825 = vadd.f32 %v2071, %v2705
      %v2826 = vadd.f32 %v2072, %v2708
      %v2827 = vadd.f32 %v2073, %v2713
      %v2828 = vadd.f32 %v2074, %v2716
      %v2829 = vadd.f32 %v2075, %v2721
      %v2830 = vadd.f32 %v2076, %v2724
      %v2831 = vadd.f32 %v2077, %v2729
      %v2832 = vadd.f32 %v2078, %v2732
      %v2833 = vadd.f32 %v2079, %v2737
      %v2834 = vadd.f32 %v2080, %v2740
      %v2835 = vadd.f32 %v2081, %v2745
      %v2836 = vadd.f32 %v2082, %v2748
      %v2837 = vadd.f32 %v2083, %v2753
      %v2838 = vadd.f32 %v2084, %v2756
      %v2839 = vadd.f32 %v2085, %v2761
      %v2840 = vadd.f32 %v2086, %v2764
      %v2841 = vadd.f32 %v2087, %v2769
      %v2842 = vadd.f32 %v2088, %v2772
      %v2843 = vadd.f32 %v2089, %v2777
      %v2844 = vadd.f32 %v2090, %v2780
      %v2845 = vadd.f32 %v2091, %v2785
      %v2846 = vadd.f32 %v2092, %v2788
      %v2847 = vadd.f32 %v2093, %v2793
      %v2848 = vadd.f32 %v2094, %v2796
      %v2849 = vadd.f32 %v2095, %v2801
      %v2850 = vadd.f32 %v2096, %v2804
      %v2851 = vadd.f32 %v2097, %v2809
      %v2852 = vadd.f32 %v2098, %v2812
      %v2853 = vadd.f32 %v2099, %v2817
      %v2854 = vadd.f32 %v2100, %v2820
      %v2855 = vld [vmem:[%s1714] sm:$0xe]
      %v2856 = vld [vmem:[%s1714 + $0xc] sm:$0xe]
      %v2857 = vld [vmem:[%s1714 + $0x18] sm:$0xe]
      %v2858 = vld [vmem:[%s1714 + $0x24] sm:$0xe]
      %v2859 = vld [vmem:[%s1714 + $0x30] sm:$0xe]
      %v2860 = vld [vmem:[%s1714 + $0x3c] sm:$0xe]
      %v2861 = vld [vmem:[%s1714 + $0x48] sm:$0xe]
      %v2862 = vld [vmem:[%s1714 + $0x54] sm:$0xe]
      %v2863 = vld [vmem:[%s1714 + $0x60] sm:$0xe]
      %v2864 = vld [vmem:[%s1714 + $0x6c] sm:$0xe]
      %v2865 = vld [vmem:[%s1714 + $0x78] sm:$0xe]
      %v2866 = vld [vmem:[%s1714 + $0x84] sm:$0xe]
      %v2867 = vld [vmem:[%s1714 + $0x90] sm:$0xe]
      %v2868 = vld [vmem:[%s1714 + $0x9c] sm:$0xe]
      %v2869 = vld [vmem:[%s1714 + $0xa8] sm:$0xe]
      %v2870 = vld [vmem:[%s1714 + $0xb4] sm:$0xe]
      %v2919 = vrot.slane %v2855, 5
      %v2920 = vrot.slane %v2919, 4
      %v2921 = vrot.slane %v2102, 5
      %v2922 = vsel %vm1279, %v2920, %v2921
      %v2923 = vrot.slane %v2921, 4
      %v2924 = vrot.slane %v2103, 5
      %v2925 = vsel %vm1279, %v2923, %v2924
      %v2926 = vrot.slane %v2856, 5
      %v2927 = vrot.slane %v2926, 4
      %v2928 = vrot.slane %v2105, 5
      %v2929 = vsel %vm1279, %v2927, %v2928
      %v2930 = vrot.slane %v2928, 4
      %v2931 = vrot.slane %v2106, 5
      %v2932 = vsel %vm1279, %v2930, %v2931
      %v2933 = vrot.slane %v2857, 5
      %v2934 = vrot.slane %v2933, 4
      %v2935 = vrot.slane %v2108, 5
      %v2936 = vsel %vm1279, %v2934, %v2935
      %v2937 = vrot.slane %v2935, 4
      %v2938 = vrot.slane %v2109, 5
      %v2939 = vsel %vm1279, %v2937, %v2938
      %v2940 = vrot.slane %v2858, 5
      %v2941 = vrot.slane %v2940, 4
      %v2942 = vrot.slane %v2111, 5
      %v2943 = vsel %vm1279, %v2941, %v2942
      %v2944 = vrot.slane %v2942, 4
      %v2945 = vrot.slane %v2112, 5
      %v2946 = vsel %vm1279, %v2944, %v2945
      %v2947 = vrot.slane %v2859, 5
      %v2948 = vrot.slane %v2947, 4
      %v2949 = vrot.slane %v2114, 5
      %v2950 = vsel %vm1279, %v2948, %v2949
      %v2951 = vrot.slane %v2949, 4
      %v2952 = vrot.slane %v2115, 5
      %v2953 = vsel %vm1279, %v2951, %v2952
      %v2954 = vrot.slane %v2860, 5
      %v2955 = vrot.slane %v2954, 4
      %v2956 = vrot.slane %v2117, 5
      %v2957 = vsel %vm1279, %v2955, %v2956
      %v2958 = vrot.slane %v2956, 4
      %v2959 = vrot.slane %v2118, 5
      %v2960 = vsel %vm1279, %v2958, %v2959
      %v2961 = vrot.slane %v2861, 5
      %v2962 = vrot.slane %v2961, 4
      %v2963 = vrot.slane %v2120, 5
      %v2964 = vsel %vm1279, %v2962, %v2963
      %v2965 = vrot.slane %v2963, 4
      %v2966 = vrot.slane %v2121, 5
      %v2967 = vsel %vm1279, %v2965, %v2966
      %v2968 = vrot.slane %v2862, 5
      %v2969 = vrot.slane %v2968, 4
      %v2970 = vrot.slane %v2123, 5
      %v2971 = vsel %vm1279, %v2969, %v2970
      %v2972 = vrot.slane %v2970, 4
      %v2973 = vrot.slane %v2124, 5
      %v2974 = vsel %vm1279, %v2972, %v2973
      %v2975 = vrot.slane %v2863, 5
      %v2976 = vrot.slane %v2975, 4
      %v2977 = vrot.slane %v2126, 5
      %v2978 = vsel %vm1279, %v2976, %v2977
      %v2979 = vrot.slane %v2977, 4
      %v2980 = vrot.slane %v2127, 5
      %v2981 = vsel %vm1279, %v2979, %v2980
      %v2982 = vrot.slane %v2864, 5
      %v2983 = vrot.slane %v2982, 4
      %v2984 = vrot.slane %v2129, 5
      %v2985 = vsel %vm1279, %v2983, %v2984
      %v2986 = vrot.slane %v2984, 4
      %v2987 = vrot.slane %v2130, 5
      %v2988 = vsel %vm1279, %v2986, %v2987
      %v2989 = vrot.slane %v2865, 5
      %v2990 = vrot.slane %v2989, 4
      %v2991 = vrot.slane %v2132, 5
      %v2992 = vsel %vm1279, %v2990, %v2991
      %v2993 = vrot.slane %v2991, 4
      %v2994 = vrot.slane %v2133, 5
      %v2995 = vsel %vm1279, %v2993, %v2994
      %v2996 = vrot.slane %v2866, 5
      %v2997 = vrot.slane %v2996, 4
      %v2998 = vrot.slane %v2135, 5
      %v2999 = vsel %vm1279, %v2997, %v2998
      %v3000 = vrot.slane %v2998, 4
      %v3001 = vrot.slane %v2136, 5
      %v3002 = vsel %vm1279, %v3000, %v3001
      %v3003 = vrot.slane %v2867, 5
      %v3004 = vrot.slane %v3003, 4
      %v3005 = vrot.slane %v2138, 5
      %v3006 = vsel %vm1279, %v3004, %v3005
      %v3007 = vrot.slane %v3005, 4
      %v3008 = vrot.slane %v2139, 5
      %v3009 = vsel %vm1279, %v3007, %v3008
      %v3010 = vrot.slane %v2868, 5
      %v3011 = vrot.slane %v3010, 4
      %v3012 = vrot.slane %v2141, 5
      %v3013 = vsel %vm1279, %v3011, %v3012
      %v3014 = vrot.slane %v3012, 4
      %v3015 = vrot.slane %v2142, 5
      %v3016 = vsel %vm1279, %v3014, %v3015
      %v3017 = vrot.slane %v2869, 5
      %v3018 = vrot.slane %v3017, 4
      %v3019 = vrot.slane %v2144, 5
      %v3020 = vsel %vm1279, %v3018, %v3019
      %v3021 = vrot.slane %v3019, 4
      %v3022 = vrot.slane %v2145, 5
      %v3023 = vsel %vm1279, %v3021, %v3022
      %v3024 = vrot.slane %v2870, 5
      %v3025 = vrot.slane %v3024, 4
      %v3026 = vrot.slane %v2147, 5
      %v3027 = vsel %vm1279, %v3025, %v3026
      %v3028 = vrot.slane %v3026, 4
      %v3029 = vrot.slane %v2148, 5
      %v3030 = vsel %vm1279, %v3028, %v3029
      %s3031 = scalar_lea.vmem %s1, 320
      %v3032 = vld [vmem:[%s3031] sm:$0xf]
      %v3033 = vld [vmem:[%s3031 + $0x4] sm:$0xf]
      %v3034 = vld [vmem:[%s3031 + $0x8] sm:$0xf]
      %v3035 = vld [vmem:[%s3031 + $0xc] sm:$0xf]
      %v3036 = vld [vmem:[%s3031 + $0x10] sm:$0xf]
      %v3037 = vld [vmem:[%s3031 + $0x14] sm:$0xf]
      %v3038 = vld [vmem:[%s3031 + $0x18] sm:$0xf]
      %v3039 = vld [vmem:[%s3031 + $0x1c] sm:$0xf]
      %v3040 = vld [vmem:[%s3031 + $0x20] sm:$0xf]
      %v3041 = vld [vmem:[%s3031 + $0x24] sm:$0xf]
      %v3042 = vld [vmem:[%s3031 + $0x28] sm:$0xf]
      %v3043 = vld [vmem:[%s3031 + $0x2c] sm:$0xf]
      %v3044 = vld [vmem:[%s3031 + $0x30] sm:$0xf]
      %v3045 = vld [vmem:[%s3031 + $0x34] sm:$0xf]
      %v3046 = vld [vmem:[%s3031 + $0x38] sm:$0xf]
      %v3047 = vld [vmem:[%s3031 + $0x3c] sm:$0xf]
      %v3048 = vunpack.c.l.b16 %v2922
      %v3049 = vunpack.c.l.b16 %v2925
      %v3050 = vunpack.c.l.b16 %v2929
      %v3051 = vunpack.c.l.b16 %v2932
      %v3052 = vunpack.c.l.b16 %v2936
      %v3053 = vunpack.c.l.b16 %v2939
      %v3054 = vunpack.c.l.b16 %v2943
      %v3055 = vunpack.c.l.b16 %v2946
      %v3056 = vunpack.c.l.b16 %v2950
      %v3057 = vunpack.c.l.b16 %v2953
      %v3058 = vunpack.c.l.b16 %v2957
      %v3059 = vunpack.c.l.b16 %v2960
      %v3060 = vunpack.c.l.b16 %v2964
      %v3061 = vunpack.c.l.b16 %v2967
      %v3062 = vunpack.c.l.b16 %v2971
      %v3063 = vunpack.c.l.b16 %v2974
      %v3064 = vunpack.c.l.b16 %v2978
      %v3065 = vunpack.c.l.b16 %v2981
      %v3066 = vunpack.c.l.b16 %v2985
      %v3067 = vunpack.c.l.b16 %v2988
      %v3068 = vunpack.c.l.b16 %v2992
      %v3069 = vunpack.c.l.b16 %v2995
      %v3070 = vunpack.c.l.b16 %v2999
      %v3071 = vunpack.c.l.b16 %v3002
      %v3072 = vunpack.c.l.b16 %v3006
      %v3073 = vunpack.c.l.b16 %v3009
      %v3074 = vunpack.c.l.b16 %v3013
      %v3075 = vunpack.c.l.b16 %v3016
      %v3076 = vunpack.c.l.b16 %v3020
      %v3077 = vunpack.c.l.b16 %v3023
      %v3078 = vunpack.c.l.b16 %v3027
      %v3079 = vunpack.c.l.b16 %v3030
      %v3080 = vpack.c.b16 %v3049, %v3048
      %v3081 = vpack.c.b16 %v3051, %v3050
      %v3082 = vpack.c.b16 %v3053, %v3052
      %v3083 = vpack.c.b16 %v3055, %v3054
      %v3084 = vpack.c.b16 %v3057, %v3056
      %v3085 = vpack.c.b16 %v3059, %v3058
      %v3086 = vpack.c.b16 %v3061, %v3060
      %v3087 = vpack.c.b16 %v3063, %v3062
      %v3088 = vpack.c.b16 %v3065, %v3064
      %v3089 = vpack.c.b16 %v3067, %v3066
      %v3090 = vpack.c.b16 %v3069, %v3068
      %v3091 = vpack.c.b16 %v3071, %v3070
      %v3092 = vpack.c.b16 %v3073, %v3072
      %v3093 = vpack.c.b16 %v3075, %v3074
      %v3094 = vpack.c.b16 %v3077, %v3076
      %v3095 = vpack.c.b16 %v3079, %v3078
      %v3128 = vunpack.c.l.b16 %v3032
      %v3129 = vunpack.c.l.b16 %v3033
      %v3130 = vunpack.c.l.b16 %v3034
      %v3131 = vunpack.c.l.b16 %v3035
      %v3132 = vunpack.c.l.b16 %v3036
      %v3133 = vunpack.c.l.b16 %v3037
      %v3134 = vunpack.c.l.b16 %v3038
      %v3135 = vunpack.c.l.b16 %v3039
      %v3136 = vunpack.c.l.b16 %v3040
      %v3137 = vunpack.c.l.b16 %v3041
      %v3138 = vunpack.c.l.b16 %v3042
      %v3139 = vunpack.c.l.b16 %v3043
      %v3140 = vunpack.c.l.b16 %v3044
      %v3141 = vunpack.c.l.b16 %v3045
      %v3142 = vunpack.c.l.b16 %v3046
      %v3143 = vunpack.c.l.b16 %v3047
      %v3144 = vpack.c.b16 %v3129, %v3128
      %v3145 = vpack.c.b16 %v3131, %v3130
      %v3146 = vpack.c.b16 %v3133, %v3132
      %v3147 = vpack.c.b16 %v3135, %v3134
      %v3148 = vpack.c.b16 %v3137, %v3136
      %v3149 = vpack.c.b16 %v3139, %v3138
      %v3150 = vpack.c.b16 %v3141, %v3140
      %v3151 = vpack.c.b16 %v3143, %v3142
      %3160 = vmatprep.subr.bf16.mxu0 0
      %3161 = vmatpush1.bf16.msra.mxu0 %v3144
      %3162 = vmatprep.subr.bf16.mxu0 0
      %3163 = vmatpush1.bf16.msra.mxu0 %v3145
      %3164 = vmatprep.subr.bf16.mxu0 0
      %3165 = vmatpush1.bf16.msra.mxu0 %v3146
      %3166 = vmatprep.subr.bf16.mxu0 0
      %3167 = vmatpush1.bf16.msra.mxu0 %v3147
      %3168 = vmatprep.subr.bf16.mxu0 0
      %3169 = vmatpush1.bf16.msra.mxu0 %v3148
      %3170 = vmatprep.subr.bf16.mxu0 0
      %3171 = vmatpush1.bf16.msra.mxu0 %v3149
      %3172 = vmatprep.subr.bf16.mxu0 0
      %3173 = vmatpush1.bf16.msra.mxu0 %v3150
      %3174 = vmatprep.subr.bf16.mxu0 0
      %3175 = vmatpush1.bf16.msra.mxu0 %v3151
      %3176 = vmatprep.subr.bf16.mxu0 0
      %3177 = vmatpush1.bf16.msra.mxu0 0
      %3178 = vmatprep.subr.bf16.mxu0 0
      %3179 = vmatpush1.bf16.msra.mxu0 0
      %3180 = vmatprep.subr.bf16.mxu0 0
      %3181 = vmatpush1.bf16.msra.mxu0 0
      %3182 = vmatprep.subr.bf16.mxu0 0
      %3183 = vmatpush1.bf16.msra.mxu0 0
      %3184 = vmatprep.subr.bf16.mxu0 0
      %3185 = vmatpush1.bf16.msra.mxu0 0
      %3186 = vmatprep.subr.bf16.mxu0 0
      %3187 = vmatpush1.bf16.msra.mxu0 0
      %3188 = vmatprep.subr.bf16.mxu0 0
      %3189 = vmatpush1.bf16.msra.mxu0 0
      %3190 = vmatprep.subr.bf16.mxu0 0
      %3191 = vmatpush1.bf16.msra.mxu0 0
      %3192 = vmatprep.mubr.bf16.mxu0 0
      %3193 = vmatmul.mubr.bf16.gmra.mrb[0].mxu0 %v3080
      %v3194 = vpop.f32.mrb[0].mxu0
      %v3195 = vadd.f32 0.0, %v3194
      %v3196 = vpop.f32.mrb[0].mxu0
      %v3197 = vpop.f32.mrb[0].mxu0
      %v3198 = vadd.f32 0.0, %v3197
      %v3199 = vpop.f32.mrb[0].mxu0
      %3200 = vmatprep.mubr.bf16.mxu0 0
      %3201 = vmatmul.mubr.bf16.gmra.mrb[0].mxu0 %v3081
      %v3202 = vpop.f32.mrb[0].mxu0
      %v3203 = vadd.f32 0.0, %v3202
      %v3204 = vpop.f32.mrb[0].mxu0
      %v3205 = vpop.f32.mrb[0].mxu0
      %v3206 = vadd.f32 0.0, %v3205
      %v3207 = vpop.f32.mrb[0].mxu0
      %3208 = vmatprep.mubr.bf16.mxu0 0
      %3209 = vmatmul.mubr.bf16.gmra.mrb[0].mxu0 %v3082
      %v3210 = vpop.f32.mrb[0].mxu0
      %v3211 = vadd.f32 0.0, %v3210
      %v3212 = vpop.f32.mrb[0].mxu0
      %v3213 = vpop.f32.mrb[0].mxu0
      %v3214 = vadd.f32 0.0, %v3213
      %v3215 = vpop.f32.mrb[0].mxu0
      %3216 = vmatprep.mubr.bf16.mxu0 0
      %3217 = vmatmul.mubr.bf16.gmra.mrb[0].mxu0 %v3083
      %v3218 = vpop.f32.mrb[0].mxu0
      %v3219 = vadd.f32 0.0, %v3218
      %v3220 = vpop.f32.mrb[0].mxu0
      %v3221 = vpop.f32.mrb[0].mxu0
      %v3222 = vadd.f32 0.0, %v3221
      %v3223 = vpop.f32.mrb[0].mxu0
      %3224 = vmatprep.mubr.bf16.mxu0 0
      %3225 = vmatmul.mubr.bf16.gmra.mrb[0].mxu0 %v3084
      %v3226 = vpop.f32.mrb[0].mxu0
      %v3227 = vadd.f32 0.0, %v3226
      %v3228 = vpop.f32.mrb[0].mxu0
      %v3229 = vpop.f32.mrb[0].mxu0
      %v3230 = vadd.f32 0.0, %v3229
      %v3231 = vpop.f32.mrb[0].mxu0
      %3232 = vmatprep.mubr.bf16.mxu0 0
      %3233 = vmatmul.mubr.bf16.gmra.mrb[0].mxu0 %v3085
      %v3234 = vpop.f32.mrb[0].mxu0
      %v3235 = vadd.f32 0.0, %v3234
      %v3236 = vpop.f32.mrb[0].mxu0
      %v3237 = vpop.f32.mrb[0].mxu0
      %v3238 = vadd.f32 0.0, %v3237
      %v3239 = vpop.f32.mrb[0].mxu0
      %3240 = vmatprep.mubr.bf16.mxu0 0
      %3241 = vmatmul.mubr.bf16.gmra.mrb[0].mxu0 %v3086
      %v3242 = vpop.f32.mrb[0].mxu0
      %v3243 = vadd.f32 0.0, %v3242
      %v3244 = vpop.f32.mrb[0].mxu0
      %v3245 = vpop.f32.mrb[0].mxu0
      %v3246 = vadd.f32 0.0, %v3245
      %v3247 = vpop.f32.mrb[0].mxu0
      %3248 = vmatprep.mubr.bf16.mxu0 0
      %3249 = vmatmul.mubr.bf16.gmra.mrb[0].mxu0 %v3087
      %v3250 = vpop.f32.mrb[0].mxu0
      %v3251 = vadd.f32 0.0, %v3250
      %v3252 = vpop.f32.mrb[0].mxu0
      %v3253 = vpop.f32.mrb[0].mxu0
      %v3254 = vadd.f32 0.0, %v3253
      %v3255 = vpop.f32.mrb[0].mxu0
      %3256 = vmatprep.mubr.bf16.mxu0 0
      %3257 = vmatmul.mubr.bf16.gmra.mrb[0].mxu0 %v3088
      %v3258 = vpop.f32.mrb[0].mxu0
      %v3259 = vadd.f32 0.0, %v3258
      %v3260 = vpop.f32.mrb[0].mxu0
      %v3261 = vpop.f32.mrb[0].mxu0
      %v3262 = vadd.f32 0.0, %v3261
      %v3263 = vpop.f32.mrb[0].mxu0
      %3264 = vmatprep.mubr.bf16.mxu0 0
      %3265 = vmatmul.mubr.bf16.gmra.mrb[0].mxu0 %v3089
      %v3266 = vpop.f32.mrb[0].mxu0
      %v3267 = vadd.f32 0.0, %v3266
      %v3268 = vpop.f32.mrb[0].mxu0
      %v3269 = vpop.f32.mrb[0].mxu0
      %v3270 = vadd.f32 0.0, %v3269
      %v3271 = vpop.f32.mrb[0].mxu0
      %3272 = vmatprep.mubr.bf16.mxu0 0
      %3273 = vmatmul.mubr.bf16.gmra.mrb[0].mxu0 %v3090
      %v3274 = vpop.f32.mrb[0].mxu0
      %v3275 = vadd.f32 0.0, %v3274
      %v3276 = vpop.f32.mrb[0].mxu0
      %v3277 = vpop.f32.mrb[0].mxu0
      %v3278 = vadd.f32 0.0, %v3277
      %v3279 = vpop.f32.mrb[0].mxu0
      %3280 = vmatprep.mubr.bf16.mxu0 0
      %3281 = vmatmul.mubr.bf16.gmra.mrb[0].mxu0 %v3091
      %v3282 = vpop.f32.mrb[0].mxu0
      %v3283 = vadd.f32 0.0, %v3282
      %v3284 = vpop.f32.mrb[0].mxu0
      %v3285 = vpop.f32.mrb[0].mxu0
      %v3286 = vadd.f32 0.0, %v3285
      %v3287 = vpop.f32.mrb[0].mxu0
      %3288 = vmatprep.mubr.bf16.mxu0 0
      %3289 = vmatmul.mubr.bf16.gmra.mrb[0].mxu0 %v3092
      %v3290 = vpop.f32.mrb[0].mxu0
      %v3291 = vadd.f32 0.0, %v3290
      %v3292 = vpop.f32.mrb[0].mxu0
      %v3293 = vpop.f32.mrb[0].mxu0
      %v3294 = vadd.f32 0.0, %v3293
      %v3295 = vpop.f32.mrb[0].mxu0
      %3296 = vmatprep.mubr.bf16.mxu0 0
      %3297 = vmatmul.mubr.bf16.gmra.mrb[0].mxu0 %v3093
      %v3298 = vpop.f32.mrb[0].mxu0
      %v3299 = vadd.f32 0.0, %v3298
      %v3300 = vpop.f32.mrb[0].mxu0
      %v3301 = vpop.f32.mrb[0].mxu0
      %v3302 = vadd.f32 0.0, %v3301
      %v3303 = vpop.f32.mrb[0].mxu0
      %3304 = vmatprep.mubr.bf16.mxu0 0
      %3305 = vmatmul.mubr.bf16.gmra.mrb[0].mxu0 %v3094
      %v3306 = vpop.f32.mrb[0].mxu0
      %v3307 = vadd.f32 0.0, %v3306
      %v3308 = vpop.f32.mrb[0].mxu0
      %v3309 = vpop.f32.mrb[0].mxu0
      %v3310 = vadd.f32 0.0, %v3309
      %v3311 = vpop.f32.mrb[0].mxu0
      %3312 = vmatprep.mubr.bf16.mxu0 0
      %3313 = vmatmul.mubr.bf16.gmra.mrb[0].mxu0 %v3095
      %v3314 = vpop.f32.mrb[0].mxu0
      %v3315 = vadd.f32 0.0, %v3314
      %v3316 = vpop.f32.mrb[0].mxu0
      %v3317 = vpop.f32.mrb[0].mxu0
      %v3318 = vadd.f32 0.0, %v3317
      %v3319 = vpop.f32.mrb[0].mxu0
      %3320 = vdwg.mxu0
      %v3321 = vadd.f32 %v2823, %v3195
      %v3322 = vadd.f32 %v2824, %v3198
      %v3323 = vadd.f32 %v2825, %v3203
      %v3324 = vadd.f32 %v2826, %v3206
      %v3325 = vadd.f32 %v2827, %v3211
      %v3326 = vadd.f32 %v2828, %v3214
      %v3327 = vadd.f32 %v2829, %v3219
      %v3328 = vadd.f32 %v2830, %v3222
      %v3329 = vadd.f32 %v2831, %v3227
      %v3330 = vadd.f32 %v2832, %v3230
      %v3331 = vadd.f32 %v2833, %v3235
      %v3332 = vadd.f32 %v2834, %v3238
      %v3333 = vadd.f32 %v2835, %v3243
      %v3334 = vadd.f32 %v2836, %v3246
      %v3335 = vadd.f32 %v2837, %v3251
      %v3336 = vadd.f32 %v2838, %v3254
      %v3337 = vadd.f32 %v2839, %v3259
      %v3338 = vadd.f32 %v2840, %v3262
      %v3339 = vadd.f32 %v2841, %v3267
      %v3340 = vadd.f32 %v2842, %v3270
      %v3341 = vadd.f32 %v2843, %v3275
      %v3342 = vadd.f32 %v2844, %v3278
      %v3343 = vadd.f32 %v2845, %v3283
      %v3344 = vadd.f32 %v2846, %v3286
      %v3345 = vadd.f32 %v2847, %v3291
      %v3346 = vadd.f32 %v2848, %v3294
      %v3347 = vadd.f32 %v2849, %v3299
      %v3348 = vadd.f32 %v2850, %v3302
      %v3349 = vadd.f32 %v2851, %v3307
      %v3350 = vadd.f32 %v2852, %v3310
      %v3351 = vadd.f32 %v2853, %v3315
      %v3352 = vadd.f32 %v2854, %v3318
      %s3353 = scalar_lea.vmem %s172, 24
      %v3354 = vld [vmem:[%s3353] sm:$0xf]
      %v3355 = vld [vmem:[%s3353 + $0x4] sm:$0xf]
      %v3356 = vld [vmem:[%s3353 + $0xc] sm:$0xf]
      %v3357 = vld [vmem:[%s3353 + $0x10] sm:$0xf]
      %v3358 = vld [vmem:[%s3353 + $0x18] sm:$0xf]
      %v3359 = vld [vmem:[%s3353 + $0x1c] sm:$0xf]
      %v3360 = vld [vmem:[%s3353 + $0x24] sm:$0xf]
      %v3361 = vld [vmem:[%s3353 + $0x28] sm:$0xf]
      %v3362 = vld [vmem:[%s3353 + $0x30] sm:$0xf]
      %v3363 = vld [vmem:[%s3353 + $0x34] sm:$0xf]
      %v3364 = vld [vmem:[%s3353 + $0x3c] sm:$0xf]
      %v3365 = vld [vmem:[%s3353 + $0x40] sm:$0xf]
      %v3366 = vld [vmem:[%s3353 + $0x48] sm:$0xf]
      %v3367 = vld [vmem:[%s3353 + $0x4c] sm:$0xf]
      %v3368 = vld [vmem:[%s3353 + $0x54] sm:$0xf]
      %v3369 = vld [vmem:[%s3353 + $0x58] sm:$0xf]
      %v3370 = vld [vmem:[%s3353 + $0x60] sm:$0xf]
      %v3371 = vld [vmem:[%s3353 + $0x64] sm:$0xf]
      %v3372 = vld [vmem:[%s3353 + $0x6c] sm:$0xf]
      %v3373 = vld [vmem:[%s3353 + $0x70] sm:$0xf]
      %v3374 = vld [vmem:[%s3353 + $0x78] sm:$0xf]
      %v3375 = vld [vmem:[%s3353 + $0x7c] sm:$0xf]
      %v3376 = vld [vmem:[%s3353 + $0x84] sm:$0xf]
      %v3377 = vld [vmem:[%s3353 + $0x88] sm:$0xf]
      %v3378 = vld [vmem:[%s3353 + $0x90] sm:$0xf]
      %v3379 = vld [vmem:[%s3353 + $0x94] sm:$0xf]
      %v3380 = vld [vmem:[%s3353 + $0x9c] sm:$0xf]
      %v3381 = vld [vmem:[%s3353 + $0xa0] sm:$0xf]
      %v3382 = vld [vmem:[%s3353 + $0xa8] sm:$0xf]
      %v3383 = vld [vmem:[%s3353 + $0xac] sm:$0xf]
      %v3384 = vld [vmem:[%s3353 + $0xb4] sm:$0xf]
      %v3385 = vld [vmem:[%s3353 + $0xb8] sm:$0xf]
      %s3386 = scalar_lea.vmem %s1, 384
      %v3387 = vld [vmem:[%s3386] sm:$0xf]
      %v3388 = vld [vmem:[%s3386 + $0x4] sm:$0xf]
      %v3389 = vld [vmem:[%s3386 + $0x8] sm:$0xf]
      %v3390 = vld [vmem:[%s3386 + $0xc] sm:$0xf]
      %v3391 = vld [vmem:[%s3386 + $0x10] sm:$0xf]
      %v3392 = vld [vmem:[%s3386 + $0x14] sm:$0xf]
      %v3393 = vld [vmem:[%s3386 + $0x18] sm:$0xf]
      %v3394 = vld [vmem:[%s3386 + $0x1c] sm:$0xf]
      %v3395 = vld [vmem:[%s3386 + $0x20] sm:$0xf]
      %v3396 = vld [vmem:[%s3386 + $0x24] sm:$0xf]
      %v3397 = vld [vmem:[%s3386 + $0x28] sm:$0xf]
      %v3398 = vld [vmem:[%s3386 + $0x2c] sm:$0xf]
      %v3399 = vld [vmem:[%s3386 + $0x30] sm:$0xf]
      %v3400 = vld [vmem:[%s3386 + $0x34] sm:$0xf]
      %v3401 = vld [vmem:[%s3386 + $0x38] sm:$0xf]
      %v3402 = vld [vmem:[%s3386 + $0x3c] sm:$0xf]
      %v3435 = vunpack.c.l.b16 %v3354
      %v3436 = vunpack.c.l.b16 %v3355
      %v3437 = vunpack.c.l.b16 %v3356
      %v3438 = vunpack.c.l.b16 %v3357
      %v3439 = vunpack.c.l.b16 %v3358
      %v3440 = vunpack.c.l.b16 %v3359
      %v3441 = vunpack.c.l.b16 %v3360
      %v3442 = vunpack.c.l.b16 %v3361
      %v3443 = vunpack.c.l.b16 %v3362
      %v3444 = vunpack.c.l.b16 %v3363
      %v3445 = vunpack.c.l.b16 %v3364
      %v3446 = vunpack.c.l.b16 %v3365
      %v3447 = vunpack.c.l.b16 %v3366
      %v3448 = vunpack.c.l.b16 %v3367
      %v3449 = vunpack.c.l.b16 %v3368
      %v3450 = vunpack.c.l.b16 %v3369
      %v3451 = vunpack.c.l.b16 %v3370
      %v3452 = vunpack.c.l.b16 %v3371
      %v3453 = vunpack.c.l.b16 %v3372
      %v3454 = vunpack.c.l.b16 %v3373
      %v3455 = vunpack.c.l.b16 %v3374
      %v3456 = vunpack.c.l.b16 %v3375
      %v3457 = vunpack.c.l.b16 %v3376
      %v3458 = vunpack.c.l.b16 %v3377
      %v3459 = vunpack.c.l.b16 %v3378
      %v3460 = vunpack.c.l.b16 %v3379
      %v3461 = vunpack.c.l.b16 %v3380
      %v3462 = vunpack.c.l.b16 %v3381
      %v3463 = vunpack.c.l.b16 %v3382
      %v3464 = vunpack.c.l.b16 %v3383
      %v3465 = vunpack.c.l.b16 %v3384
      %v3466 = vunpack.c.l.b16 %v3385
      %v3467 = vpack.c.b16 %v3436, %v3435
      %v3468 = vpack.c.b16 %v3438, %v3437
      %v3469 = vpack.c.b16 %v3440, %v3439
      %v3470 = vpack.c.b16 %v3442, %v3441
      %v3471 = vpack.c.b16 %v3444, %v3443
      %v3472 = vpack.c.b16 %v3446, %v3445
      %v3473 = vpack.c.b16 %v3448, %v3447
      %v3474 = vpack.c.b16 %v3450, %v3449
      %v3475 = vpack.c.b16 %v3452, %v3451
      %v3476 = vpack.c.b16 %v3454, %v3453
      %v3477 = vpack.c.b16 %v3456, %v3455
      %v3478 = vpack.c.b16 %v3458, %v3457
      %v3479 = vpack.c.b16 %v3460, %v3459
      %v3480 = vpack.c.b16 %v3462, %v3461
      %v3481 = vpack.c.b16 %v3464, %v3463
      %v3482 = vpack.c.b16 %v3466, %v3465
      %v3515 = vunpack.c.l.b16 %v3387
      %v3516 = vunpack.c.l.b16 %v3388
      %v3517 = vunpack.c.l.b16 %v3389
      %v3518 = vunpack.c.l.b16 %v3390
      %v3519 = vunpack.c.l.b16 %v3391
      %v3520 = vunpack.c.l.b16 %v3392
      %v3521 = vunpack.c.l.b16 %v3393
      %v3522 = vunpack.c.l.b16 %v3394
      %v3523 = vunpack.c.l.b16 %v3395
      %v3524 = vunpack.c.l.b16 %v3396
      %v3525 = vunpack.c.l.b16 %v3397
      %v3526 = vunpack.c.l.b16 %v3398
      %v3527 = vunpack.c.l.b16 %v3399
      %v3528 = vunpack.c.l.b16 %v3400
      %v3529 = vunpack.c.l.b16 %v3401
      %v3530 = vunpack.c.l.b16 %v3402
      %v3531 = vpack.c.b16 %v3516, %v3515
      %v3532 = vpack.c.b16 %v3518, %v3517
      %v3533 = vpack.c.b16 %v3520, %v3519
      %v3534 = vpack.c.b16 %v3522, %v3521
      %v3535 = vpack.c.b16 %v3524, %v3523
      %v3536 = vpack.c.b16 %v3526, %v3525
      %v3537 = vpack.c.b16 %v3528, %v3527
      %v3538 = vpack.c.b16 %v3530, %v3529
      %3547 = vmatprep.subr.bf16.mxu0 0
      %3548 = vmatpush1.bf16.msra.mxu0 %v3531
      %3549 = vmatprep.subr.bf16.mxu0 0
      %3550 = vmatpush1.bf16.msra.mxu0 %v3532
      %3551 = vmatprep.subr.bf16.mxu0 0
      %3552 = vmatpush1.bf16.msra.mxu0 %v3533
      %3553 = vmatprep.subr.bf16.mxu0 0
      %3554 = vmatpush1.bf16.msra.mxu0 %v3534
      %3555 = vmatprep.subr.bf16.mxu0 0
      %3556 = vmatpush1.bf16.msra.mxu0 %v3535
      %3557 = vmatprep.subr.bf16.mxu0 0
      %3558 = vmatpush1.bf16.msra.mxu0 %v3536
      %3559 = vmatprep.subr.bf16.mxu0 0
      %3560 = vmatpush1.bf16.msra.mxu0 %v3537
      %3561 = vmatprep.subr.bf16.mxu0 0
      %3562 = vmatpush1.bf16.msra.mxu0 %v3538
      %3563 = vmatprep.subr.bf16.mxu0 0
      %3564 = vmatpush1.bf16.msra.mxu0 0
      %3565 = vmatprep.subr.bf16.mxu0 0
      %3566 = vmatpush1.bf16.msra.mxu0 0
      %3567 = vmatprep.subr.bf16.mxu0 0
      %3568 = vmatpush1.bf16.msra.mxu0 0
      %3569 = vmatprep.subr.bf16.mxu0 0
      %3570 = vmatpush1.bf16.msra.mxu0 0
      %3571 = vmatprep.subr.bf16.mxu0 0
      %3572 = vmatpush1.bf16.msra.mxu0 0
      %3573 = vmatprep.subr.bf16.mxu0 0
      %3574 = vmatpush1.bf16.msra.mxu0 0
      %3575 = vmatprep.subr.bf16.mxu0 0
      %3576 = vmatpush1.bf16.msra.mxu0 0
      %3577 = vmatprep.subr.bf16.mxu0 0
      %3578 = vmatpush1.bf16.msra.mxu0 0
      %3579 = vmatprep.mubr.bf16.mxu0 0
      %3580 = vmatmul.mubr.bf16.gmra.mrb[0].mxu0 %v3467
      %v3581 = vpop.f32.mrb[0].mxu0
      %v3582 = vadd.f32 0.0, %v3581
      %v3583 = vpop.f32.mrb[0].mxu0
      %v3584 = vpop.f32.mrb[0].mxu0
      %v3585 = vadd.f32 0.0, %v3584
      %v3586 = vpop.f32.mrb[0].mxu0
      %3587 = vmatprep.mubr.bf16.mxu0 0
      %3588 = vmatmul.mubr.bf16.gmra.mrb[0].mxu0 %v3468
      %v3589 = vpop.f32.mrb[0].mxu0
      %v3590 = vadd.f32 0.0, %v3589
      %v3591 = vpop.f32.mrb[0].mxu0
      %v3592 = vpop.f32.mrb[0].mxu0
      %v3593 = vadd.f32 0.0, %v3592
      %v3594 = vpop.f32.mrb[0].mxu0
      %3595 = vmatprep.mubr.bf16.mxu0 0
      %3596 = vmatmul.mubr.bf16.gmra.mrb[0].mxu0 %v3469
      %v3597 = vpop.f32.mrb[0].mxu0
      %v3598 = vadd.f32 0.0, %v3597
      %v3599 = vpop.f32.mrb[0].mxu0
      %v3600 = vpop.f32.mrb[0].mxu0
      %v3601 = vadd.f32 0.0, %v3600
      %v3602 = vpop.f32.mrb[0].mxu0
      %3603 = vmatprep.mubr.bf16.mxu0 0
      %3604 = vmatmul.mubr.bf16.gmra.mrb[0].mxu0 %v3470
      %v3605 = vpop.f32.mrb[0].mxu0
      %v3606 = vadd.f32 0.0, %v3605
      %v3607 = vpop.f32.mrb[0].mxu0
      %v3608 = vpop.f32.mrb[0].mxu0
      %v3609 = vadd.f32 0.0, %v3608
      %v3610 = vpop.f32.mrb[0].mxu0
      %3611 = vmatprep.mubr.bf16.mxu0 0
      %3612 = vmatmul.mubr.bf16.gmra.mrb[0].mxu0 %v3471
      %v3613 = vpop.f32.mrb[0].mxu0
      %v3614 = vadd.f32 0.0, %v3613
      %v3615 = vpop.f32.mrb[0].mxu0
      %v3616 = vpop.f32.mrb[0].mxu0
      %v3617 = vadd.f32 0.0, %v3616
      %v3618 = vpop.f32.mrb[0].mxu0
      %3619 = vmatprep.mubr.bf16.mxu0 0
      %3620 = vmatmul.mubr.bf16.gmra.mrb[0].mxu0 %v3472
      %v3621 = vpop.f32.mrb[0].mxu0
      %v3622 = vadd.f32 0.0, %v3621
      %v3623 = vpop.f32.mrb[0].mxu0
      %v3624 = vpop.f32.mrb[0].mxu0
      %v3625 = vadd.f32 0.0, %v3624
      %v3626 = vpop.f32.mrb[0].mxu0
      %3627 = vmatprep.mubr.bf16.mxu0 0
      %3628 = vmatmul.mubr.bf16.gmra.mrb[0].mxu0 %v3473
      %v3629 = vpop.f32.mrb[0].mxu0
      %v3630 = vadd.f32 0.0, %v3629
      %v3631 = vpop.f32.mrb[0].mxu0
      %v3632 = vpop.f32.mrb[0].mxu0
      %v3633 = vadd.f32 0.0, %v3632
      %v3634 = vpop.f32.mrb[0].mxu0
      %3635 = vmatprep.mubr.bf16.mxu0 0
      %3636 = vmatmul.mubr.bf16.gmra.mrb[0].mxu0 %v3474
      %v3637 = vpop.f32.mrb[0].mxu0
      %v3638 = vadd.f32 0.0, %v3637
      %v3639 = vpop.f32.mrb[0].mxu0
      %v3640 = vpop.f32.mrb[0].mxu0
      %v3641 = vadd.f32 0.0, %v3640
      %v3642 = vpop.f32.mrb[0].mxu0
      %3643 = vmatprep.mubr.bf16.mxu0 0
      %3644 = vmatmul.mubr.bf16.gmra.mrb[0].mxu0 %v3475
      %v3645 = vpop.f32.mrb[0].mxu0
      %v3646 = vadd.f32 0.0, %v3645
      %v3647 = vpop.f32.mrb[0].mxu0
      %v3648 = vpop.f32.mrb[0].mxu0
      %v3649 = vadd.f32 0.0, %v3648
      %v3650 = vpop.f32.mrb[0].mxu0
      %3651 = vmatprep.mubr.bf16.mxu0 0
      %3652 = vmatmul.mubr.bf16.gmra.mrb[0].mxu0 %v3476
      %v3653 = vpop.f32.mrb[0].mxu0
      %v3654 = vadd.f32 0.0, %v3653
      %v3655 = vpop.f32.mrb[0].mxu0
      %v3656 = vpop.f32.mrb[0].mxu0
      %v3657 = vadd.f32 0.0, %v3656
      %v3658 = vpop.f32.mrb[0].mxu0
      %3659 = vmatprep.mubr.bf16.mxu0 0
      %3660 = vmatmul.mubr.bf16.gmra.mrb[0].mxu0 %v3477
      %v3661 = vpop.f32.mrb[0].mxu0
      %v3662 = vadd.f32 0.0, %v3661
      %v3663 = vpop.f32.mrb[0].mxu0
      %v3664 = vpop.f32.mrb[0].mxu0
      %v3665 = vadd.f32 0.0, %v3664
      %v3666 = vpop.f32.mrb[0].mxu0
      %3667 = vmatprep.mubr.bf16.mxu0 0
      %3668 = vmatmul.mubr.bf16.gmra.mrb[0].mxu0 %v3478
      %v3669 = vpop.f32.mrb[0].mxu0
      %v3670 = vadd.f32 0.0, %v3669
      %v3671 = vpop.f32.mrb[0].mxu0
      %v3672 = vpop.f32.mrb[0].mxu0
      %v3673 = vadd.f32 0.0, %v3672
      %v3674 = vpop.f32.mrb[0].mxu0
      %3675 = vmatprep.mubr.bf16.mxu0 0
      %3676 = vmatmul.mubr.bf16.gmra.mrb[0].mxu0 %v3479
      %v3677 = vpop.f32.mrb[0].mxu0
      %v3678 = vadd.f32 0.0, %v3677
      %v3679 = vpop.f32.mrb[0].mxu0
      %v3680 = vpop.f32.mrb[0].mxu0
      %v3681 = vadd.f32 0.0, %v3680
      %v3682 = vpop.f32.mrb[0].mxu0
      %3683 = vmatprep.mubr.bf16.mxu0 0
      %3684 = vmatmul.mubr.bf16.gmra.mrb[0].mxu0 %v3480
      %v3685 = vpop.f32.mrb[0].mxu0
      %v3686 = vadd.f32 0.0, %v3685
      %v3687 = vpop.f32.mrb[0].mxu0
      %v3688 = vpop.f32.mrb[0].mxu0
      %v3689 = vadd.f32 0.0, %v3688
      %v3690 = vpop.f32.mrb[0].mxu0
      %3691 = vmatprep.mubr.bf16.mxu0 0
      %3692 = vmatmul.mubr.bf16.gmra.mrb[0].mxu0 %v3481
      %v3693 = vpop.f32.mrb[0].mxu0
      %v3694 = vadd.f32 0.0, %v3693
      %v3695 = vpop.f32.mrb[0].mxu0
      %v3696 = vpop.f32.mrb[0].mxu0
      %v3697 = vadd.f32 0.0, %v3696
      %v3698 = vpop.f32.mrb[0].mxu0
      %3699 = vmatprep.mubr.bf16.mxu0 0
      %3700 = vmatmul.mubr.bf16.gmra.mrb[0].mxu0 %v3482
      %v3701 = vpop.f32.mrb[0].mxu0
      %v3702 = vadd.f32 0.0, %v3701
      %v3703 = vpop.f32.mrb[0].mxu0
      %v3704 = vpop.f32.mrb[0].mxu0
      %v3705 = vadd.f32 0.0, %v3704
      %v3706 = vpop.f32.mrb[0].mxu0
      %3707 = vdwg.mxu0
      %v3708 = vadd.f32 %v3321, %v3582
      %v3709 = vadd.f32 %v3322, %v3585
      %v3710 = vadd.f32 %v3323, %v3590
      %v3711 = vadd.f32 %v3324, %v3593
      %v3712 = vadd.f32 %v3325, %v3598
      %v3713 = vadd.f32 %v3326, %v3601
      %v3714 = vadd.f32 %v3327, %v3606
      %v3715 = vadd.f32 %v3328, %v3609
      %v3716 = vadd.f32 %v3329, %v3614
      %v3717 = vadd.f32 %v3330, %v3617
      %v3718 = vadd.f32 %v3331, %v3622
      %v3719 = vadd.f32 %v3332, %v3625
      %v3720 = vadd.f32 %v3333, %v3630
      %v3721 = vadd.f32 %v3334, %v3633
      %v3722 = vadd.f32 %v3335, %v3638
      %v3723 = vadd.f32 %v3336, %v3641
      %v3724 = vadd.f32 %v3337, %v3646
      %v3725 = vadd.f32 %v3338, %v3649
      %v3726 = vadd.f32 %v3339, %v3654
      %v3727 = vadd.f32 %v3340, %v3657
      %v3728 = vadd.f32 %v3341, %v3662
      %v3729 = vadd.f32 %v3342, %v3665
      %v3730 = vadd.f32 %v3343, %v3670
      %v3731 = vadd.f32 %v3344, %v3673
      %v3732 = vadd.f32 %v3345, %v3678
      %v3733 = vadd.f32 %v3346, %v3681
      %v3734 = vadd.f32 %v3347, %v3686
      %v3735 = vadd.f32 %v3348, %v3689
      %v3736 = vadd.f32 %v3349, %v3694
      %v3737 = vadd.f32 %v3350, %v3697
      %v3738 = vadd.f32 %v3351, %v3702
      %v3739 = vadd.f32 %v3352, %v3705
      %v3740 = vld [vmem:[%s3353] sm:$0xf]
      %v3741 = vld [vmem:[%s3353 + $0x4] sm:$0xf]
      %v3742 = vld [vmem:[%s3353 + $0x8] sm:$0x1]
      %v3743 = vld [vmem:[%s3353 + $0xc] sm:$0xf]
      %v3744 = vld [vmem:[%s3353 + $0x10] sm:$0xf]
      %v3745 = vld [vmem:[%s3353 + $0x14] sm:$0x1]
      %v3746 = vld [vmem:[%s3353 + $0x18] sm:$0xf]
      %v3747 = vld [vmem:[%s3353 + $0x1c] sm:$0xf]
      %v3748 = vld [vmem:[%s3353 + $0x20] sm:$0x1]
      %v3749 = vld [vmem:[%s3353 + $0x24] sm:$0xf]
      %v3750 = vld [vmem:[%s3353 + $0x28] sm:$0xf]
      %v3751 = vld [vmem:[%s3353 + $0x2c] sm:$0x1]
      %v3752 = vld [vmem:[%s3353 + $0x30] sm:$0xf]
      %v3753 = vld [vmem:[%s3353 + $0x34] sm:$0xf]
      %v3754 = vld [vmem:[%s3353 + $0x38] sm:$0x1]
      %v3755 = vld [vmem:[%s3353 + $0x3c] sm:$0xf]
      %v3756 = vld [vmem:[%s3353 + $0x40] sm:$0xf]
      %v3757 = vld [vmem:[%s3353 + $0x44] sm:$0x1]
      %v3758 = vld [vmem:[%s3353 + $0x48] sm:$0xf]
      %v3759 = vld [vmem:[%s3353 + $0x4c] sm:$0xf]
      %v3760 = vld [vmem:[%s3353 + $0x50] sm:$0x1]
      %v3761 = vld [vmem:[%s3353 + $0x54] sm:$0xf]
      %v3762 = vld [vmem:[%s3353 + $0x58] sm:$0xf]
      %v3763 = vld [vmem:[%s3353 + $0x5c] sm:$0x1]
      %v3764 = vld [vmem:[%s3353 + $0x60] sm:$0xf]
      %v3765 = vld [vmem:[%s3353 + $0x64] sm:$0xf]
      %v3766 = vld [vmem:[%s3353 + $0x68] sm:$0x1]
      %v3767 = vld [vmem:[%s3353 + $0x6c] sm:$0xf]
      %v3768 = vld [vmem:[%s3353 + $0x70] sm:$0xf]
      %v3769 = vld [vmem:[%s3353 + $0x74] sm:$0x1]
      %v3770 = vld [vmem:[%s3353 + $0x78] sm:$0xf]
      %v3771 = vld [vmem:[%s3353 + $0x7c] sm:$0xf]
      %v3772 = vld [vmem:[%s3353 + $0x80] sm:$0x1]
      %v3773 = vld [vmem:[%s3353 + $0x84] sm:$0xf]
      %v3774 = vld [vmem:[%s3353 + $0x88] sm:$0xf]
      %v3775 = vld [vmem:[%s3353 + $0x8c] sm:$0x1]
      %v3776 = vld [vmem:[%s3353 + $0x90] sm:$0xf]
      %v3777 = vld [vmem:[%s3353 + $0x94] sm:$0xf]
      %v3778 = vld [vmem:[%s3353 + $0x98] sm:$0x1]
      %v3779 = vld [vmem:[%s3353 + $0x9c] sm:$0xf]
      %v3780 = vld [vmem:[%s3353 + $0xa0] sm:$0xf]
      %v3781 = vld [vmem:[%s3353 + $0xa4] sm:$0x1]
      %v3782 = vld [vmem:[%s3353 + $0xa8] sm:$0xf]
      %v3783 = vld [vmem:[%s3353 + $0xac] sm:$0xf]
      %v3784 = vld [vmem:[%s3353 + $0xb0] sm:$0x1]
      %v3785 = vld [vmem:[%s3353 + $0xb4] sm:$0xf]
      %v3786 = vld [vmem:[%s3353 + $0xb8] sm:$0xf]
      %v3787 = vld [vmem:[%s3353 + $0xbc] sm:$0x1]
      %v3789 = vshrl.u32 %v3740, 16
      %v3791 = vrot.slane %v3789, 4
      %v3792 = vshll.u32 %v3740, 16
      %v3794 = vrot.slane %v3792, 5
      %v3795 = vor.u32 %v3791, %v3794
      %v3796 = vrot.slane %v3795, 4
      %v3798 = vshll.u32 %v3741, 16
      %v3800 = vrot.slane %v3798, 5
      %v3801 = vsel %vm249, %v3796, %v3800
      %v3802 = vshrl.u32 %v3741, 16
      %v3804 = vrot.slane %v3802, 4
      %v3805 = vor.u32 %v3804, %v3800
      %v3806 = vrot.slane %v3805, 4
      %v3808 = vshll.u32 %v3742, 16
      %v3810 = vrot.slane %v3808, 5
      %v3811 = vsel %vm249, %v3806, %v3810
      %v3813 = vshrl.u32 %v3743, 16
      %v3815 = vrot.slane %v3813, 4
      %v3816 = vshll.u32 %v3743, 16
      %v3818 = vrot.slane %v3816, 5
      %v3819 = vor.u32 %v3815, %v3818
      %v3820 = vrot.slane %v3819, 4
      %v3822 = vshll.u32 %v3744, 16
      %v3824 = vrot.slane %v3822, 5
      %v3825 = vsel %vm249, %v3820, %v3824
      %v3826 = vshrl.u32 %v3744, 16
      %v3828 = vrot.slane %v3826, 4
      %v3829 = vor.u32 %v3828, %v3824
      %v3830 = vrot.slane %v3829, 4
      %v3832 = vshll.u32 %v3745, 16
      %v3834 = vrot.slane %v3832, 5
      %v3835 = vsel %vm249, %v3830, %v3834
      %v3837 = vshrl.u32 %v3746, 16
      %v3839 = vrot.slane %v3837, 4
      %v3840 = vshll.u32 %v3746, 16
      %v3842 = vrot.slane %v3840, 5
      %v3843 = vor.u32 %v3839, %v3842
      %v3844 = vrot.slane %v3843, 4
      %v3846 = vshll.u32 %v3747, 16
      %v3848 = vrot.slane %v3846, 5
      %v3849 = vsel %vm249, %v3844, %v3848
      %v3850 = vshrl.u32 %v3747, 16
      %v3852 = vrot.slane %v3850, 4
      %v3853 = vor.u32 %v3852, %v3848
      %v3854 = vrot.slane %v3853, 4
      %v3856 = vshll.u32 %v3748, 16
      %v3858 = vrot.slane %v3856, 5
      %v3859 = vsel %vm249, %v3854, %v3858
      %v3861 = vshrl.u32 %v3749, 16
      %v3863 = vrot.slane %v3861, 4
      %v3864 = vshll.u32 %v3749, 16
      %v3866 = vrot.slane %v3864, 5
      %v3867 = vor.u32 %v3863, %v3866
      %v3868 = vrot.slane %v3867, 4
      %v3870 = vshll.u32 %v3750, 16
      %v3872 = vrot.slane %v3870, 5
      %v3873 = vsel %vm249, %v3868, %v3872
      %v3874 = vshrl.u32 %v3750, 16
      %v3876 = vrot.slane %v3874, 4
      %v3877 = vor.u32 %v3876, %v3872
      %v3878 = vrot.slane %v3877, 4
      %v3880 = vshll.u32 %v3751, 16
      %v3882 = vrot.slane %v3880, 5
      %v3883 = vsel %vm249, %v3878, %v3882
      %v3885 = vshrl.u32 %v3752, 16
      %v3887 = vrot.slane %v3885, 4
      %v3888 = vshll.u32 %v3752, 16
      %v3890 = vrot.slane %v3888, 5
      %v3891 = vor.u32 %v3887, %v3890
      %v3892 = vrot.slane %v3891, 4
      %v3894 = vshll.u32 %v3753, 16
      %v3896 = vrot.slane %v3894, 5
      %v3897 = vsel %vm249, %v3892, %v3896
      %v3898 = vshrl.u32 %v3753, 16
      %v3900 = vrot.slane %v3898, 4
      %v3901 = vor.u32 %v3900, %v3896
      %v3902 = vrot.slane %v3901, 4
      %v3904 = vshll.u32 %v3754, 16
      %v3906 = vrot.slane %v3904, 5
      %v3907 = vsel %vm249, %v3902, %v3906
      %v3909 = vshrl.u32 %v3755, 16
      %v3911 = vrot.slane %v3909, 4
      %v3912 = vshll.u32 %v3755, 16
      %v3914 = vrot.slane %v3912, 5
      %v3915 = vor.u32 %v3911, %v3914
      %v3916 = vrot.slane %v3915, 4
      %v3918 = vshll.u32 %v3756, 16
      %v3920 = vrot.slane %v3918, 5
      %v3921 = vsel %vm249, %v3916, %v3920
      %v3922 = vshrl.u32 %v3756, 16
      %v3924 = vrot.slane %v3922, 4
      %v3925 = vor.u32 %v3924, %v3920
      %v3926 = vrot.slane %v3925, 4
      %v3928 = vshll.u32 %v3757, 16
      %v3930 = vrot.slane %v3928, 5
      %v3931 = vsel %vm249, %v3926, %v3930
      %v3933 = vshrl.u32 %v3758, 16
      %v3935 = vrot.slane %v3933, 4
      %v3936 = vshll.u32 %v3758, 16
      %v3938 = vrot.slane %v3936, 5
      %v3939 = vor.u32 %v3935, %v3938
      %v3940 = vrot.slane %v3939, 4
      %v3942 = vshll.u32 %v3759, 16
      %v3944 = vrot.slane %v3942, 5
      %v3945 = vsel %vm249, %v3940, %v3944
      %v3946 = vshrl.u32 %v3759, 16
      %v3948 = vrot.slane %v3946, 4
      %v3949 = vor.u32 %v3948, %v3944
      %v3950 = vrot.slane %v3949, 4
      %v3952 = vshll.u32 %v3760, 16
      %v3954 = vrot.slane %v3952, 5
      %v3955 = vsel %vm249, %v3950, %v3954
      %v3957 = vshrl.u32 %v3761, 16
      %v3959 = vrot.slane %v3957, 4
      %v3960 = vshll.u32 %v3761, 16
      %v3962 = vrot.slane %v3960, 5
      %v3963 = vor.u32 %v3959, %v3962
      %v3964 = vrot.slane %v3963, 4
      %v3966 = vshll.u32 %v3762, 16
      %v3968 = vrot.slane %v3966, 5
      %v3969 = vsel %vm249, %v3964, %v3968
      %v3970 = vshrl.u32 %v3762, 16
      %v3972 = vrot.slane %v3970, 4
      %v3973 = vor.u32 %v3972, %v3968
      %v3974 = vrot.slane %v3973, 4
      %v3976 = vshll.u32 %v3763, 16
      %v3978 = vrot.slane %v3976, 5
      %v3979 = vsel %vm249, %v3974, %v3978
      %v3981 = vshrl.u32 %v3764, 16
      %v3983 = vrot.slane %v3981, 4
      %v3984 = vshll.u32 %v3764, 16
      %v3986 = vrot.slane %v3984, 5
      %v3987 = vor.u32 %v3983, %v3986
      %v3988 = vrot.slane %v3987, 4
      %v3990 = vshll.u32 %v3765, 16
      %v3992 = vrot.slane %v3990, 5
      %v3993 = vsel %vm249, %v3988, %v3992
      %v3994 = vshrl.u32 %v3765, 16
      %v3996 = vrot.slane %v3994, 4
      %v3997 = vor.u32 %v3996, %v3992
      %v3998 = vrot.slane %v3997, 4
      %v4000 = vshll.u32 %v3766, 16
      %v4002 = vrot.slane %v4000, 5
      %v4003 = vsel %vm249, %v3998, %v4002
      %v4005 = vshrl.u32 %v3767, 16
      %v4007 = vrot.slane %v4005, 4
      %v4008 = vshll.u32 %v3767, 16
      %v4010 = vrot.slane %v4008, 5
      %v4011 = vor.u32 %v4007, %v4010
      %v4012 = vrot.slane %v4011, 4
      %v4014 = vshll.u32 %v3768, 16
      %v4016 = vrot.slane %v4014, 5
      %v4017 = vsel %vm249, %v4012, %v4016
      %v4018 = vshrl.u32 %v3768, 16
      %v4020 = vrot.slane %v4018, 4
      %v4021 = vor.u32 %v4020, %v4016
      %v4022 = vrot.slane %v4021, 4
      %v4024 = vshll.u32 %v3769, 16
      %v4026 = vrot.slane %v4024, 5
      %v4027 = vsel %vm249, %v4022, %v4026
      %v4029 = vshrl.u32 %v3770, 16
      %v4031 = vrot.slane %v4029, 4
      %v4032 = vshll.u32 %v3770, 16
      %v4034 = vrot.slane %v4032, 5
      %v4035 = vor.u32 %v4031, %v4034
      %v4036 = vrot.slane %v4035, 4
      %v4038 = vshll.u32 %v3771, 16
      %v4040 = vrot.slane %v4038, 5
      %v4041 = vsel %vm249, %v4036, %v4040
      %v4042 = vshrl.u32 %v3771, 16
      %v4044 = vrot.slane %v4042, 4
      %v4045 = vor.u32 %v4044, %v4040
      %v4046 = vrot.slane %v4045, 4
      %v4048 = vshll.u32 %v3772, 16
      %v4050 = vrot.slane %v4048, 5
      %v4051 = vsel %vm249, %v4046, %v4050
      %v4053 = vshrl.u32 %v3773, 16
      %v4055 = vrot.slane %v4053, 4
      %v4056 = vshll.u32 %v3773, 16
      %v4058 = vrot.slane %v4056, 5
      %v4059 = vor.u32 %v4055, %v4058
      %v4060 = vrot.slane %v4059, 4
      %v4062 = vshll.u32 %v3774, 16
      %v4064 = vrot.slane %v4062, 5
      %v4065 = vsel %vm249, %v4060, %v4064
      %v4066 = vshrl.u32 %v3774, 16
      %v4068 = vrot.slane %v4066, 4
      %v4069 = vor.u32 %v4068, %v4064
      %v4070 = vrot.slane %v4069, 4
      %v4072 = vshll.u32 %v3775, 16
      %v4074 = vrot.slane %v4072, 5
      %v4075 = vsel %vm249, %v4070, %v4074
      %v4077 = vshrl.u32 %v3776, 16
      %v4079 = vrot.slane %v4077, 4
      %v4080 = vshll.u32 %v3776, 16
      %v4082 = vrot.slane %v4080, 5
      %v4083 = vor.u32 %v4079, %v4082
      %v4084 = vrot.slane %v4083, 4
      %v4086 = vshll.u32 %v3777, 16
      %v4088 = vrot.slane %v4086, 5
      %v4089 = vsel %vm249, %v4084, %v4088
      %v4090 = vshrl.u32 %v3777, 16
      %v4092 = vrot.slane %v4090, 4
      %v4093 = vor.u32 %v4092, %v4088
      %v4094 = vrot.slane %v4093, 4
      %v4096 = vshll.u32 %v3778, 16
      %v4098 = vrot.slane %v4096, 5
      %v4099 = vsel %vm249, %v4094, %v4098
      %v4101 = vshrl.u32 %v3779, 16
      %v4103 = vrot.slane %v4101, 4
      %v4104 = vshll.u32 %v3779, 16
      %v4106 = vrot.slane %v4104, 5
      %v4107 = vor.u32 %v4103, %v4106
      %v4108 = vrot.slane %v4107, 4
      %v4110 = vshll.u32 %v3780, 16
      %v4112 = vrot.slane %v4110, 5
      %v4113 = vsel %vm249, %v4108, %v4112
      %v4114 = vshrl.u32 %v3780, 16
      %v4116 = vrot.slane %v4114, 4
      %v4117 = vor.u32 %v4116, %v4112
      %v4118 = vrot.slane %v4117, 4
      %v4120 = vshll.u32 %v3781, 16
      %v4122 = vrot.slane %v4120, 5
      %v4123 = vsel %vm249, %v4118, %v4122
      %v4125 = vshrl.u32 %v3782, 16
      %v4127 = vrot.slane %v4125, 4
      %v4128 = vshll.u32 %v3782, 16
      %v4130 = vrot.slane %v4128, 5
      %v4131 = vor.u32 %v4127, %v4130
      %v4132 = vrot.slane %v4131, 4
      %v4134 = vshll.u32 %v3783, 16
      %v4136 = vrot.slane %v4134, 5
      %v4137 = vsel %vm249, %v4132, %v4136
      %v4138 = vshrl.u32 %v3783, 16
      %v4140 = vrot.slane %v4138, 4
      %v4141 = vor.u32 %v4140, %v4136
      %v4142 = vrot.slane %v4141, 4
      %v4144 = vshll.u32 %v3784, 16
      %v4146 = vrot.slane %v4144, 5
      %v4147 = vsel %vm249, %v4142, %v4146
      %v4149 = vshrl.u32 %v3785, 16
      %v4151 = vrot.slane %v4149, 4
      %v4152 = vshll.u32 %v3785, 16
      %v4154 = vrot.slane %v4152, 5
      %v4155 = vor.u32 %v4151, %v4154
      %v4156 = vrot.slane %v4155, 4
      %v4158 = vshll.u32 %v3786, 16
      %v4160 = vrot.slane %v4158, 5
      %v4161 = vsel %vm249, %v4156, %v4160
      %v4162 = vshrl.u32 %v3786, 16
      %v4164 = vrot.slane %v4162, 4
      %v4165 = vor.u32 %v4164, %v4160
      %v4166 = vrot.slane %v4165, 4
      %v4168 = vshll.u32 %v3787, 16
      %v4170 = vrot.slane %v4168, 5
      %v4171 = vsel %vm249, %v4166, %v4170
      %s4172 = scalar_lea.vmem %s1, 448
      %v4173 = vld [vmem:[%s4172] sm:$0xf]
      %v4174 = vld [vmem:[%s4172 + $0x4] sm:$0xf]
      %v4175 = vld [vmem:[%s4172 + $0x8] sm:$0xf]
      %v4176 = vld [vmem:[%s4172 + $0xc] sm:$0xf]
      %v4177 = vld [vmem:[%s4172 + $0x10] sm:$0xf]
      %v4178 = vld [vmem:[%s4172 + $0x14] sm:$0xf]
      %v4179 = vld [vmem:[%s4172 + $0x18] sm:$0xf]
      %v4180 = vld [vmem:[%s4172 + $0x1c] sm:$0xf]
      %v4181 = vld [vmem:[%s4172 + $0x20] sm:$0xf]
      %v4182 = vld [vmem:[%s4172 + $0x24] sm:$0xf]
      %v4183 = vld [vmem:[%s4172 + $0x28] sm:$0xf]
      %v4184 = vld [vmem:[%s4172 + $0x2c] sm:$0xf]
      %v4185 = vld [vmem:[%s4172 + $0x30] sm:$0xf]
      %v4186 = vld [vmem:[%s4172 + $0x34] sm:$0xf]
      %v4187 = vld [vmem:[%s4172 + $0x38] sm:$0xf]
      %v4188 = vld [vmem:[%s4172 + $0x3c] sm:$0xf]
      %v4189 = vunpack.c.l.b16 %v3801
      %v4190 = vunpack.c.l.b16 %v3811
      %v4191 = vunpack.c.l.b16 %v3825
      %v4192 = vunpack.c.l.b16 %v3835
      %v4193 = vunpack.c.l.b16 %v3849
      %v4194 = vunpack.c.l.b16 %v3859
      %v4195 = vunpack.c.l.b16 %v3873
      %v4196 = vunpack.c.l.b16 %v3883
      %v4197 = vunpack.c.l.b16 %v3897
      %v4198 = vunpack.c.l.b16 %v3907
      %v4199 = vunpack.c.l.b16 %v3921
      %v4200 = vunpack.c.l.b16 %v3931
      %v4201 = vunpack.c.l.b16 %v3945
      %v4202 = vunpack.c.l.b16 %v3955
      %v4203 = vunpack.c.l.b16 %v3969
      %v4204 = vunpack.c.l.b16 %v3979
      %v4205 = vunpack.c.l.b16 %v3993
      %v4206 = vunpack.c.l.b16 %v4003
      %v4207 = vunpack.c.l.b16 %v4017
      %v4208 = vunpack.c.l.b16 %v4027
      %v4209 = vunpack.c.l.b16 %v4041
      %v4210 = vunpack.c.l.b16 %v4051
      %v4211 = vunpack.c.l.b16 %v4065
      %v4212 = vunpack.c.l.b16 %v4075
      %v4213 = vunpack.c.l.b16 %v4089
      %v4214 = vunpack.c.l.b16 %v4099
      %v4215 = vunpack.c.l.b16 %v4113
      %v4216 = vunpack.c.l.b16 %v4123
      %v4217 = vunpack.c.l.b16 %v4137
      %v4218 = vunpack.c.l.b16 %v4147
      %v4219 = vunpack.c.l.b16 %v4161
      %v4220 = vunpack.c.l.b16 %v4171
      %v4221 = vpack.c.b16 %v4190, %v4189
      %v4222 = vpack.c.b16 %v4192, %v4191
      %v4223 = vpack.c.b16 %v4194, %v4193
      %v4224 = vpack.c.b16 %v4196, %v4195
      %v4225 = vpack.c.b16 %v4198, %v4197
      %v4226 = vpack.c.b16 %v4200, %v4199
      %v4227 = vpack.c.b16 %v4202, %v4201
      %v4228 = vpack.c.b16 %v4204, %v4203
      %v4229 = vpack.c.b16 %v4206, %v4205
      %v4230 = vpack.c.b16 %v4208, %v4207
      %v4231 = vpack.c.b16 %v4210, %v4209
      %v4232 = vpack.c.b16 %v4212, %v4211
      %v4233 = vpack.c.b16 %v4214, %v4213
      %v4234 = vpack.c.b16 %v4216, %v4215
      %v4235 = vpack.c.b16 %v4218, %v4217
      %v4236 = vpack.c.b16 %v4220, %v4219
      %v4269 = vunpack.c.l.b16 %v4173
      %v4270 = vunpack.c.l.b16 %v4174
      %v4271 = vunpack.c.l.b16 %v4175
      %v4272 = vunpack.c.l.b16 %v4176
      %v4273 = vunpack.c.l.b16 %v4177
      %v4274 = vunpack.c.l.b16 %v4178
      %v4275 = vunpack.c.l.b16 %v4179
      %v4276 = vunpack.c.l.b16 %v4180
      %v4277 = vunpack.c.l.b16 %v4181
      %v4278 = vunpack.c.l.b16 %v4182
      %v4279 = vunpack.c.l.b16 %v4183
      %v4280 = vunpack.c.l.b16 %v4184
      %v4281 = vunpack.c.l.b16 %v4185
      %v4282 = vunpack.c.l.b16 %v4186
      %v4283 = vunpack.c.l.b16 %v4187
      %v4284 = vunpack.c.l.b16 %v4188
      %v4285 = vpack.c.b16 %v4270, %v4269
      %v4286 = vpack.c.b16 %v4272, %v4271
      %v4287 = vpack.c.b16 %v4274, %v4273
      %v4288 = vpack.c.b16 %v4276, %v4275
      %v4289 = vpack.c.b16 %v4278, %v4277
      %v4290 = vpack.c.b16 %v4280, %v4279
      %v4291 = vpack.c.b16 %v4282, %v4281
      %v4292 = vpack.c.b16 %v4284, %v4283
      %4301 = vmatprep.subr.bf16.mxu0 0
      %4302 = vmatpush1.bf16.msra.mxu0 %v4285
      %4303 = vmatprep.subr.bf16.mxu0 0
      %4304 = vmatpush1.bf16.msra.mxu0 %v4286
      %4305 = vmatprep.subr.bf16.mxu0 0
      %4306 = vmatpush1.bf16.msra.mxu0 %v4287
      %4307 = vmatprep.subr.bf16.mxu0 0
      %4308 = vmatpush1.bf16.msra.mxu0 %v4288
      %4309 = vmatprep.subr.bf16.mxu0 0
      %4310 = vmatpush1.bf16.msra.mxu0 %v4289
      %4311 = vmatprep.subr.bf16.mxu0 0
      %4312 = vmatpush1.bf16.msra.mxu0 %v4290
      %4313 = vmatprep.subr.bf16.mxu0 0
      %4314 = vmatpush1.bf16.msra.mxu0 %v4291
      %4315 = vmatprep.subr.bf16.mxu0 0
      %4316 = vmatpush1.bf16.msra.mxu0 %v4292
      %4317 = vmatprep.subr.bf16.mxu0 0
      %4318 = vmatpush1.bf16.msra.mxu0 0
      %4319 = vmatprep.subr.bf16.mxu0 0
      %4320 = vmatpush1.bf16.msra.mxu0 0
      %4321 = vmatprep.subr.bf16.mxu0 0
      %4322 = vmatpush1.bf16.msra.mxu0 0
      %4323 = vmatprep.subr.bf16.mxu0 0
      %4324 = vmatpush1.bf16.msra.mxu0 0
      %4325 = vmatprep.subr.bf16.mxu0 0
      %4326 = vmatpush1.bf16.msra.mxu0 0
      %4327 = vmatprep.subr.bf16.mxu0 0
      %4328 = vmatpush1.bf16.msra.mxu0 0
      %4329 = vmatprep.subr.bf16.mxu0 0
      %4330 = vmatpush1.bf16.msra.mxu0 0
      %4331 = vmatprep.subr.bf16.mxu0 0
      %4332 = vmatpush1.bf16.msra.mxu0 0
      %4333 = vmatprep.mubr.bf16.mxu0 0
      %4334 = vmatmul.mubr.bf16.gmra.mrb[0].mxu0 %v4221
      %v4335 = vpop.f32.mrb[0].mxu0
      %v4336 = vadd.f32 0.0, %v4335
      %v4337 = vpop.f32.mrb[0].mxu0
      %v4338 = vpop.f32.mrb[0].mxu0
      %v4339 = vadd.f32 0.0, %v4338
      %v4340 = vpop.f32.mrb[0].mxu0
      %4341 = vmatprep.mubr.bf16.mxu0 0
      %4342 = vmatmul.mubr.bf16.gmra.mrb[0].mxu0 %v4222
      %v4343 = vpop.f32.mrb[0].mxu0
      %v4344 = vadd.f32 0.0, %v4343
      %v4345 = vpop.f32.mrb[0].mxu0
      %v4346 = vpop.f32.mrb[0].mxu0
      %v4347 = vadd.f32 0.0, %v4346
      %v4348 = vpop.f32.mrb[0].mxu0
      %4349 = vmatprep.mubr.bf16.mxu0 0
      %4350 = vmatmul.mubr.bf16.gmra.mrb[0].mxu0 %v4223
      %v4351 = vpop.f32.mrb[0].mxu0
      %v4352 = vadd.f32 0.0, %v4351
      %v4353 = vpop.f32.mrb[0].mxu0
      %v4354 = vpop.f32.mrb[0].mxu0
      %v4355 = vadd.f32 0.0, %v4354
      %v4356 = vpop.f32.mrb[0].mxu0
      %4357 = vmatprep.mubr.bf16.mxu0 0
      %4358 = vmatmul.mubr.bf16.gmra.mrb[0].mxu0 %v4224
      %v4359 = vpop.f32.mrb[0].mxu0
      %v4360 = vadd.f32 0.0, %v4359
      %v4361 = vpop.f32.mrb[0].mxu0
      %v4362 = vpop.f32.mrb[0].mxu0
      %v4363 = vadd.f32 0.0, %v4362
      %v4364 = vpop.f32.mrb[0].mxu0
      %4365 = vmatprep.mubr.bf16.mxu0 0
      %4366 = vmatmul.mubr.bf16.gmra.mrb[0].mxu0 %v4225
      %v4367 = vpop.f32.mrb[0].mxu0
      %v4368 = vadd.f32 0.0, %v4367
      %v4369 = vpop.f32.mrb[0].mxu0
      %v4370 = vpop.f32.mrb[0].mxu0
      %v4371 = vadd.f32 0.0, %v4370
      %v4372 = vpop.f32.mrb[0].mxu0
      %4373 = vmatprep.mubr.bf16.mxu0 0
      %4374 = vmatmul.mubr.bf16.gmra.mrb[0].mxu0 %v4226
      %v4375 = vpop.f32.mrb[0].mxu0
      %v4376 = vadd.f32 0.0, %v4375
      %v4377 = vpop.f32.mrb[0].mxu0
      %v4378 = vpop.f32.mrb[0].mxu0
      %v4379 = vadd.f32 0.0, %v4378
      %v4380 = vpop.f32.mrb[0].mxu0
      %4381 = vmatprep.mubr.bf16.mxu0 0
      %4382 = vmatmul.mubr.bf16.gmra.mrb[0].mxu0 %v4227
      %v4383 = vpop.f32.mrb[0].mxu0
      %v4384 = vadd.f32 0.0, %v4383
      %v4385 = vpop.f32.mrb[0].mxu0
      %v4386 = vpop.f32.mrb[0].mxu0
      %v4387 = vadd.f32 0.0, %v4386
      %v4388 = vpop.f32.mrb[0].mxu0
      %4389 = vmatprep.mubr.bf16.mxu0 0
      %4390 = vmatmul.mubr.bf16.gmra.mrb[0].mxu0 %v4228
      %v4391 = vpop.f32.mrb[0].mxu0
      %v4392 = vadd.f32 0.0, %v4391
      %v4393 = vpop.f32.mrb[0].mxu0
      %v4394 = vpop.f32.mrb[0].mxu0
      %v4395 = vadd.f32 0.0, %v4394
      %v4396 = vpop.f32.mrb[0].mxu0
      %4397 = vmatprep.mubr.bf16.mxu0 0
      %4398 = vmatmul.mubr.bf16.gmra.mrb[0].mxu0 %v4229
      %v4399 = vpop.f32.mrb[0].mxu0
      %v4400 = vadd.f32 0.0, %v4399
      %v4401 = vpop.f32.mrb[0].mxu0
      %v4402 = vpop.f32.mrb[0].mxu0
      %v4403 = vadd.f32 0.0, %v4402
      %v4404 = vpop.f32.mrb[0].mxu0
      %4405 = vmatprep.mubr.bf16.mxu0 0
      %4406 = vmatmul.mubr.bf16.gmra.mrb[0].mxu0 %v4230
      %v4407 = vpop.f32.mrb[0].mxu0
      %v4408 = vadd.f32 0.0, %v4407
      %v4409 = vpop.f32.mrb[0].mxu0
      %v4410 = vpop.f32.mrb[0].mxu0
      %v4411 = vadd.f32 0.0, %v4410
      %v4412 = vpop.f32.mrb[0].mxu0
      %4413 = vmatprep.mubr.bf16.mxu0 0
      %4414 = vmatmul.mubr.bf16.gmra.mrb[0].mxu0 %v4231
      %v4415 = vpop.f32.mrb[0].mxu0
      %v4416 = vadd.f32 0.0, %v4415
      %v4417 = vpop.f32.mrb[0].mxu0
      %v4418 = vpop.f32.mrb[0].mxu0
      %v4419 = vadd.f32 0.0, %v4418
      %v4420 = vpop.f32.mrb[0].mxu0
      %4421 = vmatprep.mubr.bf16.mxu0 0
      %4422 = vmatmul.mubr.bf16.gmra.mrb[0].mxu0 %v4232
      %v4423 = vpop.f32.mrb[0].mxu0
      %v4424 = vadd.f32 0.0, %v4423
      %v4425 = vpop.f32.mrb[0].mxu0
      %v4426 = vpop.f32.mrb[0].mxu0
      %v4427 = vadd.f32 0.0, %v4426
      %v4428 = vpop.f32.mrb[0].mxu0
      %4429 = vmatprep.mubr.bf16.mxu0 0
      %4430 = vmatmul.mubr.bf16.gmra.mrb[0].mxu0 %v4233
      %v4431 = vpop.f32.mrb[0].mxu0
      %v4432 = vadd.f32 0.0, %v4431
      %v4433 = vpop.f32.mrb[0].mxu0
      %v4434 = vpop.f32.mrb[0].mxu0
      %v4435 = vadd.f32 0.0, %v4434
      %v4436 = vpop.f32.mrb[0].mxu0
      %4437 = vmatprep.mubr.bf16.mxu0 0
      %4438 = vmatmul.mubr.bf16.gmra.mrb[0].mxu0 %v4234
      %v4439 = vpop.f32.mrb[0].mxu0
      %v4440 = vadd.f32 0.0, %v4439
      %v4441 = vpop.f32.mrb[0].mxu0
      %v4442 = vpop.f32.mrb[0].mxu0
      %v4443 = vadd.f32 0.0, %v4442
      %v4444 = vpop.f32.mrb[0].mxu0
      %4445 = vmatprep.mubr.bf16.mxu0 0
      %4446 = vmatmul.mubr.bf16.gmra.mrb[0].mxu0 %v4235
      %v4447 = vpop.f32.mrb[0].mxu0
      %v4448 = vadd.f32 0.0, %v4447
      %v4449 = vpop.f32.mrb[0].mxu0
      %v4450 = vpop.f32.mrb[0].mxu0
      %v4451 = vadd.f32 0.0, %v4450
      %v4452 = vpop.f32.mrb[0].mxu0
      %4453 = vmatprep.mubr.bf16.mxu0 0
      %4454 = vmatmul.mubr.bf16.gmra.mrb[0].mxu0 %v4236
      %v4455 = vpop.f32.mrb[0].mxu0
      %v4456 = vadd.f32 0.0, %v4455
      %v4457 = vpop.f32.mrb[0].mxu0
      %v4458 = vpop.f32.mrb[0].mxu0
      %v4459 = vadd.f32 0.0, %v4458
      %v4460 = vpop.f32.mrb[0].mxu0
      %4461 = vdwg.mxu0
      %v4462 = vadd.f32 %v3708, %v4336
      %v4463 = vadd.f32 %v3709, %v4339
      %v4464 = vadd.f32 %v3710, %v4344
      %v4465 = vadd.f32 %v3711, %v4347
      %v4466 = vadd.f32 %v3712, %v4352
      %v4467 = vadd.f32 %v3713, %v4355
      %v4468 = vadd.f32 %v3714, %v4360
      %v4469 = vadd.f32 %v3715, %v4363
      %v4470 = vadd.f32 %v3716, %v4368
      %v4471 = vadd.f32 %v3717, %v4371
      %v4472 = vadd.f32 %v3718, %v4376
      %v4473 = vadd.f32 %v3719, %v4379
      %v4474 = vadd.f32 %v3720, %v4384
      %v4475 = vadd.f32 %v3721, %v4387
      %v4476 = vadd.f32 %v3722, %v4392
      %v4477 = vadd.f32 %v3723, %v4395
      %v4478 = vadd.f32 %v3724, %v4400
      %v4479 = vadd.f32 %v3725, %v4403
      %v4480 = vadd.f32 %v3726, %v4408
      %v4481 = vadd.f32 %v3727, %v4411
      %v4482 = vadd.f32 %v3728, %v4416
      %v4483 = vadd.f32 %v3729, %v4419
      %v4484 = vadd.f32 %v3730, %v4424
      %v4485 = vadd.f32 %v3731, %v4427
      %v4486 = vadd.f32 %v3732, %v4432
      %v4487 = vadd.f32 %v3733, %v4435
      %v4488 = vadd.f32 %v3734, %v4440
      %v4489 = vadd.f32 %v3735, %v4443
      %v4490 = vadd.f32 %v3736, %v4448
      %v4491 = vadd.f32 %v3737, %v4451
      %v4492 = vadd.f32 %v3738, %v4456
      %v4493 = vadd.f32 %v3739, %v4459
      %v4494 = vld [vmem:[%s3353] sm:$0xe]
      %v4495 = vld [vmem:[%s3353 + $0xc] sm:$0xe]
      %v4496 = vld [vmem:[%s3353 + $0x18] sm:$0xe]
      %v4497 = vld [vmem:[%s3353 + $0x24] sm:$0xe]
      %v4498 = vld [vmem:[%s3353 + $0x30] sm:$0xe]
      %v4499 = vld [vmem:[%s3353 + $0x3c] sm:$0xe]
      %v4500 = vld [vmem:[%s3353 + $0x48] sm:$0xe]
      %v4501 = vld [vmem:[%s3353 + $0x54] sm:$0xe]
      %v4502 = vld [vmem:[%s3353 + $0x60] sm:$0xe]
      %v4503 = vld [vmem:[%s3353 + $0x6c] sm:$0xe]
      %v4504 = vld [vmem:[%s3353 + $0x78] sm:$0xe]
      %v4505 = vld [vmem:[%s3353 + $0x84] sm:$0xe]
      %v4506 = vld [vmem:[%s3353 + $0x90] sm:$0xe]
      %v4507 = vld [vmem:[%s3353 + $0x9c] sm:$0xe]
      %v4508 = vld [vmem:[%s3353 + $0xa8] sm:$0xe]
      %v4509 = vld [vmem:[%s3353 + $0xb4] sm:$0xe]
      %v4558 = vrot.slane %v4494, 5
      %v4559 = vrot.slane %v4558, 4
      %v4560 = vrot.slane %v3741, 5
      %v4561 = vsel %vm1279, %v4559, %v4560
      %v4562 = vrot.slane %v4560, 4
      %v4563 = vrot.slane %v3742, 5
      %v4564 = vsel %vm1279, %v4562, %v4563
      %v4565 = vrot.slane %v4495, 5
      %v4566 = vrot.slane %v4565, 4
      %v4567 = vrot.slane %v3744, 5
      %v4568 = vsel %vm1279, %v4566, %v4567
      %v4569 = vrot.slane %v4567, 4
      %v4570 = vrot.slane %v3745, 5
      %v4571 = vsel %vm1279, %v4569, %v4570
      %v4572 = vrot.slane %v4496, 5
      %v4573 = vrot.slane %v4572, 4
      %v4574 = vrot.slane %v3747, 5
      %v4575 = vsel %vm1279, %v4573, %v4574
      %v4576 = vrot.slane %v4574, 4
      %v4577 = vrot.slane %v3748, 5
      %v4578 = vsel %vm1279, %v4576, %v4577
      %v4579 = vrot.slane %v4497, 5
      %v4580 = vrot.slane %v4579, 4
      %v4581 = vrot.slane %v3750, 5
      %v4582 = vsel %vm1279, %v4580, %v4581
      %v4583 = vrot.slane %v4581, 4
      %v4584 = vrot.slane %v3751, 5
      %v4585 = vsel %vm1279, %v4583, %v4584
      %v4586 = vrot.slane %v4498, 5
      %v4587 = vrot.slane %v4586, 4
      %v4588 = vrot.slane %v3753, 5
      %v4589 = vsel %vm1279, %v4587, %v4588
      %v4590 = vrot.slane %v4588, 4
      %v4591 = vrot.slane %v3754, 5
      %v4592 = vsel %vm1279, %v4590, %v4591
      %v4593 = vrot.slane %v4499, 5
      %v4594 = vrot.slane %v4593, 4
      %v4595 = vrot.slane %v3756, 5
      %v4596 = vsel %vm1279, %v4594, %v4595
      %v4597 = vrot.slane %v4595, 4
      %v4598 = vrot.slane %v3757, 5
      %v4599 = vsel %vm1279, %v4597, %v4598
      %v4600 = vrot.slane %v4500, 5
      %v4601 = vrot.slane %v4600, 4
      %v4602 = vrot.slane %v3759, 5
      %v4603 = vsel %vm1279, %v4601, %v4602
      %v4604 = vrot.slane %v4602, 4
      %v4605 = vrot.slane %v3760, 5
      %v4606 = vsel %vm1279, %v4604, %v4605
      %v4607 = vrot.slane %v4501, 5
      %v4608 = vrot.slane %v4607, 4
      %v4609 = vrot.slane %v3762, 5
      %v4610 = vsel %vm1279, %v4608, %v4609
      %v4611 = vrot.slane %v4609, 4
      %v4612 = vrot.slane %v3763, 5
      %v4613 = vsel %vm1279, %v4611, %v4612
      %v4614 = vrot.slane %v4502, 5
      %v4615 = vrot.slane %v4614, 4
      %v4616 = vrot.slane %v3765, 5
      %v4617 = vsel %vm1279, %v4615, %v4616
      %v4618 = vrot.slane %v4616, 4
      %v4619 = vrot.slane %v3766, 5
      %v4620 = vsel %vm1279, %v4618, %v4619
      %v4621 = vrot.slane %v4503, 5
      %v4622 = vrot.slane %v4621, 4
      %v4623 = vrot.slane %v3768, 5
      %v4624 = vsel %vm1279, %v4622, %v4623
      %v4625 = vrot.slane %v4623, 4
      %v4626 = vrot.slane %v3769, 5
      %v4627 = vsel %vm1279, %v4625, %v4626
      %v4628 = vrot.slane %v4504, 5
      %v4629 = vrot.slane %v4628, 4
      %v4630 = vrot.slane %v3771, 5
      %v4631 = vsel %vm1279, %v4629, %v4630
      %v4632 = vrot.slane %v4630, 4
      %v4633 = vrot.slane %v3772, 5
      %v4634 = vsel %vm1279, %v4632, %v4633
      %v4635 = vrot.slane %v4505, 5
      %v4636 = vrot.slane %v4635, 4
      %v4637 = vrot.slane %v3774, 5
      %v4638 = vsel %vm1279, %v4636, %v4637
      %v4639 = vrot.slane %v4637, 4
      %v4640 = vrot.slane %v3775, 5
      %v4641 = vsel %vm1279, %v4639, %v4640
      %v4642 = vrot.slane %v4506, 5
      %v4643 = vrot.slane %v4642, 4
      %v4644 = vrot.slane %v3777, 5
      %v4645 = vsel %vm1279, %v4643, %v4644
      %v4646 = vrot.slane %v4644, 4
      %v4647 = vrot.slane %v3778, 5
      %v4648 = vsel %vm1279, %v4646, %v4647
      %v4649 = vrot.slane %v4507, 5
      %v4650 = vrot.slane %v4649, 4
      %v4651 = vrot.slane %v3780, 5
      %v4652 = vsel %vm1279, %v4650, %v4651
      %v4653 = vrot.slane %v4651, 4
      %v4654 = vrot.slane %v3781, 5
      %v4655 = vsel %vm1279, %v4653, %v4654
      %v4656 = vrot.slane %v4508, 5
      %v4657 = vrot.slane %v4656, 4
      %v4658 = vrot.slane %v3783, 5
      %v4659 = vsel %vm1279, %v4657, %v4658
      %v4660 = vrot.slane %v4658, 4
      %v4661 = vrot.slane %v3784, 5
      %v4662 = vsel %vm1279, %v4660, %v4661
      %v4663 = vrot.slane %v4509, 5
      %v4664 = vrot.slane %v4663, 4
      %v4665 = vrot.slane %v3786, 5
      %v4666 = vsel %vm1279, %v4664, %v4665
      %v4667 = vrot.slane %v4665, 4
      %v4668 = vrot.slane %v3787, 5
      %v4669 = vsel %vm1279, %v4667, %v4668
      %s4670 = scalar_lea.vmem %s1, 512
      %v4671 = vld [vmem:[%s4670] sm:$0xf]
      %v4672 = vld [vmem:[%s4670 + $0x4] sm:$0xf]
      %v4673 = vld [vmem:[%s4670 + $0x8] sm:$0xf]
      %v4674 = vld [vmem:[%s4670 + $0xc] sm:$0xf]
      %v4675 = vld [vmem:[%s4670 + $0x10] sm:$0xf]
      %v4676 = vld [vmem:[%s4670 + $0x14] sm:$0xf]
      %v4677 = vld [vmem:[%s4670 + $0x18] sm:$0xf]
      %v4678 = vld [vmem:[%s4670 + $0x1c] sm:$0xf]
      %v4679 = vld [vmem:[%s4670 + $0x20] sm:$0xf]
      %v4680 = vld [vmem:[%s4670 + $0x24] sm:$0xf]
      %v4681 = vld [vmem:[%s4670 + $0x28] sm:$0xf]
      %v4682 = vld [vmem:[%s4670 + $0x2c] sm:$0xf]
      %v4683 = vld [vmem:[%s4670 + $0x30] sm:$0xf]
      %v4684 = vld [vmem:[%s4670 + $0x34] sm:$0xf]
      %v4685 = vld [vmem:[%s4670 + $0x38] sm:$0xf]
      %v4686 = vld [vmem:[%s4670 + $0x3c] sm:$0xf]
      %v4687 = vunpack.c.l.b16 %v4561
      %v4688 = vunpack.c.l.b16 %v4564
      %v4689 = vunpack.c.l.b16 %v4568
      %v4690 = vunpack.c.l.b16 %v4571
      %v4691 = vunpack.c.l.b16 %v4575
      %v4692 = vunpack.c.l.b16 %v4578
      %v4693 = vunpack.c.l.b16 %v4582
      %v4694 = vunpack.c.l.b16 %v4585
      %v4695 = vunpack.c.l.b16 %v4589
      %v4696 = vunpack.c.l.b16 %v4592
      %v4697 = vunpack.c.l.b16 %v4596
      %v4698 = vunpack.c.l.b16 %v4599
      %v4699 = vunpack.c.l.b16 %v4603
      %v4700 = vunpack.c.l.b16 %v4606
      %v4701 = vunpack.c.l.b16 %v4610
      %v4702 = vunpack.c.l.b16 %v4613
      %v4703 = vunpack.c.l.b16 %v4617
      %v4704 = vunpack.c.l.b16 %v4620
      %v4705 = vunpack.c.l.b16 %v4624
      %v4706 = vunpack.c.l.b16 %v4627
      %v4707 = vunpack.c.l.b16 %v4631
      %v4708 = vunpack.c.l.b16 %v4634
      %v4709 = vunpack.c.l.b16 %v4638
      %v4710 = vunpack.c.l.b16 %v4641
      %v4711 = vunpack.c.l.b16 %v4645
      %v4712 = vunpack.c.l.b16 %v4648
      %v4713 = vunpack.c.l.b16 %v4652
      %v4714 = vunpack.c.l.b16 %v4655
      %v4715 = vunpack.c.l.b16 %v4659
      %v4716 = vunpack.c.l.b16 %v4662
      %v4717 = vunpack.c.l.b16 %v4666
      %v4718 = vunpack.c.l.b16 %v4669
      %v4719 = vpack.c.b16 %v4688, %v4687
      %v4720 = vpack.c.b16 %v4690, %v4689
      %v4721 = vpack.c.b16 %v4692, %v4691
      %v4722 = vpack.c.b16 %v4694, %v4693
      %v4723 = vpack.c.b16 %v4696, %v4695
      %v4724 = vpack.c.b16 %v4698, %v4697
      %v4725 = vpack.c.b16 %v4700, %v4699
      %v4726 = vpack.c.b16 %v4702, %v4701
      %v4727 = vpack.c.b16 %v4704, %v4703
      %v4728 = vpack.c.b16 %v4706, %v4705
      %v4729 = vpack.c.b16 %v4708, %v4707
      %v4730 = vpack.c.b16 %v4710, %v4709
      %v4731 = vpack.c.b16 %v4712, %v4711
      %v4732 = vpack.c.b16 %v4714, %v4713
      %v4733 = vpack.c.b16 %v4716, %v4715
      %v4734 = vpack.c.b16 %v4718, %v4717
      %v4767 = vunpack.c.l.b16 %v4671
      %v4768 = vunpack.c.l.b16 %v4672
      %v4769 = vunpack.c.l.b16 %v4673
      %v4770 = vunpack.c.l.b16 %v4674
      %v4771 = vunpack.c.l.b16 %v4675
      %v4772 = vunpack.c.l.b16 %v4676
      %v4773 = vunpack.c.l.b16 %v4677
      %v4774 = vunpack.c.l.b16 %v4678
      %v4775 = vunpack.c.l.b16 %v4679
      %v4776 = vunpack.c.l.b16 %v4680
      %v4777 = vunpack.c.l.b16 %v4681
      %v4778 = vunpack.c.l.b16 %v4682
      %v4779 = vunpack.c.l.b16 %v4683
      %v4780 = vunpack.c.l.b16 %v4684
      %v4781 = vunpack.c.l.b16 %v4685
      %v4782 = vunpack.c.l.b16 %v4686
      %v4783 = vpack.c.b16 %v4768, %v4767
      %v4784 = vpack.c.b16 %v4770, %v4769
      %v4785 = vpack.c.b16 %v4772, %v4771
      %v4786 = vpack.c.b16 %v4774, %v4773
      %v4787 = vpack.c.b16 %v4776, %v4775
      %v4788 = vpack.c.b16 %v4778, %v4777
      %v4789 = vpack.c.b16 %v4780, %v4779
      %v4790 = vpack.c.b16 %v4782, %v4781
      %4799 = vmatprep.subr.bf16.mxu0 0
      %4800 = vmatpush1.bf16.msra.mxu0 %v4783
      %4801 = vmatprep.subr.bf16.mxu0 0
      %4802 = vmatpush1.bf16.msra.mxu0 %v4784
      %4803 = vmatprep.subr.bf16.mxu0 0
      %4804 = vmatpush1.bf16.msra.mxu0 %v4785
      %4805 = vmatprep.subr.bf16.mxu0 0
      %4806 = vmatpush1.bf16.msra.mxu0 %v4786
      %4807 = vmatprep.subr.bf16.mxu0 0
      %4808 = vmatpush1.bf16.msra.mxu0 %v4787
      %4809 = vmatprep.subr.bf16.mxu0 0
      %4810 = vmatpush1.bf16.msra.mxu0 %v4788
      %4811 = vmatprep.subr.bf16.mxu0 0
      %4812 = vmatpush1.bf16.msra.mxu0 %v4789
      %4813 = vmatprep.subr.bf16.mxu0 0
      %4814 = vmatpush1.bf16.msra.mxu0 %v4790
      %4815 = vmatprep.subr.bf16.mxu0 0
      %4816 = vmatpush1.bf16.msra.mxu0 0
      %4817 = vmatprep.subr.bf16.mxu0 0
      %4818 = vmatpush1.bf16.msra.mxu0 0
      %4819 = vmatprep.subr.bf16.mxu0 0
      %4820 = vmatpush1.bf16.msra.mxu0 0
      %4821 = vmatprep.subr.bf16.mxu0 0
      %4822 = vmatpush1.bf16.msra.mxu0 0
      %4823 = vmatprep.subr.bf16.mxu0 0
      %4824 = vmatpush1.bf16.msra.mxu0 0
      %4825 = vmatprep.subr.bf16.mxu0 0
      %4826 = vmatpush1.bf16.msra.mxu0 0
      %4827 = vmatprep.subr.bf16.mxu0 0
      %4828 = vmatpush1.bf16.msra.mxu0 0
      %4829 = vmatprep.subr.bf16.mxu0 0
      %4830 = vmatpush1.bf16.msra.mxu0 0
      %4831 = vmatprep.mubr.bf16.mxu0 0
      %4832 = vmatmul.mubr.bf16.gmra.mrb[0].mxu0 %v4719
      %v4833 = vpop.f32.mrb[0].mxu0
      %v4834 = vadd.f32 0.0, %v4833
      %v4835 = vpop.f32.mrb[0].mxu0
      %v4836 = vpop.f32.mrb[0].mxu0
      %v4837 = vadd.f32 0.0, %v4836
      %v4838 = vpop.f32.mrb[0].mxu0
      %4839 = vmatprep.mubr.bf16.mxu0 0
      %4840 = vmatmul.mubr.bf16.gmra.mrb[0].mxu0 %v4720
      %v4841 = vpop.f32.mrb[0].mxu0
      %v4842 = vadd.f32 0.0, %v4841
      %v4843 = vpop.f32.mrb[0].mxu0
      %v4844 = vpop.f32.mrb[0].mxu0
      %v4845 = vadd.f32 0.0, %v4844
      %v4846 = vpop.f32.mrb[0].mxu0
      %4847 = vmatprep.mubr.bf16.mxu0 0
      %4848 = vmatmul.mubr.bf16.gmra.mrb[0].mxu0 %v4721
      %v4849 = vpop.f32.mrb[0].mxu0
      %v4850 = vadd.f32 0.0, %v4849
      %v4851 = vpop.f32.mrb[0].mxu0
      %v4852 = vpop.f32.mrb[0].mxu0
      %v4853 = vadd.f32 0.0, %v4852
      %v4854 = vpop.f32.mrb[0].mxu0
      %4855 = vmatprep.mubr.bf16.mxu0 0
      %4856 = vmatmul.mubr.bf16.gmra.mrb[0].mxu0 %v4722
      %v4857 = vpop.f32.mrb[0].mxu0
      %v4858 = vadd.f32 0.0, %v4857
      %v4859 = vpop.f32.mrb[0].mxu0
      %v4860 = vpop.f32.mrb[0].mxu0
      %v4861 = vadd.f32 0.0, %v4860
      %v4862 = vpop.f32.mrb[0].mxu0
      %4863 = vmatprep.mubr.bf16.mxu0 0
      %4864 = vmatmul.mubr.bf16.gmra.mrb[0].mxu0 %v4723
      %v4865 = vpop.f32.mrb[0].mxu0
      %v4866 = vadd.f32 0.0, %v4865
      %v4867 = vpop.f32.mrb[0].mxu0
      %v4868 = vpop.f32.mrb[0].mxu0
      %v4869 = vadd.f32 0.0, %v4868
      %v4870 = vpop.f32.mrb[0].mxu0
      %4871 = vmatprep.mubr.bf16.mxu0 0
      %4872 = vmatmul.mubr.bf16.gmra.mrb[0].mxu0 %v4724
      %v4873 = vpop.f32.mrb[0].mxu0
      %v4874 = vadd.f32 0.0, %v4873
      %v4875 = vpop.f32.mrb[0].mxu0
      %v4876 = vpop.f32.mrb[0].mxu0
      %v4877 = vadd.f32 0.0, %v4876
      %v4878 = vpop.f32.mrb[0].mxu0
      %4879 = vmatprep.mubr.bf16.mxu0 0
      %4880 = vmatmul.mubr.bf16.gmra.mrb[0].mxu0 %v4725
      %v4881 = vpop.f32.mrb[0].mxu0
      %v4882 = vadd.f32 0.0, %v4881
      %v4883 = vpop.f32.mrb[0].mxu0
      %v4884 = vpop.f32.mrb[0].mxu0
      %v4885 = vadd.f32 0.0, %v4884
      %v4886 = vpop.f32.mrb[0].mxu0
      %4887 = vmatprep.mubr.bf16.mxu0 0
      %4888 = vmatmul.mubr.bf16.gmra.mrb[0].mxu0 %v4726
      %v4889 = vpop.f32.mrb[0].mxu0
      %v4890 = vadd.f32 0.0, %v4889
      %v4891 = vpop.f32.mrb[0].mxu0
      %v4892 = vpop.f32.mrb[0].mxu0
      %v4893 = vadd.f32 0.0, %v4892
      %v4894 = vpop.f32.mrb[0].mxu0
      %4895 = vmatprep.mubr.bf16.mxu0 0
      %4896 = vmatmul.mubr.bf16.gmra.mrb[0].mxu0 %v4727
      %v4897 = vpop.f32.mrb[0].mxu0
      %v4898 = vadd.f32 0.0, %v4897
      %v4899 = vpop.f32.mrb[0].mxu0
      %v4900 = vpop.f32.mrb[0].mxu0
      %v4901 = vadd.f32 0.0, %v4900
      %v4902 = vpop.f32.mrb[0].mxu0
      %4903 = vmatprep.mubr.bf16.mxu0 0
      %4904 = vmatmul.mubr.bf16.gmra.mrb[0].mxu0 %v4728
      %v4905 = vpop.f32.mrb[0].mxu0
      %v4906 = vadd.f32 0.0, %v4905
      %v4907 = vpop.f32.mrb[0].mxu0
      %v4908 = vpop.f32.mrb[0].mxu0
      %v4909 = vadd.f32 0.0, %v4908
      %v4910 = vpop.f32.mrb[0].mxu0
      %4911 = vmatprep.mubr.bf16.mxu0 0
      %4912 = vmatmul.mubr.bf16.gmra.mrb[0].mxu0 %v4729
      %v4913 = vpop.f32.mrb[0].mxu0
      %v4914 = vadd.f32 0.0, %v4913
      %v4915 = vpop.f32.mrb[0].mxu0
      %v4916 = vpop.f32.mrb[0].mxu0
      %v4917 = vadd.f32 0.0, %v4916
      %v4918 = vpop.f32.mrb[0].mxu0
      %4919 = vmatprep.mubr.bf16.mxu0 0
      %4920 = vmatmul.mubr.bf16.gmra.mrb[0].mxu0 %v4730
      %v4921 = vpop.f32.mrb[0].mxu0
      %v4922 = vadd.f32 0.0, %v4921
      %v4923 = vpop.f32.mrb[0].mxu0
      %v4924 = vpop.f32.mrb[0].mxu0
      %v4925 = vadd.f32 0.0, %v4924
      %v4926 = vpop.f32.mrb[0].mxu0
      %4927 = vmatprep.mubr.bf16.mxu0 0
      %4928 = vmatmul.mubr.bf16.gmra.mrb[0].mxu0 %v4731
      %v4929 = vpop.f32.mrb[0].mxu0
      %v4930 = vadd.f32 0.0, %v4929
      %v4931 = vpop.f32.mrb[0].mxu0
      %v4932 = vpop.f32.mrb[0].mxu0
      %v4933 = vadd.f32 0.0, %v4932
      %v4934 = vpop.f32.mrb[0].mxu0
      %4935 = vmatprep.mubr.bf16.mxu0 0
      %4936 = vmatmul.mubr.bf16.gmra.mrb[0].mxu0 %v4732
      %v4937 = vpop.f32.mrb[0].mxu0
      %v4938 = vadd.f32 0.0, %v4937
      %v4939 = vpop.f32.mrb[0].mxu0
      %v4940 = vpop.f32.mrb[0].mxu0
      %v4941 = vadd.f32 0.0, %v4940
      %v4942 = vpop.f32.mrb[0].mxu0
      %4943 = vmatprep.mubr.bf16.mxu0 0
      %4944 = vmatmul.mubr.bf16.gmra.mrb[0].mxu0 %v4733
      %v4945 = vpop.f32.mrb[0].mxu0
      %v4946 = vadd.f32 0.0, %v4945
      %v4947 = vpop.f32.mrb[0].mxu0
      %v4948 = vpop.f32.mrb[0].mxu0
      %v4949 = vadd.f32 0.0, %v4948
      %v4950 = vpop.f32.mrb[0].mxu0
      %4951 = vmatprep.mubr.bf16.mxu0 0
      %4952 = vmatmul.mubr.bf16.gmra.mrb[0].mxu0 %v4734
      %v4953 = vpop.f32.mrb[0].mxu0
      %v4954 = vadd.f32 0.0, %v4953
      %v4955 = vpop.f32.mrb[0].mxu0
      %v4956 = vpop.f32.mrb[0].mxu0
      %v4957 = vadd.f32 0.0, %v4956
      %v4958 = vpop.f32.mrb[0].mxu0
      %4959 = vdwg.mxu0
      %v4960 = vadd.f32 %v4462, %v4834
      %v4961 = vadd.f32 %v4463, %v4837
      %v4962 = vadd.f32 %v4464, %v4842
      %v4963 = vadd.f32 %v4465, %v4845
      %v4964 = vadd.f32 %v4466, %v4850
      %v4965 = vadd.f32 %v4467, %v4853
      %v4966 = vadd.f32 %v4468, %v4858
      %v4967 = vadd.f32 %v4469, %v4861
      %v4968 = vadd.f32 %v4470, %v4866
      %v4969 = vadd.f32 %v4471, %v4869
      %v4970 = vadd.f32 %v4472, %v4874
      %v4971 = vadd.f32 %v4473, %v4877
      %v4972 = vadd.f32 %v4474, %v4882
      %v4973 = vadd.f32 %v4475, %v4885
      %v4974 = vadd.f32 %v4476, %v4890
      %v4975 = vadd.f32 %v4477, %v4893
      %v4976 = vadd.f32 %v4478, %v4898
      %v4977 = vadd.f32 %v4479, %v4901
      %v4978 = vadd.f32 %v4480, %v4906
      %v4979 = vadd.f32 %v4481, %v4909
      %v4980 = vadd.f32 %v4482, %v4914
      %v4981 = vadd.f32 %v4483, %v4917
      %v4982 = vadd.f32 %v4484, %v4922
      %v4983 = vadd.f32 %v4485, %v4925
      %v4984 = vadd.f32 %v4486, %v4930
      %v4985 = vadd.f32 %v4487, %v4933
      %v4986 = vadd.f32 %v4488, %v4938
      %v4987 = vadd.f32 %v4489, %v4941
      %v4988 = vadd.f32 %v4490, %v4946
      %v4989 = vadd.f32 %v4491, %v4949
      %v4990 = vadd.f32 %v4492, %v4954
      %v4991 = vadd.f32 %v4493, %v4957
      %v4992 = vpack.c.bf16 %v4961, %v4960
      %v4993 = vpack.c.bf16 %v4963, %v4962
      %v4994 = vpack.c.bf16 %v4965, %v4964
      %v4995 = vpack.c.bf16 %v4967, %v4966
      %v4996 = vpack.c.bf16 %v4969, %v4968
      %v4997 = vpack.c.bf16 %v4971, %v4970
      %v4998 = vpack.c.bf16 %v4973, %v4972
      %v4999 = vpack.c.bf16 %v4975, %v4974
      %v5000 = vpack.c.bf16 %v4977, %v4976
      %v5001 = vpack.c.bf16 %v4979, %v4978
      %v5002 = vpack.c.bf16 %v4981, %v4980
      %v5003 = vpack.c.bf16 %v4983, %v4982
      %v5004 = vpack.c.bf16 %v4985, %v4984
      %v5005 = vpack.c.bf16 %v4987, %v4986
      %v5006 = vpack.c.bf16 %v4989, %v4988
      %v5007 = vpack.c.bf16 %v4991, %v4990
      %v5024 = vunpack.c.l.b16 %v4992
      %v5025 = vunpack.c.h.b16 %v4992
      %v5026 = vunpack.c.l.b16 %v4993
      %v5027 = vunpack.c.h.b16 %v4993
      %v5028 = vunpack.c.l.b16 %v4994
      %v5029 = vunpack.c.h.b16 %v4994
      %v5030 = vunpack.c.l.b16 %v4995
      %v5031 = vunpack.c.h.b16 %v4995
      %v5032 = vunpack.c.l.b16 %v4996
      %v5033 = vunpack.c.h.b16 %v4996
      %v5034 = vunpack.c.l.b16 %v4997
      %v5035 = vunpack.c.h.b16 %v4997
      %v5036 = vunpack.c.l.b16 %v4998
      %v5037 = vunpack.c.h.b16 %v4998
      %v5038 = vunpack.c.l.b16 %v4999
      %v5039 = vunpack.c.h.b16 %v4999
      %v5040 = vunpack.c.l.b16 %v5000
      %v5041 = vunpack.c.h.b16 %v5000
      %v5042 = vunpack.c.l.b16 %v5001
      %v5043 = vunpack.c.h.b16 %v5001
      %v5044 = vunpack.c.l.b16 %v5002
      %v5045 = vunpack.c.h.b16 %v5002
      %v5046 = vunpack.c.l.b16 %v5003
      %v5047 = vunpack.c.h.b16 %v5003
      %v5048 = vunpack.c.l.b16 %v5004
      %v5049 = vunpack.c.h.b16 %v5004
      %v5050 = vunpack.c.l.b16 %v5005
      %v5051 = vunpack.c.h.b16 %v5005
      %v5052 = vunpack.c.l.b16 %v5006
      %v5053 = vunpack.c.h.b16 %v5006
      %v5054 = vunpack.c.l.b16 %v5007
      %v5055 = vunpack.c.h.b16 %v5007
      %v5056 = vpack.c.b16 %v5024, %v5024
      %v5057 = vpack.c.b16 %v5025, %v5025
      %v5058 = vpack.c.b16 %v5026, %v5026
      %v5059 = vpack.c.b16 %v5027, %v5027
      %v5060 = vpack.c.b16 %v5028, %v5028
      %v5061 = vpack.c.b16 %v5029, %v5029
      %v5062 = vpack.c.b16 %v5030, %v5030
      %v5063 = vpack.c.b16 %v5031, %v5031
      %v5064 = vpack.c.b16 %v5032, %v5032
      %v5065 = vpack.c.b16 %v5033, %v5033
      %v5066 = vpack.c.b16 %v5034, %v5034
      %v5067 = vpack.c.b16 %v5035, %v5035
      %v5068 = vpack.c.b16 %v5036, %v5036
      %v5069 = vpack.c.b16 %v5037, %v5037
      %v5070 = vpack.c.b16 %v5038, %v5038
      %v5071 = vpack.c.b16 %v5039, %v5039
      %v5072 = vpack.c.b16 %v5040, %v5040
      %v5073 = vpack.c.b16 %v5041, %v5041
      %v5074 = vpack.c.b16 %v5042, %v5042
      %v5075 = vpack.c.b16 %v5043, %v5043
      %v5076 = vpack.c.b16 %v5044, %v5044
      %v5077 = vpack.c.b16 %v5045, %v5045
      %v5078 = vpack.c.b16 %v5046, %v5046
      %v5079 = vpack.c.b16 %v5047, %v5047
      %v5080 = vpack.c.b16 %v5048, %v5048
      %v5081 = vpack.c.b16 %v5049, %v5049
      %v5082 = vpack.c.b16 %v5050, %v5050
      %v5083 = vpack.c.b16 %v5051, %v5051
      %v5084 = vpack.c.b16 %v5052, %v5052
      %v5085 = vpack.c.b16 %v5053, %v5053
      %v5086 = vpack.c.b16 %v5054, %v5054
      %v5087 = vpack.c.b16 %v5055, %v5055
      %5120 = vst [vmem:[%s177] sm:$0xf] %v5056
      %5121 = vst [vmem:[%s177 + $0x4] sm:$0xf] %v5057
      %5122 = vst [vmem:[%s177 + $0x8] sm:$0xf] %v5058
      %5123 = vst [vmem:[%s177 + $0xc] sm:$0xf] %v5059
      %5124 = vst [vmem:[%s177 + $0x10] sm:$0xf] %v5060
      %5125 = vst [vmem:[%s177 + $0x14] sm:$0xf] %v5061
      %5126 = vst [vmem:[%s177 + $0x18] sm:$0xf] %v5062
      %5127 = vst [vmem:[%s177 + $0x1c] sm:$0xf] %v5063
      %5128 = vst [vmem:[%s177 + $0x20] sm:$0xf] %v5064
      %5129 = vst [vmem:[%s177 + $0x24] sm:$0xf] %v5065
      %5130 = vst [vmem:[%s177 + $0x28] sm:$0xf] %v5066
      %5131 = vst [vmem:[%s177 + $0x2c] sm:$0xf] %v5067
      %5132 = vst [vmem:[%s177 + $0x30] sm:$0xf] %v5068
      %5133 = vst [vmem:[%s177 + $0x34] sm:$0xf] %v5069
      %5134 = vst [vmem:[%s177 + $0x38] sm:$0xf] %v5070
      %5135 = vst [vmem:[%s177 + $0x3c] sm:$0xf] %v5071
      %5136 = vst [vmem:[%s177 + $0x40] sm:$0xf] %v5072
      %5137 = vst [vmem:[%s177 + $0x44] sm:$0xf] %v5073
      %5138 = vst [vmem:[%s177 + $0x48] sm:$0xf] %v5074
      %5139 = vst [vmem:[%s177 + $0x4c] sm:$0xf] %v5075
      %5140 = vst [vmem:[%s177 + $0x50] sm:$0xf] %v5076
      %5141 = vst [vmem:[%s177 + $0x54] sm:$0xf] %v5077
      %5142 = vst [vmem:[%s177 + $0x58] sm:$0xf] %v5078
      %5143 = vst [vmem:[%s177 + $0x5c] sm:$0xf] %v5079
      %5144 = vst [vmem:[%s177 + $0x60] sm:$0xf] %v5080
      %5145 = vst [vmem:[%s177 + $0x64] sm:$0xf] %v5081
      %5146 = vst [vmem:[%s177 + $0x68] sm:$0xf] %v5082
      %5147 = vst [vmem:[%s177 + $0x6c] sm:$0xf] %v5083
      %5148 = vst [vmem:[%s177 + $0x70] sm:$0xf] %v5084
      %5149 = vst [vmem:[%s177 + $0x74] sm:$0xf] %v5085
      %5150 = vst [vmem:[%s177 + $0x78] sm:$0xf] %v5086
      %5151 = vst [vmem:[%s177 + $0x7c] sm:$0xf] %v5087
      %v5152 = vadd.f32 %v4960, %v4961
      %v5153 = vadd.f32 %v5152, %v4962
      %v5154 = vadd.f32 %v5153, %v4963
      %v5155 = vadd.f32 %v5154, %v4964
      %v5156 = vadd.f32 %v5155, %v4965
      %v5157 = vadd.f32 %v5156, %v4966
      %v5158 = vadd.f32 %v5157, %v4967
      %v5159 = vadd.f32 %v5158, %v4968
      %v5160 = vadd.f32 %v5159, %v4969
      %v5161 = vadd.f32 %v5160, %v4970
      %v5162 = vadd.f32 %v5161, %v4971
      %v5163 = vadd.f32 %v5162, %v4972
      %v5164 = vadd.f32 %v5163, %v4973
      %v5165 = vadd.f32 %v5164, %v4974
      %v5166 = vadd.f32 %v5165, %v4975
      %v5167 = vadd.f32 %v5166, %v4976
      %v5168 = vadd.f32 %v5167, %v4977
      %v5169 = vadd.f32 %v5168, %v4978
      %v5170 = vadd.f32 %v5169, %v4979
      %v5171 = vadd.f32 %v5170, %v4980
      %v5172 = vadd.f32 %v5171, %v4981
      %v5173 = vadd.f32 %v5172, %v4982
      %v5174 = vadd.f32 %v5173, %v4983
      %v5175 = vadd.f32 %v5174, %v4984
      %v5176 = vadd.f32 %v5175, %v4985
      %v5177 = vadd.f32 %v5176, %v4986
      %v5178 = vadd.f32 %v5177, %v4987
      %v5179 = vadd.f32 %v5178, %v4988
      %v5180 = vadd.f32 %v5179, %v4989
      %v5181 = vadd.f32 %v5180, %v4990
      %v5182 = vadd.f32 %v5181, %v4991
      %v5183 = vrot.slane %v5182, 4
      %v5184 = vadd.f32 %v5182, %v5183
      %v5185 = vrot.slane %v5184, 2
      %v5186 = vadd.f32 %v5184, %v5185
      %v5187 = vrot.slane %v5186, 1
      %v5188 = vadd.f32 %v5186, %v5187
      %v5189 = vmul.f32 %v4960, %v4960
      %v5190 = vmul.f32 %v4961, %v4961
      %v5191 = vmul.f32 %v4962, %v4962
      %v5192 = vmul.f32 %v4963, %v4963
      %v5193 = vmul.f32 %v4964, %v4964
      %v5194 = vmul.f32 %v4965, %v4965
      %v5195 = vmul.f32 %v4966, %v4966
      %v5196 = vmul.f32 %v4967, %v4967
      %v5197 = vmul.f32 %v4968, %v4968
      %v5198 = vmul.f32 %v4969, %v4969
      %v5199 = vmul.f32 %v4970, %v4970
      %v5200 = vmul.f32 %v4971, %v4971
      %v5201 = vmul.f32 %v4972, %v4972
      %v5202 = vmul.f32 %v4973, %v4973
      %v5203 = vmul.f32 %v4974, %v4974
      %v5204 = vmul.f32 %v4975, %v4975
      %v5205 = vmul.f32 %v4976, %v4976
      %v5206 = vmul.f32 %v4977, %v4977
      %v5207 = vmul.f32 %v4978, %v4978
      %v5208 = vmul.f32 %v4979, %v4979
      %v5209 = vmul.f32 %v4980, %v4980
      %v5210 = vmul.f32 %v4981, %v4981
      %v5211 = vmul.f32 %v4982, %v4982
      %v5212 = vmul.f32 %v4983, %v4983
      %v5213 = vmul.f32 %v4984, %v4984
      %v5214 = vmul.f32 %v4985, %v4985
      %v5215 = vmul.f32 %v4986, %v4986
      %v5216 = vmul.f32 %v4987, %v4987
      %v5217 = vmul.f32 %v4988, %v4988
      %v5218 = vmul.f32 %v4989, %v4989
      %v5219 = vmul.f32 %v4990, %v4990
      %v5220 = vmul.f32 %v4991, %v4991
      %v5221 = vadd.f32 %v5189, %v5190
      %v5222 = vadd.f32 %v5221, %v5191
      %v5223 = vadd.f32 %v5222, %v5192
      %v5224 = vadd.f32 %v5223, %v5193
      %v5225 = vadd.f32 %v5224, %v5194
      %v5226 = vadd.f32 %v5225, %v5195
      %v5227 = vadd.f32 %v5226, %v5196
      %v5228 = vadd.f32 %v5227, %v5197
      %v5229 = vadd.f32 %v5228, %v5198
      %v5230 = vadd.f32 %v5229, %v5199
      %v5231 = vadd.f32 %v5230, %v5200
      %v5232 = vadd.f32 %v5231, %v5201
      %v5233 = vadd.f32 %v5232, %v5202
      %v5234 = vadd.f32 %v5233, %v5203
      %v5235 = vadd.f32 %v5234, %v5204
      %v5236 = vadd.f32 %v5235, %v5205
      %v5237 = vadd.f32 %v5236, %v5206
      %v5238 = vadd.f32 %v5237, %v5207
      %v5239 = vadd.f32 %v5238, %v5208
      %v5240 = vadd.f32 %v5239, %v5209
      %v5241 = vadd.f32 %v5240, %v5210
      %v5242 = vadd.f32 %v5241, %v5211
      %v5243 = vadd.f32 %v5242, %v5212
      %v5244 = vadd.f32 %v5243, %v5213
      %v5245 = vadd.f32 %v5244, %v5214
      %v5246 = vadd.f32 %v5245, %v5215
      %v5247 = vadd.f32 %v5246, %v5216
      %v5248 = vadd.f32 %v5247, %v5217
      %v5249 = vadd.f32 %v5248, %v5218
      %v5250 = vadd.f32 %v5249, %v5219
      %v5251 = vadd.f32 %v5250, %v5220
      %v5252 = vrot.slane %v5251, 4
      %v5253 = vadd.f32 %v5251, %v5252
      %v5254 = vrot.slane %v5253, 2
      %v5255 = vadd.f32 %v5253, %v5254
      %v5256 = vrot.slane %v5255, 1
      %v5257 = vadd.f32 %v5255, %v5256
      %vm5258 = vcmask 1040384
      %v5259 = vsel %vm5258, %v5188, %v5257
      %5260 = vst [vmem:[%s181] sm:$0x3] %v5259
      %p5261 = scmp.lt.s32.totalorder %s15, 1
      %s5262 = scalar_select %p5261, %s15, 1
      %s5263 = smul.addr %s5262, 32
      %s5264 = smul.addr %s5263, 4
      %s5265 = scalar_lea.vmem %s2, %s5264
      %p5266 = scmp.lt.s32.totalorder %s15, 1
      %s5267 = scalar_select %p5266, %s15, 1
      %s5268 = smul.addr %s5267, 2
      %s5269 = scalar_lea.vmem %s3, %s5268
      // Predicated region
      $region29: #{residual_block.3} parent=27 // pred_check
        %p5270 = pneg %p80
      $region30: #{residual_block.3} parent=27 // pred_check_branch
        %5272 = sbr.rel (%p5270) target = $region32
      $region31: #{residual_block.3} parent=27 // pred_region
        _
      $region32: #{residual_block.3} parent=27 // pred_fallthru
        _
      // Predicated region
      $region33: #{residual_block.3} parent=27 // pred_check
        %p5273 = pneg %p106
      $region34: #{residual_block.3} parent=27 // pred_check_branch
        %5275 = sbr.rel (%p5273) target = $region36
      $region35: #{residual_block.3} parent=27 // pred_region
        _
      $region36: #{residual_block.3} parent=27 // pred_fallthru
        _
    $region28: #{residual_block.3} parent=5 // pred_fallthru
      _
    %p5276 = scmp.le.s32.totalorder 2, %s10
    // Predicated region
    $region37: #{residual_block.3} parent=5 // pred_check
      %p5277 = pneg %p5276
    $region38: #{residual_block.3} parent=5 // pred_check_branch
      %5279 = sbr.rel (%p5277) target = $region40
    $region39: #{residual_block.3} parent=5 // pred_region
      %s5280 = ssub.s32 %s10, 2
      // Predicated region
      $region41: #{residual_block.3} parent=39 // pred_check
        %p5281 = pneg %p86
      $region42: #{residual_block.3} parent=39 // pred_check_branch
        %5283 = sbr.rel (%p5281) target = $region44
      $region43: #{residual_block.3} parent=39 // pred_region
        %p5284 = scmp.lt.s32.totalorder %s16, 1
        %s5285 = scalar_select %p5284, %s16, 1
        %s5286 = smul.addr %s5285, 32
        %s5287 = smul.addr %s5286, 4
        %s5288 = scalar_lea.vmem %s2, %s5287
      $region44: #{residual_block.3} parent=39 // pred_fallthru
        _
      // Predicated region
      $region45: #{residual_block.3} parent=39 // pred_check
        %p5289 = pneg %p112
      $region46: #{residual_block.3} parent=39 // pred_check_branch
        %5291 = sbr.rel (%p5289) target = $region48
      $region47: #{residual_block.3} parent=39 // pred_region
        %p5292 = scmp.lt.s32.totalorder %s16, 1
        %s5293 = scalar_select %p5292, %s16, 1
        %s5294 = smul.addr %s5293, 2
        %s5295 = scalar_lea.vmem %s3, %s5294
      $region48: #{residual_block.3} parent=39 // pred_fallthru
        _
    $region40: #{residual_block.3} parent=5 // pred_fallthru
      _
  $region6: #{residual_block.3} parent=0 // loop_footer
    %s14 = sadd.s32 1, %s10
  $region7: #{residual_block.3} parent=0 // loop_footer_branch
    %9 = sbr.rel target = $region3
  $region8: #{residual_block.3} parent=0 // loop_exit
    _

// kernel: residual_block.4
$region0: #{residual_block.4}
  #allocation0 [shape = 'u32[]', space=smem, size = 0x4, offset = 0x4, fixed_abs, tag = 'smem constant byte address 0x4 - core index']
  #allocation1 [shape = 'u32[144,128]{1,0:T(1,128)}', space=vmem, size = 0x12000, scoped, tag = 'internal scratch']
  #allocation2 [shape = 'bf16[18,18,128]{2,1,0:T(8,128)(2,1)}', space=vmem, size = 0x1b000, scoped, tag = 'scratch operand']
  %s0 = inlined_call_operand.vmem [shape: bf16[2,16,16,128], index: 0, kind: input, shape index: {}]
  %s1 = inlined_call_operand.vmem [shape: f32[1,128], index: 1, kind: input, shape index: {}]
  %s2 = inlined_call_operand.vmem [shape: f32[1,128], index: 2, kind: input, shape index: {}]
  %s3 = inlined_call_operand.vmem [shape: bf16[9,128,128], index: 3, kind: input, shape index: {}]
  %s4 = inlined_call_operand.vmem [shape: bf16[2,16,16,128], index: 4, kind: output, shape index: {0}]
  %s5 = inlined_call_operand.vmem [shape: f32[2,2,128], index: 5, kind: output, shape index: {1}]
  %6 = xla_tuple %s4, %s5
  %s7 = sld [smem:[#allocation0]]
  $region57: #{residual_block.4} parent=0
    _
  %s9 = ssub.s32 1, %s7
  %s10 = scalar_select 0, %s9, %s7
  loop: start=0, step=1, limit=4
  $region2: #{residual_block.4} parent=0 // loop_pre_header
    _
  $region3: #{residual_block.4} parent=0 // loop_header
    %s12 = sphi 0, %s16
    %p13 = scmp.ge.s32.totalorder %s12, 4
    %s22 = sphi 0, %s24
    %s25 = sphi 0, %s22
    %s26 = sphi 0, %s25
    %s42 = sphi 0, %s26
    %s46 = sphi 0, %s46
    %s48 = sphi 0, %s46
    %s49 = sphi 0, %s48
    %s63 = sphi 0, %s49
    %s67 = sphi 0, %s67
    %s69 = sphi 0, %s67
    %s70 = sphi 0, %s69
    %s84 = sphi 0, %s70
    %s88 = sphi 0, %s88
    %s90 = sphi 0, %s88
    %s91 = sphi 0, %s90
    %s105 = sphi 0, %s91
    %s111 = sphi 0, %s113
    %s114 = sphi 0, %s111
    %s115 = sphi 0, %s114
    %s131 = sphi 0, %s115
    %s137 = sphi 0, %s139
    %s140 = sphi 0, %s137
    %s141 = sphi 0, %s140
    %s157 = sphi 0, %s141
  $region4: #{residual_block.4} parent=0 // loop_header_branch
    %15 = sbr.rel (%p13) target = $region8
  $region5: #{residual_block.4} parent=0 // loop_body
    %s17 = ssub.s32 %s12, 1
    %s18 = ssub.s32 %s12, 2
    %s19 = sadd.s32 %s12, 1
    %s20 = ssub.s32 %s12, %s19
    %p21 = scmp.eq.s32.totalorder %s20, 0
    %s23 = sadd.s32 %s22, 1
    %s24 = scalar_select %p21, %s22, %s23
    %p27 = pneg %p21
    %p28 = scmp.eq.s32.totalorder %s12, 1
    %p29 = por %p27, %p28
    %p30 = scmp.ne.s32.totalorder %s22, %s25
    %p31 = scmp.eq.s32.totalorder %s12, 0
    %p32 = por %p30, %p31
    %p33 = scmp.ne.s32.totalorder %s22, %s25
    %p34 = scmp.eq.s32.totalorder %s17, 1
    %p35 = por %p33, %p34
    %p36 = scmp.ne.s32.totalorder %s25, %s26
    %p37 = scmp.eq.s32.totalorder %s17, 0
    %p38 = por %p36, %p37
    %p39 = scmp.ne.s32.totalorder %s25, %s26
    %p40 = scmp.eq.s32.totalorder %s18, 1
    %p41 = por %p39, %p40
    %p43 = scmp.ne.s32.totalorder %s26, %s42
    %p44 = scmp.eq.s32.totalorder %s18, 0
    %p45 = por %p43, %p44
    %s47 = sadd.s32 %s46, 1
    %p50 = scmp.eq.s32.totalorder %s12, 1
    %p51 = scmp.ne.s32.totalorder %s46, %s48
    %p52 = scmp.eq.s32.totalorder %s12, 0
    %p53 = por %p51, %p52
    %p54 = scmp.ne.s32.totalorder %s46, %s48
    %p55 = scmp.eq.s32.totalorder %s17, 1
    %p56 = por %p54, %p55
    %p57 = scmp.ne.s32.totalorder %s48, %s49
    %p58 = scmp.eq.s32.totalorder %s17, 0
    %p59 = por %p57, %p58
    %p60 = scmp.ne.s32.totalorder %s48, %s49
    %p61 = scmp.eq.s32.totalorder %s18, 1
    %p62 = por %p60, %p61
    %p64 = scmp.ne.s32.totalorder %s49, %s63
    %p65 = scmp.eq.s32.totalorder %s18, 0
    %p66 = por %p64, %p65
    %s68 = sadd.s32 %s67, 1
    %p71 = scmp.eq.s32.totalorder %s12, 1
    %p72 = scmp.ne.s32.totalorder %s67, %s69
    %p73 = scmp.eq.s32.totalorder %s12, 0
    %p74 = por %p72, %p73
    %p75 = scmp.ne.s32.totalorder %s67, %s69
    %p76 = scmp.eq.s32.totalorder %s17, 1
    %p77 = por %p75, %p76
    %p78 = scmp.ne.s32.totalorder %s69, %s70
    %p79 = scmp.eq.s32.totalorder %s17, 0
    %p80 = por %p78, %p79
    %p81 = scmp.ne.s32.totalorder %s69, %s70
    %p82 = scmp.eq.s32.totalorder %s18, 1
    %p83 = por %p81, %p82
    %p85 = scmp.ne.s32.totalorder %s70, %s84
    %p86 = scmp.eq.s32.totalorder %s18, 0
    %p87 = por %p85, %p86
    %s89 = sadd.s32 %s88, 1
    %p92 = scmp.eq.s32.totalorder %s12, 1
    %p93 = scmp.ne.s32.totalorder %s88, %s90
    %p94 = scmp.eq.s32.totalorder %s12, 0
    %p95 = por %p93, %p94
    %p96 = scmp.ne.s32.totalorder %s88, %s90
    %p97 = scmp.eq.s32.totalorder %s17, 1
    %p98 = por %p96, %p97
    %p99 = scmp.ne.s32.totalorder %s90, %s91
    %p100 = scmp.eq.s32.totalorder %s17, 0
    %p101 = por %p99, %p100
    %p102 = scmp.ne.s32.totalorder %s90, %s91
    %p103 = scmp.eq.s32.totalorder %s18, 1
    %p104 = por %p102, %p103
    %p106 = scmp.ne.s32.totalorder %s91, %s105
    %p107 = scmp.eq.s32.totalorder %s18, 0
    %p108 = por %p106, %p107
    %s109 = ssub.s32 %s12, %s19
    %p110 = scmp.eq.s32.totalorder %s109, 0
    %s112 = sadd.s32 %s111, 1
    %s113 = scalar_select %p110, %s111, %s112
    %p116 = pneg %p110
    %p117 = scmp.eq.s32.totalorder %s12, 1
    %p118 = por %p116, %p117
    %p119 = scmp.ne.s32.totalorder %s111, %s114
    %p120 = scmp.eq.s32.totalorder %s12, 0
    %p121 = por %p119, %p120
    %p122 = scmp.ne.s32.totalorder %s111, %s114
    %p123 = scmp.eq.s32.totalorder %s17, 1
    %p124 = por %p122, %p123
    %p125 = scmp.ne.s32.totalorder %s114, %s115
    %p126 = scmp.eq.s32.totalorder %s17, 0
    %p127 = por %p125, %p126
    %p128 = scmp.ne.s32.totalorder %s114, %s115
    %p129 = scmp.eq.s32.totalorder %s18, 1
    %p130 = por %p128, %p129
    %p132 = scmp.ne.s32.totalorder %s115, %s131
    %p133 = scmp.eq.s32.totalorder %s18, 0
    %p134 = por %p132, %p133
    %s135 = ssub.s32 %s12, %s19
    %p136 = scmp.eq.s32.totalorder %s135, 0
    %s138 = sadd.s32 %s137, 1
    %s139 = scalar_select %p136, %s137, %s138
    %p142 = pneg %p136
    %p143 = scmp.eq.s32.totalorder %s12, 1
    %p144 = por %p142, %p143
    %p145 = scmp.ne.s32.totalorder %s137, %s140
    %p146 = scmp.eq.s32.totalorder %s12, 0
    %p147 = por %p145, %p146
    %p148 = scmp.ne.s32.totalorder %s137, %s140
    %p149 = scmp.eq.s32.totalorder %s17, 1
    %p150 = por %p148, %p149
    %p151 = scmp.ne.s32.totalorder %s140, %s141
    %p152 = scmp.eq.s32.totalorder %s17, 0
    %p153 = por %p151, %p152
    %p154 = scmp.ne.s32.totalorder %s140, %s141
    %p155 = scmp.eq.s32.totalorder %s18, 1
    %p156 = por %p154, %p155
    %p158 = scmp.ne.s32.totalorder %s141, %s157
    %p159 = scmp.eq.s32.totalorder %s18, 0
    %p160 = por %p158, %p159
    %p161 = scmp.le.s32.totalorder 1, %s12
    %p162 = scmp.lt.s32.totalorder %s12, 3
    %p163 = pnand %p161, %p162
    %p164 = pneg %p163
    // Predicated region
    $region9: #{residual_block.4} parent=5 // pred_check
      _
    $region10: #{residual_block.4} parent=5 // pred_check_branch
      %166 = sbr.rel (%p163) target = $region12
    $region11: #{residual_block.4} parent=5 // pred_region
      %s167 = ssub.s32 %s12, 1
      // Predicated region
      $region13: #{residual_block.4} parent=11 // pred_check
        %p168 = pneg %p59
      $region14: #{residual_block.4} parent=11 // pred_check_branch
        %170 = sbr.rel (%p168) target = $region16
      $region15: #{residual_block.4} parent=11 // pred_region
        _
      $region16: #{residual_block.4} parent=11 // pred_fallthru
        _
      // Predicated region
      $region17: #{residual_block.4} parent=11 // pred_check
        %p171 = pneg %p80
      $region18: #{residual_block.4} parent=11 // pred_check_branch
        %173 = sbr.rel (%p171) target = $region20
      $region19: #{residual_block.4} parent=11 // pred_region
        _
      $region20: #{residual_block.4} parent=11 // pred_fallthru
        _
      // Predicated region
      $region21: #{residual_block.4} parent=11 // pred_check
        %p174 = pneg %p101
      $region22: #{residual_block.4} parent=11 // pred_check_branch
        %176 = sbr.rel (%p174) target = $region24
      $region23: #{residual_block.4} parent=11 // pred_region
        _
      $region24: #{residual_block.4} parent=11 // pred_fallthru
        _
    $region12: #{residual_block.4} parent=5 // pred_fallthru
      _
    %p177 = scmp.lt.s32.totalorder %s12, 2
    // Predicated region
    $region25: #{residual_block.4} parent=5 // pred_check
      %p178 = pneg %p177
    $region26: #{residual_block.4} parent=5 // pred_check_branch
      %180 = sbr.rel (%p178) target = $region28
    $region27: #{residual_block.4} parent=5 // pred_region
      // Predicated region
      $region29: #{residual_block.4} parent=27 // pred_check
        %p181 = pneg %p32
      $region30: #{residual_block.4} parent=27 // pred_check_branch
        %183 = sbr.rel (%p181) target = $region32
      $region31: #{residual_block.4} parent=27 // pred_region
        %p184 = scmp.lt.s32.totalorder %s12, 1
        %s185 = scalar_select %p184, %s12, 1
        %s186 = smul.addr %s185, 32
        %s187 = smul.addr %s186, 4
        %s188 = scalar_lea.vmem %s0, %s187
      $region32: #{residual_block.4} parent=27 // pred_fallthru
        _
    $region28: #{residual_block.4} parent=5 // pred_fallthru
      _
    %p189 = scmp.le.s32.totalorder 1, %s12
    %p190 = scmp.lt.s32.totalorder %s12, 3
    %p191 = pnand %p189, %p190
    %p192 = pneg %p191
    // Predicated region
    $region33: #{residual_block.4} parent=5 // pred_check
      _
    $region34: #{residual_block.4} parent=5 // pred_check_branch
      %194 = sbr.rel (%p191) target = $region36
    $region35: #{residual_block.4} parent=5 // pred_region
      %s195 = ssub.s32 %s12, 1
      %p196 = scmp.lt.s32.totalorder %s17, 1
      %s197 = scalar_select %p196, %s17, 1
      %s198 = smul.addr %s197, 32
      %s199 = smul.addr %s198, 4
      %s200 = scalar_lea.vmem %s0, %s199
      %p201 = pneg %p38
      %p202 = pneg %p35
      %p203 = pneg %p59
      %p204 = pneg %p56
      %p205 = pneg %p80
      %p206 = pneg %p77
      %p207 = pneg %p101
      %p208 = pneg %p98
      %p209 = pneg %p127
      %p210 = pneg %p124
      %p211 = scmp.lt.s32.totalorder %s17, 1
      %s212 = scalar_select %p211, %s17, 1
      %s213 = smul.addr %s212, 32
      %s214 = smul.addr %s213, 4
      %s215 = scalar_lea.vmem %s4, %s214
      %p216 = pneg %p153
      %p217 = pneg %p150
      %p218 = scmp.lt.s32.totalorder %s17, 1
      %s219 = scalar_select %p218, %s17, 1
      %s220 = smul.addr %s219, 2
      %s221 = scalar_lea.vmem %s5, %s220
      %p222 = scmp.lt.s32.totalorder %s17, 1
      %s223 = scalar_select %p222, %s17, 1
      %s224 = smul.addr %s223, 32
      %s225 = smul.addr %s224, 4
      %s226 = scalar_lea.vmem %s0, %s225
      %p227 = scmp.lt.s32.totalorder %s17, 1
      %s228 = scalar_select %p227, %s17, 1
      %s229 = smul.addr %s228, 32
      %s230 = smul.addr %s229, 4
      %s231 = scalar_lea.vmem %s4, %s230
      %p232 = scmp.lt.s32.totalorder %s17, 1
      %s233 = scalar_select %p232, %s17, 1
      %s234 = smul.addr %s233, 2
      %s235 = scalar_lea.vmem %s5, %s234
      %v237 = vld [vmem:[%s226] sm:$0xf]
      %v238 = vld [vmem:[%s226 + $0x4] sm:$0xf]
      %v239 = vld [vmem:[%s226 + $0x8] sm:$0xf]
      %v240 = vld [vmem:[%s226 + $0xc] sm:$0xf]
      %v241 = vld [vmem:[%s226 + $0x10] sm:$0xf]
      %v242 = vld [vmem:[%s226 + $0x14] sm:$0xf]
      %v243 = vld [vmem:[%s226 + $0x18] sm:$0xf]
      %v244 = vld [vmem:[%s226 + $0x1c] sm:$0xf]
      %v245 = vld [vmem:[%s226 + $0x20] sm:$0xf]
      %v246 = vld [vmem:[%s226 + $0x24] sm:$0xf]
      %v247 = vld [vmem:[%s226 + $0x28] sm:$0xf]
      %v248 = vld [vmem:[%s226 + $0x2c] sm:$0xf]
      %v249 = vld [vmem:[%s226 + $0x30] sm:$0xf]
      %v250 = vld [vmem:[%s226 + $0x34] sm:$0xf]
      %v251 = vld [vmem:[%s226 + $0x38] sm:$0xf]
      %v252 = vld [vmem:[%s226 + $0x3c] sm:$0xf]
      %v253 = vld [vmem:[%s226 + $0x40] sm:$0xf]
      %v254 = vld [vmem:[%s226 + $0x44] sm:$0xf]
      %v255 = vld [vmem:[%s226 + $0x48] sm:$0xf]
      %v256 = vld [vmem:[%s226 + $0x4c] sm:$0xf]
      %v257 = vld [vmem:[%s226 + $0x50] sm:$0xf]
      %v258 = vld [vmem:[%s226 + $0x54] sm:$0xf]
      %v259 = vld [vmem:[%s226 + $0x58] sm:$0xf]
      %v260 = vld [vmem:[%s226 + $0x5c] sm:$0xf]
      %v261 = vld [vmem:[%s226 + $0x60] sm:$0xf]
      %v262 = vld [vmem:[%s226 + $0x64] sm:$0xf]
      %v263 = vld [vmem:[%s226 + $0x68] sm:$0xf]
      %v264 = vld [vmem:[%s226 + $0x6c] sm:$0xf]
      %v265 = vld [vmem:[%s226 + $0x70] sm:$0xf]
      %v266 = vld [vmem:[%s226 + $0x74] sm:$0xf]
      %v267 = vld [vmem:[%s226 + $0x78] sm:$0xf]
      %v268 = vld [vmem:[%s226 + $0x7c] sm:$0xf]
      %v269 = vunpack.c.l.bf16 %v237
      %v270 = vunpack.c.l.bf16 %v238
      %v271 = vunpack.c.l.bf16 %v239
      %v272 = vunpack.c.l.bf16 %v240
      %v273 = vunpack.c.l.bf16 %v241
      %v274 = vunpack.c.l.bf16 %v242
      %v275 = vunpack.c.l.bf16 %v243
      %v276 = vunpack.c.l.bf16 %v244
      %v277 = vunpack.c.l.bf16 %v245
      %v278 = vunpack.c.l.bf16 %v246
      %v279 = vunpack.c.l.bf16 %v247
      %v280 = vunpack.c.l.bf16 %v248
      %v281 = vunpack.c.l.bf16 %v249
      %v282 = vunpack.c.l.bf16 %v250
      %v283 = vunpack.c.l.bf16 %v251
      %v284 = vunpack.c.l.bf16 %v252
      %v285 = vunpack.c.l.bf16 %v253
      %v286 = vunpack.c.l.bf16 %v254
      %v287 = vunpack.c.l.bf16 %v255
      %v288 = vunpack.c.l.bf16 %v256
      %v289 = vunpack.c.l.bf16 %v257
      %v290 = vunpack.c.l.bf16 %v258
      %v291 = vunpack.c.l.bf16 %v259
      %v292 = vunpack.c.l.bf16 %v260
      %v293 = vunpack.c.l.bf16 %v261
      %v294 = vunpack.c.l.bf16 %v262
      %v295 = vunpack.c.l.bf16 %v263
      %v296 = vunpack.c.l.bf16 %v264
      %v297 = vunpack.c.l.bf16 %v265
      %v298 = vunpack.c.l.bf16 %v266
      %v299 = vunpack.c.l.bf16 %v267
      %v300 = vunpack.c.l.bf16 %v268
      %v301 = vld [vmem:[%s1] sm:$0x1]
      %v303 = vlaneseq
      %v304 = vshrl.u32 %v303, 7
      %v305 = vsub.s32 0, %v304
      %v306 = vrot.slane %v301, %v305
      %v308 = vmul.f32 %v269, %v306
      %v309 = vmul.f32 %v270, %v306
      %v310 = vmul.f32 %v271, %v306
      %v311 = vmul.f32 %v272, %v306
      %v312 = vmul.f32 %v273, %v306
      %v313 = vmul.f32 %v274, %v306
      %v314 = vmul.f32 %v275, %v306
      %v315 = vmul.f32 %v276, %v306
      %v316 = vmul.f32 %v277, %v306
      %v317 = vmul.f32 %v278, %v306
      %v318 = vmul.f32 %v279, %v306
      %v319 = vmul.f32 %v280, %v306
      %v320 = vmul.f32 %v281, %v306
      %v321 = vmul.f32 %v282, %v306
      %v322 = vmul.f32 %v283, %v306
      %v323 = vmul.f32 %v284, %v306
      %v324 = vmul.f32 %v285, %v306
      %v325 = vmul.f32 %v286, %v306
      %v326 = vmul.f32 %v287, %v306
      %v327 = vmul.f32 %v288, %v306
      %v328 = vmul.f32 %v289, %v306
      %v329 = vmul.f32 %v290, %v306
      %v330 = vmul.f32 %v291, %v306
      %v331 = vmul.f32 %v292, %v306
      %v332 = vmul.f32 %v293, %v306
      %v333 = vmul.f32 %v294, %v306
      %v334 = vmul.f32 %v295, %v306
      %v335 = vmul.f32 %v296, %v306
      %v336 = vmul.f32 %v297, %v306
      %v337 = vmul.f32 %v298, %v306
      %v338 = vmul.f32 %v299, %v306
      %v339 = vmul.f32 %v300, %v306
      %v340 = vld [vmem:[%s2] sm:$0x1]
      %v342 = vlaneseq
      %v343 = vshrl.u32 %v342, 7
      %v344 = vsub.s32 0, %v343
      %v345 = vrot.slane %v340, %v344
      %v347 = vadd.f32 %v308, %v345
      %v348 = vadd.f32 %v309, %v345
      %v349 = vadd.f32 %v310, %v345
      %v350 = vadd.f32 %v311, %v345
      %v351 = vadd.f32 %v312, %v345
      %v352 = vadd.f32 %v313, %v345
      %v353 = vadd.f32 %v314, %v345
      %v354 = vadd.f32 %v315, %v345
      %v355 = vadd.f32 %v316, %v345
      %v356 = vadd.f32 %v317, %v345
      %v357 = vadd.f32 %v318, %v345
      %v358 = vadd.f32 %v319, %v345
      %v359 = vadd.f32 %v320, %v345
      %v360 = vadd.f32 %v321, %v345
      %v361 = vadd.f32 %v322, %v345
      %v362 = vadd.f32 %v323, %v345
      %v363 = vadd.f32 %v324, %v345
      %v364 = vadd.f32 %v325, %v345
      %v365 = vadd.f32 %v326, %v345
      %v366 = vadd.f32 %v327, %v345
      %v367 = vadd.f32 %v328, %v345
      %v368 = vadd.f32 %v329, %v345
      %v369 = vadd.f32 %v330, %v345
      %v370 = vadd.f32 %v331, %v345
      %v371 = vadd.f32 %v332, %v345
      %v372 = vadd.f32 %v333, %v345
      %v373 = vadd.f32 %v334, %v345
      %v374 = vadd.f32 %v335, %v345
      %v375 = vadd.f32 %v336, %v345
      %v376 = vadd.f32 %v337, %v345
      %v377 = vadd.f32 %v338, %v345
      %v378 = vadd.f32 %v339, %v345
      %v379 = vmax.f32 %v347, 0.0
      %v380 = vmax.f32 %v348, 0.0
      %v381 = vmax.f32 %v349, 0.0
      %v382 = vmax.f32 %v350, 0.0
      %v383 = vmax.f32 %v351, 0.0
      %v384 = vmax.f32 %v352, 0.0
      %v385 = vmax.f32 %v353, 0.0
      %v386 = vmax.f32 %v354, 0.0
      %v387 = vmax.f32 %v355, 0.0
      %v388 = vmax.f32 %v356, 0.0
      %v389 = vmax.f32 %v357, 0.0
      %v390 = vmax.f32 %v358, 0.0
      %v391 = vmax.f32 %v359, 0.0
      %v392 = vmax.f32 %v360, 0.0
      %v393 = vmax.f32 %v361, 0.0
      %v394 = vmax.f32 %v362, 0.0
      %v395 = vmax.f32 %v363, 0.0
      %v396 = vmax.f32 %v364, 0.0
      %v397 = vmax.f32 %v365, 0.0
      %v398 = vmax.f32 %v366, 0.0
      %v399 = vmax.f32 %v367, 0.0
      %v400 = vmax.f32 %v368, 0.0
      %v401 = vmax.f32 %v369, 0.0
      %v402 = vmax.f32 %v370, 0.0
      %v403 = vmax.f32 %v371, 0.0
      %v404 = vmax.f32 %v372, 0.0
      %v405 = vmax.f32 %v373, 0.0
      %v406 = vmax.f32 %v374, 0.0
      %v407 = vmax.f32 %v375, 0.0
      %v408 = vmax.f32 %v376, 0.0
      %v409 = vmax.f32 %v377, 0.0
      %v410 = vmax.f32 %v378, 0.0
      %411 = vst [vmem:[#allocation2] sm:$0xf] 0
      %412 = vst [vmem:[#allocation2 + $0x4] sm:$0xf] 0
      %413 = vst [vmem:[#allocation2 + $0x8] sm:$0x1] 0
      %414 = vst [vmem:[#allocation2 + $0xc] sm:$0xf] 0
      %415 = vst [vmem:[#allocation2 + $0x10] sm:$0xf] 0
      %416 = vst [vmem:[#allocation2 + $0x14] sm:$0x1] 0
      %417 = vst [vmem:[#allocation2 + $0x18] sm:$0xf] 0
      %418 = vst [vmem:[#allocation2 + $0x1c] sm:$0xf] 0
      %419 = vst [vmem:[#allocation2 + $0x20] sm:$0x1] 0
      %420 = vst [vmem:[#allocation2 + $0x24] sm:$0xf] 0
      %421 = vst [vmem:[#allocation2 + $0x28] sm:$0xf] 0
      %422 = vst [vmem:[#allocation2 + $0x2c] sm:$0x1] 0
      %423 = vst [vmem:[#allocation2 + $0x30] sm:$0xf] 0
      %424 = vst [vmem:[#allocation2 + $0x34] sm:$0xf] 0
      %425 = vst [vmem:[#allocation2 + $0x38] sm:$0x1] 0
      %426 = vst [vmem:[#allocation2 + $0x3c] sm:$0xf] 0
      %427 = vst [vmem:[#allocation2 + $0x40] sm:$0xf] 0
      %428 = vst [vmem:[#allocation2 + $0x44] sm:$0x1] 0
      %429 = vst [vmem:[#allocation2 + $0x48] sm:$0xf] 0
      %430 = vst [vmem:[#allocation2 + $0x4c] sm:$0xf] 0
      %431 = vst [vmem:[#allocation2 + $0x50] sm:$0x1] 0
      %432 = vst [vmem:[#allocation2 + $0x54] sm:$0xf] 0
      %433 = vst [vmem:[#allocation2 + $0x58] sm:$0xf] 0
      %434 = vst [vmem:[#allocation2 + $0x5c] sm:$0x1] 0
      %435 = vst [vmem:[#allocation2 + $0x60] sm:$0xf] 0
      %436 = vst [vmem:[#allocation2 + $0x64] sm:$0xf] 0
      %437 = vst [vmem:[#allocation2 + $0x68] sm:$0x1] 0
      %438 = vst [vmem:[#allocation2 + $0x6c] sm:$0xf] 0
      %439 = vst [vmem:[#allocation2 + $0x70] sm:$0xf] 0
      %440 = vst [vmem:[#allocation2 + $0x74] sm:$0x1] 0
      %441 = vst [vmem:[#allocation2 + $0x78] sm:$0xf] 0
      %442 = vst [vmem:[#allocation2 + $0x7c] sm:$0xf] 0
      %443 = vst [vmem:[#allocation2 + $0x80] sm:$0x1] 0
      %444 = vst [vmem:[#allocation2 + $0x84] sm:$0xf] 0
      %445 = vst [vmem:[#allocation2 + $0x88] sm:$0xf] 0
      %446 = vst [vmem:[#allocation2 + $0x8c] sm:$0x1] 0
      %447 = vst [vmem:[#allocation2 + $0x90] sm:$0xf] 0
      %448 = vst [vmem:[#allocation2 + $0x94] sm:$0xf] 0
      %449 = vst [vmem:[#allocation2 + $0x98] sm:$0x1] 0
      %450 = vst [vmem:[#allocation2 + $0x9c] sm:$0xf] 0
      %451 = vst [vmem:[#allocation2 + $0xa0] sm:$0xf] 0
      %452 = vst [vmem:[#allocation2 + $0xa4] sm:$0x1] 0
      %453 = vst [vmem:[#allocation2 + $0xa8] sm:$0xf] 0
      %454 = vst [vmem:[#allocation2 + $0xac] sm:$0xf] 0
      %455 = vst [vmem:[#allocation2 + $0xb0] sm:$0x1] 0
      %456 = vst [vmem:[#allocation2 + $0xb4] sm:$0xf] 0
      %457 = vst [vmem:[#allocation2 + $0xb8] sm:$0xf] 0
      %458 = vst [vmem:[#allocation2 + $0xbc] sm:$0x1] 0
      %459 = vst [vmem:[#allocation2 + $0xc0] sm:$0xf] 0
      %460 = vst [vmem:[#allocation2 + $0xc4] sm:$0xf] 0
      %461 = vst [vmem:[#allocation2 + $0xc8] sm:$0x1] 0
      %462 = vst [vmem:[#allocation2 + $0xcc] sm:$0xf] 0
      %463 = vst [vmem:[#allocation2 + $0xd0] sm:$0xf] 0
      %464 = vst [vmem:[#allocation2 + $0xd4] sm:$0x1] 0
      %v465 = vpack.c.bf16 %v380, %v379
      %v466 = vpack.c.bf16 %v382, %v381
      %v467 = vpack.c.bf16 %v384, %v383
      %v468 = vpack.c.bf16 %v386, %v385
      %v469 = vpack.c.bf16 %v388, %v387
      %v470 = vpack.c.bf16 %v390, %v389
      %v471 = vpack.c.bf16 %v392, %v391
      %v472 = vpack.c.bf16 %v394, %v393
      %v473 = vpack.c.bf16 %v396, %v395
      %v474 = vpack.c.bf16 %v398, %v397
      %v475 = vpack.c.bf16 %v400, %v399
      %v476 = vpack.c.bf16 %v402, %v401
      %v477 = vpack.c.bf16 %v404, %v403
      %v478 = vpack.c.bf16 %v406, %v405
      %v479 = vpack.c.bf16 %v408, %v407
      %v480 = vpack.c.bf16 %v410, %v409
      %v497 = vunpack.c.l.b16 %v465
      %v498 = vunpack.c.h.b16 %v465
      %v499 = vunpack.c.l.b16 %v466
      %v500 = vunpack.c.h.b16 %v466
      %v501 = vunpack.c.l.b16 %v467
      %v502 = vunpack.c.h.b16 %v467
      %v503 = vunpack.c.l.b16 %v468
      %v504 = vunpack.c.h.b16 %v468
      %v505 = vunpack.c.l.b16 %v469
      %v506 = vunpack.c.h.b16 %v469
      %v507 = vunpack.c.l.b16 %v470
      %v508 = vunpack.c.h.b16 %v470
      %v509 = vunpack.c.l.b16 %v471
      %v510 = vunpack.c.h.b16 %v471
      %v511 = vunpack.c.l.b16 %v472
      %v512 = vunpack.c.h.b16 %v472
      %v513 = vunpack.c.l.b16 %v473
      %v514 = vunpack.c.h.b16 %v473
      %v515 = vunpack.c.l.b16 %v474
      %v516 = vunpack.c.h.b16 %v474
      %v517 = vunpack.c.l.b16 %v475
      %v518 = vunpack.c.h.b16 %v475
      %v519 = vunpack.c.l.b16 %v476
      %v520 = vunpack.c.h.b16 %v476
      %v521 = vunpack.c.l.b16 %v477
      %v522 = vunpack.c.h.b16 %v477
      %v523 = vunpack.c.l.b16 %v478
      %v524 = vunpack.c.h.b16 %v478
      %v525 = vunpack.c.l.b16 %v479
      %v526 = vunpack.c.h.b16 %v479
      %v527 = vunpack.c.l.b16 %v480
      %v528 = vunpack.c.h.b16 %v480
      %v529 = vpack.c.b16 %v497, %v497
      %v530 = vpack.c.b16 %v498, %v498
      %v531 = vpack.c.b16 %v499, %v499
      %v532 = vpack.c.b16 %v500, %v500
      %v533 = vpack.c.b16 %v501, %v501
      %v534 = vpack.c.b16 %v502, %v502
      %v535 = vpack.c.b16 %v503, %v503
      %v536 = vpack.c.b16 %v504, %v504
      %v537 = vpack.c.b16 %v505, %v505
      %v538 = vpack.c.b16 %v506, %v506
      %v539 = vpack.c.b16 %v507, %v507
      %v540 = vpack.c.b16 %v508, %v508
      %v541 = vpack.c.b16 %v509, %v509
      %v542 = vpack.c.b16 %v510, %v510
      %v543 = vpack.c.b16 %v511, %v511
      %v544 = vpack.c.b16 %v512, %v512
      %v545 = vpack.c.b16 %v513, %v513
      %v546 = vpack.c.b16 %v514, %v514
      %v547 = vpack.c.b16 %v515, %v515
      %v548 = vpack.c.b16 %v516, %v516
      %v549 = vpack.c.b16 %v517, %v517
      %v550 = vpack.c.b16 %v518, %v518
      %v551 = vpack.c.b16 %v519, %v519
      %v552 = vpack.c.b16 %v520, %v520
      %v553 = vpack.c.b16 %v521, %v521
      %v554 = vpack.c.b16 %v522, %v522
      %v555 = vpack.c.b16 %v523, %v523
      %v556 = vpack.c.b16 %v524, %v524
      %v557 = vpack.c.b16 %v525, %v525
      %v558 = vpack.c.b16 %v526, %v526
      %v559 = vpack.c.b16 %v527, %v527
      %v560 = vpack.c.b16 %v528, %v528
      %vm561 = vsmask.f32 256
      %vm562 = vsmask.f32 4368
      %vm563 = vmor %vm561, %vm562
      %v565 = vshrl.u32 %v529, 16
      %v567 = vrot.slane %v565, 7
      %v568 = vshll.u32 %v529, 16
      %v570 = vor.u32 %v567, %v568
      %v571 = vrot.slane %v567, 4
      %v573 = vshrl.u32 %v530, 16
      %v575 = vrot.slane %v573, 7
      %v576 = vshll.u32 %v530, 16
      %v578 = vor.u32 %v575, %v576
      %v579 = vsel %vm563, %v571, %v578
      %v580 = vrot.slane %v575, 4
      %v582 = vshrl.u32 %v531, 16
      %v584 = vrot.slane %v582, 7
      %v585 = vshll.u32 %v531, 16
      %v587 = vor.u32 %v584, %v585
      %v588 = vrot.slane %v584, 4
      %v590 = vshrl.u32 %v532, 16
      %v592 = vrot.slane %v590, 7
      %v593 = vshll.u32 %v532, 16
      %v595 = vor.u32 %v592, %v593
      %v596 = vsel %vm563, %v588, %v595
      %v597 = vrot.slane %v592, 4
      %v599 = vshrl.u32 %v533, 16
      %v601 = vrot.slane %v599, 7
      %v602 = vshll.u32 %v533, 16
      %v604 = vor.u32 %v601, %v602
      %v605 = vrot.slane %v601, 4
      %v607 = vshrl.u32 %v534, 16
      %v609 = vrot.slane %v607, 7
      %v610 = vshll.u32 %v534, 16
      %v612 = vor.u32 %v609, %v610
      %v613 = vsel %vm563, %v605, %v612
      %v614 = vrot.slane %v609, 4
      %v616 = vshrl.u32 %v535, 16
      %v618 = vrot.slane %v616, 7
      %v619 = vshll.u32 %v535, 16
      %v621 = vor.u32 %v618, %v619
      %v622 = vrot.slane %v618, 4
      %v624 = vshrl.u32 %v536, 16
      %v626 = vrot.slane %v624, 7
      %v627 = vshll.u32 %v536, 16
      %v629 = vor.u32 %v626, %v627
      %v630 = vsel %vm563, %v622, %v629
      %v631 = vrot.slane %v626, 4
      %v633 = vshrl.u32 %v537, 16
      %v635 = vrot.slane %v633, 7
      %v636 = vshll.u32 %v537, 16
      %v638 = vor.u32 %v635, %v636
      %v639 = vrot.slane %v635, 4
      %v641 = vshrl.u32 %v538, 16
      %v643 = vrot.slane %v641, 7
      %v644 = vshll.u32 %v538, 16
      %v646 = vor.u32 %v643, %v644
      %v647 = vsel %vm563, %v639, %v646
      %v648 = vrot.slane %v643, 4
      %v650 = vshrl.u32 %v539, 16
      %v652 = vrot.slane %v650, 7
      %v653 = vshll.u32 %v539, 16
      %v655 = vor.u32 %v652, %v653
      %v656 = vrot.slane %v652, 4
      %v658 = vshrl.u32 %v540, 16
      %v660 = vrot.slane %v658, 7
      %v661 = vshll.u32 %v540, 16
      %v663 = vor.u32 %v660, %v661
      %v664 = vsel %vm563, %v656, %v663
      %v665 = vrot.slane %v660, 4
      %v667 = vshrl.u32 %v541, 16
      %v669 = vrot.slane %v667, 7
      %v670 = vshll.u32 %v541, 16
      %v672 = vor.u32 %v669, %v670
      %v673 = vrot.slane %v669, 4
      %v675 = vshrl.u32 %v542, 16
      %v677 = vrot.slane %v675, 7
      %v678 = vshll.u32 %v542, 16
      %v680 = vor.u32 %v677, %v678
      %v681 = vsel %vm563, %v673, %v680
      %v682 = vrot.slane %v677, 4
      %v684 = vshrl.u32 %v543, 16
      %v686 = vrot.slane %v684, 7
      %v687 = vshll.u32 %v543, 16
      %v689 = vor.u32 %v686, %v687
      %v690 = vrot.slane %v686, 4
      %v692 = vshrl.u32 %v544, 16
      %v694 = vrot.slane %v692, 7
      %v695 = vshll.u32 %v544, 16
      %v697 = vor.u32 %v694, %v695
      %v698 = vsel %vm563, %v690, %v697
      %v699 = vrot.slane %v694, 4
      %v701 = vshrl.u32 %v545, 16
      %v703 = vrot.slane %v701, 7
      %v704 = vshll.u32 %v545, 16
      %v706 = vor.u32 %v703, %v704
      %v707 = vrot.slane %v703, 4
      %v709 = vshrl.u32 %v546, 16
      %v711 = vrot.slane %v709, 7
      %v712 = vshll.u32 %v546, 16
      %v714 = vor.u32 %v711, %v712
      %v715 = vsel %vm563, %v707, %v714
      %v716 = vrot.slane %v711, 4
      %v718 = vshrl.u32 %v547, 16
      %v720 = vrot.slane %v718, 7
      %v721 = vshll.u32 %v547, 16
      %v723 = vor.u32 %v720, %v721
      %v724 = vrot.slane %v720, 4
      %v726 = vshrl.u32 %v548, 16
      %v728 = vrot.slane %v726, 7
      %v729 = vshll.u32 %v548, 16
      %v731 = vor.u32 %v728, %v729
      %v732 = vsel %vm563, %v724, %v731
      %v733 = vrot.slane %v728, 4
      %v735 = vshrl.u32 %v549, 16
      %v737 = vrot.slane %v735, 7
      %v738 = vshll.u32 %v549, 16
      %v740 = vor.u32 %v737, %v738
      %v741 = vrot.slane %v737, 4
      %v743 = vshrl.u32 %v550, 16
      %v745 = vrot.slane %v743, 7
      %v746 = vshll.u32 %v550, 16
      %v748 = vor.u32 %v745, %v746
      %v749 = vsel %vm563, %v741, %v748
      %v750 = vrot.slane %v745, 4
      %v752 = vshrl.u32 %v551, 16
      %v754 = vrot.slane %v752, 7
      %v755 = vshll.u32 %v551, 16
      %v757 = vor.u32 %v754, %v755
      %v758 = vrot.slane %v754, 4
      %v760 = vshrl.u32 %v552, 16
      %v762 = vrot.slane %v760, 7
      %v763 = vshll.u32 %v552, 16
      %v765 = vor.u32 %v762, %v763
      %v766 = vsel %vm563, %v758, %v765
      %v767 = vrot.slane %v762, 4
      %v769 = vshrl.u32 %v553, 16
      %v771 = vrot.slane %v769, 7
      %v772 = vshll.u32 %v553, 16
      %v774 = vor.u32 %v771, %v772
      %v775 = vrot.slane %v771, 4
      %v777 = vshrl.u32 %v554, 16
      %v779 = vrot.slane %v777, 7
      %v780 = vshll.u32 %v554, 16
      %v782 = vor.u32 %v779, %v780
      %v783 = vsel %vm563, %v775, %v782
      %v784 = vrot.slane %v779, 4
      %v786 = vshrl.u32 %v555, 16
      %v788 = vrot.slane %v786, 7
      %v789 = vshll.u32 %v555, 16
      %v791 = vor.u32 %v788, %v789
      %v792 = vrot.slane %v788, 4
      %v794 = vshrl.u32 %v556, 16
      %v796 = vrot.slane %v794, 7
      %v797 = vshll.u32 %v556, 16
      %v799 = vor.u32 %v796, %v797
      %v800 = vsel %vm563, %v792, %v799
      %v801 = vrot.slane %v796, 4
      %v803 = vshrl.u32 %v557, 16
      %v805 = vrot.slane %v803, 7
      %v806 = vshll.u32 %v557, 16
      %v808 = vor.u32 %v805, %v806
      %v809 = vrot.slane %v805, 4
      %v811 = vshrl.u32 %v558, 16
      %v813 = vrot.slane %v811, 7
      %v814 = vshll.u32 %v558, 16
      %v816 = vor.u32 %v813, %v814
      %v817 = vsel %vm563, %v809, %v816
      %v818 = vrot.slane %v813, 4
      %v820 = vshrl.u32 %v559, 16
      %v822 = vrot.slane %v820, 7
      %v823 = vshll.u32 %v559, 16
      %v825 = vor.u32 %v822, %v823
      %v826 = vrot.slane %v822, 4
      %v828 = vshrl.u32 %v560, 16
      %v830 = vrot.slane %v828, 7
      %v831 = vshll.u32 %v560, 16
      %v833 = vor.u32 %v830, %v831
      %v834 = vsel %vm563, %v826, %v833
      %v835 = vrot.slane %v830, 4
      %s884 = scalar_lea.vmem [#allocation2], 12
      %vm885 = vcmask 1043456
      %vm886 = vsmask.f32 7938
      %vm887 = vmand %vm885, %vm886
      %v888 = vld [vmem:[%s884] sm:$0xf]
      %v889 = vsel %vm887, %v570, %v888
      %890 = vst [vmem:[%s884] sm:$0xf] %v889
      %891 = vst [vmem:[%s884 + $0x4] sm:$0xf] %v579
      %vm892 = vcmask 1040384
      %vm893 = vmand %vm892, %vm561
      %v894 = vld [vmem:[%s884 + $0x8] sm:$0x1]
      %v895 = vsel %vm893, %v580, %v894
      %896 = vst [vmem:[%s884 + $0x8] sm:$0x1] %v895
      %v897 = vld [vmem:[%s884 + $0xc] sm:$0xf]
      %v898 = vsel %vm887, %v587, %v897
      %899 = vst [vmem:[%s884 + $0xc] sm:$0xf] %v898
      %900 = vst [vmem:[%s884 + $0x10] sm:$0xf] %v596
      %v901 = vld [vmem:[%s884 + $0x14] sm:$0x1]
      %v902 = vsel %vm893, %v597, %v901
      %903 = vst [vmem:[%s884 + $0x14] sm:$0x1] %v902
      %v904 = vld [vmem:[%s884 + $0x18] sm:$0xf]
      %v905 = vsel %vm887, %v604, %v904
      %906 = vst [vmem:[%s884 + $0x18] sm:$0xf] %v905
      %907 = vst [vmem:[%s884 + $0x1c] sm:$0xf] %v613
      %v908 = vld [vmem:[%s884 + $0x20] sm:$0x1]
      %v909 = vsel %vm893, %v614, %v908
      %910 = vst [vmem:[%s884 + $0x20] sm:$0x1] %v909
      %v911 = vld [vmem:[%s884 + $0x24] sm:$0xf]
      %v912 = vsel %vm887, %v621, %v911
      %913 = vst [vmem:[%s884 + $0x24] sm:$0xf] %v912
      %914 = vst [vmem:[%s884 + $0x28] sm:$0xf] %v630
      %v915 = vld [vmem:[%s884 + $0x2c] sm:$0x1]
      %v916 = vsel %vm893, %v631, %v915
      %917 = vst [vmem:[%s884 + $0x2c] sm:$0x1] %v916
      %v918 = vld [vmem:[%s884 + $0x30] sm:$0xf]
      %v919 = vsel %vm887, %v638, %v918
      %920 = vst [vmem:[%s884 + $0x30] sm:$0xf] %v919
      %921 = vst [vmem:[%s884 + $0x34] sm:$0xf] %v647
      %v922 = vld [vmem:[%s884 + $0x38] sm:$0x1]
      %v923 = vsel %vm893, %v648, %v922
      %924 = vst [vmem:[%s884 + $0x38] sm:$0x1] %v923
      %v925 = vld [vmem:[%s884 + $0x3c] sm:$0xf]
      %v926 = vsel %vm887, %v655, %v925
      %927 = vst [vmem:[%s884 + $0x3c] sm:$0xf] %v926
      %928 = vst [vmem:[%s884 + $0x40] sm:$0xf] %v664
      %v929 = vld [vmem:[%s884 + $0x44] sm:$0x1]
      %v930 = vsel %vm893, %v665, %v929
      %931 = vst [vmem:[%s884 + $0x44] sm:$0x1] %v930
      %v932 = vld [vmem:[%s884 + $0x48] sm:$0xf]
      %v933 = vsel %vm887, %v672, %v932
      %934 = vst [vmem:[%s884 + $0x48] sm:$0xf] %v933
      %935 = vst [vmem:[%s884 + $0x4c] sm:$0xf] %v681
      %v936 = vld [vmem:[%s884 + $0x50] sm:$0x1]
      %v937 = vsel %vm893, %v682, %v936
      %938 = vst [vmem:[%s884 + $0x50] sm:$0x1] %v937
      %v939 = vld [vmem:[%s884 + $0x54] sm:$0xf]
      %v940 = vsel %vm887, %v689, %v939
      %941 = vst [vmem:[%s884 + $0x54] sm:$0xf] %v940
      %942 = vst [vmem:[%s884 + $0x58] sm:$0xf] %v698
      %v943 = vld [vmem:[%s884 + $0x5c] sm:$0x1]
      %v944 = vsel %vm893, %v699, %v943
      %945 = vst [vmem:[%s884 + $0x5c] sm:$0x1] %v944
      %v946 = vld [vmem:[%s884 + $0x60] sm:$0xf]
      %v947 = vsel %vm887, %v706, %v946
      %948 = vst [vmem:[%s884 + $0x60] sm:$0xf] %v947
      %949 = vst [vmem:[%s884 + $0x64] sm:$0xf] %v715
      %v950 = vld [vmem:[%s884 + $0x68] sm:$0x1]
      %v951 = vsel %vm893, %v716, %v950
      %952 = vst [vmem:[%s884 + $0x68] sm:$0x1] %v951
      %v953 = vld [vmem:[%s884 + $0x6c] sm:$0xf]
      %v954 = vsel %vm887, %v723, %v953
      %955 = vst [vmem:[%s884 + $0x6c] sm:$0xf] %v954
      %956 = vst [vmem:[%s884 + $0x70] sm:$0xf] %v732
      %v957 = vld [vmem:[%s884 + $0x74] sm:$0x1]
      %v958 = vsel %vm893, %v733, %v957
      %959 = vst [vmem:[%s884 + $0x74] sm:$0x1] %v958
      %v960 = vld [vmem:[%s884 + $0x78] sm:$0xf]
      %v961 = vsel %vm887, %v740, %v960
      %962 = vst [vmem:[%s884 + $0x78] sm:$0xf] %v961
      %963 = vst [vmem:[%s884 + $0x7c] sm:$0xf] %v749
      %v964 = vld [vmem:[%s884 + $0x80] sm:$0x1]
      %v965 = vsel %vm893, %v750, %v964
      %966 = vst [vmem:[%s884 + $0x80] sm:$0x1] %v965
      %v967 = vld [vmem:[%s884 + $0x84] sm:$0xf]
      %v968 = vsel %vm887, %v757, %v967
      %969 = vst [vmem:[%s884 + $0x84] sm:$0xf] %v968
      %970 = vst [vmem:[%s884 + $0x88] sm:$0xf] %v766
      %v971 = vld [vmem:[%s884 + $0x8c] sm:$0x1]
      %v972 = vsel %vm893, %v767, %v971
      %973 = vst [vmem:[%s884 + $0x8c] sm:$0x1] %v972
      %v974 = vld [vmem:[%s884 + $0x90] sm:$0xf]
      %v975 = vsel %vm887, %v774, %v974
      %976 = vst [vmem:[%s884 + $0x90] sm:$0xf] %v975
      %977 = vst [vmem:[%s884 + $0x94] sm:$0xf] %v783
      %v978 = vld [vmem:[%s884 + $0x98] sm:$0x1]
      %v979 = vsel %vm893, %v784, %v978
      %980 = vst [vmem:[%s884 + $0x98] sm:$0x1] %v979
      %v981 = vld [vmem:[%s884 + $0x9c] sm:$0xf]
      %v982 = vsel %vm887, %v791, %v981
      %983 = vst [vmem:[%s884 + $0x9c] sm:$0xf] %v982
      %984 = vst [vmem:[%s884 + $0xa0] sm:$0xf] %v800
      %v985 = vld [vmem:[%s884 + $0xa4] sm:$0x1]
      %v986 = vsel %vm893, %v801, %v985
      %987 = vst [vmem:[%s884 + $0xa4] sm:$0x1] %v986
      %v988 = vld [vmem:[%s884 + $0xa8] sm:$0xf]
      %v989 = vsel %vm887, %v808, %v988
      %990 = vst [vmem:[%s884 + $0xa8] sm:$0xf] %v989
      %991 = vst [vmem:[%s884 + $0xac] sm:$0xf] %v817
      %v992 = vld [vmem:[%s884 + $0xb0] sm:$0x1]
      %v993 = vsel %vm893, %v818, %v992
      %994 = vst [vmem:[%s884 + $0xb0] sm:$0x1] %v993
      %v995 = vld [vmem:[%s884 + $0xb4] sm:$0xf]
      %v996 = vsel %vm887, %v825, %v995
      %997 = vst [vmem:[%s884 + $0xb4] sm:$0xf] %v996
      %998 = vst [vmem:[%s884 + $0xb8] sm:$0xf] %v834
      %v999 = vld [vmem:[%s884 + $0xbc] sm:$0x1]
      %v1000 = vsel %vm893, %v835, %v999
      %1001 = vst [vmem:[%s884 + $0xbc] sm:$0x1] %v1000
      %v1002 = vld [vmem:[#allocation2] sm:$0xf]
      %v1003 = vld [vmem:[#allocation2 + $0x4] sm:$0xf]
      %v1004 = vld [vmem:[#allocation2 + $0xc] sm:$0xf]
      %v1005 = vld [vmem:[#allocation2 + $0x10] sm:$0xf]
      %v1006 = vld [vmem:[#allocation2 + $0x18] sm:$0xf]
      %v1007 = vld [vmem:[#allocation2 + $0x1c] sm:$0xf]
      %v1008 = vld [vmem:[#allocation2 + $0x24] sm:$0xf]
      %v1009 = vld [vmem:[#allocation2 + $0x28] sm:$0xf]
      %v1010 = vld [vmem:[#allocation2 + $0x30] sm:$0xf]
      %v1011 = vld [vmem:[#allocation2 + $0x34] sm:$0xf]
      %v1012 = vld [vmem:[#allocation2 + $0x3c] sm:$0xf]
      %v1013 = vld [vmem:[#allocation2 + $0x40] sm:$0xf]
      %v1014 = vld [vmem:[#allocation2 + $0x48] sm:$0xf]
      %v1015 = vld [vmem:[#allocation2 + $0x4c] sm:$0xf]
      %v1016 = vld [vmem:[#allocation2 + $0x54] sm:$0xf]
      %v1017 = vld [vmem:[#allocation2 + $0x58] sm:$0xf]
      %v1018 = vld [vmem:[#allocation2 + $0x60] sm:$0xf]
      %v1019 = vld [vmem:[#allocation2 + $0x64] sm:$0xf]
      %v1020 = vld [vmem:[#allocation2 + $0x6c] sm:$0xf]
      %v1021 = vld [vmem:[#allocation2 + $0x70] sm:$0xf]
      %v1022 = vld [vmem:[#allocation2 + $0x78] sm:$0xf]
      %v1023 = vld [vmem:[#allocation2 + $0x7c] sm:$0xf]
      %v1024 = vld [vmem:[#allocation2 + $0x84] sm:$0xf]
      %v1025 = vld [vmem:[#allocation2 + $0x88] sm:$0xf]
      %v1026 = vld [vmem:[#allocation2 + $0x90] sm:$0xf]
      %v1027 = vld [vmem:[#allocation2 + $0x94] sm:$0xf]
      %v1028 = vld [vmem:[#allocation2 + $0x9c] sm:$0xf]
      %v1029 = vld [vmem:[#allocation2 + $0xa0] sm:$0xf]
      %v1030 = vld [vmem:[#allocation2 + $0xa8] sm:$0xf]
      %v1031 = vld [vmem:[#allocation2 + $0xac] sm:$0xf]
      %v1032 = vld [vmem:[#allocation2 + $0xb4] sm:$0xf]
      %v1033 = vld [vmem:[#allocation2 + $0xb8] sm:$0xf]
      %v1034 = vld [vmem:[%s3] sm:$0xf]
      %v1035 = vld [vmem:[%s3 + $0x4] sm:$0xf]
      %v1036 = vld [vmem:[%s3 + $0x8] sm:$0xf]
      %v1037 = vld [vmem:[%s3 + $0xc] sm:$0xf]
      %v1038 = vld [vmem:[%s3 + $0x10] sm:$0xf]
      %v1039 = vld [vmem:[%s3 + $0x14] sm:$0xf]
      %v1040 = vld [vmem:[%s3 + $0x18] sm:$0xf]
      %v1041 = vld [vmem:[%s3 + $0x1c] sm:$0xf]
      %v1042 = vld [vmem:[%s3 + $0x20] sm:$0xf]
      %v1043 = vld [vmem:[%s3 + $0x24] sm:$0xf]
      %v1044 = vld [vmem:[%s3 + $0x28] sm:$0xf]
      %v1045 = vld [vmem:[%s3 + $0x2c] sm:$0xf]
      %v1046 = vld [vmem:[%s3 + $0x30] sm:$0xf]
      %v1047 = vld [vmem:[%s3 + $0x34] sm:$0xf]
      %v1048 = vld [vmem:[%s3 + $0x38] sm:$0xf]
      %v1049 = vld [vmem:[%s3 + $0x3c] sm:$0xf]
      %v1050 = vld [vmem:[#allocation2 + $0x8] sm:$0x1]
      %v1051 = vld [vmem:[#allocation2 + $0x14] sm:$0x1]
      %v1052 = vld [vmem:[#allocation2 + $0x20] sm:$0x1]
      %v1053 = vld [vmem:[#allocation2 + $0x2c] sm:$0x1]
      %v1054 = vld [vmem:[#allocation2 + $0x38] sm:$0x1]
      %v1055 = vld [vmem:[#allocation2 + $0x44] sm:$0x1]
      %v1056 = vld [vmem:[#allocation2 + $0x50] sm:$0x1]
      %v1057 = vld [vmem:[#allocation2 + $0x5c] sm:$0x1]
      %v1058 = vld [vmem:[#allocation2 + $0x68] sm:$0x1]
      %v1059 = vld [vmem:[#allocation2 + $0x74] sm:$0x1]
      %v1060 = vld [vmem:[#allocation2 + $0x80] sm:$0x1]
      %v1061 = vld [vmem:[#allocation2 + $0x8c] sm:$0x1]
      %v1062 = vld [vmem:[#allocation2 + $0x98] sm:$0x1]
      %v1063 = vld [vmem:[#allocation2 + $0xa4] sm:$0x1]
      %v1064 = vld [vmem:[#allocation2 + $0xb0] sm:$0x1]
      %v1065 = vld [vmem:[#allocation2 + $0xbc] sm:$0x1]
      %vm1066 = vsmask.f32 3328
      %vm1067 = vsmask.f32 7440
      %vm1068 = vmor %vm1066, %vm1067
      %v1070 = vshrl.u32 %v1002, 16
      %v1072 = vrot.slane %v1070, 4
      %v1073 = vshll.u32 %v1002, 16
      %v1075 = vrot.slane %v1073, 5
      %v1076 = vor.u32 %v1072, %v1075
      %v1077 = vrot.slane %v1076, 4
      %v1079 = vshll.u32 %v1003, 16
      %v1081 = vrot.slane %v1079, 5
      %v1082 = vsel %vm1068, %v1077, %v1081
      %v1083 = vshrl.u32 %v1003, 16
      %v1085 = vrot.slane %v1083, 4
      %v1086 = vor.u32 %v1085, %v1081
      %v1087 = vrot.slane %v1086, 4
      %v1089 = vshll.u32 %v1050, 16
      %v1091 = vrot.slane %v1089, 5
      %v1092 = vsel %vm1068, %v1087, %v1091
      %v1094 = vshrl.u32 %v1004, 16
      %v1096 = vrot.slane %v1094, 4
      %v1097 = vshll.u32 %v1004, 16
      %v1099 = vrot.slane %v1097, 5
      %v1100 = vor.u32 %v1096, %v1099
      %v1101 = vrot.slane %v1100, 4
      %v1103 = vshll.u32 %v1005, 16
      %v1105 = vrot.slane %v1103, 5
      %v1106 = vsel %vm1068, %v1101, %v1105
      %v1107 = vshrl.u32 %v1005, 16
      %v1109 = vrot.slane %v1107, 4
      %v1110 = vor.u32 %v1109, %v1105
      %v1111 = vrot.slane %v1110, 4
      %v1113 = vshll.u32 %v1051, 16
      %v1115 = vrot.slane %v1113, 5
      %v1116 = vsel %vm1068, %v1111, %v1115
      %v1118 = vshrl.u32 %v1006, 16
      %v1120 = vrot.slane %v1118, 4
      %v1121 = vshll.u32 %v1006, 16
      %v1123 = vrot.slane %v1121, 5
      %v1124 = vor.u32 %v1120, %v1123
      %v1125 = vrot.slane %v1124, 4
      %v1127 = vshll.u32 %v1007, 16
      %v1129 = vrot.slane %v1127, 5
      %v1130 = vsel %vm1068, %v1125, %v1129
      %v1131 = vshrl.u32 %v1007, 16
      %v1133 = vrot.slane %v1131, 4
      %v1134 = vor.u32 %v1133, %v1129
      %v1135 = vrot.slane %v1134, 4
      %v1137 = vshll.u32 %v1052, 16
      %v1139 = vrot.slane %v1137, 5
      %v1140 = vsel %vm1068, %v1135, %v1139
      %v1142 = vshrl.u32 %v1008, 16
      %v1144 = vrot.slane %v1142, 4
      %v1145 = vshll.u32 %v1008, 16
      %v1147 = vrot.slane %v1145, 5
      %v1148 = vor.u32 %v1144, %v1147
      %v1149 = vrot.slane %v1148, 4
      %v1151 = vshll.u32 %v1009, 16
      %v1153 = vrot.slane %v1151, 5
      %v1154 = vsel %vm1068, %v1149, %v1153
      %v1155 = vshrl.u32 %v1009, 16
      %v1157 = vrot.slane %v1155, 4
      %v1158 = vor.u32 %v1157, %v1153
      %v1159 = vrot.slane %v1158, 4
      %v1161 = vshll.u32 %v1053, 16
      %v1163 = vrot.slane %v1161, 5
      %v1164 = vsel %vm1068, %v1159, %v1163
      %v1166 = vshrl.u32 %v1010, 16
      %v1168 = vrot.slane %v1166, 4
      %v1169 = vshll.u32 %v1010, 16
      %v1171 = vrot.slane %v1169, 5
      %v1172 = vor.u32 %v1168, %v1171
      %v1173 = vrot.slane %v1172, 4
      %v1175 = vshll.u32 %v1011, 16
      %v1177 = vrot.slane %v1175, 5
      %v1178 = vsel %vm1068, %v1173, %v1177
      %v1179 = vshrl.u32 %v1011, 16
      %v1181 = vrot.slane %v1179, 4
      %v1182 = vor.u32 %v1181, %v1177
      %v1183 = vrot.slane %v1182, 4
      %v1185 = vshll.u32 %v1054, 16
      %v1187 = vrot.slane %v1185, 5
      %v1188 = vsel %vm1068, %v1183, %v1187
      %v1190 = vshrl.u32 %v1012, 16
      %v1192 = vrot.slane %v1190, 4
      %v1193 = vshll.u32 %v1012, 16
      %v1195 = vrot.slane %v1193, 5
      %v1196 = vor.u32 %v1192, %v1195
      %v1197 = vrot.slane %v1196, 4
      %v1199 = vshll.u32 %v1013, 16
      %v1201 = vrot.slane %v1199, 5
      %v1202 = vsel %vm1068, %v1197, %v1201
      %v1203 = vshrl.u32 %v1013, 16
      %v1205 = vrot.slane %v1203, 4
      %v1206 = vor.u32 %v1205, %v1201
      %v1207 = vrot.slane %v1206, 4
      %v1209 = vshll.u32 %v1055, 16
      %v1211 = vrot.slane %v1209, 5
      %v1212 = vsel %vm1068, %v1207, %v1211
      %v1214 = vshrl.u32 %v1014, 16
      %v1216 = vrot.slane %v1214, 4
      %v1217 = vshll.u32 %v1014, 16
      %v1219 = vrot.slane %v1217, 5
      %v1220 = vor.u32 %v1216, %v1219
      %v1221 = vrot.slane %v1220, 4
      %v1223 = vshll.u32 %v1015, 16
      %v1225 = vrot.slane %v1223, 5
      %v1226 = vsel %vm1068, %v1221, %v1225
      %v1227 = vshrl.u32 %v1015, 16
      %v1229 = vrot.slane %v1227, 4
      %v1230 = vor.u32 %v1229, %v1225
      %v1231 = vrot.slane %v1230, 4
      %v1233 = vshll.u32 %v1056, 16
      %v1235 = vrot.slane %v1233, 5
      %v1236 = vsel %vm1068, %v1231, %v1235
      %v1238 = vshrl.u32 %v1016, 16
      %v1240 = vrot.slane %v1238, 4
      %v1241 = vshll.u32 %v1016, 16
      %v1243 = vrot.slane %v1241, 5
      %v1244 = vor.u32 %v1240, %v1243
      %v1245 = vrot.slane %v1244, 4
      %v1247 = vshll.u32 %v1017, 16
      %v1249 = vrot.slane %v1247, 5
      %v1250 = vsel %vm1068, %v1245, %v1249
      %v1251 = vshrl.u32 %v1017, 16
      %v1253 = vrot.slane %v1251, 4
      %v1254 = vor.u32 %v1253, %v1249
      %v1255 = vrot.slane %v1254, 4
      %v1257 = vshll.u32 %v1057, 16
      %v1259 = vrot.slane %v1257, 5
      %v1260 = vsel %vm1068, %v1255, %v1259
      %v1262 = vshrl.u32 %v1018, 16
      %v1264 = vrot.slane %v1262, 4
      %v1265 = vshll.u32 %v1018, 16
      %v1267 = vrot.slane %v1265, 5
      %v1268 = vor.u32 %v1264, %v1267
      %v1269 = vrot.slane %v1268, 4
      %v1271 = vshll.u32 %v1019, 16
      %v1273 = vrot.slane %v1271, 5
      %v1274 = vsel %vm1068, %v1269, %v1273
      %v1275 = vshrl.u32 %v1019, 16
      %v1277 = vrot.slane %v1275, 4
      %v1278 = vor.u32 %v1277, %v1273
      %v1279 = vrot.slane %v1278, 4
      %v1281 = vshll.u32 %v1058, 16
      %v1283 = vrot.slane %v1281, 5
      %v1284 = vsel %vm1068, %v1279, %v1283
      %v1286 = vshrl.u32 %v1020, 16
      %v1288 = vrot.slane %v1286, 4
      %v1289 = vshll.u32 %v1020, 16
      %v1291 = vrot.slane %v1289, 5
      %v1292 = vor.u32 %v1288, %v1291
      %v1293 = vrot.slane %v1292, 4
      %v1295 = vshll.u32 %v1021, 16
      %v1297 = vrot.slane %v1295, 5
      %v1298 = vsel %vm1068, %v1293, %v1297
      %v1299 = vshrl.u32 %v1021, 16
      %v1301 = vrot.slane %v1299, 4
      %v1302 = vor.u32 %v1301, %v1297
      %v1303 = vrot.slane %v1302, 4
      %v1305 = vshll.u32 %v1059, 16
      %v1307 = vrot.slane %v1305, 5
      %v1308 = vsel %vm1068, %v1303, %v1307
      %v1310 = vshrl.u32 %v1022, 16
      %v1312 = vrot.slane %v1310, 4
      %v1313 = vshll.u32 %v1022, 16
      %v1315 = vrot.slane %v1313, 5
      %v1316 = vor.u32 %v1312, %v1315
      %v1317 = vrot.slane %v1316, 4
      %v1319 = vshll.u32 %v1023, 16
      %v1321 = vrot.slane %v1319, 5
      %v1322 = vsel %vm1068, %v1317, %v1321
      %v1323 = vshrl.u32 %v1023, 16
      %v1325 = vrot.slane %v1323, 4
      %v1326 = vor.u32 %v1325, %v1321
      %v1327 = vrot.slane %v1326, 4
      %v1329 = vshll.u32 %v1060, 16
      %v1331 = vrot.slane %v1329, 5
      %v1332 = vsel %vm1068, %v1327, %v1331
      %v1334 = vshrl.u32 %v1024, 16
      %v1336 = vrot.slane %v1334, 4
      %v1337 = vshll.u32 %v1024, 16
      %v1339 = vrot.slane %v1337, 5
      %v1340 = vor.u32 %v1336, %v1339
      %v1341 = vrot.slane %v1340, 4
      %v1343 = vshll.u32 %v1025, 16
      %v1345 = vrot.slane %v1343, 5
      %v1346 = vsel %vm1068, %v1341, %v1345
      %v1347 = vshrl.u32 %v1025, 16
      %v1349 = vrot.slane %v1347, 4
      %v1350 = vor.u32 %v1349, %v1345
      %v1351 = vrot.slane %v1350, 4
      %v1353 = vshll.u32 %v1061, 16
      %v1355 = vrot.slane %v1353, 5
      %v1356 = vsel %vm1068, %v1351, %v1355
      %v1358 = vshrl.u32 %v1026, 16
      %v1360 = vrot.slane %v1358, 4
      %v1361 = vshll.u32 %v1026, 16
      %v1363 = vrot.slane %v1361, 5
      %v1364 = vor.u32 %v1360, %v1363
      %v1365 = vrot.slane %v1364, 4
      %v1367 = vshll.u32 %v1027, 16
      %v1369 = vrot.slane %v1367, 5
      %v1370 = vsel %vm1068, %v1365, %v1369
      %v1371 = vshrl.u32 %v1027, 16
      %v1373 = vrot.slane %v1371, 4
      %v1374 = vor.u32 %v1373, %v1369
      %v1375 = vrot.slane %v1374, 4
      %v1377 = vshll.u32 %v1062, 16
      %v1379 = vrot.slane %v1377, 5
      %v1380 = vsel %vm1068, %v1375, %v1379
      %v1382 = vshrl.u32 %v1028, 16
      %v1384 = vrot.slane %v1382, 4
      %v1385 = vshll.u32 %v1028, 16
      %v1387 = vrot.slane %v1385, 5
      %v1388 = vor.u32 %v1384, %v1387
      %v1389 = vrot.slane %v1388, 4
      %v1391 = vshll.u32 %v1029, 16
      %v1393 = vrot.slane %v1391, 5
      %v1394 = vsel %vm1068, %v1389, %v1393
      %v1395 = vshrl.u32 %v1029, 16
      %v1397 = vrot.slane %v1395, 4
      %v1398 = vor.u32 %v1397, %v1393
      %v1399 = vrot.slane %v1398, 4
      %v1401 = vshll.u32 %v1063, 16
      %v1403 = vrot.slane %v1401, 5
      %v1404 = vsel %vm1068, %v1399, %v1403
      %v1406 = vshrl.u32 %v1030, 16
      %v1408 = vrot.slane %v1406, 4
      %v1409 = vshll.u32 %v1030, 16
      %v1411 = vrot.slane %v1409, 5
      %v1412 = vor.u32 %v1408, %v1411
      %v1413 = vrot.slane %v1412, 4
      %v1415 = vshll.u32 %v1031, 16
      %v1417 = vrot.slane %v1415, 5
      %v1418 = vsel %vm1068, %v1413, %v1417
      %v1419 = vshrl.u32 %v1031, 16
      %v1421 = vrot.slane %v1419, 4
      %v1422 = vor.u32 %v1421, %v1417
      %v1423 = vrot.slane %v1422, 4
      %v1425 = vshll.u32 %v1064, 16
      %v1427 = vrot.slane %v1425, 5
      %v1428 = vsel %vm1068, %v1423, %v1427
      %v1430 = vshrl.u32 %v1032, 16
      %v1432 = vrot.slane %v1430, 4
      %v1433 = vshll.u32 %v1032, 16
      %v1435 = vrot.slane %v1433, 5
      %v1436 = vor.u32 %v1432, %v1435
      %v1437 = vrot.slane %v1436, 4
      %v1439 = vshll.u32 %v1033, 16
      %v1441 = vrot.slane %v1439, 5
      %v1442 = vsel %vm1068, %v1437, %v1441
      %v1443 = vshrl.u32 %v1033, 16
      %v1445 = vrot.slane %v1443, 4
      %v1446 = vor.u32 %v1445, %v1441
      %v1447 = vrot.slane %v1446, 4
      %v1449 = vshll.u32 %v1065, 16
      %v1451 = vrot.slane %v1449, 5
      %v1452 = vsel %vm1068, %v1447, %v1451
      %s1453 = scalar_lea.vmem %s3, 64
      %v1454 = vld [vmem:[%s1453] sm:$0xf]
      %v1455 = vld [vmem:[%s1453 + $0x4] sm:$0xf]
      %v1456 = vld [vmem:[%s1453 + $0x8] sm:$0xf]
      %v1457 = vld [vmem:[%s1453 + $0xc] sm:$0xf]
      %v1458 = vld [vmem:[%s1453 + $0x10] sm:$0xf]
      %v1459 = vld [vmem:[%s1453 + $0x14] sm:$0xf]
      %v1460 = vld [vmem:[%s1453 + $0x18] sm:$0xf]
      %v1461 = vld [vmem:[%s1453 + $0x1c] sm:$0xf]
      %v1462 = vld [vmem:[%s1453 + $0x20] sm:$0xf]
      %v1463 = vld [vmem:[%s1453 + $0x24] sm:$0xf]
      %v1464 = vld [vmem:[%s1453 + $0x28] sm:$0xf]
      %v1465 = vld [vmem:[%s1453 + $0x2c] sm:$0xf]
      %v1466 = vld [vmem:[%s1453 + $0x30] sm:$0xf]
      %v1467 = vld [vmem:[%s1453 + $0x34] sm:$0xf]
      %v1468 = vld [vmem:[%s1453 + $0x38] sm:$0xf]
      %v1469 = vld [vmem:[%s1453 + $0x3c] sm:$0xf]
      %v1470 = vunpack.c.l.b16 %v1082
      %v1471 = vunpack.c.l.b16 %v1092
      %v1472 = vunpack.c.l.b16 %v1106
      %v1473 = vunpack.c.l.b16 %v1116
      %v1474 = vunpack.c.l.b16 %v1130
      %v1475 = vunpack.c.l.b16 %v1140
      %v1476 = vunpack.c.l.b16 %v1154
      %v1477 = vunpack.c.l.b16 %v1164
      %v1478 = vunpack.c.l.b16 %v1178
      %v1479 = vunpack.c.l.b16 %v1188
      %v1480 = vunpack.c.l.b16 %v1202
      %v1481 = vunpack.c.l.b16 %v1212
      %v1482 = vunpack.c.l.b16 %v1226
      %v1483 = vunpack.c.l.b16 %v1236
      %v1484 = vunpack.c.l.b16 %v1250
      %v1485 = vunpack.c.l.b16 %v1260
      %v1486 = vunpack.c.l.b16 %v1274
      %v1487 = vunpack.c.l.b16 %v1284
      %v1488 = vunpack.c.l.b16 %v1298
      %v1489 = vunpack.c.l.b16 %v1308
      %v1490 = vunpack.c.l.b16 %v1322
      %v1491 = vunpack.c.l.b16 %v1332
      %v1492 = vunpack.c.l.b16 %v1346
      %v1493 = vunpack.c.l.b16 %v1356
      %v1494 = vunpack.c.l.b16 %v1370
      %v1495 = vunpack.c.l.b16 %v1380
      %v1496 = vunpack.c.l.b16 %v1394
      %v1497 = vunpack.c.l.b16 %v1404
      %v1498 = vunpack.c.l.b16 %v1418
      %v1499 = vunpack.c.l.b16 %v1428
      %v1500 = vunpack.c.l.b16 %v1442
      %v1501 = vunpack.c.l.b16 %v1452
      %v1502 = vpack.c.b16 %v1471, %v1470
      %v1503 = vpack.c.b16 %v1473, %v1472
      %v1504 = vpack.c.b16 %v1475, %v1474
      %v1505 = vpack.c.b16 %v1477, %v1476
      %v1506 = vpack.c.b16 %v1479, %v1478
      %v1507 = vpack.c.b16 %v1481, %v1480
      %v1508 = vpack.c.b16 %v1483, %v1482
      %v1509 = vpack.c.b16 %v1485, %v1484
      %v1510 = vpack.c.b16 %v1487, %v1486
      %v1511 = vpack.c.b16 %v1489, %v1488
      %v1512 = vpack.c.b16 %v1491, %v1490
      %v1513 = vpack.c.b16 %v1493, %v1492
      %v1514 = vpack.c.b16 %v1495, %v1494
      %v1515 = vpack.c.b16 %v1497, %v1496
      %v1516 = vpack.c.b16 %v1499, %v1498
      %v1517 = vpack.c.b16 %v1501, %v1500
      %v1550 = vunpack.c.l.b16 %v1454
      %v1551 = vunpack.c.l.b16 %v1455
      %v1552 = vunpack.c.l.b16 %v1456
      %v1553 = vunpack.c.l.b16 %v1457
      %v1554 = vunpack.c.l.b16 %v1458
      %v1555 = vunpack.c.l.b16 %v1459
      %v1556 = vunpack.c.l.b16 %v1460
      %v1557 = vunpack.c.l.b16 %v1461
      %v1558 = vunpack.c.l.b16 %v1462
      %v1559 = vunpack.c.l.b16 %v1463
      %v1560 = vunpack.c.l.b16 %v1464
      %v1561 = vunpack.c.l.b16 %v1465
      %v1562 = vunpack.c.l.b16 %v1466
      %v1563 = vunpack.c.l.b16 %v1467
      %v1564 = vunpack.c.l.b16 %v1468
      %v1565 = vunpack.c.l.b16 %v1469
      %v1566 = vpack.c.b16 %v1551, %v1550
      %v1567 = vpack.c.b16 %v1553, %v1552
      %v1568 = vpack.c.b16 %v1555, %v1554
      %v1569 = vpack.c.b16 %v1557, %v1556
      %v1570 = vpack.c.b16 %v1559, %v1558
      %v1571 = vpack.c.b16 %v1561, %v1560
      %v1572 = vpack.c.b16 %v1563, %v1562
      %v1573 = vpack.c.b16 %v1565, %v1564
      %1582 = vmatprep.subr.bf16.mxu0 0
      %1583 = vmatpush1.bf16.msra.mxu0 %v1566
      %1584 = vmatprep.subr.bf16.mxu0 0
      %1585 = vmatpush1.bf16.msra.mxu0 %v1567
      %1586 = vmatprep.subr.bf16.mxu0 0
      %1587 = vmatpush1.bf16.msra.mxu0 %v1568
      %1588 = vmatprep.subr.bf16.mxu0 0
      %1589 = vmatpush1.bf16.msra.mxu0 %v1569
      %1590 = vmatprep.subr.bf16.mxu0 0
      %1591 = vmatpush1.bf16.msra.mxu0 %v1570
      %1592 = vmatprep.subr.bf16.mxu0 0
      %1593 = vmatpush1.bf16.msra.mxu0 %v1571
      %1594 = vmatprep.subr.bf16.mxu0 0
      %1595 = vmatpush1.bf16.msra.mxu0 %v1572
      %1596 = vmatprep.subr.bf16.mxu0 0
      %1597 = vmatpush1.bf16.msra.mxu0 %v1573
      %1598 = vmatprep.subr.bf16.mxu0 0
      %1599 = vmatpush1.bf16.msra.mxu0 0
      %1600 = vmatprep.subr.bf16.mxu0 0
      %1601 = vmatpush1.bf16.msra.mxu0 0
      %1602 = vmatprep.subr.bf16.mxu0 0
      %1603 = vmatpush1.bf16.msra.mxu0 0
      %1604 = vmatprep.subr.bf16.mxu0 0
      %1605 = vmatpush1.bf16.msra.mxu0 0
      %1606 = vmatprep.subr.bf16.mxu0 0
      %1607 = vmatpush1.bf16.msra.mxu0 0
      %1608 = vmatprep.subr.bf16.mxu0 0
      %1609 = vmatpush1.bf16.msra.mxu0 0
      %1610 = vmatprep.subr.bf16.mxu0 0
      %1611 = vmatpush1.bf16.msra.mxu0 0
      %1612 = vmatprep.subr.bf16.mxu0 0
      %1613 = vmatpush1.bf16.msra.mxu0 0
      %1614 = vmatprep.mubr.bf16.mxu0 0
      %1615 = vmatmul.mubr.bf16.gmra.mrb[0].mxu0 %v1502
      %v1616 = vpop.f32.mrb[0].mxu0
      %v1617 = vadd.f32 0.0, %v1616
      %v1618 = vpop.f32.mrb[0].mxu0
      %v1619 = vpop.f32.mrb[0].mxu0
      %v1620 = vadd.f32 0.0, %v1619
      %v1621 = vpop.f32.mrb[0].mxu0
      %1622 = vmatprep.mubr.bf16.mxu0 0
      %1623 = vmatmul.mubr.bf16.gmra.mrb[0].mxu0 %v1503
      %v1624 = vpop.f32.mrb[0].mxu0
      %v1625 = vadd.f32 0.0, %v1624
      %v1626 = vpop.f32.mrb[0].mxu0
      %v1627 = vpop.f32.mrb[0].mxu0
      %v1628 = vadd.f32 0.0, %v1627
      %v1629 = vpop.f32.mrb[0].mxu0
      %1630 = vmatprep.mubr.bf16.mxu0 0
      %1631 = vmatmul.mubr.bf16.gmra.mrb[0].mxu0 %v1504
      %v1632 = vpop.f32.mrb[0].mxu0
      %v1633 = vadd.f32 0.0, %v1632
      %v1634 = vpop.f32.mrb[0].mxu0
      %v1635 = vpop.f32.mrb[0].mxu0
      %v1636 = vadd.f32 0.0, %v1635
      %v1637 = vpop.f32.mrb[0].mxu0
      %1638 = vmatprep.mubr.bf16.mxu0 0
      %1639 = vmatmul.mubr.bf16.gmra.mrb[0].mxu0 %v1505
      %v1640 = vpop.f32.mrb[0].mxu0
      %v1641 = vadd.f32 0.0, %v1640
      %v1642 = vpop.f32.mrb[0].mxu0
      %v1643 = vpop.f32.mrb[0].mxu0
      %v1644 = vadd.f32 0.0, %v1643
      %v1645 = vpop.f32.mrb[0].mxu0
      %1646 = vmatprep.mubr.bf16.mxu0 0
      %1647 = vmatmul.mubr.bf16.gmra.mrb[0].mxu0 %v1506
      %v1648 = vpop.f32.mrb[0].mxu0
      %v1649 = vadd.f32 0.0, %v1648
      %v1650 = vpop.f32.mrb[0].mxu0
      %v1651 = vpop.f32.mrb[0].mxu0
      %v1652 = vadd.f32 0.0, %v1651
      %v1653 = vpop.f32.mrb[0].mxu0
      %1654 = vmatprep.mubr.bf16.mxu0 0
      %1655 = vmatmul.mubr.bf16.gmra.mrb[0].mxu0 %v1507
      %v1656 = vpop.f32.mrb[0].mxu0
      %v1657 = vadd.f32 0.0, %v1656
      %v1658 = vpop.f32.mrb[0].mxu0
      %v1659 = vpop.f32.mrb[0].mxu0
      %v1660 = vadd.f32 0.0, %v1659
      %v1661 = vpop.f32.mrb[0].mxu0
      %1662 = vmatprep.mubr.bf16.mxu0 0
      %1663 = vmatmul.mubr.bf16.gmra.mrb[0].mxu0 %v1508
      %v1664 = vpop.f32.mrb[0].mxu0
      %v1665 = vadd.f32 0.0, %v1664
      %v1666 = vpop.f32.mrb[0].mxu0
      %v1667 = vpop.f32.mrb[0].mxu0
      %v1668 = vadd.f32 0.0, %v1667
      %v1669 = vpop.f32.mrb[0].mxu0
      %1670 = vmatprep.mubr.bf16.mxu0 0
      %1671 = vmatmul.mubr.bf16.gmra.mrb[0].mxu0 %v1509
      %v1672 = vpop.f32.mrb[0].mxu0
      %v1673 = vadd.f32 0.0, %v1672
      %v1674 = vpop.f32.mrb[0].mxu0
      %v1675 = vpop.f32.mrb[0].mxu0
      %v1676 = vadd.f32 0.0, %v1675
      %v1677 = vpop.f32.mrb[0].mxu0
      %1678 = vmatprep.mubr.bf16.mxu0 0
      %1679 = vmatmul.mubr.bf16.gmra.mrb[0].mxu0 %v1510
      %v1680 = vpop.f32.mrb[0].mxu0
      %v1681 = vadd.f32 0.0, %v1680
      %v1682 = vpop.f32.mrb[0].mxu0
      %v1683 = vpop.f32.mrb[0].mxu0
      %v1684 = vadd.f32 0.0, %v1683
      %v1685 = vpop.f32.mrb[0].mxu0
      %1686 = vmatprep.mubr.bf16.mxu0 0
      %1687 = vmatmul.mubr.bf16.gmra.mrb[0].mxu0 %v1511
      %v1688 = vpop.f32.mrb[0].mxu0
      %v1689 = vadd.f32 0.0, %v1688
      %v1690 = vpop.f32.mrb[0].mxu0
      %v1691 = vpop.f32.mrb[0].mxu0
      %v1692 = vadd.f32 0.0, %v1691
      %v1693 = vpop.f32.mrb[0].mxu0
      %1694 = vmatprep.mubr.bf16.mxu0 0
      %1695 = vmatmul.mubr.bf16.gmra.mrb[0].mxu0 %v1512
      %v1696 = vpop.f32.mrb[0].mxu0
      %v1697 = vadd.f32 0.0, %v1696
      %v1698 = vpop.f32.mrb[0].mxu0
      %v1699 = vpop.f32.mrb[0].mxu0
      %v1700 = vadd.f32 0.0, %v1699
      %v1701 = vpop.f32.mrb[0].mxu0
      %1702 = vmatprep.mubr.bf16.mxu0 0
      %1703 = vmatmul.mubr.bf16.gmra.mrb[0].mxu0 %v1513
      %v1704 = vpop.f32.mrb[0].mxu0
      %v1705 = vadd.f32 0.0, %v1704
      %v1706 = vpop.f32.mrb[0].mxu0
      %v1707 = vpop.f32.mrb[0].mxu0
      %v1708 = vadd.f32 0.0, %v1707
      %v1709 = vpop.f32.mrb[0].mxu0
      %1710 = vmatprep.mubr.bf16.mxu0 0
      %1711 = vmatmul.mubr.bf16.gmra.mrb[0].mxu0 %v1514
      %v1712 = vpop.f32.mrb[0].mxu0
      %v1713 = vadd.f32 0.0, %v1712
      %v1714 = vpop.f32.mrb[0].mxu0
      %v1715 = vpop.f32.mrb[0].mxu0
      %v1716 = vadd.f32 0.0, %v1715
      %v1717 = vpop.f32.mrb[0].mxu0
      %1718 = vmatprep.mubr.bf16.mxu0 0
      %1719 = vmatmul.mubr.bf16.gmra.mrb[0].mxu0 %v1515
      %v1720 = vpop.f32.mrb[0].mxu0
      %v1721 = vadd.f32 0.0, %v1720
      %v1722 = vpop.f32.mrb[0].mxu0
      %v1723 = vpop.f32.mrb[0].mxu0
      %v1724 = vadd.f32 0.0, %v1723
      %v1725 = vpop.f32.mrb[0].mxu0
      %1726 = vmatprep.mubr.bf16.mxu0 0
      %1727 = vmatmul.mubr.bf16.gmra.mrb[0].mxu0 %v1516
      %v1728 = vpop.f32.mrb[0].mxu0
      %v1729 = vadd.f32 0.0, %v1728
      %v1730 = vpop.f32.mrb[0].mxu0
      %v1731 = vpop.f32.mrb[0].mxu0
      %v1732 = vadd.f32 0.0, %v1731
      %v1733 = vpop.f32.mrb[0].mxu0
      %1734 = vmatprep.mubr.bf16.mxu0 0
      %1735 = vmatmul.mubr.bf16.gmra.mrb[0].mxu0 %v1517
      %v1736 = vpop.f32.mrb[0].mxu0
      %v1737 = vadd.f32 0.0, %v1736
      %v1738 = vpop.f32.mrb[0].mxu0
      %v1739 = vpop.f32.mrb[0].mxu0
      %v1740 = vadd.f32 0.0, %v1739
      %v1741 = vpop.f32.mrb[0].mxu0
      %1742 = vdwg.mxu0
      %v1775 = vunpack.c.l.b16 %v1002
      %v1776 = vunpack.c.l.b16 %v1003
      %v1777 = vunpack.c.l.b16 %v1004
      %v1778 = vunpack.c.l.b16 %v1005
      %v1779 = vunpack.c.l.b16 %v1006
      %v1780 = vunpack.c.l.b16 %v1007
      %v1781 = vunpack.c.l.b16 %v1008
      %v1782 = vunpack.c.l.b16 %v1009
      %v1783 = vunpack.c.l.b16 %v1010
      %v1784 = vunpack.c.l.b16 %v1011
      %v1785 = vunpack.c.l.b16 %v1012
      %v1786 = vunpack.c.l.b16 %v1013
      %v1787 = vunpack.c.l.b16 %v1014
      %v1788 = vunpack.c.l.b16 %v1015
      %v1789 = vunpack.c.l.b16 %v1016
      %v1790 = vunpack.c.l.b16 %v1017
      %v1791 = vunpack.c.l.b16 %v1018
      %v1792 = vunpack.c.l.b16 %v1019
      %v1793 = vunpack.c.l.b16 %v1020
      %v1794 = vunpack.c.l.b16 %v1021
      %v1795 = vunpack.c.l.b16 %v1022
      %v1796 = vunpack.c.l.b16 %v1023
      %v1797 = vunpack.c.l.b16 %v1024
      %v1798 = vunpack.c.l.b16 %v1025
      %v1799 = vunpack.c.l.b16 %v1026
      %v1800 = vunpack.c.l.b16 %v1027
      %v1801 = vunpack.c.l.b16 %v1028
      %v1802 = vunpack.c.l.b16 %v1029
      %v1803 = vunpack.c.l.b16 %v1030
      %v1804 = vunpack.c.l.b16 %v1031
      %v1805 = vunpack.c.l.b16 %v1032
      %v1806 = vunpack.c.l.b16 %v1033
      %v1807 = vpack.c.b16 %v1776, %v1775
      %v1808 = vpack.c.b16 %v1778, %v1777
      %v1809 = vpack.c.b16 %v1780, %v1779
      %v1810 = vpack.c.b16 %v1782, %v1781
      %v1811 = vpack.c.b16 %v1784, %v1783
      %v1812 = vpack.c.b16 %v1786, %v1785
      %v1813 = vpack.c.b16 %v1788, %v1787
      %v1814 = vpack.c.b16 %v1790, %v1789
      %v1815 = vpack.c.b16 %v1792, %v1791
      %v1816 = vpack.c.b16 %v1794, %v1793
      %v1817 = vpack.c.b16 %v1796, %v1795
      %v1818 = vpack.c.b16 %v1798, %v1797
      %v1819 = vpack.c.b16 %v1800, %v1799
      %v1820 = vpack.c.b16 %v1802, %v1801
      %v1821 = vpack.c.b16 %v1804, %v1803
      %v1822 = vpack.c.b16 %v1806, %v1805
      %v1855 = vunpack.c.l.b16 %v1034
      %v1856 = vunpack.c.l.b16 %v1035
      %v1857 = vunpack.c.l.b16 %v1036
      %v1858 = vunpack.c.l.b16 %v1037
      %v1859 = vunpack.c.l.b16 %v1038
      %v1860 = vunpack.c.l.b16 %v1039
      %v1861 = vunpack.c.l.b16 %v1040
      %v1862 = vunpack.c.l.b16 %v1041
      %v1863 = vunpack.c.l.b16 %v1042
      %v1864 = vunpack.c.l.b16 %v1043
      %v1865 = vunpack.c.l.b16 %v1044
      %v1866 = vunpack.c.l.b16 %v1045
      %v1867 = vunpack.c.l.b16 %v1046
      %v1868 = vunpack.c.l.b16 %v1047
      %v1869 = vunpack.c.l.b16 %v1048
      %v1870 = vunpack.c.l.b16 %v1049
      %v1871 = vpack.c.b16 %v1856, %v1855
      %v1872 = vpack.c.b16 %v1858, %v1857
      %v1873 = vpack.c.b16 %v1860, %v1859
      %v1874 = vpack.c.b16 %v1862, %v1861
      %v1875 = vpack.c.b16 %v1864, %v1863
      %v1876 = vpack.c.b16 %v1866, %v1865
      %v1877 = vpack.c.b16 %v1868, %v1867
      %v1878 = vpack.c.b16 %v1870, %v1869
      %1887 = vmatprep.subr.bf16.mxu0 0
      %1888 = vmatpush1.bf16.msra.mxu0 %v1871
      %1889 = vmatprep.subr.bf16.mxu0 0
      %1890 = vmatpush1.bf16.msra.mxu0 %v1872
      %1891 = vmatprep.subr.bf16.mxu0 0
      %1892 = vmatpush1.bf16.msra.mxu0 %v1873
      %1893 = vmatprep.subr.bf16.mxu0 0
      %1894 = vmatpush1.bf16.msra.mxu0 %v1874
      %1895 = vmatprep.subr.bf16.mxu0 0
      %1896 = vmatpush1.bf16.msra.mxu0 %v1875
      %1897 = vmatprep.subr.bf16.mxu0 0
      %1898 = vmatpush1.bf16.msra.mxu0 %v1876
      %1899 = vmatprep.subr.bf16.mxu0 0
      %1900 = vmatpush1.bf16.msra.mxu0 %v1877
      %1901 = vmatprep.subr.bf16.mxu0 0
      %1902 = vmatpush1.bf16.msra.mxu0 %v1878
      %1903 = vmatprep.subr.bf16.mxu0 0
      %1904 = vmatpush1.bf16.msra.mxu0 0
      %1905 = vmatprep.subr.bf16.mxu0 0
      %1906 = vmatpush1.bf16.msra.mxu0 0
      %1907 = vmatprep.subr.bf16.mxu0 0
      %1908 = vmatpush1.bf16.msra.mxu0 0
      %1909 = vmatprep.subr.bf16.mxu0 0
      %1910 = vmatpush1.bf16.msra.mxu0 0
      %1911 = vmatprep.subr.bf16.mxu0 0
      %1912 = vmatpush1.bf16.msra.mxu0 0
      %1913 = vmatprep.subr.bf16.mxu0 0
      %1914 = vmatpush1.bf16.msra.mxu0 0
      %1915 = vmatprep.subr.bf16.mxu0 0
      %1916 = vmatpush1.bf16.msra.mxu0 0
      %1917 = vmatprep.subr.bf16.mxu0 0
      %1918 = vmatpush1.bf16.msra.mxu0 0
      %1919 = vmatprep.mubr.bf16.mxu0 0
      %1920 = vmatmul.mubr.bf16.gmra.mrb[0].mxu0 %v1807
      %v1921 = vpop.f32.mrb[0].mxu0
      %v1922 = vadd.f32 %v1617, %v1921
      %v1923 = vpop.f32.mrb[0].mxu0
      %v1924 = vpop.f32.mrb[0].mxu0
      %v1925 = vadd.f32 %v1620, %v1924
      %v1926 = vpop.f32.mrb[0].mxu0
      %1927 = vmatprep.mubr.bf16.mxu0 0
      %1928 = vmatmul.mubr.bf16.gmra.mrb[0].mxu0 %v1808
      %v1929 = vpop.f32.mrb[0].mxu0
      %v1930 = vadd.f32 %v1625, %v1929
      %v1931 = vpop.f32.mrb[0].mxu0
      %v1932 = vpop.f32.mrb[0].mxu0
      %v1933 = vadd.f32 %v1628, %v1932
      %v1934 = vpop.f32.mrb[0].mxu0
      %1935 = vmatprep.mubr.bf16.mxu0 0
      %1936 = vmatmul.mubr.bf16.gmra.mrb[0].mxu0 %v1809
      %v1937 = vpop.f32.mrb[0].mxu0
      %v1938 = vadd.f32 %v1633, %v1937
      %v1939 = vpop.f32.mrb[0].mxu0
      %v1940 = vpop.f32.mrb[0].mxu0
      %v1941 = vadd.f32 %v1636, %v1940
      %v1942 = vpop.f32.mrb[0].mxu0
      %1943 = vmatprep.mubr.bf16.mxu0 0
      %1944 = vmatmul.mubr.bf16.gmra.mrb[0].mxu0 %v1810
      %v1945 = vpop.f32.mrb[0].mxu0
      %v1946 = vadd.f32 %v1641, %v1945
      %v1947 = vpop.f32.mrb[0].mxu0
      %v1948 = vpop.f32.mrb[0].mxu0
      %v1949 = vadd.f32 %v1644, %v1948
      %v1950 = vpop.f32.mrb[0].mxu0
      %1951 = vmatprep.mubr.bf16.mxu0 0
      %1952 = vmatmul.mubr.bf16.gmra.mrb[0].mxu0 %v1811
      %v1953 = vpop.f32.mrb[0].mxu0
      %v1954 = vadd.f32 %v1649, %v1953
      %v1955 = vpop.f32.mrb[0].mxu0
      %v1956 = vpop.f32.mrb[0].mxu0
      %v1957 = vadd.f32 %v1652, %v1956
      %v1958 = vpop.f32.mrb[0].mxu0
      %1959 = vmatprep.mubr.bf16.mxu0 0
      %1960 = vmatmul.mubr.bf16.gmra.mrb[0].mxu0 %v1812
      %v1961 = vpop.f32.mrb[0].mxu0
      %v1962 = vadd.f32 %v1657, %v1961
      %v1963 = vpop.f32.mrb[0].mxu0
      %v1964 = vpop.f32.mrb[0].mxu0
      %v1965 = vadd.f32 %v1660, %v1964
      %v1966 = vpop.f32.mrb[0].mxu0
      %1967 = vmatprep.mubr.bf16.mxu0 0
      %1968 = vmatmul.mubr.bf16.gmra.mrb[0].mxu0 %v1813
      %v1969 = vpop.f32.mrb[0].mxu0
      %v1970 = vadd.f32 %v1665, %v1969
      %v1971 = vpop.f32.mrb[0].mxu0
      %v1972 = vpop.f32.mrb[0].mxu0
      %v1973 = vadd.f32 %v1668, %v1972
      %v1974 = vpop.f32.mrb[0].mxu0
      %1975 = vmatprep.mubr.bf16.mxu0 0
      %1976 = vmatmul.mubr.bf16.gmra.mrb[0].mxu0 %v1814
      %v1977 = vpop.f32.mrb[0].mxu0
      %v1978 = vadd.f32 %v1673, %v1977
      %v1979 = vpop.f32.mrb[0].mxu0
      %v1980 = vpop.f32.mrb[0].mxu0
      %v1981 = vadd.f32 %v1676, %v1980
      %v1982 = vpop.f32.mrb[0].mxu0
      %1983 = vmatprep.mubr.bf16.mxu0 0
      %1984 = vmatmul.mubr.bf16.gmra.mrb[0].mxu0 %v1815
      %v1985 = vpop.f32.mrb[0].mxu0
      %v1986 = vadd.f32 %v1681, %v1985
      %v1987 = vpop.f32.mrb[0].mxu0
      %v1988 = vpop.f32.mrb[0].mxu0
      %v1989 = vadd.f32 %v1684, %v1988
      %v1990 = vpop.f32.mrb[0].mxu0
      %1991 = vmatprep.mubr.bf16.mxu0 0
      %1992 = vmatmul.mubr.bf16.gmra.mrb[0].mxu0 %v1816
      %v1993 = vpop.f32.mrb[0].mxu0
      %v1994 = vadd.f32 %v1689, %v1993
      %v1995 = vpop.f32.mrb[0].mxu0
      %v1996 = vpop.f32.mrb[0].mxu0
      %v1997 = vadd.f32 %v1692, %v1996
      %v1998 = vpop.f32.mrb[0].mxu0
      %1999 = vmatprep.mubr.bf16.mxu0 0
      %2000 = vmatmul.mubr.bf16.gmra.mrb[0].mxu0 %v1817
      %v2001 = vpop.f32.mrb[0].mxu0
      %v2002 = vadd.f32 %v1697, %v2001
      %v2003 = vpop.f32.mrb[0].mxu0
      %v2004 = vpop.f32.mrb[0].mxu0
      %v2005 = vadd.f32 %v1700, %v2004
      %v2006 = vpop.f32.mrb[0].mxu0
      %2007 = vmatprep.mubr.bf16.mxu0 0
      %2008 = vmatmul.mubr.bf16.gmra.mrb[0].mxu0 %v1818
      %v2009 = vpop.f32.mrb[0].mxu0
      %v2010 = vadd.f32 %v1705, %v2009
      %v2011 = vpop.f32.mrb[0].mxu0
      %v2012 = vpop.f32.mrb[0].mxu0
      %v2013 = vadd.f32 %v1708, %v2012
      %v2014 = vpop.f32.mrb[0].mxu0
      %2015 = vmatprep.mubr.bf16.mxu0 0
      %2016 = vmatmul.mubr.bf16.gmra.mrb[0].mxu0 %v1819
      %v2017 = vpop.f32.mrb[0].mxu0
      %v2018 = vadd.f32 %v1713, %v2017
      %v2019 = vpop.f32.mrb[0].mxu0
      %v2020 = vpop.f32.mrb[0].mxu0
      %v2021 = vadd.f32 %v1716, %v2020
      %v2022 = vpop.f32.mrb[0].mxu0
      %2023 = vmatprep.mubr.bf16.mxu0 0
      %2024 = vmatmul.mubr.bf16.gmra.mrb[0].mxu0 %v1820
      %v2025 = vpop.f32.mrb[0].mxu0
      %v2026 = vadd.f32 %v1721, %v2025
      %v2027 = vpop.f32.mrb[0].mxu0
      %v2028 = vpop.f32.mrb[0].mxu0
      %v2029 = vadd.f32 %v1724, %v2028
      %v2030 = vpop.f32.mrb[0].mxu0
      %2031 = vmatprep.mubr.bf16.mxu0 0
      %2032 = vmatmul.mubr.bf16.gmra.mrb[0].mxu0 %v1821
      %v2033 = vpop.f32.mrb[0].mxu0
      %v2034 = vadd.f32 %v1729, %v2033
      %v2035 = vpop.f32.mrb[0].mxu0
      %v2036 = vpop.f32.mrb[0].mxu0
      %v2037 = vadd.f32 %v1732, %v2036
      %v2038 = vpop.f32.mrb[0].mxu0
      %2039 = vmatprep.mubr.bf16.mxu0 0
      %2040 = vmatmul.mubr.bf16.gmra.mrb[0].mxu0 %v1822
      %v2041 = vpop.f32.mrb[0].mxu0
      %v2042 = vadd.f32 %v1737, %v2041
      %v2043 = vpop.f32.mrb[0].mxu0
      %v2044 = vpop.f32.mrb[0].mxu0
      %v2045 = vadd.f32 %v1740, %v2044
      %v2046 = vpop.f32.mrb[0].mxu0
      %2047 = vdwg.mxu0
      %v2048 = vld [vmem:[#allocation2] sm:$0xe]
      %v2049 = vld [vmem:[#allocation2 + $0xc] sm:$0xe]
      %v2050 = vld [vmem:[#allocation2 + $0x18] sm:$0xe]
      %v2051 = vld [vmem:[#allocation2 + $0x24] sm:$0xe]
      %v2052 = vld [vmem:[#allocation2 + $0x30] sm:$0xe]
      %v2053 = vld [vmem:[#allocation2 + $0x3c] sm:$0xe]
      %v2054 = vld [vmem:[#allocation2 + $0x48] sm:$0xe]
      %v2055 = vld [vmem:[#allocation2 + $0x54] sm:$0xe]
      %v2056 = vld [vmem:[#allocation2 + $0x60] sm:$0xe]
      %v2057 = vld [vmem:[#allocation2 + $0x6c] sm:$0xe]
      %v2058 = vld [vmem:[#allocation2 + $0x78] sm:$0xe]
      %v2059 = vld [vmem:[#allocation2 + $0x84] sm:$0xe]
      %v2060 = vld [vmem:[#allocation2 + $0x90] sm:$0xe]
      %v2061 = vld [vmem:[#allocation2 + $0x9c] sm:$0xe]
      %v2062 = vld [vmem:[#allocation2 + $0xa8] sm:$0xe]
      %v2063 = vld [vmem:[#allocation2 + $0xb4] sm:$0xe]
      %vm2096 = vcmask 1042432
      %vm2097 = vcmask 1046532
      %vm2098 = vmor %vm2096, %vm2097
      %v2099 = vrot.slane %v2048, 5
      %v2100 = vrot.slane %v2099, 4
      %v2101 = vrot.slane %v1003, 5
      %v2102 = vsel %vm2098, %v2100, %v2101
      %v2103 = vrot.slane %v2101, 4
      %v2104 = vrot.slane %v1050, 5
      %v2105 = vsel %vm2098, %v2103, %v2104
      %v2106 = vrot.slane %v2049, 5
      %v2107 = vrot.slane %v2106, 4
      %v2108 = vrot.slane %v1005, 5
      %v2109 = vsel %vm2098, %v2107, %v2108
      %v2110 = vrot.slane %v2108, 4
      %v2111 = vrot.slane %v1051, 5
      %v2112 = vsel %vm2098, %v2110, %v2111
      %v2113 = vrot.slane %v2050, 5
      %v2114 = vrot.slane %v2113, 4
      %v2115 = vrot.slane %v1007, 5
      %v2116 = vsel %vm2098, %v2114, %v2115
      %v2117 = vrot.slane %v2115, 4
      %v2118 = vrot.slane %v1052, 5
      %v2119 = vsel %vm2098, %v2117, %v2118
      %v2120 = vrot.slane %v2051, 5
      %v2121 = vrot.slane %v2120, 4
      %v2122 = vrot.slane %v1009, 5
      %v2123 = vsel %vm2098, %v2121, %v2122
      %v2124 = vrot.slane %v2122, 4
      %v2125 = vrot.slane %v1053, 5
      %v2126 = vsel %vm2098, %v2124, %v2125
      %v2127 = vrot.slane %v2052, 5
      %v2128 = vrot.slane %v2127, 4
      %v2129 = vrot.slane %v1011, 5
      %v2130 = vsel %vm2098, %v2128, %v2129
      %v2131 = vrot.slane %v2129, 4
      %v2132 = vrot.slane %v1054, 5
      %v2133 = vsel %vm2098, %v2131, %v2132
      %v2134 = vrot.slane %v2053, 5
      %v2135 = vrot.slane %v2134, 4
      %v2136 = vrot.slane %v1013, 5
      %v2137 = vsel %vm2098, %v2135, %v2136
      %v2138 = vrot.slane %v2136, 4
      %v2139 = vrot.slane %v1055, 5
      %v2140 = vsel %vm2098, %v2138, %v2139
      %v2141 = vrot.slane %v2054, 5
      %v2142 = vrot.slane %v2141, 4
      %v2143 = vrot.slane %v1015, 5
      %v2144 = vsel %vm2098, %v2142, %v2143
      %v2145 = vrot.slane %v2143, 4
      %v2146 = vrot.slane %v1056, 5
      %v2147 = vsel %vm2098, %v2145, %v2146
      %v2148 = vrot.slane %v2055, 5
      %v2149 = vrot.slane %v2148, 4
      %v2150 = vrot.slane %v1017, 5
      %v2151 = vsel %vm2098, %v2149, %v2150
      %v2152 = vrot.slane %v2150, 4
      %v2153 = vrot.slane %v1057, 5
      %v2154 = vsel %vm2098, %v2152, %v2153
      %v2155 = vrot.slane %v2056, 5
      %v2156 = vrot.slane %v2155, 4
      %v2157 = vrot.slane %v1019, 5
      %v2158 = vsel %vm2098, %v2156, %v2157
      %v2159 = vrot.slane %v2157, 4
      %v2160 = vrot.slane %v1058, 5
      %v2161 = vsel %vm2098, %v2159, %v2160
      %v2162 = vrot.slane %v2057, 5
      %v2163 = vrot.slane %v2162, 4
      %v2164 = vrot.slane %v1021, 5
      %v2165 = vsel %vm2098, %v2163, %v2164
      %v2166 = vrot.slane %v2164, 4
      %v2167 = vrot.slane %v1059, 5
      %v2168 = vsel %vm2098, %v2166, %v2167
      %v2169 = vrot.slane %v2058, 5
      %v2170 = vrot.slane %v2169, 4
      %v2171 = vrot.slane %v1023, 5
      %v2172 = vsel %vm2098, %v2170, %v2171
      %v2173 = vrot.slane %v2171, 4
      %v2174 = vrot.slane %v1060, 5
      %v2175 = vsel %vm2098, %v2173, %v2174
      %v2176 = vrot.slane %v2059, 5
      %v2177 = vrot.slane %v2176, 4
      %v2178 = vrot.slane %v1025, 5
      %v2179 = vsel %vm2098, %v2177, %v2178
      %v2180 = vrot.slane %v2178, 4
      %v2181 = vrot.slane %v1061, 5
      %v2182 = vsel %vm2098, %v2180, %v2181
      %v2183 = vrot.slane %v2060, 5
      %v2184 = vrot.slane %v2183, 4
      %v2185 = vrot.slane %v1027, 5
      %v2186 = vsel %vm2098, %v2184, %v2185
      %v2187 = vrot.slane %v2185, 4
      %v2188 = vrot.slane %v1062, 5
      %v2189 = vsel %vm2098, %v2187, %v2188
      %v2190 = vrot.slane %v2061, 5
      %v2191 = vrot.slane %v2190, 4
      %v2192 = vrot.slane %v1029, 5
      %v2193 = vsel %vm2098, %v2191, %v2192
      %v2194 = vrot.slane %v2192, 4
      %v2195 = vrot.slane %v1063, 5
      %v2196 = vsel %vm2098, %v2194, %v2195
      %v2197 = vrot.slane %v2062, 5
      %v2198 = vrot.slane %v2197, 4
      %v2199 = vrot.slane %v1031, 5
      %v2200 = vsel %vm2098, %v2198, %v2199
      %v2201 = vrot.slane %v2199, 4
      %v2202 = vrot.slane %v1064, 5
      %v2203 = vsel %vm2098, %v2201, %v2202
      %v2204 = vrot.slane %v2063, 5
      %v2205 = vrot.slane %v2204, 4
      %v2206 = vrot.slane %v1033, 5
      %v2207 = vsel %vm2098, %v2205, %v2206
      %v2208 = vrot.slane %v2206, 4
      %v2209 = vrot.slane %v1065, 5
      %v2210 = vsel %vm2098, %v2208, %v2209
      %s2211 = scalar_lea.vmem %s3, 128
      %v2212 = vld [vmem:[%s2211] sm:$0xf]
      %v2213 = vld [vmem:[%s2211 + $0x4] sm:$0xf]
      %v2214 = vld [vmem:[%s2211 + $0x8] sm:$0xf]
      %v2215 = vld [vmem:[%s2211 + $0xc] sm:$0xf]
      %v2216 = vld [vmem:[%s2211 + $0x10] sm:$0xf]
      %v2217 = vld [vmem:[%s2211 + $0x14] sm:$0xf]
      %v2218 = vld [vmem:[%s2211 + $0x18] sm:$0xf]
      %v2219 = vld [vmem:[%s2211 + $0x1c] sm:$0xf]
      %v2220 = vld [vmem:[%s2211 + $0x20] sm:$0xf]
      %v2221 = vld [vmem:[%s2211 + $0x24] sm:$0xf]
      %v2222 = vld [vmem:[%s2211 + $0x28] sm:$0xf]
      %v2223 = vld [vmem:[%s2211 + $0x2c] sm:$0xf]
      %v2224 = vld [vmem:[%s2211 + $0x30] sm:$0xf]
      %v2225 = vld [vmem:[%s2211 + $0x34] sm:$0xf]
      %v2226 = vld [vmem:[%s2211 + $0x38] sm:$0xf]
      %v2227 = vld [vmem:[%s2211 + $0x3c] sm:$0xf]
      %v2228 = vunpack.c.l.b16 %v2102
      %v2229 = vunpack.c.l.b16 %v2105
      %v2230 = vunpack.c.l.b16 %v2109
      %v2231 = vunpack.c.l.b16 %v2112
      %v2232 = vunpack.c.l.b16 %v2116
      %v2233 = vunpack.c.l.b16 %v2119
      %v2234 = vunpack.c.l.b16 %v2123
      %v2235 = vunpack.c.l.b16 %v2126
      %v2236 = vunpack.c.l.b16 %v2130
      %v2237 = vunpack.c.l.b16 %v2133
      %v2238 = vunpack.c.l.b16 %v2137
      %v2239 = vunpack.c.l.b16 %v2140
      %v2240 = vunpack.c.l.b16 %v2144
      %v2241 = vunpack.c.l.b16 %v2147
      %v2242 = vunpack.c.l.b16 %v2151
      %v2243 = vunpack.c.l.b16 %v2154
      %v2244 = vunpack.c.l.b16 %v2158
      %v2245 = vunpack.c.l.b16 %v2161
      %v2246 = vunpack.c.l.b16 %v2165
      %v2247 = vunpack.c.l.b16 %v2168
      %v2248 = vunpack.c.l.b16 %v2172
      %v2249 = vunpack.c.l.b16 %v2175
      %v2250 = vunpack.c.l.b16 %v2179
      %v2251 = vunpack.c.l.b16 %v2182
      %v2252 = vunpack.c.l.b16 %v2186
      %v2253 = vunpack.c.l.b16 %v2189
      %v2254 = vunpack.c.l.b16 %v2193
      %v2255 = vunpack.c.l.b16 %v2196
      %v2256 = vunpack.c.l.b16 %v2200
      %v2257 = vunpack.c.l.b16 %v2203
      %v2258 = vunpack.c.l.b16 %v2207
      %v2259 = vunpack.c.l.b16 %v2210
      %v2260 = vpack.c.b16 %v2229, %v2228
      %v2261 = vpack.c.b16 %v2231, %v2230
      %v2262 = vpack.c.b16 %v2233, %v2232
      %v2263 = vpack.c.b16 %v2235, %v2234
      %v2264 = vpack.c.b16 %v2237, %v2236
      %v2265 = vpack.c.b16 %v2239, %v2238
      %v2266 = vpack.c.b16 %v2241, %v2240
      %v2267 = vpack.c.b16 %v2243, %v2242
      %v2268 = vpack.c.b16 %v2245, %v2244
      %v2269 = vpack.c.b16 %v2247, %v2246
      %v2270 = vpack.c.b16 %v2249, %v2248
      %v2271 = vpack.c.b16 %v2251, %v2250
      %v2272 = vpack.c.b16 %v2253, %v2252
      %v2273 = vpack.c.b16 %v2255, %v2254
      %v2274 = vpack.c.b16 %v2257, %v2256
      %v2275 = vpack.c.b16 %v2259, %v2258
      %v2308 = vunpack.c.l.b16 %v2212
      %v2309 = vunpack.c.l.b16 %v2213
      %v2310 = vunpack.c.l.b16 %v2214
      %v2311 = vunpack.c.l.b16 %v2215
      %v2312 = vunpack.c.l.b16 %v2216
      %v2313 = vunpack.c.l.b16 %v2217
      %v2314 = vunpack.c.l.b16 %v2218
      %v2315 = vunpack.c.l.b16 %v2219
      %v2316 = vunpack.c.l.b16 %v2220
      %v2317 = vunpack.c.l.b16 %v2221
      %v2318 = vunpack.c.l.b16 %v2222
      %v2319 = vunpack.c.l.b16 %v2223
      %v2320 = vunpack.c.l.b16 %v2224
      %v2321 = vunpack.c.l.b16 %v2225
      %v2322 = vunpack.c.l.b16 %v2226
      %v2323 = vunpack.c.l.b16 %v2227
      %v2324 = vpack.c.b16 %v2309, %v2308
      %v2325 = vpack.c.b16 %v2311, %v2310
      %v2326 = vpack.c.b16 %v2313, %v2312
      %v2327 = vpack.c.b16 %v2315, %v2314
      %v2328 = vpack.c.b16 %v2317, %v2316
      %v2329 = vpack.c.b16 %v2319, %v2318
      %v2330 = vpack.c.b16 %v2321, %v2320
      %v2331 = vpack.c.b16 %v2323, %v2322
      %2340 = vmatprep.subr.bf16.mxu0 0
      %2341 = vmatpush1.bf16.msra.mxu0 %v2324
      %2342 = vmatprep.subr.bf16.mxu0 0
      %2343 = vmatpush1.bf16.msra.mxu0 %v2325
      %2344 = vmatprep.subr.bf16.mxu0 0
      %2345 = vmatpush1.bf16.msra.mxu0 %v2326
      %2346 = vmatprep.subr.bf16.mxu0 0
      %2347 = vmatpush1.bf16.msra.mxu0 %v2327
      %2348 = vmatprep.subr.bf16.mxu0 0
      %2349 = vmatpush1.bf16.msra.mxu0 %v2328
      %2350 = vmatprep.subr.bf16.mxu0 0
      %2351 = vmatpush1.bf16.msra.mxu0 %v2329
      %2352 = vmatprep.subr.bf16.mxu0 0
      %2353 = vmatpush1.bf16.msra.mxu0 %v2330
      %2354 = vmatprep.subr.bf16.mxu0 0
      %2355 = vmatpush1.bf16.msra.mxu0 %v2331
      %2356 = vmatprep.subr.bf16.mxu0 0
      %2357 = vmatpush1.bf16.msra.mxu0 0
      %2358 = vmatprep.subr.bf16.mxu0 0
      %2359 = vmatpush1.bf16.msra.mxu0 0
      %2360 = vmatprep.subr.bf16.mxu0 0
      %2361 = vmatpush1.bf16.msra.mxu0 0
      %2362 = vmatprep.subr.bf16.mxu0 0
      %2363 = vmatpush1.bf16.msra.mxu0 0
      %2364 = vmatprep.subr.bf16.mxu0 0
      %2365 = vmatpush1.bf16.msra.mxu0 0
      %2366 = vmatprep.subr.bf16.mxu0 0
      %2367 = vmatpush1.bf16.msra.mxu0 0
      %2368 = vmatprep.subr.bf16.mxu0 0
      %2369 = vmatpush1.bf16.msra.mxu0 0
      %2370 = vmatprep.subr.bf16.mxu0 0
      %2371 = vmatpush1.bf16.msra.mxu0 0
      %2372 = vmatprep.mubr.bf16.mxu0 0
      %2373 = vmatmul.mubr.bf16.gmra.mrb[0].mxu0 %v2260
      %v2374 = vpop.f32.mrb[0].mxu0
      %v2375 = vadd.f32 0.0, %v2374
      %v2376 = vpop.f32.mrb[0].mxu0
      %v2377 = vpop.f32.mrb[0].mxu0
      %v2378 = vadd.f32 0.0, %v2377
      %v2379 = vpop.f32.mrb[0].mxu0
      %2380 = vmatprep.mubr.bf16.mxu0 0
      %2381 = vmatmul.mubr.bf16.gmra.mrb[0].mxu0 %v2261
      %v2382 = vpop.f32.mrb[0].mxu0
      %v2383 = vadd.f32 0.0, %v2382
      %v2384 = vpop.f32.mrb[0].mxu0
      %v2385 = vpop.f32.mrb[0].mxu0
      %v2386 = vadd.f32 0.0, %v2385
      %v2387 = vpop.f32.mrb[0].mxu0
      %2388 = vmatprep.mubr.bf16.mxu0 0
      %2389 = vmatmul.mubr.bf16.gmra.mrb[0].mxu0 %v2262
      %v2390 = vpop.f32.mrb[0].mxu0
      %v2391 = vadd.f32 0.0, %v2390
      %v2392 = vpop.f32.mrb[0].mxu0
      %v2393 = vpop.f32.mrb[0].mxu0
      %v2394 = vadd.f32 0.0, %v2393
      %v2395 = vpop.f32.mrb[0].mxu0
      %2396 = vmatprep.mubr.bf16.mxu0 0
      %2397 = vmatmul.mubr.bf16.gmra.mrb[0].mxu0 %v2263
      %v2398 = vpop.f32.mrb[0].mxu0
      %v2399 = vadd.f32 0.0, %v2398
      %v2400 = vpop.f32.mrb[0].mxu0
      %v2401 = vpop.f32.mrb[0].mxu0
      %v2402 = vadd.f32 0.0, %v2401
      %v2403 = vpop.f32.mrb[0].mxu0
      %2404 = vmatprep.mubr.bf16.mxu0 0
      %2405 = vmatmul.mubr.bf16.gmra.mrb[0].mxu0 %v2264
      %v2406 = vpop.f32.mrb[0].mxu0
      %v2407 = vadd.f32 0.0, %v2406
      %v2408 = vpop.f32.mrb[0].mxu0
      %v2409 = vpop.f32.mrb[0].mxu0
      %v2410 = vadd.f32 0.0, %v2409
      %v2411 = vpop.f32.mrb[0].mxu0
      %2412 = vmatprep.mubr.bf16.mxu0 0
      %2413 = vmatmul.mubr.bf16.gmra.mrb[0].mxu0 %v2265
      %v2414 = vpop.f32.mrb[0].mxu0
      %v2415 = vadd.f32 0.0, %v2414
      %v2416 = vpop.f32.mrb[0].mxu0
      %v2417 = vpop.f32.mrb[0].mxu0
      %v2418 = vadd.f32 0.0, %v2417
      %v2419 = vpop.f32.mrb[0].mxu0
      %2420 = vmatprep.mubr.bf16.mxu0 0
      %2421 = vmatmul.mubr.bf16.gmra.mrb[0].mxu0 %v2266
      %v2422 = vpop.f32.mrb[0].mxu0
      %v2423 = vadd.f32 0.0, %v2422
      %v2424 = vpop.f32.mrb[0].mxu0
      %v2425 = vpop.f32.mrb[0].mxu0
      %v2426 = vadd.f32 0.0, %v2425
      %v2427 = vpop.f32.mrb[0].mxu0
      %2428 = vmatprep.mubr.bf16.mxu0 0
      %2429 = vmatmul.mubr.bf16.gmra.mrb[0].mxu0 %v2267
      %v2430 = vpop.f32.mrb[0].mxu0
      %v2431 = vadd.f32 0.0, %v2430
      %v2432 = vpop.f32.mrb[0].mxu0
      %v2433 = vpop.f32.mrb[0].mxu0
      %v2434 = vadd.f32 0.0, %v2433
      %v2435 = vpop.f32.mrb[0].mxu0
      %2436 = vmatprep.mubr.bf16.mxu0 0
      %2437 = vmatmul.mubr.bf16.gmra.mrb[0].mxu0 %v2268
      %v2438 = vpop.f32.mrb[0].mxu0
      %v2439 = vadd.f32 0.0, %v2438
      %v2440 = vpop.f32.mrb[0].mxu0
      %v2441 = vpop.f32.mrb[0].mxu0
      %v2442 = vadd.f32 0.0, %v2441
      %v2443 = vpop.f32.mrb[0].mxu0
      %2444 = vmatprep.mubr.bf16.mxu0 0
      %2445 = vmatmul.mubr.bf16.gmra.mrb[0].mxu0 %v2269
      %v2446 = vpop.f32.mrb[0].mxu0
      %v2447 = vadd.f32 0.0, %v2446
      %v2448 = vpop.f32.mrb[0].mxu0
      %v2449 = vpop.f32.mrb[0].mxu0
      %v2450 = vadd.f32 0.0, %v2449
      %v2451 = vpop.f32.mrb[0].mxu0
      %2452 = vmatprep.mubr.bf16.mxu0 0
      %2453 = vmatmul.mubr.bf16.gmra.mrb[0].mxu0 %v2270
      %v2454 = vpop.f32.mrb[0].mxu0
      %v2455 = vadd.f32 0.0, %v2454
      %v2456 = vpop.f32.mrb[0].mxu0
      %v2457 = vpop.f32.mrb[0].mxu0
      %v2458 = vadd.f32 0.0, %v2457
      %v2459 = vpop.f32.mrb[0].mxu0
      %2460 = vmatprep.mubr.bf16.mxu0 0
      %2461 = vmatmul.mubr.bf16.gmra.mrb[0].mxu0 %v2271
      %v2462 = vpop.f32.mrb[0].mxu0
      %v2463 = vadd.f32 0.0, %v2462
      %v2464 = vpop.f32.mrb[0].mxu0
      %v2465 = vpop.f32.mrb[0].mxu0
      %v2466 = vadd.f32 0.0, %v2465
      %v2467 = vpop.f32.mrb[0].mxu0
      %2468 = vmatprep.mubr.bf16.mxu0 0
      %2469 = vmatmul.mubr.bf16.gmra.mrb[0].mxu0 %v2272
      %v2470 = vpop.f32.mrb[0].mxu0
      %v2471 = vadd.f32 0.0, %v2470
      %v2472 = vpop.f32.mrb[0].mxu0
      %v2473 = vpop.f32.mrb[0].mxu0
      %v2474 = vadd.f32 0.0, %v2473
      %v2475 = vpop.f32.mrb[0].mxu0
      %2476 = vmatprep.mubr.bf16.mxu0 0
      %2477 = vmatmul.mubr.bf16.gmra.mrb[0].mxu0 %v2273
      %v2478 = vpop.f32.mrb[0].mxu0
      %v2479 = vadd.f32 0.0, %v2478
      %v2480 = vpop.f32.mrb[0].mxu0
      %v2481 = vpop.f32.mrb[0].mxu0
      %v2482 = vadd.f32 0.0, %v2481
      %v2483 = vpop.f32.mrb[0].mxu0
      %2484 = vmatprep.mubr.bf16.mxu0 0
      %2485 = vmatmul.mubr.bf16.gmra.mrb[0].mxu0 %v2274
      %v2486 = vpop.f32.mrb[0].mxu0
      %v2487 = vadd.f32 0.0, %v2486
      %v2488 = vpop.f32.mrb[0].mxu0
      %v2489 = vpop.f32.mrb[0].mxu0
      %v2490 = vadd.f32 0.0, %v2489
      %v2491 = vpop.f32.mrb[0].mxu0
      %2492 = vmatprep.mubr.bf16.mxu0 0
      %2493 = vmatmul.mubr.bf16.gmra.mrb[0].mxu0 %v2275
      %v2494 = vpop.f32.mrb[0].mxu0
      %v2495 = vadd.f32 0.0, %v2494
      %v2496 = vpop.f32.mrb[0].mxu0
      %v2497 = vpop.f32.mrb[0].mxu0
      %v2498 = vadd.f32 0.0, %v2497
      %v2499 = vpop.f32.mrb[0].mxu0
      %2500 = vdwg.mxu0
      %v2501 = vadd.f32 %v1922, %v2375
      %v2502 = vadd.f32 %v1925, %v2378
      %v2503 = vadd.f32 %v1930, %v2383
      %v2504 = vadd.f32 %v1933, %v2386
      %v2505 = vadd.f32 %v1938, %v2391
      %v2506 = vadd.f32 %v1941, %v2394
      %v2507 = vadd.f32 %v1946, %v2399
      %v2508 = vadd.f32 %v1949, %v2402
      %v2509 = vadd.f32 %v1954, %v2407
      %v2510 = vadd.f32 %v1957, %v2410
      %v2511 = vadd.f32 %v1962, %v2415
      %v2512 = vadd.f32 %v1965, %v2418
      %v2513 = vadd.f32 %v1970, %v2423
      %v2514 = vadd.f32 %v1973, %v2426
      %v2515 = vadd.f32 %v1978, %v2431
      %v2516 = vadd.f32 %v1981, %v2434
      %v2517 = vadd.f32 %v1986, %v2439
      %v2518 = vadd.f32 %v1989, %v2442
      %v2519 = vadd.f32 %v1994, %v2447
      %v2520 = vadd.f32 %v1997, %v2450
      %v2521 = vadd.f32 %v2002, %v2455
      %v2522 = vadd.f32 %v2005, %v2458
      %v2523 = vadd.f32 %v2010, %v2463
      %v2524 = vadd.f32 %v2013, %v2466
      %v2525 = vadd.f32 %v2018, %v2471
      %v2526 = vadd.f32 %v2021, %v2474
      %v2527 = vadd.f32 %v2026, %v2479
      %v2528 = vadd.f32 %v2029, %v2482
      %v2529 = vadd.f32 %v2034, %v2487
      %v2530 = vadd.f32 %v2037, %v2490
      %v2531 = vadd.f32 %v2042, %v2495
      %v2532 = vadd.f32 %v2045, %v2498
      %v2533 = vld [vmem:[%s884] sm:$0xf]
      %v2534 = vld [vmem:[%s884 + $0x4] sm:$0xf]
      %v2535 = vld [vmem:[%s884 + $0xc] sm:$0xf]
      %v2536 = vld [vmem:[%s884 + $0x10] sm:$0xf]
      %v2537 = vld [vmem:[%s884 + $0x18] sm:$0xf]
      %v2538 = vld [vmem:[%s884 + $0x1c] sm:$0xf]
      %v2539 = vld [vmem:[%s884 + $0x24] sm:$0xf]
      %v2540 = vld [vmem:[%s884 + $0x28] sm:$0xf]
      %v2541 = vld [vmem:[%s884 + $0x30] sm:$0xf]
      %v2542 = vld [vmem:[%s884 + $0x34] sm:$0xf]
      %v2543 = vld [vmem:[%s884 + $0x3c] sm:$0xf]
      %v2544 = vld [vmem:[%s884 + $0x40] sm:$0xf]
      %v2545 = vld [vmem:[%s884 + $0x48] sm:$0xf]
      %v2546 = vld [vmem:[%s884 + $0x4c] sm:$0xf]
      %v2547 = vld [vmem:[%s884 + $0x54] sm:$0xf]
      %v2548 = vld [vmem:[%s884 + $0x58] sm:$0xf]
      %v2549 = vld [vmem:[%s884 + $0x60] sm:$0xf]
      %v2550 = vld [vmem:[%s884 + $0x64] sm:$0xf]
      %v2551 = vld [vmem:[%s884 + $0x6c] sm:$0xf]
      %v2552 = vld [vmem:[%s884 + $0x70] sm:$0xf]
      %v2553 = vld [vmem:[%s884 + $0x78] sm:$0xf]
      %v2554 = vld [vmem:[%s884 + $0x7c] sm:$0xf]
      %v2555 = vld [vmem:[%s884 + $0x84] sm:$0xf]
      %v2556 = vld [vmem:[%s884 + $0x88] sm:$0xf]
      %v2557 = vld [vmem:[%s884 + $0x90] sm:$0xf]
      %v2558 = vld [vmem:[%s884 + $0x94] sm:$0xf]
      %v2559 = vld [vmem:[%s884 + $0x9c] sm:$0xf]
      %v2560 = vld [vmem:[%s884 + $0xa0] sm:$0xf]
      %v2561 = vld [vmem:[%s884 + $0xa8] sm:$0xf]
      %v2562 = vld [vmem:[%s884 + $0xac] sm:$0xf]
      %v2563 = vld [vmem:[%s884 + $0xb4] sm:$0xf]
      %v2564 = vld [vmem:[%s884 + $0xb8] sm:$0xf]
      %s2565 = scalar_lea.vmem %s3, 192
      %v2566 = vld [vmem:[%s2565] sm:$0xf]
      %v2567 = vld [vmem:[%s2565 + $0x4] sm:$0xf]
      %v2568 = vld [vmem:[%s2565 + $0x8] sm:$0xf]
      %v2569 = vld [vmem:[%s2565 + $0xc] sm:$0xf]
      %v2570 = vld [vmem:[%s2565 + $0x10] sm:$0xf]
      %v2571 = vld [vmem:[%s2565 + $0x14] sm:$0xf]
      %v2572 = vld [vmem:[%s2565 + $0x18] sm:$0xf]
      %v2573 = vld [vmem:[%s2565 + $0x1c] sm:$0xf]
      %v2574 = vld [vmem:[%s2565 + $0x20] sm:$0xf]
      %v2575 = vld [vmem:[%s2565 + $0x24] sm:$0xf]
      %v2576 = vld [vmem:[%s2565 + $0x28] sm:$0xf]
      %v2577 = vld [vmem:[%s2565 + $0x2c] sm:$0xf]
      %v2578 = vld [vmem:[%s2565 + $0x30] sm:$0xf]
      %v2579 = vld [vmem:[%s2565 + $0x34] sm:$0xf]
      %v2580 = vld [vmem:[%s2565 + $0x38] sm:$0xf]
      %v2581 = vld [vmem:[%s2565 + $0x3c] sm:$0xf]
      %v2614 = vunpack.c.l.b16 %v2533
      %v2615 = vunpack.c.l.b16 %v2534
      %v2616 = vunpack.c.l.b16 %v2535
      %v2617 = vunpack.c.l.b16 %v2536
      %v2618 = vunpack.c.l.b16 %v2537
      %v2619 = vunpack.c.l.b16 %v2538
      %v2620 = vunpack.c.l.b16 %v2539
      %v2621 = vunpack.c.l.b16 %v2540
      %v2622 = vunpack.c.l.b16 %v2541
      %v2623 = vunpack.c.l.b16 %v2542
      %v2624 = vunpack.c.l.b16 %v2543
      %v2625 = vunpack.c.l.b16 %v2544
      %v2626 = vunpack.c.l.b16 %v2545
      %v2627 = vunpack.c.l.b16 %v2546
      %v2628 = vunpack.c.l.b16 %v2547
      %v2629 = vunpack.c.l.b16 %v2548
      %v2630 = vunpack.c.l.b16 %v2549
      %v2631 = vunpack.c.l.b16 %v2550
      %v2632 = vunpack.c.l.b16 %v2551
      %v2633 = vunpack.c.l.b16 %v2552
      %v2634 = vunpack.c.l.b16 %v2553
      %v2635 = vunpack.c.l.b16 %v2554
      %v2636 = vunpack.c.l.b16 %v2555
      %v2637 = vunpack.c.l.b16 %v2556
      %v2638 = vunpack.c.l.b16 %v2557
      %v2639 = vunpack.c.l.b16 %v2558
      %v2640 = vunpack.c.l.b16 %v2559
      %v2641 = vunpack.c.l.b16 %v2560
      %v2642 = vunpack.c.l.b16 %v2561
      %v2643 = vunpack.c.l.b16 %v2562
      %v2644 = vunpack.c.l.b16 %v2563
      %v2645 = vunpack.c.l.b16 %v2564
      %v2646 = vpack.c.b16 %v2615, %v2614
      %v2647 = vpack.c.b16 %v2617, %v2616
      %v2648 = vpack.c.b16 %v2619, %v2618
      %v2649 = vpack.c.b16 %v2621, %v2620
      %v2650 = vpack.c.b16 %v2623, %v2622
      %v2651 = vpack.c.b16 %v2625, %v2624
      %v2652 = vpack.c.b16 %v2627, %v2626
      %v2653 = vpack.c.b16 %v2629, %v2628
      %v2654 = vpack.c.b16 %v2631, %v2630
      %v2655 = vpack.c.b16 %v2633, %v2632
      %v2656 = vpack.c.b16 %v2635, %v2634
      %v2657 = vpack.c.b16 %v2637, %v2636
      %v2658 = vpack.c.b16 %v2639, %v2638
      %v2659 = vpack.c.b16 %v2641, %v2640
      %v2660 = vpack.c.b16 %v2643, %v2642
      %v2661 = vpack.c.b16 %v2645, %v2644
      %v2694 = vunpack.c.l.b16 %v2566
      %v2695 = vunpack.c.l.b16 %v2567
      %v2696 = vunpack.c.l.b16 %v2568
      %v2697 = vunpack.c.l.b16 %v2569
      %v2698 = vunpack.c.l.b16 %v2570
      %v2699 = vunpack.c.l.b16 %v2571
      %v2700 = vunpack.c.l.b16 %v2572
      %v2701 = vunpack.c.l.b16 %v2573
      %v2702 = vunpack.c.l.b16 %v2574
      %v2703 = vunpack.c.l.b16 %v2575
      %v2704 = vunpack.c.l.b16 %v2576
      %v2705 = vunpack.c.l.b16 %v2577
      %v2706 = vunpack.c.l.b16 %v2578
      %v2707 = vunpack.c.l.b16 %v2579
      %v2708 = vunpack.c.l.b16 %v2580
      %v2709 = vunpack.c.l.b16 %v2581
      %v2710 = vpack.c.b16 %v2695, %v2694
      %v2711 = vpack.c.b16 %v2697, %v2696
      %v2712 = vpack.c.b16 %v2699, %v2698
      %v2713 = vpack.c.b16 %v2701, %v2700
      %v2714 = vpack.c.b16 %v2703, %v2702
      %v2715 = vpack.c.b16 %v2705, %v2704
      %v2716 = vpack.c.b16 %v2707, %v2706
      %v2717 = vpack.c.b16 %v2709, %v2708
      %2726 = vmatprep.subr.bf16.mxu0 0
      %2727 = vmatpush1.bf16.msra.mxu0 %v2710
      %2728 = vmatprep.subr.bf16.mxu0 0
      %2729 = vmatpush1.bf16.msra.mxu0 %v2711
      %2730 = vmatprep.subr.bf16.mxu0 0
      %2731 = vmatpush1.bf16.msra.mxu0 %v2712
      %2732 = vmatprep.subr.bf16.mxu0 0
      %2733 = vmatpush1.bf16.msra.mxu0 %v2713
      %2734 = vmatprep.subr.bf16.mxu0 0
      %2735 = vmatpush1.bf16.msra.mxu0 %v2714
      %2736 = vmatprep.subr.bf16.mxu0 0
      %2737 = vmatpush1.bf16.msra.mxu0 %v2715
      %2738 = vmatprep.subr.bf16.mxu0 0
      %2739 = vmatpush1.bf16.msra.mxu0 %v2716
      %2740 = vmatprep.subr.bf16.mxu0 0
      %2741 = vmatpush1.bf16.msra.mxu0 %v2717
      %2742 = vmatprep.subr.bf16.mxu0 0
      %2743 = vmatpush1.bf16.msra.mxu0 0
      %2744 = vmatprep.subr.bf16.mxu0 0
      %2745 = vmatpush1.bf16.msra.mxu0 0
      %2746 = vmatprep.subr.bf16.mxu0 0
      %2747 = vmatpush1.bf16.msra.mxu0 0
      %2748 = vmatprep.subr.bf16.mxu0 0
      %2749 = vmatpush1.bf16.msra.mxu0 0
      %2750 = vmatprep.subr.bf16.mxu0 0
      %2751 = vmatpush1.bf16.msra.mxu0 0
      %2752 = vmatprep.subr.bf16.mxu0 0
      %2753 = vmatpush1.bf16.msra.mxu0 0
      %2754 = vmatprep.subr.bf16.mxu0 0
      %2755 = vmatpush1.bf16.msra.mxu0 0
      %2756 = vmatprep.subr.bf16.mxu0 0
      %2757 = vmatpush1.bf16.msra.mxu0 0
      %2758 = vmatprep.mubr.bf16.mxu0 0
      %2759 = vmatmul.mubr.bf16.gmra.mrb[0].mxu0 %v2646
      %v2760 = vpop.f32.mrb[0].mxu0
      %v2761 = vadd.f32 0.0, %v2760
      %v2762 = vpop.f32.mrb[0].mxu0
      %v2763 = vpop.f32.mrb[0].mxu0
      %v2764 = vadd.f32 0.0, %v2763
      %v2765 = vpop.f32.mrb[0].mxu0
      %2766 = vmatprep.mubr.bf16.mxu0 0
      %2767 = vmatmul.mubr.bf16.gmra.mrb[0].mxu0 %v2647
      %v2768 = vpop.f32.mrb[0].mxu0
      %v2769 = vadd.f32 0.0, %v2768
      %v2770 = vpop.f32.mrb[0].mxu0
      %v2771 = vpop.f32.mrb[0].mxu0
      %v2772 = vadd.f32 0.0, %v2771
      %v2773 = vpop.f32.mrb[0].mxu0
      %2774 = vmatprep.mubr.bf16.mxu0 0
      %2775 = vmatmul.mubr.bf16.gmra.mrb[0].mxu0 %v2648
      %v2776 = vpop.f32.mrb[0].mxu0
      %v2777 = vadd.f32 0.0, %v2776
      %v2778 = vpop.f32.mrb[0].mxu0
      %v2779 = vpop.f32.mrb[0].mxu0
      %v2780 = vadd.f32 0.0, %v2779
      %v2781 = vpop.f32.mrb[0].mxu0
      %2782 = vmatprep.mubr.bf16.mxu0 0
      %2783 = vmatmul.mubr.bf16.gmra.mrb[0].mxu0 %v2649
      %v2784 = vpop.f32.mrb[0].mxu0
      %v2785 = vadd.f32 0.0, %v2784
      %v2786 = vpop.f32.mrb[0].mxu0
      %v2787 = vpop.f32.mrb[0].mxu0
      %v2788 = vadd.f32 0.0, %v2787
      %v2789 = vpop.f32.mrb[0].mxu0
      %2790 = vmatprep.mubr.bf16.mxu0 0
      %2791 = vmatmul.mubr.bf16.gmra.mrb[0].mxu0 %v2650
      %v2792 = vpop.f32.mrb[0].mxu0
      %v2793 = vadd.f32 0.0, %v2792
      %v2794 = vpop.f32.mrb[0].mxu0
      %v2795 = vpop.f32.mrb[0].mxu0
      %v2796 = vadd.f32 0.0, %v2795
      %v2797 = vpop.f32.mrb[0].mxu0
      %2798 = vmatprep.mubr.bf16.mxu0 0
      %2799 = vmatmul.mubr.bf16.gmra.mrb[0].mxu0 %v2651
      %v2800 = vpop.f32.mrb[0].mxu0
      %v2801 = vadd.f32 0.0, %v2800
      %v2802 = vpop.f32.mrb[0].mxu0
      %v2803 = vpop.f32.mrb[0].mxu0
      %v2804 = vadd.f32 0.0, %v2803
      %v2805 = vpop.f32.mrb[0].mxu0
      %2806 = vmatprep.mubr.bf16.mxu0 0
      %2807 = vmatmul.mubr.bf16.gmra.mrb[0].mxu0 %v2652
      %v2808 = vpop.f32.mrb[0].mxu0
      %v2809 = vadd.f32 0.0, %v2808
      %v2810 = vpop.f32.mrb[0].mxu0
      %v2811 = vpop.f32.mrb[0].mxu0
      %v2812 = vadd.f32 0.0, %v2811
      %v2813 = vpop.f32.mrb[0].mxu0
      %2814 = vmatprep.mubr.bf16.mxu0 0
      %2815 = vmatmul.mubr.bf16.gmra.mrb[0].mxu0 %v2653
      %v2816 = vpop.f32.mrb[0].mxu0
      %v2817 = vadd.f32 0.0, %v2816
      %v2818 = vpop.f32.mrb[0].mxu0
      %v2819 = vpop.f32.mrb[0].mxu0
      %v2820 = vadd.f32 0.0, %v2819
      %v2821 = vpop.f32.mrb[0].mxu0
      %2822 = vmatprep.mubr.bf16.mxu0 0
      %2823 = vmatmul.mubr.bf16.gmra.mrb[0].mxu0 %v2654
      %v2824 = vpop.f32.mrb[0].mxu0
      %v2825 = vadd.f32 0.0, %v2824
      %v2826 = vpop.f32.mrb[0].mxu0
      %v2827 = vpop.f32.mrb[0].mxu0
      %v2828 = vadd.f32 0.0, %v2827
      %v2829 = vpop.f32.mrb[0].mxu0
      %2830 = vmatprep.mubr.bf16.mxu0 0
      %2831 = vmatmul.mubr.bf16.gmra.mrb[0].mxu0 %v2655
      %v2832 = vpop.f32.mrb[0].mxu0
      %v2833 = vadd.f32 0.0, %v2832
      %v2834 = vpop.f32.mrb[0].mxu0
      %v2835 = vpop.f32.mrb[0].mxu0
      %v2836 = vadd.f32 0.0, %v2835
      %v2837 = vpop.f32.mrb[0].mxu0
      %2838 = vmatprep.mubr.bf16.mxu0 0
      %2839 = vmatmul.mubr.bf16.gmra.mrb[0].mxu0 %v2656
      %v2840 = vpop.f32.mrb[0].mxu0
      %v2841 = vadd.f32 0.0, %v2840
      %v2842 = vpop.f32.mrb[0].mxu0
      %v2843 = vpop.f32.mrb[0].mxu0
      %v2844 = vadd.f32 0.0, %v2843
      %v2845 = vpop.f32.mrb[0].mxu0
      %2846 = vmatprep.mubr.bf16.mxu0 0
      %2847 = vmatmul.mubr.bf16.gmra.mrb[0].mxu0 %v2657
      %v2848 = vpop.f32.mrb[0].mxu0
      %v2849 = vadd.f32 0.0, %v2848
      %v2850 = vpop.f32.mrb[0].mxu0
      %v2851 = vpop.f32.mrb[0].mxu0
      %v2852 = vadd.f32 0.0, %v2851
      %v2853 = vpop.f32.mrb[0].mxu0
      %2854 = vmatprep.mubr.bf16.mxu0 0
      %2855 = vmatmul.mubr.bf16.gmra.mrb[0].mxu0 %v2658
      %v2856 = vpop.f32.mrb[0].mxu0
      %v2857 = vadd.f32 0.0, %v2856
      %v2858 = vpop.f32.mrb[0].mxu0
      %v2859 = vpop.f32.mrb[0].mxu0
      %v2860 = vadd.f32 0.0, %v2859
      %v2861 = vpop.f32.mrb[0].mxu0
      %2862 = vmatprep.mubr.bf16.mxu0 0
      %2863 = vmatmul.mubr.bf16.gmra.mrb[0].mxu0 %v2659
      %v2864 = vpop.f32.mrb[0].mxu0
      %v2865 = vadd.f32 0.0, %v2864
      %v2866 = vpop.f32.mrb[0].mxu0
      %v2867 = vpop.f32.mrb[0].mxu0
      %v2868 = vadd.f32 0.0, %v2867
      %v2869 = vpop.f32.mrb[0].mxu0
      %2870 = vmatprep.mubr.bf16.mxu0 0
      %2871 = vmatmul.mubr.bf16.gmra.mrb[0].mxu0 %v2660
      %v2872 = vpop.f32.mrb[0].mxu0
      %v2873 = vadd.f32 0.0, %v2872
      %v2874 = vpop.f32.mrb[0].mxu0
      %v2875 = vpop.f32.mrb[0].mxu0
      %v2876 = vadd.f32 0.0, %v2875
      %v2877 = vpop.f32.mrb[0].mxu0
      %2878 = vmatprep.mubr.bf16.mxu0 0
      %2879 = vmatmul.mubr.bf16.gmra.mrb[0].mxu0 %v2661
      %v2880 = vpop.f32.mrb[0].mxu0
      %v2881 = vadd.f32 0.0, %v2880
      %v2882 = vpop.f32.mrb[0].mxu0
      %v2883 = vpop.f32.mrb[0].mxu0
      %v2884 = vadd.f32 0.0, %v2883
      %v2885 = vpop.f32.mrb[0].mxu0
      %2886 = vdwg.mxu0
      %v2887 = vadd.f32 %v2501, %v2761
      %v2888 = vadd.f32 %v2502, %v2764
      %v2889 = vadd.f32 %v2503, %v2769
      %v2890 = vadd.f32 %v2504, %v2772
      %v2891 = vadd.f32 %v2505, %v2777
      %v2892 = vadd.f32 %v2506, %v2780
      %v2893 = vadd.f32 %v2507, %v2785
      %v2894 = vadd.f32 %v2508, %v2788
      %v2895 = vadd.f32 %v2509, %v2793
      %v2896 = vadd.f32 %v2510, %v2796
      %v2897 = vadd.f32 %v2511, %v2801
      %v2898 = vadd.f32 %v2512, %v2804
      %v2899 = vadd.f32 %v2513, %v2809
      %v2900 = vadd.f32 %v2514, %v2812
      %v2901 = vadd.f32 %v2515, %v2817
      %v2902 = vadd.f32 %v2516, %v2820
      %v2903 = vadd.f32 %v2517, %v2825
      %v2904 = vadd.f32 %v2518, %v2828
      %v2905 = vadd.f32 %v2519, %v2833
      %v2906 = vadd.f32 %v2520, %v2836
      %v2907 = vadd.f32 %v2521, %v2841
      %v2908 = vadd.f32 %v2522, %v2844
      %v2909 = vadd.f32 %v2523, %v2849
      %v2910 = vadd.f32 %v2524, %v2852
      %v2911 = vadd.f32 %v2525, %v2857
      %v2912 = vadd.f32 %v2526, %v2860
      %v2913 = vadd.f32 %v2527, %v2865
      %v2914 = vadd.f32 %v2528, %v2868
      %v2915 = vadd.f32 %v2529, %v2873
      %v2916 = vadd.f32 %v2530, %v2876
      %v2917 = vadd.f32 %v2531, %v2881
      %v2918 = vadd.f32 %v2532, %v2884
      %v2919 = vld [vmem:[%s884] sm:$0xf]
      %v2920 = vld [vmem:[%s884 + $0x4] sm:$0xf]
      %v2921 = vld [vmem:[%s884 + $0x8] sm:$0x1]
      %v2922 = vld [vmem:[%s884 + $0xc] sm:$0xf]
      %v2923 = vld [vmem:[%s884 + $0x10] sm:$0xf]
      %v2924 = vld [vmem:[%s884 + $0x14] sm:$0x1]
      %v2925 = vld [vmem:[%s884 + $0x18] sm:$0xf]
      %v2926 = vld [vmem:[%s884 + $0x1c] sm:$0xf]
      %v2927 = vld [vmem:[%s884 + $0x20] sm:$0x1]
      %v2928 = vld [vmem:[%s884 + $0x24] sm:$0xf]
      %v2929 = vld [vmem:[%s884 + $0x28] sm:$0xf]
      %v2930 = vld [vmem:[%s884 + $0x2c] sm:$0x1]
      %v2931 = vld [vmem:[%s884 + $0x30] sm:$0xf]
      %v2932 = vld [vmem:[%s884 + $0x34] sm:$0xf]
      %v2933 = vld [vmem:[%s884 + $0x38] sm:$0x1]
      %v2934 = vld [vmem:[%s884 + $0x3c] sm:$0xf]
      %v2935 = vld [vmem:[%s884 + $0x40] sm:$0xf]
      %v2936 = vld [vmem:[%s884 + $0x44] sm:$0x1]
      %v2937 = vld [vmem:[%s884 + $0x48] sm:$0xf]
      %v2938 = vld [vmem:[%s884 + $0x4c] sm:$0xf]
      %v2939 = vld [vmem:[%s884 + $0x50] sm:$0x1]
      %v2940 = vld [vmem:[%s884 + $0x54] sm:$0xf]
      %v2941 = vld [vmem:[%s884 + $0x58] sm:$0xf]
      %v2942 = vld [vmem:[%s884 + $0x5c] sm:$0x1]
      %v2943 = vld [vmem:[%s884 + $0x60] sm:$0xf]
      %v2944 = vld [vmem:[%s884 + $0x64] sm:$0xf]
      %v2945 = vld [vmem:[%s884 + $0x68] sm:$0x1]
      %v2946 = vld [vmem:[%s884 + $0x6c] sm:$0xf]
      %v2947 = vld [vmem:[%s884 + $0x70] sm:$0xf]
      %v2948 = vld [vmem:[%s884 + $0x74] sm:$0x1]
      %v2949 = vld [vmem:[%s884 + $0x78] sm:$0xf]
      %v2950 = vld [vmem:[%s884 + $0x7c] sm:$0xf]
      %v2951 = vld [vmem:[%s884 + $0x80] sm:$0x1]
      %v2952 = vld [vmem:[%s884 + $0x84] sm:$0xf]
      %v2953 = vld [vmem:[%s884 + $0x88] sm:$0xf]
      %v2954 = vld [vmem:[%s884 + $0x8c] sm:$0x1]
      %v2955 = vld [vmem:[%s884 + $0x90] sm:$0xf]
      %v2956 = vld [vmem:[%s884 + $0x94] sm:$0xf]
      %v2957 = vld [vmem:[%s884 + $0x98] sm:$0x1]
      %v2958 = vld [vmem:[%s884 + $0x9c] sm:$0xf]
      %v2959 = vld [vmem:[%s884 + $0xa0] sm:$0xf]
      %v2960 = vld [vmem:[%s884 + $0xa4] sm:$0x1]
      %v2961 = vld [vmem:[%s884 + $0xa8] sm:$0xf]
      %v2962 = vld [vmem:[%s884 + $0xac] sm:$0xf]
      %v2963 = vld [vmem:[%s884 + $0xb0] sm:$0x1]
      %v2964 = vld [vmem:[%s884 + $0xb4] sm:$0xf]
      %v2965 = vld [vmem:[%s884 + $0xb8] sm:$0xf]
      %v2966 = vld [vmem:[%s884 + $0xbc] sm:$0x1]
      %v2968 = vshrl.u32 %v2919, 16
      %v2970 = vrot.slane %v2968, 4
      %v2971 = vshll.u32 %v2919, 16
      %v2973 = vrot.slane %v2971, 5
      %v2974 = vor.u32 %v2970, %v2973
      %v2975 = vrot.slane %v2974, 4
      %v2977 = vshll.u32 %v2920, 16
      %v2979 = vrot.slane %v2977, 5
      %v2980 = vsel %vm1068, %v2975, %v2979
      %v2981 = vshrl.u32 %v2920, 16
      %v2983 = vrot.slane %v2981, 4
      %v2984 = vor.u32 %v2983, %v2979
      %v2985 = vrot.slane %v2984, 4
      %v2987 = vshll.u32 %v2921, 16
      %v2989 = vrot.slane %v2987, 5
      %v2990 = vsel %vm1068, %v2985, %v2989
      %v2992 = vshrl.u32 %v2922, 16
      %v2994 = vrot.slane %v2992, 4
      %v2995 = vshll.u32 %v2922, 16
      %v2997 = vrot.slane %v2995, 5
      %v2998 = vor.u32 %v2994, %v2997
      %v2999 = vrot.slane %v2998, 4
      %v3001 = vshll.u32 %v2923, 16
      %v3003 = vrot.slane %v3001, 5
      %v3004 = vsel %vm1068, %v2999, %v3003
      %v3005 = vshrl.u32 %v2923, 16
      %v3007 = vrot.slane %v3005, 4
      %v3008 = vor.u32 %v3007, %v3003
      %v3009 = vrot.slane %v3008, 4
      %v3011 = vshll.u32 %v2924, 16
      %v3013 = vrot.slane %v3011, 5
      %v3014 = vsel %vm1068, %v3009, %v3013
      %v3016 = vshrl.u32 %v2925, 16
      %v3018 = vrot.slane %v3016, 4
      %v3019 = vshll.u32 %v2925, 16
      %v3021 = vrot.slane %v3019, 5
      %v3022 = vor.u32 %v3018, %v3021
      %v3023 = vrot.slane %v3022, 4
      %v3025 = vshll.u32 %v2926, 16
      %v3027 = vrot.slane %v3025, 5
      %v3028 = vsel %vm1068, %v3023, %v3027
      %v3029 = vshrl.u32 %v2926, 16
      %v3031 = vrot.slane %v3029, 4
      %v3032 = vor.u32 %v3031, %v3027
      %v3033 = vrot.slane %v3032, 4
      %v3035 = vshll.u32 %v2927, 16
      %v3037 = vrot.slane %v3035, 5
      %v3038 = vsel %vm1068, %v3033, %v3037
      %v3040 = vshrl.u32 %v2928, 16
      %v3042 = vrot.slane %v3040, 4
      %v3043 = vshll.u32 %v2928, 16
      %v3045 = vrot.slane %v3043, 5
      %v3046 = vor.u32 %v3042, %v3045
      %v3047 = vrot.slane %v3046, 4
      %v3049 = vshll.u32 %v2929, 16
      %v3051 = vrot.slane %v3049, 5
      %v3052 = vsel %vm1068, %v3047, %v3051
      %v3053 = vshrl.u32 %v2929, 16
      %v3055 = vrot.slane %v3053, 4
      %v3056 = vor.u32 %v3055, %v3051
      %v3057 = vrot.slane %v3056, 4
      %v3059 = vshll.u32 %v2930, 16
      %v3061 = vrot.slane %v3059, 5
      %v3062 = vsel %vm1068, %v3057, %v3061
      %v3064 = vshrl.u32 %v2931, 16
      %v3066 = vrot.slane %v3064, 4
      %v3067 = vshll.u32 %v2931, 16
      %v3069 = vrot.slane %v3067, 5
      %v3070 = vor.u32 %v3066, %v3069
      %v3071 = vrot.slane %v3070, 4
      %v3073 = vshll.u32 %v2932, 16
      %v3075 = vrot.slane %v3073, 5
      %v3076 = vsel %vm1068, %v3071, %v3075
      %v3077 = vshrl.u32 %v2932, 16
      %v3079 = vrot.slane %v3077, 4
      %v3080 = vor.u32 %v3079, %v3075
      %v3081 = vrot.slane %v3080, 4
      %v3083 = vshll.u32 %v2933, 16
      %v3085 = vrot.slane %v3083, 5
      %v3086 = vsel %vm1068, %v3081, %v3085
      %v3088 = vshrl.u32 %v2934, 16
      %v3090 = vrot.slane %v3088, 4
      %v3091 = vshll.u32 %v2934, 16
      %v3093 = vrot.slane %v3091, 5
      %v3094 = vor.u32 %v3090, %v3093
      %v3095 = vrot.slane %v3094, 4
      %v3097 = vshll.u32 %v2935, 16
      %v3099 = vrot.slane %v3097, 5
      %v3100 = vsel %vm1068, %v3095, %v3099
      %v3101 = vshrl.u32 %v2935, 16
      %v3103 = vrot.slane %v3101, 4
      %v3104 = vor.u32 %v3103, %v3099
      %v3105 = vrot.slane %v3104, 4
      %v3107 = vshll.u32 %v2936, 16
      %v3109 = vrot.slane %v3107, 5
      %v3110 = vsel %vm1068, %v3105, %v3109
      %v3112 = vshrl.u32 %v2937, 16
      %v3114 = vrot.slane %v3112, 4
      %v3115 = vshll.u32 %v2937, 16
      %v3117 = vrot.slane %v3115, 5
      %v3118 = vor.u32 %v3114, %v3117
      %v3119 = vrot.slane %v3118, 4
      %v3121 = vshll.u32 %v2938, 16
      %v3123 = vrot.slane %v3121, 5
      %v3124 = vsel %vm1068, %v3119, %v3123
      %v3125 = vshrl.u32 %v2938, 16
      %v3127 = vrot.slane %v3125, 4
      %v3128 = vor.u32 %v3127, %v3123
      %v3129 = vrot.slane %v3128, 4
      %v3131 = vshll.u32 %v2939, 16
      %v3133 = vrot.slane %v3131, 5
      %v3134 = vsel %vm1068, %v3129, %v3133
      %v3136 = vshrl.u32 %v2940, 16
      %v3138 = vrot.slane %v3136, 4
      %v3139 = vshll.u32 %v2940, 16
      %v3141 = vrot.slane %v3139, 5
      %v3142 = vor.u32 %v3138, %v3141
      %v3143 = vrot.slane %v3142, 4
      %v3145 = vshll.u32 %v2941, 16
      %v3147 = vrot.slane %v3145, 5
      %v3148 = vsel %vm1068, %v3143, %v3147
      %v3149 = vshrl.u32 %v2941, 16
      %v3151 = vrot.slane %v3149, 4
      %v3152 = vor.u32 %v3151, %v3147
      %v3153 = vrot.slane %v3152, 4
      %v3155 = vshll.u32 %v2942, 16
      %v3157 = vrot.slane %v3155, 5
      %v3158 = vsel %vm1068, %v3153, %v3157
      %v3160 = vshrl.u32 %v2943, 16
      %v3162 = vrot.slane %v3160, 4
      %v3163 = vshll.u32 %v2943, 16
      %v3165 = vrot.slane %v3163, 5
      %v3166 = vor.u32 %v3162, %v3165
      %v3167 = vrot.slane %v3166, 4
      %v3169 = vshll.u32 %v2944, 16
      %v3171 = vrot.slane %v3169, 5
      %v3172 = vsel %vm1068, %v3167, %v3171
      %v3173 = vshrl.u32 %v2944, 16
      %v3175 = vrot.slane %v3173, 4
      %v3176 = vor.u32 %v3175, %v3171
      %v3177 = vrot.slane %v3176, 4
      %v3179 = vshll.u32 %v2945, 16
      %v3181 = vrot.slane %v3179, 5
      %v3182 = vsel %vm1068, %v3177, %v3181
      %v3184 = vshrl.u32 %v2946, 16
      %v3186 = vrot.slane %v3184, 4
      %v3187 = vshll.u32 %v2946, 16
      %v3189 = vrot.slane %v3187, 5
      %v3190 = vor.u32 %v3186, %v3189
      %v3191 = vrot.slane %v3190, 4
      %v3193 = vshll.u32 %v2947, 16
      %v3195 = vrot.slane %v3193, 5
      %v3196 = vsel %vm1068, %v3191, %v3195
      %v3197 = vshrl.u32 %v2947, 16
      %v3199 = vrot.slane %v3197, 4
      %v3200 = vor.u32 %v3199, %v3195
      %v3201 = vrot.slane %v3200, 4
      %v3203 = vshll.u32 %v2948, 16
      %v3205 = vrot.slane %v3203, 5
      %v3206 = vsel %vm1068, %v3201, %v3205
      %v3208 = vshrl.u32 %v2949, 16
      %v3210 = vrot.slane %v3208, 4
      %v3211 = vshll.u32 %v2949, 16
      %v3213 = vrot.slane %v3211, 5
      %v3214 = vor.u32 %v3210, %v3213
      %v3215 = vrot.slane %v3214, 4
      %v3217 = vshll.u32 %v2950, 16
      %v3219 = vrot.slane %v3217, 5
      %v3220 = vsel %vm1068, %v3215, %v3219
      %v3221 = vshrl.u32 %v2950, 16
      %v3223 = vrot.slane %v3221, 4
      %v3224 = vor.u32 %v3223, %v3219
      %v3225 = vrot.slane %v3224, 4
      %v3227 = vshll.u32 %v2951, 16
      %v3229 = vrot.slane %v3227, 5
      %v3230 = vsel %vm1068, %v3225, %v3229
      %v3232 = vshrl.u32 %v2952, 16
      %v3234 = vrot.slane %v3232, 4
      %v3235 = vshll.u32 %v2952, 16
      %v3237 = vrot.slane %v3235, 5
      %v3238 = vor.u32 %v3234, %v3237
      %v3239 = vrot.slane %v3238, 4
      %v3241 = vshll.u32 %v2953, 16
      %v3243 = vrot.slane %v3241, 5
      %v3244 = vsel %vm1068, %v3239, %v3243
      %v3245 = vshrl.u32 %v2953, 16
      %v3247 = vrot.slane %v3245, 4
      %v3248 = vor.u32 %v3247, %v3243
      %v3249 = vrot.slane %v3248, 4
      %v3251 = vshll.u32 %v2954, 16
      %v3253 = vrot.slane %v3251, 5
      %v3254 = vsel %vm1068, %v3249, %v3253
      %v3256 = vshrl.u32 %v2955, 16
      %v3258 = vrot.slane %v3256, 4
      %v3259 = vshll.u32 %v2955, 16
      %v3261 = vrot.slane %v3259, 5
      %v3262 = vor.u32 %v3258, %v3261
      %v3263 = vrot.slane %v3262, 4
      %v3265 = vshll.u32 %v2956, 16
      %v3267 = vrot.slane %v3265, 5
      %v3268 = vsel %vm1068, %v3263, %v3267
      %v3269 = vshrl.u32 %v2956, 16
      %v3271 = vrot.slane %v3269, 4
      %v3272 = vor.u32 %v3271, %v3267
      %v3273 = vrot.slane %v3272, 4
      %v3275 = vshll.u32 %v2957, 16
      %v3277 = vrot.slane %v3275, 5
      %v3278 = vsel %vm1068, %v3273, %v3277
      %v3280 = vshrl.u32 %v2958, 16
      %v3282 = vrot.slane %v3280, 4
      %v3283 = vshll.u32 %v2958, 16
      %v3285 = vrot.slane %v3283, 5
      %v3286 = vor.u32 %v3282, %v3285
      %v3287 = vrot.slane %v3286, 4
      %v3289 = vshll.u32 %v2959, 16
      %v3291 = vrot.slane %v3289, 5
      %v3292 = vsel %vm1068, %v3287, %v3291
      %v3293 = vshrl.u32 %v2959, 16
      %v3295 = vrot.slane %v3293, 4
      %v3296 = vor.u32 %v3295, %v3291
      %v3297 = vrot.slane %v3296, 4
      %v3299 = vshll.u32 %v2960, 16
      %v3301 = vrot.slane %v3299, 5
      %v3302 = vsel %vm1068, %v3297, %v3301
      %v3304 = vshrl.u32 %v2961, 16
      %v3306 = vrot.slane %v3304, 4
      %v3307 = vshll.u32 %v2961, 16
      %v3309 = vrot.slane %v3307, 5
      %v3310 = vor.u32 %v3306, %v3309
      %v3311 = vrot.slane %v3310, 4
      %v3313 = vshll.u32 %v2962, 16
      %v3315 = vrot.slane %v3313, 5
      %v3316 = vsel %vm1068, %v3311, %v3315
      %v3317 = vshrl.u32 %v2962, 16
      %v3319 = vrot.slane %v3317, 4
      %v3320 = vor.u32 %v3319, %v3315
      %v3321 = vrot.slane %v3320, 4
      %v3323 = vshll.u32 %v2963, 16
      %v3325 = vrot.slane %v3323, 5
      %v3326 = vsel %vm1068, %v3321, %v3325
      %v3328 = vshrl.u32 %v2964, 16
      %v3330 = vrot.slane %v3328, 4
      %v3331 = vshll.u32 %v2964, 16
      %v3333 = vrot.slane %v3331, 5
      %v3334 = vor.u32 %v3330, %v3333
      %v3335 = vrot.slane %v3334, 4
      %v3337 = vshll.u32 %v2965, 16
      %v3339 = vrot.slane %v3337, 5
      %v3340 = vsel %vm1068, %v3335, %v3339
      %v3341 = vshrl.u32 %v2965, 16
      %v3343 = vrot.slane %v3341, 4
      %v3344 = vor.u32 %v3343, %v3339
      %v3345 = vrot.slane %v3344, 4
      %v3347 = vshll.u32 %v2966, 16
      %v3349 = vrot.slane %v3347, 5
      %v3350 = vsel %vm1068, %v3345, %v3349
      %s3351 = scalar_lea.vmem %s3, 256
      %v3352 = vld [vmem:[%s3351] sm:$0xf]
      %v3353 = vld [vmem:[%s3351 + $0x4] sm:$0xf]
      %v3354 = vld [vmem:[%s3351 + $0x8] sm:$0xf]
      %v3355 = vld [vmem:[%s3351 + $0xc] sm:$0xf]
      %v3356 = vld [vmem:[%s3351 + $0x10] sm:$0xf]
      %v3357 = vld [vmem:[%s3351 + $0x14] sm:$0xf]
      %v3358 = vld [vmem:[%s3351 + $0x18] sm:$0xf]
      %v3359 = vld [vmem:[%s3351 + $0x1c] sm:$0xf]
      %v3360 = vld [vmem:[%s3351 + $0x20] sm:$0xf]
      %v3361 = vld [vmem:[%s3351 + $0x24] sm:$0xf]
      %v3362 = vld [vmem:[%s3351 + $0x28] sm:$0xf]
      %v3363 = vld [vmem:[%s3351 + $0x2c] sm:$0xf]
      %v3364 = vld [vmem:[%s3351 + $0x30] sm:$0xf]
      %v3365 = vld [vmem:[%s3351 + $0x34] sm:$0xf]
      %v3366 = vld [vmem:[%s3351 + $0x38] sm:$0xf]
      %v3367 = vld [vmem:[%s3351 + $0x3c] sm:$0xf]
      %v3368 = vunpack.c.l.b16 %v2980
      %v3369 = vunpack.c.l.b16 %v2990
      %v3370 = vunpack.c.l.b16 %v3004
      %v3371 = vunpack.c.l.b16 %v3014
      %v3372 = vunpack.c.l.b16 %v3028
      %v3373 = vunpack.c.l.b16 %v3038
      %v3374 = vunpack.c.l.b16 %v3052
      %v3375 = vunpack.c.l.b16 %v3062
      %v3376 = vunpack.c.l.b16 %v3076
      %v3377 = vunpack.c.l.b16 %v3086
      %v3378 = vunpack.c.l.b16 %v3100
      %v3379 = vunpack.c.l.b16 %v3110
      %v3380 = vunpack.c.l.b16 %v3124
      %v3381 = vunpack.c.l.b16 %v3134
      %v3382 = vunpack.c.l.b16 %v3148
      %v3383 = vunpack.c.l.b16 %v3158
      %v3384 = vunpack.c.l.b16 %v3172
      %v3385 = vunpack.c.l.b16 %v3182
      %v3386 = vunpack.c.l.b16 %v3196
      %v3387 = vunpack.c.l.b16 %v3206
      %v3388 = vunpack.c.l.b16 %v3220
      %v3389 = vunpack.c.l.b16 %v3230
      %v3390 = vunpack.c.l.b16 %v3244
      %v3391 = vunpack.c.l.b16 %v3254
      %v3392 = vunpack.c.l.b16 %v3268
      %v3393 = vunpack.c.l.b16 %v3278
      %v3394 = vunpack.c.l.b16 %v3292
      %v3395 = vunpack.c.l.b16 %v3302
      %v3396 = vunpack.c.l.b16 %v3316
      %v3397 = vunpack.c.l.b16 %v3326
      %v3398 = vunpack.c.l.b16 %v3340
      %v3399 = vunpack.c.l.b16 %v3350
      %v3400 = vpack.c.b16 %v3369, %v3368
      %v3401 = vpack.c.b16 %v3371, %v3370
      %v3402 = vpack.c.b16 %v3373, %v3372
      %v3403 = vpack.c.b16 %v3375, %v3374
      %v3404 = vpack.c.b16 %v3377, %v3376
      %v3405 = vpack.c.b16 %v3379, %v3378
      %v3406 = vpack.c.b16 %v3381, %v3380
      %v3407 = vpack.c.b16 %v3383, %v3382
      %v3408 = vpack.c.b16 %v3385, %v3384
      %v3409 = vpack.c.b16 %v3387, %v3386
      %v3410 = vpack.c.b16 %v3389, %v3388
      %v3411 = vpack.c.b16 %v3391, %v3390
      %v3412 = vpack.c.b16 %v3393, %v3392
      %v3413 = vpack.c.b16 %v3395, %v3394
      %v3414 = vpack.c.b16 %v3397, %v3396
      %v3415 = vpack.c.b16 %v3399, %v3398
      %v3448 = vunpack.c.l.b16 %v3352
      %v3449 = vunpack.c.l.b16 %v3353
      %v3450 = vunpack.c.l.b16 %v3354
      %v3451 = vunpack.c.l.b16 %v3355
      %v3452 = vunpack.c.l.b16 %v3356
      %v3453 = vunpack.c.l.b16 %v3357
      %v3454 = vunpack.c.l.b16 %v3358
      %v3455 = vunpack.c.l.b16 %v3359
      %v3456 = vunpack.c.l.b16 %v3360
      %v3457 = vunpack.c.l.b16 %v3361
      %v3458 = vunpack.c.l.b16 %v3362
      %v3459 = vunpack.c.l.b16 %v3363
      %v3460 = vunpack.c.l.b16 %v3364
      %v3461 = vunpack.c.l.b16 %v3365
      %v3462 = vunpack.c.l.b16 %v3366
      %v3463 = vunpack.c.l.b16 %v3367
      %v3464 = vpack.c.b16 %v3449, %v3448
      %v3465 = vpack.c.b16 %v3451, %v3450
      %v3466 = vpack.c.b16 %v3453, %v3452
      %v3467 = vpack.c.b16 %v3455, %v3454
      %v3468 = vpack.c.b16 %v3457, %v3456
      %v3469 = vpack.c.b16 %v3459, %v3458
      %v3470 = vpack.c.b16 %v3461, %v3460
      %v3471 = vpack.c.b16 %v3463, %v3462
      %3480 = vmatprep.subr.bf16.mxu0 0
      %3481 = vmatpush1.bf16.msra.mxu0 %v3464
      %3482 = vmatprep.subr.bf16.mxu0 0
      %3483 = vmatpush1.bf16.msra.mxu0 %v3465
      %3484 = vmatprep.subr.bf16.mxu0 0
      %3485 = vmatpush1.bf16.msra.mxu0 %v3466
      %3486 = vmatprep.subr.bf16.mxu0 0
      %3487 = vmatpush1.bf16.msra.mxu0 %v3467
      %3488 = vmatprep.subr.bf16.mxu0 0
      %3489 = vmatpush1.bf16.msra.mxu0 %v3468
      %3490 = vmatprep.subr.bf16.mxu0 0
      %3491 = vmatpush1.bf16.msra.mxu0 %v3469
      %3492 = vmatprep.subr.bf16.mxu0 0
      %3493 = vmatpush1.bf16.msra.mxu0 %v3470
      %3494 = vmatprep.subr.bf16.mxu0 0
      %3495 = vmatpush1.bf16.msra.mxu0 %v3471
      %3496 = vmatprep.subr.bf16.mxu0 0
      %3497 = vmatpush1.bf16.msra.mxu0 0
      %3498 = vmatprep.subr.bf16.mxu0 0
      %3499 = vmatpush1.bf16.msra.mxu0 0
      %3500 = vmatprep.subr.bf16.mxu0 0
      %3501 = vmatpush1.bf16.msra.mxu0 0
      %3502 = vmatprep.subr.bf16.mxu0 0
      %3503 = vmatpush1.bf16.msra.mxu0 0
      %3504 = vmatprep.subr.bf16.mxu0 0
      %3505 = vmatpush1.bf16.msra.mxu0 0
      %3506 = vmatprep.subr.bf16.mxu0 0
      %3507 = vmatpush1.bf16.msra.mxu0 0
      %3508 = vmatprep.subr.bf16.mxu0 0
      %3509 = vmatpush1.bf16.msra.mxu0 0
      %3510 = vmatprep.subr.bf16.mxu0 0
      %3511 = vmatpush1.bf16.msra.mxu0 0
      %3512 = vmatprep.mubr.bf16.mxu0 0
      %3513 = vmatmul.mubr.bf16.gmra.mrb[0].mxu0 %v3400
      %v3514 = vpop.f32.mrb[0].mxu0
      %v3515 = vadd.f32 0.0, %v3514
      %v3516 = vpop.f32.mrb[0].mxu0
      %v3517 = vpop.f32.mrb[0].mxu0
      %v3518 = vadd.f32 0.0, %v3517
      %v3519 = vpop.f32.mrb[0].mxu0
      %3520 = vmatprep.mubr.bf16.mxu0 0
      %3521 = vmatmul.mubr.bf16.gmra.mrb[0].mxu0 %v3401
      %v3522 = vpop.f32.mrb[0].mxu0
      %v3523 = vadd.f32 0.0, %v3522
      %v3524 = vpop.f32.mrb[0].mxu0
      %v3525 = vpop.f32.mrb[0].mxu0
      %v3526 = vadd.f32 0.0, %v3525
      %v3527 = vpop.f32.mrb[0].mxu0
      %3528 = vmatprep.mubr.bf16.mxu0 0
      %3529 = vmatmul.mubr.bf16.gmra.mrb[0].mxu0 %v3402
      %v3530 = vpop.f32.mrb[0].mxu0
      %v3531 = vadd.f32 0.0, %v3530
      %v3532 = vpop.f32.mrb[0].mxu0
      %v3533 = vpop.f32.mrb[0].mxu0
      %v3534 = vadd.f32 0.0, %v3533
      %v3535 = vpop.f32.mrb[0].mxu0
      %3536 = vmatprep.mubr.bf16.mxu0 0
      %3537 = vmatmul.mubr.bf16.gmra.mrb[0].mxu0 %v3403
      %v3538 = vpop.f32.mrb[0].mxu0
      %v3539 = vadd.f32 0.0, %v3538
      %v3540 = vpop.f32.mrb[0].mxu0
      %v3541 = vpop.f32.mrb[0].mxu0
      %v3542 = vadd.f32 0.0, %v3541
      %v3543 = vpop.f32.mrb[0].mxu0
      %3544 = vmatprep.mubr.bf16.mxu0 0
      %3545 = vmatmul.mubr.bf16.gmra.mrb[0].mxu0 %v3404
      %v3546 = vpop.f32.mrb[0].mxu0
      %v3547 = vadd.f32 0.0, %v3546
      %v3548 = vpop.f32.mrb[0].mxu0
      %v3549 = vpop.f32.mrb[0].mxu0
      %v3550 = vadd.f32 0.0, %v3549
      %v3551 = vpop.f32.mrb[0].mxu0
      %3552 = vmatprep.mubr.bf16.mxu0 0
      %3553 = vmatmul.mubr.bf16.gmra.mrb[0].mxu0 %v3405
      %v3554 = vpop.f32.mrb[0].mxu0
      %v3555 = vadd.f32 0.0, %v3554
      %v3556 = vpop.f32.mrb[0].mxu0
      %v3557 = vpop.f32.mrb[0].mxu0
      %v3558 = vadd.f32 0.0, %v3557
      %v3559 = vpop.f32.mrb[0].mxu0
      %3560 = vmatprep.mubr.bf16.mxu0 0
      %3561 = vmatmul.mubr.bf16.gmra.mrb[0].mxu0 %v3406
      %v3562 = vpop.f32.mrb[0].mxu0
      %v3563 = vadd.f32 0.0, %v3562
      %v3564 = vpop.f32.mrb[0].mxu0
      %v3565 = vpop.f32.mrb[0].mxu0
      %v3566 = vadd.f32 0.0, %v3565
      %v3567 = vpop.f32.mrb[0].mxu0
      %3568 = vmatprep.mubr.bf16.mxu0 0
      %3569 = vmatmul.mubr.bf16.gmra.mrb[0].mxu0 %v3407
      %v3570 = vpop.f32.mrb[0].mxu0
      %v3571 = vadd.f32 0.0, %v3570
      %v3572 = vpop.f32.mrb[0].mxu0
      %v3573 = vpop.f32.mrb[0].mxu0
      %v3574 = vadd.f32 0.0, %v3573
      %v3575 = vpop.f32.mrb[0].mxu0
      %3576 = vmatprep.mubr.bf16.mxu0 0
      %3577 = vmatmul.mubr.bf16.gmra.mrb[0].mxu0 %v3408
      %v3578 = vpop.f32.mrb[0].mxu0
      %v3579 = vadd.f32 0.0, %v3578
      %v3580 = vpop.f32.mrb[0].mxu0
      %v3581 = vpop.f32.mrb[0].mxu0
      %v3582 = vadd.f32 0.0, %v3581
      %v3583 = vpop.f32.mrb[0].mxu0
      %3584 = vmatprep.mubr.bf16.mxu0 0
      %3585 = vmatmul.mubr.bf16.gmra.mrb[0].mxu0 %v3409
      %v3586 = vpop.f32.mrb[0].mxu0
      %v3587 = vadd.f32 0.0, %v3586
      %v3588 = vpop.f32.mrb[0].mxu0
      %v3589 = vpop.f32.mrb[0].mxu0
      %v3590 = vadd.f32 0.0, %v3589
      %v3591 = vpop.f32.mrb[0].mxu0
      %3592 = vmatprep.mubr.bf16.mxu0 0
      %3593 = vmatmul.mubr.bf16.gmra.mrb[0].mxu0 %v3410
      %v3594 = vpop.f32.mrb[0].mxu0
      %v3595 = vadd.f32 0.0, %v3594
      %v3596 = vpop.f32.mrb[0].mxu0
      %v3597 = vpop.f32.mrb[0].mxu0
      %v3598 = vadd.f32 0.0, %v3597
      %v3599 = vpop.f32.mrb[0].mxu0
      %3600 = vmatprep.mubr.bf16.mxu0 0
      %3601 = vmatmul.mubr.bf16.gmra.mrb[0].mxu0 %v3411
      %v3602 = vpop.f32.mrb[0].mxu0
      %v3603 = vadd.f32 0.0, %v3602
      %v3604 = vpop.f32.mrb[0].mxu0
      %v3605 = vpop.f32.mrb[0].mxu0
      %v3606 = vadd.f32 0.0, %v3605
      %v3607 = vpop.f32.mrb[0].mxu0
      %3608 = vmatprep.mubr.bf16.mxu0 0
      %3609 = vmatmul.mubr.bf16.gmra.mrb[0].mxu0 %v3412
      %v3610 = vpop.f32.mrb[0].mxu0
      %v3611 = vadd.f32 0.0, %v3610
      %v3612 = vpop.f32.mrb[0].mxu0
      %v3613 = vpop.f32.mrb[0].mxu0
      %v3614 = vadd.f32 0.0, %v3613
      %v3615 = vpop.f32.mrb[0].mxu0
      %3616 = vmatprep.mubr.bf16.mxu0 0
      %3617 = vmatmul.mubr.bf16.gmra.mrb[0].mxu0 %v3413
      %v3618 = vpop.f32.mrb[0].mxu0
      %v3619 = vadd.f32 0.0, %v3618
      %v3620 = vpop.f32.mrb[0].mxu0
      %v3621 = vpop.f32.mrb[0].mxu0
      %v3622 = vadd.f32 0.0, %v3621
      %v3623 = vpop.f32.mrb[0].mxu0
      %3624 = vmatprep.mubr.bf16.mxu0 0
      %3625 = vmatmul.mubr.bf16.gmra.mrb[0].mxu0 %v3414
      %v3626 = vpop.f32.mrb[0].mxu0
      %v3627 = vadd.f32 0.0, %v3626
      %v3628 = vpop.f32.mrb[0].mxu0
      %v3629 = vpop.f32.mrb[0].mxu0
      %v3630 = vadd.f32 0.0, %v3629
      %v3631 = vpop.f32.mrb[0].mxu0
      %3632 = vmatprep.mubr.bf16.mxu0 0
      %3633 = vmatmul.mubr.bf16.gmra.mrb[0].mxu0 %v3415
      %v3634 = vpop.f32.mrb[0].mxu0
      %v3635 = vadd.f32 0.0, %v3634
      %v3636 = vpop.f32.mrb[0].mxu0
      %v3637 = vpop.f32.mrb[0].mxu0
      %v3638 = vadd.f32 0.0, %v3637
      %v3639 = vpop.f32.mrb[0].mxu0
      %3640 = vdwg.mxu0
      %v3641 = vadd.f32 %v2887, %v3515
      %v3642 = vadd.f32 %v2888, %v3518
      %v3643 = vadd.f32 %v2889, %v3523
      %v3644 = vadd.f32 %v2890, %v3526
      %v3645 = vadd.f32 %v2891, %v3531
      %v3646 = vadd.f32 %v2892, %v3534
      %v3647 = vadd.f32 %v2893, %v3539
      %v3648 = vadd.f32 %v2894, %v3542
      %v3649 = vadd.f32 %v2895, %v3547
      %v3650 = vadd.f32 %v2896, %v3550
      %v3651 = vadd.f32 %v2897, %v3555
      %v3652 = vadd.f32 %v2898, %v3558
      %v3653 = vadd.f32 %v2899, %v3563
      %v3654 = vadd.f32 %v2900, %v3566
      %v3655 = vadd.f32 %v2901, %v3571
      %v3656 = vadd.f32 %v2902, %v3574
      %v3657 = vadd.f32 %v2903, %v3579
      %v3658 = vadd.f32 %v2904, %v3582
      %v3659 = vadd.f32 %v2905, %v3587
      %v3660 = vadd.f32 %v2906, %v3590
      %v3661 = vadd.f32 %v2907, %v3595
      %v3662 = vadd.f32 %v2908, %v3598
      %v3663 = vadd.f32 %v2909, %v3603
      %v3664 = vadd.f32 %v2910, %v3606
      %v3665 = vadd.f32 %v2911, %v3611
      %v3666 = vadd.f32 %v2912, %v3614
      %v3667 = vadd.f32 %v2913, %v3619
      %v3668 = vadd.f32 %v2914, %v3622
      %v3669 = vadd.f32 %v2915, %v3627
      %v3670 = vadd.f32 %v2916, %v3630
      %v3671 = vadd.f32 %v2917, %v3635
      %v3672 = vadd.f32 %v2918, %v3638
      %v3673 = vld [vmem:[%s884] sm:$0xe]
      %v3674 = vld [vmem:[%s884 + $0xc] sm:$0xe]
      %v3675 = vld [vmem:[%s884 + $0x18] sm:$0xe]
      %v3676 = vld [vmem:[%s884 + $0x24] sm:$0xe]
      %v3677 = vld [vmem:[%s884 + $0x30] sm:$0xe]
      %v3678 = vld [vmem:[%s884 + $0x3c] sm:$0xe]
      %v3679 = vld [vmem:[%s884 + $0x48] sm:$0xe]
      %v3680 = vld [vmem:[%s884 + $0x54] sm:$0xe]
      %v3681 = vld [vmem:[%s884 + $0x60] sm:$0xe]
      %v3682 = vld [vmem:[%s884 + $0x6c] sm:$0xe]
      %v3683 = vld [vmem:[%s884 + $0x78] sm:$0xe]
      %v3684 = vld [vmem:[%s884 + $0x84] sm:$0xe]
      %v3685 = vld [vmem:[%s884 + $0x90] sm:$0xe]
      %v3686 = vld [vmem:[%s884 + $0x9c] sm:$0xe]
      %v3687 = vld [vmem:[%s884 + $0xa8] sm:$0xe]
      %v3688 = vld [vmem:[%s884 + $0xb4] sm:$0xe]
      %v3737 = vrot.slane %v3673, 5
      %v3738 = vrot.slane %v3737, 4
      %v3739 = vrot.slane %v2920, 5
      %v3740 = vsel %vm2098, %v3738, %v3739
      %v3741 = vrot.slane %v3739, 4
      %v3742 = vrot.slane %v2921, 5
      %v3743 = vsel %vm2098, %v3741, %v3742
      %v3744 = vrot.slane %v3674, 5
      %v3745 = vrot.slane %v3744, 4
      %v3746 = vrot.slane %v2923, 5
      %v3747 = vsel %vm2098, %v3745, %v3746
      %v3748 = vrot.slane %v3746, 4
      %v3749 = vrot.slane %v2924, 5
      %v3750 = vsel %vm2098, %v3748, %v3749
      %v3751 = vrot.slane %v3675, 5
      %v3752 = vrot.slane %v3751, 4
      %v3753 = vrot.slane %v2926, 5
      %v3754 = vsel %vm2098, %v3752, %v3753
      %v3755 = vrot.slane %v3753, 4
      %v3756 = vrot.slane %v2927, 5
      %v3757 = vsel %vm2098, %v3755, %v3756
      %v3758 = vrot.slane %v3676, 5
      %v3759 = vrot.slane %v3758, 4
      %v3760 = vrot.slane %v2929, 5
      %v3761 = vsel %vm2098, %v3759, %v3760
      %v3762 = vrot.slane %v3760, 4
      %v3763 = vrot.slane %v2930, 5
      %v3764 = vsel %vm2098, %v3762, %v3763
      %v3765 = vrot.slane %v3677, 5
      %v3766 = vrot.slane %v3765, 4
      %v3767 = vrot.slane %v2932, 5
      %v3768 = vsel %vm2098, %v3766, %v3767
      %v3769 = vrot.slane %v3767, 4
      %v3770 = vrot.slane %v2933, 5
      %v3771 = vsel %vm2098, %v3769, %v3770
      %v3772 = vrot.slane %v3678, 5
      %v3773 = vrot.slane %v3772, 4
      %v3774 = vrot.slane %v2935, 5
      %v3775 = vsel %vm2098, %v3773, %v3774
      %v3776 = vrot.slane %v3774, 4
      %v3777 = vrot.slane %v2936, 5
      %v3778 = vsel %vm2098, %v3776, %v3777
      %v3779 = vrot.slane %v3679, 5
      %v3780 = vrot.slane %v3779, 4
      %v3781 = vrot.slane %v2938, 5
      %v3782 = vsel %vm2098, %v3780, %v3781
      %v3783 = vrot.slane %v3781, 4
      %v3784 = vrot.slane %v2939, 5
      %v3785 = vsel %vm2098, %v3783, %v3784
      %v3786 = vrot.slane %v3680, 5
      %v3787 = vrot.slane %v3786, 4
      %v3788 = vrot.slane %v2941, 5
      %v3789 = vsel %vm2098, %v3787, %v3788
      %v3790 = vrot.slane %v3788, 4
      %v3791 = vrot.slane %v2942, 5
      %v3792 = vsel %vm2098, %v3790, %v3791
      %v3793 = vrot.slane %v3681, 5
      %v3794 = vrot.slane %v3793, 4
      %v3795 = vrot.slane %v2944, 5
      %v3796 = vsel %vm2098, %v3794, %v3795
      %v3797 = vrot.slane %v3795, 4
      %v3798 = vrot.slane %v2945, 5
      %v3799 = vsel %vm2098, %v3797, %v3798
      %v3800 = vrot.slane %v3682, 5
      %v3801 = vrot.slane %v3800, 4
      %v3802 = vrot.slane %v2947, 5
      %v3803 = vsel %vm2098, %v3801, %v3802
      %v3804 = vrot.slane %v3802, 4
      %v3805 = vrot.slane %v2948, 5
      %v3806 = vsel %vm2098, %v3804, %v3805
      %v3807 = vrot.slane %v3683, 5
      %v3808 = vrot.slane %v3807, 4
      %v3809 = vrot.slane %v2950, 5
      %v3810 = vsel %vm2098, %v3808, %v3809
      %v3811 = vrot.slane %v3809, 4
      %v3812 = vrot.slane %v2951, 5
      %v3813 = vsel %vm2098, %v3811, %v3812
      %v3814 = vrot.slane %v3684, 5
      %v3815 = vrot.slane %v3814, 4
      %v3816 = vrot.slane %v2953, 5
      %v3817 = vsel %vm2098, %v3815, %v3816
      %v3818 = vrot.slane %v3816, 4
      %v3819 = vrot.slane %v2954, 5
      %v3820 = vsel %vm2098, %v3818, %v3819
      %v3821 = vrot.slane %v3685, 5
      %v3822 = vrot.slane %v3821, 4
      %v3823 = vrot.slane %v2956, 5
      %v3824 = vsel %vm2098, %v3822, %v3823
      %v3825 = vrot.slane %v3823, 4
      %v3826 = vrot.slane %v2957, 5
      %v3827 = vsel %vm2098, %v3825, %v3826
      %v3828 = vrot.slane %v3686, 5
      %v3829 = vrot.slane %v3828, 4
      %v3830 = vrot.slane %v2959, 5
      %v3831 = vsel %vm2098, %v3829, %v3830
      %v3832 = vrot.slane %v3830, 4
      %v3833 = vrot.slane %v2960, 5
      %v3834 = vsel %vm2098, %v3832, %v3833
      %v3835 = vrot.slane %v3687, 5
      %v3836 = vrot.slane %v3835, 4
      %v3837 = vrot.slane %v2962, 5
      %v3838 = vsel %vm2098, %v3836, %v3837
      %v3839 = vrot.slane %v3837, 4
      %v3840 = vrot.slane %v2963, 5
      %v3841 = vsel %vm2098, %v3839, %v3840
      %v3842 = vrot.slane %v3688, 5
      %v3843 = vrot.slane %v3842, 4
      %v3844 = vrot.slane %v2965, 5
      %v3845 = vsel %vm2098, %v3843, %v3844
      %v3846 = vrot.slane %v3844, 4
      %v3847 = vrot.slane %v2966, 5
      %v3848 = vsel %vm2098, %v3846, %v3847
      %s3849 = scalar_lea.vmem %s3, 320
      %v3850 = vld [vmem:[%s3849] sm:$0xf]
      %v3851 = vld [vmem:[%s3849 + $0x4] sm:$0xf]
      %v3852 = vld [vmem:[%s3849 + $0x8] sm:$0xf]
      %v3853 = vld [vmem:[%s3849 + $0xc] sm:$0xf]
      %v3854 = vld [vmem:[%s3849 + $0x10] sm:$0xf]
      %v3855 = vld [vmem:[%s3849 + $0x14] sm:$0xf]
      %v3856 = vld [vmem:[%s3849 + $0x18] sm:$0xf]
      %v3857 = vld [vmem:[%s3849 + $0x1c] sm:$0xf]
      %v3858 = vld [vmem:[%s3849 + $0x20] sm:$0xf]
      %v3859 = vld [vmem:[%s3849 + $0x24] sm:$0xf]
      %v3860 = vld [vmem:[%s3849 + $0x28] sm:$0xf]
      %v3861 = vld [vmem:[%s3849 + $0x2c] sm:$0xf]
      %v3862 = vld [vmem:[%s3849 + $0x30] sm:$0xf]
      %v3863 = vld [vmem:[%s3849 + $0x34] sm:$0xf]
      %v3864 = vld [vmem:[%s3849 + $0x38] sm:$0xf]
      %v3865 = vld [vmem:[%s3849 + $0x3c] sm:$0xf]
      %v3866 = vunpack.c.l.b16 %v3740
      %v3867 = vunpack.c.l.b16 %v3743
      %v3868 = vunpack.c.l.b16 %v3747
      %v3869 = vunpack.c.l.b16 %v3750
      %v3870 = vunpack.c.l.b16 %v3754
      %v3871 = vunpack.c.l.b16 %v3757
      %v3872 = vunpack.c.l.b16 %v3761
      %v3873 = vunpack.c.l.b16 %v3764
      %v3874 = vunpack.c.l.b16 %v3768
      %v3875 = vunpack.c.l.b16 %v3771
      %v3876 = vunpack.c.l.b16 %v3775
      %v3877 = vunpack.c.l.b16 %v3778
      %v3878 = vunpack.c.l.b16 %v3782
      %v3879 = vunpack.c.l.b16 %v3785
      %v3880 = vunpack.c.l.b16 %v3789
      %v3881 = vunpack.c.l.b16 %v3792
      %v3882 = vunpack.c.l.b16 %v3796
      %v3883 = vunpack.c.l.b16 %v3799
      %v3884 = vunpack.c.l.b16 %v3803
      %v3885 = vunpack.c.l.b16 %v3806
      %v3886 = vunpack.c.l.b16 %v3810
      %v3887 = vunpack.c.l.b16 %v3813
      %v3888 = vunpack.c.l.b16 %v3817
      %v3889 = vunpack.c.l.b16 %v3820
      %v3890 = vunpack.c.l.b16 %v3824
      %v3891 = vunpack.c.l.b16 %v3827
      %v3892 = vunpack.c.l.b16 %v3831
      %v3893 = vunpack.c.l.b16 %v3834
      %v3894 = vunpack.c.l.b16 %v3838
      %v3895 = vunpack.c.l.b16 %v3841
      %v3896 = vunpack.c.l.b16 %v3845
      %v3897 = vunpack.c.l.b16 %v3848
      %v3898 = vpack.c.b16 %v3867, %v3866
      %v3899 = vpack.c.b16 %v3869, %v3868
      %v3900 = vpack.c.b16 %v3871, %v3870
      %v3901 = vpack.c.b16 %v3873, %v3872
      %v3902 = vpack.c.b16 %v3875, %v3874
      %v3903 = vpack.c.b16 %v3877, %v3876
      %v3904 = vpack.c.b16 %v3879, %v3878
      %v3905 = vpack.c.b16 %v3881, %v3880
      %v3906 = vpack.c.b16 %v3883, %v3882
      %v3907 = vpack.c.b16 %v3885, %v3884
      %v3908 = vpack.c.b16 %v3887, %v3886
      %v3909 = vpack.c.b16 %v3889, %v3888
      %v3910 = vpack.c.b16 %v3891, %v3890
      %v3911 = vpack.c.b16 %v3893, %v3892
      %v3912 = vpack.c.b16 %v3895, %v3894
      %v3913 = vpack.c.b16 %v3897, %v3896
      %v3946 = vunpack.c.l.b16 %v3850
      %v3947 = vunpack.c.l.b16 %v3851
      %v3948 = vunpack.c.l.b16 %v3852
      %v3949 = vunpack.c.l.b16 %v3853
      %v3950 = vunpack.c.l.b16 %v3854
      %v3951 = vunpack.c.l.b16 %v3855
      %v3952 = vunpack.c.l.b16 %v3856
      %v3953 = vunpack.c.l.b16 %v3857
      %v3954 = vunpack.c.l.b16 %v3858
      %v3955 = vunpack.c.l.b16 %v3859
      %v3956 = vunpack.c.l.b16 %v3860
      %v3957 = vunpack.c.l.b16 %v3861
      %v3958 = vunpack.c.l.b16 %v3862
      %v3959 = vunpack.c.l.b16 %v3863
      %v3960 = vunpack.c.l.b16 %v3864
      %v3961 = vunpack.c.l.b16 %v3865
      %v3962 = vpack.c.b16 %v3947, %v3946
      %v3963 = vpack.c.b16 %v3949, %v3948
      %v3964 = vpack.c.b16 %v3951, %v3950
      %v3965 = vpack.c.b16 %v3953, %v3952
      %v3966 = vpack.c.b16 %v3955, %v3954
      %v3967 = vpack.c.b16 %v3957, %v3956
      %v3968 = vpack.c.b16 %v3959, %v3958
      %v3969 = vpack.c.b16 %v3961, %v3960
      %3978 = vmatprep.subr.bf16.mxu0 0
      %3979 = vmatpush1.bf16.msra.mxu0 %v3962
      %3980 = vmatprep.subr.bf16.mxu0 0
      %3981 = vmatpush1.bf16.msra.mxu0 %v3963
      %3982 = vmatprep.subr.bf16.mxu0 0
      %3983 = vmatpush1.bf16.msra.mxu0 %v3964
      %3984 = vmatprep.subr.bf16.mxu0 0
      %3985 = vmatpush1.bf16.msra.mxu0 %v3965
      %3986 = vmatprep.subr.bf16.mxu0 0
      %3987 = vmatpush1.bf16.msra.mxu0 %v3966
      %3988 = vmatprep.subr.bf16.mxu0 0
      %3989 = vmatpush1.bf16.msra.mxu0 %v3967
      %3990 = vmatprep.subr.bf16.mxu0 0
      %3991 = vmatpush1.bf16.msra.mxu0 %v3968
      %3992 = vmatprep.subr.bf16.mxu0 0
      %3993 = vmatpush1.bf16.msra.mxu0 %v3969
      %3994 = vmatprep.subr.bf16.mxu0 0
      %3995 = vmatpush1.bf16.msra.mxu0 0
      %3996 = vmatprep.subr.bf16.mxu0 0
      %3997 = vmatpush1.bf16.msra.mxu0 0
      %3998 = vmatprep.subr.bf16.mxu0 0
      %3999 = vmatpush1.bf16.msra.mxu0 0
      %4000 = vmatprep.subr.bf16.mxu0 0
      %4001 = vmatpush1.bf16.msra.mxu0 0
      %4002 = vmatprep.subr.bf16.mxu0 0
      %4003 = vmatpush1.bf16.msra.mxu0 0
      %4004 = vmatprep.subr.bf16.mxu0 0
      %4005 = vmatpush1.bf16.msra.mxu0 0
      %4006 = vmatprep.subr.bf16.mxu0 0
      %4007 = vmatpush1.bf16.msra.mxu0 0
      %4008 = vmatprep.subr.bf16.mxu0 0
      %4009 = vmatpush1.bf16.msra.mxu0 0
      %4010 = vmatprep.mubr.bf16.mxu0 0
      %4011 = vmatmul.mubr.bf16.gmra.mrb[0].mxu0 %v3898
      %v4012 = vpop.f32.mrb[0].mxu0
      %v4013 = vadd.f32 0.0, %v4012
      %v4014 = vpop.f32.mrb[0].mxu0
      %v4015 = vpop.f32.mrb[0].mxu0
      %v4016 = vadd.f32 0.0, %v4015
      %v4017 = vpop.f32.mrb[0].mxu0
      %4018 = vmatprep.mubr.bf16.mxu0 0
      %4019 = vmatmul.mubr.bf16.gmra.mrb[0].mxu0 %v3899
      %v4020 = vpop.f32.mrb[0].mxu0
      %v4021 = vadd.f32 0.0, %v4020
      %v4022 = vpop.f32.mrb[0].mxu0
      %v4023 = vpop.f32.mrb[0].mxu0
      %v4024 = vadd.f32 0.0, %v4023
      %v4025 = vpop.f32.mrb[0].mxu0
      %4026 = vmatprep.mubr.bf16.mxu0 0
      %4027 = vmatmul.mubr.bf16.gmra.mrb[0].mxu0 %v3900
      %v4028 = vpop.f32.mrb[0].mxu0
      %v4029 = vadd.f32 0.0, %v4028
      %v4030 = vpop.f32.mrb[0].mxu0
      %v4031 = vpop.f32.mrb[0].mxu0
      %v4032 = vadd.f32 0.0, %v4031
      %v4033 = vpop.f32.mrb[0].mxu0
      %4034 = vmatprep.mubr.bf16.mxu0 0
      %4035 = vmatmul.mubr.bf16.gmra.mrb[0].mxu0 %v3901
      %v4036 = vpop.f32.mrb[0].mxu0
      %v4037 = vadd.f32 0.0, %v4036
      %v4038 = vpop.f32.mrb[0].mxu0
      %v4039 = vpop.f32.mrb[0].mxu0
      %v4040 = vadd.f32 0.0, %v4039
      %v4041 = vpop.f32.mrb[0].mxu0
      %4042 = vmatprep.mubr.bf16.mxu0 0
      %4043 = vmatmul.mubr.bf16.gmra.mrb[0].mxu0 %v3902
      %v4044 = vpop.f32.mrb[0].mxu0
      %v4045 = vadd.f32 0.0, %v4044
      %v4046 = vpop.f32.mrb[0].mxu0
      %v4047 = vpop.f32.mrb[0].mxu0
      %v4048 = vadd.f32 0.0, %v4047
      %v4049 = vpop.f32.mrb[0].mxu0
      %4050 = vmatprep.mubr.bf16.mxu0 0
      %4051 = vmatmul.mubr.bf16.gmra.mrb[0].mxu0 %v3903
      %v4052 = vpop.f32.mrb[0].mxu0
      %v4053 = vadd.f32 0.0, %v4052
      %v4054 = vpop.f32.mrb[0].mxu0
      %v4055 = vpop.f32.mrb[0].mxu0
      %v4056 = vadd.f32 0.0, %v4055
      %v4057 = vpop.f32.mrb[0].mxu0
      %4058 = vmatprep.mubr.bf16.mxu0 0
      %4059 = vmatmul.mubr.bf16.gmra.mrb[0].mxu0 %v3904
      %v4060 = vpop.f32.mrb[0].mxu0
      %v4061 = vadd.f32 0.0, %v4060
      %v4062 = vpop.f32.mrb[0].mxu0
      %v4063 = vpop.f32.mrb[0].mxu0
      %v4064 = vadd.f32 0.0, %v4063
      %v4065 = vpop.f32.mrb[0].mxu0
      %4066 = vmatprep.mubr.bf16.mxu0 0
      %4067 = vmatmul.mubr.bf16.gmra.mrb[0].mxu0 %v3905
      %v4068 = vpop.f32.mrb[0].mxu0
      %v4069 = vadd.f32 0.0, %v4068
      %v4070 = vpop.f32.mrb[0].mxu0
      %v4071 = vpop.f32.mrb[0].mxu0
      %v4072 = vadd.f32 0.0, %v4071
      %v4073 = vpop.f32.mrb[0].mxu0
      %4074 = vmatprep.mubr.bf16.mxu0 0
      %4075 = vmatmul.mubr.bf16.gmra.mrb[0].mxu0 %v3906
      %v4076 = vpop.f32.mrb[0].mxu0
      %v4077 = vadd.f32 0.0, %v4076
      %v4078 = vpop.f32.mrb[0].mxu0
      %v4079 = vpop.f32.mrb[0].mxu0
      %v4080 = vadd.f32 0.0, %v4079
      %v4081 = vpop.f32.mrb[0].mxu0
      %4082 = vmatprep.mubr.bf16.mxu0 0
      %4083 = vmatmul.mubr.bf16.gmra.mrb[0].mxu0 %v3907
      %v4084 = vpop.f32.mrb[0].mxu0
      %v4085 = vadd.f32 0.0, %v4084
      %v4086 = vpop.f32.mrb[0].mxu0
      %v4087 = vpop.f32.mrb[0].mxu0
      %v4088 = vadd.f32 0.0, %v4087
      %v4089 = vpop.f32.mrb[0].mxu0
      %4090 = vmatprep.mubr.bf16.mxu0 0
      %4091 = vmatmul.mubr.bf16.gmra.mrb[0].mxu0 %v3908
      %v4092 = vpop.f32.mrb[0].mxu0
      %v4093 = vadd.f32 0.0, %v4092
      %v4094 = vpop.f32.mrb[0].mxu0
      %v4095 = vpop.f32.mrb[0].mxu0
      %v4096 = vadd.f32 0.0, %v4095
      %v4097 = vpop.f32.mrb[0].mxu0
      %4098 = vmatprep.mubr.bf16.mxu0 0
      %4099 = vmatmul.mubr.bf16.gmra.mrb[0].mxu0 %v3909
      %v4100 = vpop.f32.mrb[0].mxu0
      %v4101 = vadd.f32 0.0, %v4100
      %v4102 = vpop.f32.mrb[0].mxu0
      %v4103 = vpop.f32.mrb[0].mxu0
      %v4104 = vadd.f32 0.0, %v4103
      %v4105 = vpop.f32.mrb[0].mxu0
      %4106 = vmatprep.mubr.bf16.mxu0 0
      %4107 = vmatmul.mubr.bf16.gmra.mrb[0].mxu0 %v3910
      %v4108 = vpop.f32.mrb[0].mxu0
      %v4109 = vadd.f32 0.0, %v4108
      %v4110 = vpop.f32.mrb[0].mxu0
      %v4111 = vpop.f32.mrb[0].mxu0
      %v4112 = vadd.f32 0.0, %v4111
      %v4113 = vpop.f32.mrb[0].mxu0
      %4114 = vmatprep.mubr.bf16.mxu0 0
      %4115 = vmatmul.mubr.bf16.gmra.mrb[0].mxu0 %v3911
      %v4116 = vpop.f32.mrb[0].mxu0
      %v4117 = vadd.f32 0.0, %v4116
      %v4118 = vpop.f32.mrb[0].mxu0
      %v4119 = vpop.f32.mrb[0].mxu0
      %v4120 = vadd.f32 0.0, %v4119
      %v4121 = vpop.f32.mrb[0].mxu0
      %4122 = vmatprep.mubr.bf16.mxu0 0
      %4123 = vmatmul.mubr.bf16.gmra.mrb[0].mxu0 %v3912
      %v4124 = vpop.f32.mrb[0].mxu0
      %v4125 = vadd.f32 0.0, %v4124
      %v4126 = vpop.f32.mrb[0].mxu0
      %v4127 = vpop.f32.mrb[0].mxu0
      %v4128 = vadd.f32 0.0, %v4127
      %v4129 = vpop.f32.mrb[0].mxu0
      %4130 = vmatprep.mubr.bf16.mxu0 0
      %4131 = vmatmul.mubr.bf16.gmra.mrb[0].mxu0 %v3913
      %v4132 = vpop.f32.mrb[0].mxu0
      %v4133 = vadd.f32 0.0, %v4132
      %v4134 = vpop.f32.mrb[0].mxu0
      %v4135 = vpop.f32.mrb[0].mxu0
      %v4136 = vadd.f32 0.0, %v4135
      %v4137 = vpop.f32.mrb[0].mxu0
      %4138 = vdwg.mxu0
      %v4139 = vadd.f32 %v3641, %v4013
      %v4140 = vadd.f32 %v3642, %v4016
      %v4141 = vadd.f32 %v3643, %v4021
      %v4142 = vadd.f32 %v3644, %v4024
      %v4143 = vadd.f32 %v3645, %v4029
      %v4144 = vadd.f32 %v3646, %v4032
      %v4145 = vadd.f32 %v3647, %v4037
      %v4146 = vadd.f32 %v3648, %v4040
      %v4147 = vadd.f32 %v3649, %v4045
      %v4148 = vadd.f32 %v3650, %v4048
      %v4149 = vadd.f32 %v3651, %v4053
      %v4150 = vadd.f32 %v3652, %v4056
      %v4151 = vadd.f32 %v3653, %v4061
      %v4152 = vadd.f32 %v3654, %v4064
      %v4153 = vadd.f32 %v3655, %v4069
      %v4154 = vadd.f32 %v3656, %v4072
      %v4155 = vadd.f32 %v3657, %v4077
      %v4156 = vadd.f32 %v3658, %v4080
      %v4157 = vadd.f32 %v3659, %v4085
      %v4158 = vadd.f32 %v3660, %v4088
      %v4159 = vadd.f32 %v3661, %v4093
      %v4160 = vadd.f32 %v3662, %v4096
      %v4161 = vadd.f32 %v3663, %v4101
      %v4162 = vadd.f32 %v3664, %v4104
      %v4163 = vadd.f32 %v3665, %v4109
      %v4164 = vadd.f32 %v3666, %v4112
      %v4165 = vadd.f32 %v3667, %v4117
      %v4166 = vadd.f32 %v3668, %v4120
      %v4167 = vadd.f32 %v3669, %v4125
      %v4168 = vadd.f32 %v3670, %v4128
      %v4169 = vadd.f32 %v3671, %v4133
      %v4170 = vadd.f32 %v3672, %v4136
      %s4171 = scalar_lea.vmem [#allocation2], 24
      %v4172 = vld [vmem:[%s4171] sm:$0xf]
      %v4173 = vld [vmem:[%s4171 + $0x4] sm:$0xf]
      %v4174 = vld [vmem:[%s4171 + $0xc] sm:$0xf]
      %v4175 = vld [vmem:[%s4171 + $0x10] sm:$0xf]
      %v4176 = vld [vmem:[%s4171 + $0x18] sm:$0xf]
      %v4177 = vld [vmem:[%s4171 + $0x1c] sm:$0xf]
      %v4178 = vld [vmem:[%s4171 + $0x24] sm:$0xf]
      %v4179 = vld [vmem:[%s4171 + $0x28] sm:$0xf]
      %v4180 = vld [vmem:[%s4171 + $0x30] sm:$0xf]
      %v4181 = vld [vmem:[%s4171 + $0x34] sm:$0xf]
      %v4182 = vld [vmem:[%s4171 + $0x3c] sm:$0xf]
      %v4183 = vld [vmem:[%s4171 + $0x40] sm:$0xf]
      %v4184 = vld [vmem:[%s4171 + $0x48] sm:$0xf]
      %v4185 = vld [vmem:[%s4171 + $0x4c] sm:$0xf]
      %v4186 = vld [vmem:[%s4171 + $0x54] sm:$0xf]
      %v4187 = vld [vmem:[%s4171 + $0x58] sm:$0xf]
      %v4188 = vld [vmem:[%s4171 + $0x60] sm:$0xf]
      %v4189 = vld [vmem:[%s4171 + $0x64] sm:$0xf]
      %v4190 = vld [vmem:[%s4171 + $0x6c] sm:$0xf]
      %v4191 = vld [vmem:[%s4171 + $0x70] sm:$0xf]
      %v4192 = vld [vmem:[%s4171 + $0x78] sm:$0xf]
      %v4193 = vld [vmem:[%s4171 + $0x7c] sm:$0xf]
      %v4194 = vld [vmem:[%s4171 + $0x84] sm:$0xf]
      %v4195 = vld [vmem:[%s4171 + $0x88] sm:$0xf]
      %v4196 = vld [vmem:[%s4171 + $0x90] sm:$0xf]
      %v4197 = vld [vmem:[%s4171 + $0x94] sm:$0xf]
      %v4198 = vld [vmem:[%s4171 + $0x9c] sm:$0xf]
      %v4199 = vld [vmem:[%s4171 + $0xa0] sm:$0xf]
      %v4200 = vld [vmem:[%s4171 + $0xa8] sm:$0xf]
      %v4201 = vld [vmem:[%s4171 + $0xac] sm:$0xf]
      %v4202 = vld [vmem:[%s4171 + $0xb4] sm:$0xf]
      %v4203 = vld [vmem:[%s4171 + $0xb8] sm:$0xf]
      %s4204 = scalar_lea.vmem %s3, 384
      %v4205 = vld [vmem:[%s4204] sm:$0xf]
      %v4206 = vld [vmem:[%s4204 + $0x4] sm:$0xf]
      %v4207 = vld [vmem:[%s4204 + $0x8] sm:$0xf]
      %v4208 = vld [vmem:[%s4204 + $0xc] sm:$0xf]
      %v4209 = vld [vmem:[%s4204 + $0x10] sm:$0xf]
      %v4210 = vld [vmem:[%s4204 + $0x14] sm:$0xf]
      %v4211 = vld [vmem:[%s4204 + $0x18] sm:$0xf]
      %v4212 = vld [vmem:[%s4204 + $0x1c] sm:$0xf]
      %v4213 = vld [vmem:[%s4204 + $0x20] sm:$0xf]
      %v4214 = vld [vmem:[%s4204 + $0x24] sm:$0xf]
      %v4215 = vld [vmem:[%s4204 + $0x28] sm:$0xf]
      %v4216 = vld [vmem:[%s4204 + $0x2c] sm:$0xf]
      %v4217 = vld [vmem:[%s4204 + $0x30] sm:$0xf]
      %v4218 = vld [vmem:[%s4204 + $0x34] sm:$0xf]
      %v4219 = vld [vmem:[%s4204 + $0x38] sm:$0xf]
      %v4220 = vld [vmem:[%s4204 + $0x3c] sm:$0xf]
      %v4253 = vunpack.c.l.b16 %v4172
      %v4254 = vunpack.c.l.b16 %v4173
      %v4255 = vunpack.c.l.b16 %v4174
      %v4256 = vunpack.c.l.b16 %v4175
      %v4257 = vunpack.c.l.b16 %v4176
      %v4258 = vunpack.c.l.b16 %v4177
      %v4259 = vunpack.c.l.b16 %v4178
      %v4260 = vunpack.c.l.b16 %v4179
      %v4261 = vunpack.c.l.b16 %v4180
      %v4262 = vunpack.c.l.b16 %v4181
      %v4263 = vunpack.c.l.b16 %v4182
      %v4264 = vunpack.c.l.b16 %v4183
      %v4265 = vunpack.c.l.b16 %v4184
      %v4266 = vunpack.c.l.b16 %v4185
      %v4267 = vunpack.c.l.b16 %v4186
      %v4268 = vunpack.c.l.b16 %v4187
      %v4269 = vunpack.c.l.b16 %v4188
      %v4270 = vunpack.c.l.b16 %v4189
      %v4271 = vunpack.c.l.b16 %v4190
      %v4272 = vunpack.c.l.b16 %v4191
      %v4273 = vunpack.c.l.b16 %v4192
      %v4274 = vunpack.c.l.b16 %v4193
      %v4275 = vunpack.c.l.b16 %v4194
      %v4276 = vunpack.c.l.b16 %v4195
      %v4277 = vunpack.c.l.b16 %v4196
      %v4278 = vunpack.c.l.b16 %v4197
      %v4279 = vunpack.c.l.b16 %v4198
      %v4280 = vunpack.c.l.b16 %v4199
      %v4281 = vunpack.c.l.b16 %v4200
      %v4282 = vunpack.c.l.b16 %v4201
      %v4283 = vunpack.c.l.b16 %v4202
      %v4284 = vunpack.c.l.b16 %v4203
      %v4285 = vpack.c.b16 %v4254, %v4253
      %v4286 = vpack.c.b16 %v4256, %v4255
      %v4287 = vpack.c.b16 %v4258, %v4257
      %v4288 = vpack.c.b16 %v4260, %v4259
      %v4289 = vpack.c.b16 %v4262, %v4261
      %v4290 = vpack.c.b16 %v4264, %v4263
      %v4291 = vpack.c.b16 %v4266, %v4265
      %v4292 = vpack.c.b16 %v4268, %v4267
      %v4293 = vpack.c.b16 %v4270, %v4269
      %v4294 = vpack.c.b16 %v4272, %v4271
      %v4295 = vpack.c.b16 %v4274, %v4273
      %v4296 = vpack.c.b16 %v4276, %v4275
      %v4297 = vpack.c.b16 %v4278, %v4277
      %v4298 = vpack.c.b16 %v4280, %v4279
      %v4299 = vpack.c.b16 %v4282, %v4281
      %v4300 = vpack.c.b16 %v4284, %v4283
      %v4333 = vunpack.c.l.b16 %v4205
      %v4334 = vunpack.c.l.b16 %v4206
      %v4335 = vunpack.c.l.b16 %v4207
      %v4336 = vunpack.c.l.b16 %v4208
      %v4337 = vunpack.c.l.b16 %v4209
      %v4338 = vunpack.c.l.b16 %v4210
      %v4339 = vunpack.c.l.b16 %v4211
      %v4340 = vunpack.c.l.b16 %v4212
      %v4341 = vunpack.c.l.b16 %v4213
      %v4342 = vunpack.c.l.b16 %v4214
      %v4343 = vunpack.c.l.b16 %v4215
      %v4344 = vunpack.c.l.b16 %v4216
      %v4345 = vunpack.c.l.b16 %v4217
      %v4346 = vunpack.c.l.b16 %v4218
      %v4347 = vunpack.c.l.b16 %v4219
      %v4348 = vunpack.c.l.b16 %v4220
      %v4349 = vpack.c.b16 %v4334, %v4333
      %v4350 = vpack.c.b16 %v4336, %v4335
      %v4351 = vpack.c.b16 %v4338, %v4337
      %v4352 = vpack.c.b16 %v4340, %v4339
      %v4353 = vpack.c.b16 %v4342, %v4341
      %v4354 = vpack.c.b16 %v4344, %v4343
      %v4355 = vpack.c.b16 %v4346, %v4345
      %v4356 = vpack.c.b16 %v4348, %v4347
      %4365 = vmatprep.subr.bf16.mxu0 0
      %4366 = vmatpush1.bf16.msra.mxu0 %v4349
      %4367 = vmatprep.subr.bf16.mxu0 0
      %4368 = vmatpush1.bf16.msra.mxu0 %v4350
      %4369 = vmatprep.subr.bf16.mxu0 0
      %4370 = vmatpush1.bf16.msra.mxu0 %v4351
      %4371 = vmatprep.subr.bf16.mxu0 0
      %4372 = vmatpush1.bf16.msra.mxu0 %v4352
      %4373 = vmatprep.subr.bf16.mxu0 0
      %4374 = vmatpush1.bf16.msra.mxu0 %v4353
      %4375 = vmatprep.subr.bf16.mxu0 0
      %4376 = vmatpush1.bf16.msra.mxu0 %v4354
      %4377 = vmatprep.subr.bf16.mxu0 0
      %4378 = vmatpush1.bf16.msra.mxu0 %v4355
      %4379 = vmatprep.subr.bf16.mxu0 0
      %4380 = vmatpush1.bf16.msra.mxu0 %v4356
      %4381 = vmatprep.subr.bf16.mxu0 0
      %4382 = vmatpush1.bf16.msra.mxu0 0
      %4383 = vmatprep.subr.bf16.mxu0 0
      %4384 = vmatpush1.bf16.msra.mxu0 0
      %4385 = vmatprep.subr.bf16.mxu0 0
      %4386 = vmatpush1.bf16.msra.mxu0 0
      %4387 = vmatprep.subr.bf16.mxu0 0
      %4388 = vmatpush1.bf16.msra.mxu0 0
      %4389 = vmatprep.subr.bf16.mxu0 0
      %4390 = vmatpush1.bf16.msra.mxu0 0
      %4391 = vmatprep.subr.bf16.mxu0 0
      %4392 = vmatpush1.bf16.msra.mxu0 0
      %4393 = vmatprep.subr.bf16.mxu0 0
      %4394 = vmatpush1.bf16.msra.mxu0 0
      %4395 = vmatprep.subr.bf16.mxu0 0
      %4396 = vmatpush1.bf16.msra.mxu0 0
      %4397 = vmatprep.mubr.bf16.mxu0 0
      %4398 = vmatmul.mubr.bf16.gmra.mrb[0].mxu0 %v4285
      %v4399 = vpop.f32.mrb[0].mxu0
      %v4400 = vadd.f32 0.0, %v4399
      %v4401 = vpop.f32.mrb[0].mxu0
      %v4402 = vpop.f32.mrb[0].mxu0
      %v4403 = vadd.f32 0.0, %v4402
      %v4404 = vpop.f32.mrb[0].mxu0
      %4405 = vmatprep.mubr.bf16.mxu0 0
      %4406 = vmatmul.mubr.bf16.gmra.mrb[0].mxu0 %v4286
      %v4407 = vpop.f32.mrb[0].mxu0
      %v4408 = vadd.f32 0.0, %v4407
      %v4409 = vpop.f32.mrb[0].mxu0
      %v4410 = vpop.f32.mrb[0].mxu0
      %v4411 = vadd.f32 0.0, %v4410
      %v4412 = vpop.f32.mrb[0].mxu0
      %4413 = vmatprep.mubr.bf16.mxu0 0
      %4414 = vmatmul.mubr.bf16.gmra.mrb[0].mxu0 %v4287
      %v4415 = vpop.f32.mrb[0].mxu0
      %v4416 = vadd.f32 0.0, %v4415
      %v4417 = vpop.f32.mrb[0].mxu0
      %v4418 = vpop.f32.mrb[0].mxu0
      %v4419 = vadd.f32 0.0, %v4418
      %v4420 = vpop.f32.mrb[0].mxu0
      %4421 = vmatprep.mubr.bf16.mxu0 0
      %4422 = vmatmul.mubr.bf16.gmra.mrb[0].mxu0 %v4288
      %v4423 = vpop.f32.mrb[0].mxu0
      %v4424 = vadd.f32 0.0, %v4423
      %v4425 = vpop.f32.mrb[0].mxu0
      %v4426 = vpop.f32.mrb[0].mxu0
      %v4427 = vadd.f32 0.0, %v4426
      %v4428 = vpop.f32.mrb[0].mxu0
      %4429 = vmatprep.mubr.bf16.mxu0 0
      %4430 = vmatmul.mubr.bf16.gmra.mrb[0].mxu0 %v4289
      %v4431 = vpop.f32.mrb[0].mxu0
      %v4432 = vadd.f32 0.0, %v4431
      %v4433 = vpop.f32.mrb[0].mxu0
      %v4434 = vpop.f32.mrb[0].mxu0
      %v4435 = vadd.f32 0.0, %v4434
      %v4436 = vpop.f32.mrb[0].mxu0
      %4437 = vmatprep.mubr.bf16.mxu0 0
      %4438 = vmatmul.mubr.bf16.gmra.mrb[0].mxu0 %v4290
      %v4439 = vpop.f32.mrb[0].mxu0
      %v4440 = vadd.f32 0.0, %v4439
      %v4441 = vpop.f32.mrb[0].mxu0
      %v4442 = vpop.f32.mrb[0].mxu0
      %v4443 = vadd.f32 0.0, %v4442
      %v4444 = vpop.f32.mrb[0].mxu0
      %4445 = vmatprep.mubr.bf16.mxu0 0
      %4446 = vmatmul.mubr.bf16.gmra.mrb[0].mxu0 %v4291
      %v4447 = vpop.f32.mrb[0].mxu0
      %v4448 = vadd.f32 0.0, %v4447
      %v4449 = vpop.f32.mrb[0].mxu0
      %v4450 = vpop.f32.mrb[0].mxu0
      %v4451 = vadd.f32 0.0, %v4450
      %v4452 = vpop.f32.mrb[0].mxu0
      %4453 = vmatprep.mubr.bf16.mxu0 0
      %4454 = vmatmul.mubr.bf16.gmra.mrb[0].mxu0 %v4292
      %v4455 = vpop.f32.mrb[0].mxu0
      %v4456 = vadd.f32 0.0, %v4455
      %v4457 = vpop.f32.mrb[0].mxu0
      %v4458 = vpop.f32.mrb[0].mxu0
      %v4459 = vadd.f32 0.0, %v4458
      %v4460 = vpop.f32.mrb[0].mxu0
      %4461 = vmatprep.mubr.bf16.mxu0 0
      %4462 = vmatmul.mubr.bf16.gmra.mrb[0].mxu0 %v4293
      %v4463 = vpop.f32.mrb[0].mxu0
      %v4464 = vadd.f32 0.0, %v4463
      %v4465 = vpop.f32.mrb[0].mxu0
      %v4466 = vpop.f32.mrb[0].mxu0
      %v4467 = vadd.f32 0.0, %v4466
      %v4468 = vpop.f32.mrb[0].mxu0
      %4469 = vmatprep.mubr.bf16.mxu0 0
      %4470 = vmatmul.mubr.bf16.gmra.mrb[0].mxu0 %v4294
      %v4471 = vpop.f32.mrb[0].mxu0
      %v4472 = vadd.f32 0.0, %v4471
      %v4473 = vpop.f32.mrb[0].mxu0
      %v4474 = vpop.f32.mrb[0].mxu0
      %v4475 = vadd.f32 0.0, %v4474
      %v4476 = vpop.f32.mrb[0].mxu0
      %4477 = vmatprep.mubr.bf16.mxu0 0
      %4478 = vmatmul.mubr.bf16.gmra.mrb[0].mxu0 %v4295
      %v4479 = vpop.f32.mrb[0].mxu0
      %v4480 = vadd.f32 0.0, %v4479
      %v4481 = vpop.f32.mrb[0].mxu0
      %v4482 = vpop.f32.mrb[0].mxu0
      %v4483 = vadd.f32 0.0, %v4482
      %v4484 = vpop.f32.mrb[0].mxu0
      %4485 = vmatprep.mubr.bf16.mxu0 0
      %4486 = vmatmul.mubr.bf16.gmra.mrb[0].mxu0 %v4296
      %v4487 = vpop.f32.mrb[0].mxu0
      %v4488 = vadd.f32 0.0, %v4487
      %v4489 = vpop.f32.mrb[0].mxu0
      %v4490 = vpop.f32.mrb[0].mxu0
      %v4491 = vadd.f32 0.0, %v4490
      %v4492 = vpop.f32.mrb[0].mxu0
      %4493 = vmatprep.mubr.bf16.mxu0 0
      %4494 = vmatmul.mubr.bf16.gmra.mrb[0].mxu0 %v4297
      %v4495 = vpop.f32.mrb[0].mxu0
      %v4496 = vadd.f32 0.0, %v4495
      %v4497 = vpop.f32.mrb[0].mxu0
      %v4498 = vpop.f32.mrb[0].mxu0
      %v4499 = vadd.f32 0.0, %v4498
      %v4500 = vpop.f32.mrb[0].mxu0
      %4501 = vmatprep.mubr.bf16.mxu0 0
      %4502 = vmatmul.mubr.bf16.gmra.mrb[0].mxu0 %v4298
      %v4503 = vpop.f32.mrb[0].mxu0
      %v4504 = vadd.f32 0.0, %v4503
      %v4505 = vpop.f32.mrb[0].mxu0
      %v4506 = vpop.f32.mrb[0].mxu0
      %v4507 = vadd.f32 0.0, %v4506
      %v4508 = vpop.f32.mrb[0].mxu0
      %4509 = vmatprep.mubr.bf16.mxu0 0
      %4510 = vmatmul.mubr.bf16.gmra.mrb[0].mxu0 %v4299
      %v4511 = vpop.f32.mrb[0].mxu0
      %v4512 = vadd.f32 0.0, %v4511
      %v4513 = vpop.f32.mrb[0].mxu0
      %v4514 = vpop.f32.mrb[0].mxu0
      %v4515 = vadd.f32 0.0, %v4514
      %v4516 = vpop.f32.mrb[0].mxu0
      %4517 = vmatprep.mubr.bf16.mxu0 0
      %4518 = vmatmul.mubr.bf16.gmra.mrb[0].mxu0 %v4300
      %v4519 = vpop.f32.mrb[0].mxu0
      %v4520 = vadd.f32 0.0, %v4519
      %v4521 = vpop.f32.mrb[0].mxu0
      %v4522 = vpop.f32.mrb[0].mxu0
      %v4523 = vadd.f32 0.0, %v4522
      %v4524 = vpop.f32.mrb[0].mxu0
      %4525 = vdwg.mxu0
      %v4526 = vadd.f32 %v4139, %v4400
      %v4527 = vadd.f32 %v4140, %v4403
      %v4528 = vadd.f32 %v4141, %v4408
      %v4529 = vadd.f32 %v4142, %v4411
      %v4530 = vadd.f32 %v4143, %v4416
      %v4531 = vadd.f32 %v4144, %v4419
      %v4532 = vadd.f32 %v4145, %v4424
      %v4533 = vadd.f32 %v4146, %v4427
      %v4534 = vadd.f32 %v4147, %v4432
      %v4535 = vadd.f32 %v4148, %v4435
      %v4536 = vadd.f32 %v4149, %v4440
      %v4537 = vadd.f32 %v4150, %v4443
      %v4538 = vadd.f32 %v4151, %v4448
      %v4539 = vadd.f32 %v4152, %v4451
      %v4540 = vadd.f32 %v4153, %v4456
      %v4541 = vadd.f32 %v4154, %v4459
      %v4542 = vadd.f32 %v4155, %v4464
      %v4543 = vadd.f32 %v4156, %v4467
      %v4544 = vadd.f32 %v4157, %v4472
      %v4545 = vadd.f32 %v4158, %v4475
      %v4546 = vadd.f32 %v4159, %v4480
      %v4547 = vadd.f32 %v4160, %v4483
      %v4548 = vadd.f32 %v4161, %v4488
      %v4549 = vadd.f32 %v4162, %v4491
      %v4550 = vadd.f32 %v4163, %v4496
      %v4551 = vadd.f32 %v4164, %v4499
      %v4552 = vadd.f32 %v4165, %v4504
      %v4553 = vadd.f32 %v4166, %v4507
      %v4554 = vadd.f32 %v4167, %v4512
      %v4555 = vadd.f32 %v4168, %v4515
      %v4556 = vadd.f32 %v4169, %v4520
      %v4557 = vadd.f32 %v4170, %v4523
      %v4558 = vld [vmem:[%s4171] sm:$0xf]
      %v4559 = vld [vmem:[%s4171 + $0x4] sm:$0xf]
      %v4560 = vld [vmem:[%s4171 + $0x8] sm:$0x1]
      %v4561 = vld [vmem:[%s4171 + $0xc] sm:$0xf]
      %v4562 = vld [vmem:[%s4171 + $0x10] sm:$0xf]
      %v4563 = vld [vmem:[%s4171 + $0x14] sm:$0x1]
      %v4564 = vld [vmem:[%s4171 + $0x18] sm:$0xf]
      %v4565 = vld [vmem:[%s4171 + $0x1c] sm:$0xf]
      %v4566 = vld [vmem:[%s4171 + $0x20] sm:$0x1]
      %v4567 = vld [vmem:[%s4171 + $0x24] sm:$0xf]
      %v4568 = vld [vmem:[%s4171 + $0x28] sm:$0xf]
      %v4569 = vld [vmem:[%s4171 + $0x2c] sm:$0x1]
      %v4570 = vld [vmem:[%s4171 + $0x30] sm:$0xf]
      %v4571 = vld [vmem:[%s4171 + $0x34] sm:$0xf]
      %v4572 = vld [vmem:[%s4171 + $0x38] sm:$0x1]
      %v4573 = vld [vmem:[%s4171 + $0x3c] sm:$0xf]
      %v4574 = vld [vmem:[%s4171 + $0x40] sm:$0xf]
      %v4575 = vld [vmem:[%s4171 + $0x44] sm:$0x1]
      %v4576 = vld [vmem:[%s4171 + $0x48] sm:$0xf]
      %v4577 = vld [vmem:[%s4171 + $0x4c] sm:$0xf]
      %v4578 = vld [vmem:[%s4171 + $0x50] sm:$0x1]
      %v4579 = vld [vmem:[%s4171 + $0x54] sm:$0xf]
      %v4580 = vld [vmem:[%s4171 + $0x58] sm:$0xf]
      %v4581 = vld [vmem:[%s4171 + $0x5c] sm:$0x1]
      %v4582 = vld [vmem:[%s4171 + $0x60] sm:$0xf]
      %v4583 = vld [vmem:[%s4171 + $0x64] sm:$0xf]
      %v4584 = vld [vmem:[%s4171 + $0x68] sm:$0x1]
      %v4585 = vld [vmem:[%s4171 + $0x6c] sm:$0xf]
      %v4586 = vld [vmem:[%s4171 + $0x70] sm:$0xf]
      %v4587 = vld [vmem:[%s4171 + $0x74] sm:$0x1]
      %v4588 = vld [vmem:[%s4171 + $0x78] sm:$0xf]
      %v4589 = vld [vmem:[%s4171 + $0x7c] sm:$0xf]
      %v4590 = vld [vmem:[%s4171 + $0x80] sm:$0x1]
      %v4591 = vld [vmem:[%s4171 + $0x84] sm:$0xf]
      %v4592 = vld [vmem:[%s4171 + $0x88] sm:$0xf]
      %v4593 = vld [vmem:[%s4171 + $0x8c] sm:$0x1]
      %v4594 = vld [vmem:[%s4171 + $0x90] sm:$0xf]
      %v4595 = vld [vmem:[%s4171 + $0x94] sm:$0xf]
      %v4596 = vld [vmem:[%s4171 + $0x98] sm:$0x1]
      %v4597 = vld [vmem:[%s4171 + $0x9c] sm:$0xf]
      %v4598 = vld [vmem:[%s4171 + $0xa0] sm:$0xf]
      %v4599 = vld [vmem:[%s4171 + $0xa4] sm:$0x1]
      %v4600 = vld [vmem:[%s4171 + $0xa8] sm:$0xf]
      %v4601 = vld [vmem:[%s4171 + $0xac] sm:$0xf]
      %v4602 = vld [vmem:[%s4171 + $0xb0] sm:$0x1]
      %v4603 = vld [vmem:[%s4171 + $0xb4] sm:$0xf]
      %v4604 = vld [vmem:[%s4171 + $0xb8] sm:$0xf]
      %v4605 = vld [vmem:[%s4171 + $0xbc] sm:$0x1]
      %v4607 = vshrl.u32 %v4558, 16
      %v4609 = vrot.slane %v4607, 4
      %v4610 = vshll.u32 %v4558, 16
      %v4612 = vrot.slane %v4610, 5
      %v4613 = vor.u32 %v4609, %v4612
      %v4614 = vrot.slane %v4613, 4
      %v4616 = vshll.u32 %v4559, 16
      %v4618 = vrot.slane %v4616, 5
      %v4619 = vsel %vm1068, %v4614, %v4618
      %v4620 = vshrl.u32 %v4559, 16
      %v4622 = vrot.slane %v4620, 4
      %v4623 = vor.u32 %v4622, %v4618
      %v4624 = vrot.slane %v4623, 4
      %v4626 = vshll.u32 %v4560, 16
      %v4628 = vrot.slane %v4626, 5
      %v4629 = vsel %vm1068, %v4624, %v4628
      %v4631 = vshrl.u32 %v4561, 16
      %v4633 = vrot.slane %v4631, 4
      %v4634 = vshll.u32 %v4561, 16
      %v4636 = vrot.slane %v4634, 5
      %v4637 = vor.u32 %v4633, %v4636
      %v4638 = vrot.slane %v4637, 4
      %v4640 = vshll.u32 %v4562, 16
      %v4642 = vrot.slane %v4640, 5
      %v4643 = vsel %vm1068, %v4638, %v4642
      %v4644 = vshrl.u32 %v4562, 16
      %v4646 = vrot.slane %v4644, 4
      %v4647 = vor.u32 %v4646, %v4642
      %v4648 = vrot.slane %v4647, 4
      %v4650 = vshll.u32 %v4563, 16
      %v4652 = vrot.slane %v4650, 5
      %v4653 = vsel %vm1068, %v4648, %v4652
      %v4655 = vshrl.u32 %v4564, 16
      %v4657 = vrot.slane %v4655, 4
      %v4658 = vshll.u32 %v4564, 16
      %v4660 = vrot.slane %v4658, 5
      %v4661 = vor.u32 %v4657, %v4660
      %v4662 = vrot.slane %v4661, 4
      %v4664 = vshll.u32 %v4565, 16
      %v4666 = vrot.slane %v4664, 5
      %v4667 = vsel %vm1068, %v4662, %v4666
      %v4668 = vshrl.u32 %v4565, 16
      %v4670 = vrot.slane %v4668, 4
      %v4671 = vor.u32 %v4670, %v4666
      %v4672 = vrot.slane %v4671, 4
      %v4674 = vshll.u32 %v4566, 16
      %v4676 = vrot.slane %v4674, 5
      %v4677 = vsel %vm1068, %v4672, %v4676
      %v4679 = vshrl.u32 %v4567, 16
      %v4681 = vrot.slane %v4679, 4
      %v4682 = vshll.u32 %v4567, 16
      %v4684 = vrot.slane %v4682, 5
      %v4685 = vor.u32 %v4681, %v4684
      %v4686 = vrot.slane %v4685, 4
      %v4688 = vshll.u32 %v4568, 16
      %v4690 = vrot.slane %v4688, 5
      %v4691 = vsel %vm1068, %v4686, %v4690
      %v4692 = vshrl.u32 %v4568, 16
      %v4694 = vrot.slane %v4692, 4
      %v4695 = vor.u32 %v4694, %v4690
      %v4696 = vrot.slane %v4695, 4
      %v4698 = vshll.u32 %v4569, 16
      %v4700 = vrot.slane %v4698, 5
      %v4701 = vsel %vm1068, %v4696, %v4700
      %v4703 = vshrl.u32 %v4570, 16
      %v4705 = vrot.slane %v4703, 4
      %v4706 = vshll.u32 %v4570, 16
      %v4708 = vrot.slane %v4706, 5
      %v4709 = vor.u32 %v4705, %v4708
      %v4710 = vrot.slane %v4709, 4
      %v4712 = vshll.u32 %v4571, 16
      %v4714 = vrot.slane %v4712, 5
      %v4715 = vsel %vm1068, %v4710, %v4714
      %v4716 = vshrl.u32 %v4571, 16
      %v4718 = vrot.slane %v4716, 4
      %v4719 = vor.u32 %v4718, %v4714
      %v4720 = vrot.slane %v4719, 4
      %v4722 = vshll.u32 %v4572, 16
      %v4724 = vrot.slane %v4722, 5
      %v4725 = vsel %vm1068, %v4720, %v4724
      %v4727 = vshrl.u32 %v4573, 16
      %v4729 = vrot.slane %v4727, 4
      %v4730 = vshll.u32 %v4573, 16
      %v4732 = vrot.slane %v4730, 5
      %v4733 = vor.u32 %v4729, %v4732
      %v4734 = vrot.slane %v4733, 4
      %v4736 = vshll.u32 %v4574, 16
      %v4738 = vrot.slane %v4736, 5
      %v4739 = vsel %vm1068, %v4734, %v4738
      %v4740 = vshrl.u32 %v4574, 16
      %v4742 = vrot.slane %v4740, 4
      %v4743 = vor.u32 %v4742, %v4738
      %v4744 = vrot.slane %v4743, 4
      %v4746 = vshll.u32 %v4575, 16
      %v4748 = vrot.slane %v4746, 5
      %v4749 = vsel %vm1068, %v4744, %v4748
      %v4751 = vshrl.u32 %v4576, 16
      %v4753 = vrot.slane %v4751, 4
      %v4754 = vshll.u32 %v4576, 16
      %v4756 = vrot.slane %v4754, 5
      %v4757 = vor.u32 %v4753, %v4756
      %v4758 = vrot.slane %v4757, 4
      %v4760 = vshll.u32 %v4577, 16
      %v4762 = vrot.slane %v4760, 5
      %v4763 = vsel %vm1068, %v4758, %v4762
      %v4764 = vshrl.u32 %v4577, 16
      %v4766 = vrot.slane %v4764, 4
      %v4767 = vor.u32 %v4766, %v4762
      %v4768 = vrot.slane %v4767, 4
      %v4770 = vshll.u32 %v4578, 16
      %v4772 = vrot.slane %v4770, 5
      %v4773 = vsel %vm1068, %v4768, %v4772
      %v4775 = vshrl.u32 %v4579, 16
      %v4777 = vrot.slane %v4775, 4
      %v4778 = vshll.u32 %v4579, 16
      %v4780 = vrot.slane %v4778, 5
      %v4781 = vor.u32 %v4777, %v4780
      %v4782 = vrot.slane %v4781, 4
      %v4784 = vshll.u32 %v4580, 16
      %v4786 = vrot.slane %v4784, 5
      %v4787 = vsel %vm1068, %v4782, %v4786
      %v4788 = vshrl.u32 %v4580, 16
      %v4790 = vrot.slane %v4788, 4
      %v4791 = vor.u32 %v4790, %v4786
      %v4792 = vrot.slane %v4791, 4
      %v4794 = vshll.u32 %v4581, 16
      %v4796 = vrot.slane %v4794, 5
      %v4797 = vsel %vm1068, %v4792, %v4796
      %v4799 = vshrl.u32 %v4582, 16
      %v4801 = vrot.slane %v4799, 4
      %v4802 = vshll.u32 %v4582, 16
      %v4804 = vrot.slane %v4802, 5
      %v4805 = vor.u32 %v4801, %v4804
      %v4806 = vrot.slane %v4805, 4
      %v4808 = vshll.u32 %v4583, 16
      %v4810 = vrot.slane %v4808, 5
      %v4811 = vsel %vm1068, %v4806, %v4810
      %v4812 = vshrl.u32 %v4583, 16
      %v4814 = vrot.slane %v4812, 4
      %v4815 = vor.u32 %v4814, %v4810
      %v4816 = vrot.slane %v4815, 4
      %v4818 = vshll.u32 %v4584, 16
      %v4820 = vrot.slane %v4818, 5
      %v4821 = vsel %vm1068, %v4816, %v4820
      %v4823 = vshrl.u32 %v4585, 16
      %v4825 = vrot.slane %v4823, 4
      %v4826 = vshll.u32 %v4585, 16
      %v4828 = vrot.slane %v4826, 5
      %v4829 = vor.u32 %v4825, %v4828
      %v4830 = vrot.slane %v4829, 4
      %v4832 = vshll.u32 %v4586, 16
      %v4834 = vrot.slane %v4832, 5
      %v4835 = vsel %vm1068, %v4830, %v4834
      %v4836 = vshrl.u32 %v4586, 16
      %v4838 = vrot.slane %v4836, 4
      %v4839 = vor.u32 %v4838, %v4834
      %v4840 = vrot.slane %v4839, 4
      %v4842 = vshll.u32 %v4587, 16
      %v4844 = vrot.slane %v4842, 5
      %v4845 = vsel %vm1068, %v4840, %v4844
      %v4847 = vshrl.u32 %v4588, 16
      %v4849 = vrot.slane %v4847, 4
      %v4850 = vshll.u32 %v4588, 16
      %v4852 = vrot.slane %v4850, 5
      %v4853 = vor.u32 %v4849, %v4852
      %v4854 = vrot.slane %v4853, 4
      %v4856 = vshll.u32 %v4589, 16
      %v4858 = vrot.slane %v4856, 5
      %v4859 = vsel %vm1068, %v4854, %v4858
      %v4860 = vshrl.u32 %v4589, 16
      %v4862 = vrot.slane %v4860, 4
      %v4863 = vor.u32 %v4862, %v4858
      %v4864 = vrot.slane %v4863, 4
      %v4866 = vshll.u32 %v4590, 16
      %v4868 = vrot.slane %v4866, 5
      %v4869 = vsel %vm1068, %v4864, %v4868
      %v4871 = vshrl.u32 %v4591, 16
      %v4873 = vrot.slane %v4871, 4
      %v4874 = vshll.u32 %v4591, 16
      %v4876 = vrot.slane %v4874, 5
      %v4877 = vor.u32 %v4873, %v4876
      %v4878 = vrot.slane %v4877, 4
      %v4880 = vshll.u32 %v4592, 16
      %v4882 = vrot.slane %v4880, 5
      %v4883 = vsel %vm1068, %v4878, %v4882
      %v4884 = vshrl.u32 %v4592, 16
      %v4886 = vrot.slane %v4884, 4
      %v4887 = vor.u32 %v4886, %v4882
      %v4888 = vrot.slane %v4887, 4
      %v4890 = vshll.u32 %v4593, 16
      %v4892 = vrot.slane %v4890, 5
      %v4893 = vsel %vm1068, %v4888, %v4892
      %v4895 = vshrl.u32 %v4594, 16
      %v4897 = vrot.slane %v4895, 4
      %v4898 = vshll.u32 %v4594, 16
      %v4900 = vrot.slane %v4898, 5
      %v4901 = vor.u32 %v4897, %v4900
      %v4902 = vrot.slane %v4901, 4
      %v4904 = vshll.u32 %v4595, 16
      %v4906 = vrot.slane %v4904, 5
      %v4907 = vsel %vm1068, %v4902, %v4906
      %v4908 = vshrl.u32 %v4595, 16
      %v4910 = vrot.slane %v4908, 4
      %v4911 = vor.u32 %v4910, %v4906
      %v4912 = vrot.slane %v4911, 4
      %v4914 = vshll.u32 %v4596, 16
      %v4916 = vrot.slane %v4914, 5
      %v4917 = vsel %vm1068, %v4912, %v4916
      %v4919 = vshrl.u32 %v4597, 16
      %v4921 = vrot.slane %v4919, 4
      %v4922 = vshll.u32 %v4597, 16
      %v4924 = vrot.slane %v4922, 5
      %v4925 = vor.u32 %v4921, %v4924
      %v4926 = vrot.slane %v4925, 4
      %v4928 = vshll.u32 %v4598, 16
      %v4930 = vrot.slane %v4928, 5
      %v4931 = vsel %vm1068, %v4926, %v4930
      %v4932 = vshrl.u32 %v4598, 16
      %v4934 = vrot.slane %v4932, 4
      %v4935 = vor.u32 %v4934, %v4930
      %v4936 = vrot.slane %v4935, 4
      %v4938 = vshll.u32 %v4599, 16
      %v4940 = vrot.slane %v4938, 5
      %v4941 = vsel %vm1068, %v4936, %v4940
      %v4943 = vshrl.u32 %v4600, 16
      %v4945 = vrot.slane %v4943, 4
      %v4946 = vshll.u32 %v4600, 16
      %v4948 = vrot.slane %v4946, 5
      %v4949 = vor.u32 %v4945, %v4948
      %v4950 = vrot.slane %v4949, 4
      %v4952 = vshll.u32 %v4601, 16
      %v4954 = vrot.slane %v4952, 5
      %v4955 = vsel %vm1068, %v4950, %v4954
      %v4956 = vshrl.u32 %v4601, 16
      %v4958 = vrot.slane %v4956, 4
      %v4959 = vor.u32 %v4958, %v4954
      %v4960 = vrot.slane %v4959, 4
      %v4962 = vshll.u32 %v4602, 16
      %v4964 = vrot.slane %v4962, 5
      %v4965 = vsel %vm1068, %v4960, %v4964
      %v4967 = vshrl.u32 %v4603, 16
      %v4969 = vrot.slane %v4967, 4
      %v4970 = vshll.u32 %v4603, 16
      %v4972 = vrot.slane %v4970, 5
      %v4973 = vor.u32 %v4969, %v4972
      %v4974 = vrot.slane %v4973, 4
      %v4976 = vshll.u32 %v4604, 16
      %v4978 = vrot.slane %v4976, 5
      %v4979 = vsel %vm1068, %v4974, %v4978
      %v4980 = vshrl.u32 %v4604, 16
      %v4982 = vrot.slane %v4980, 4
      %v4983 = vor.u32 %v4982, %v4978
      %v4984 = vrot.slane %v4983, 4
      %v4986 = vshll.u32 %v4605, 16
      %v4988 = vrot.slane %v4986, 5
      %v4989 = vsel %vm1068, %v4984, %v4988
      %s4990 = scalar_lea.vmem %s3, 448
      %v4991 = vld [vmem:[%s4990] sm:$0xf]
      %v4992 = vld [vmem:[%s4990 + $0x4] sm:$0xf]
      %v4993 = vld [vmem:[%s4990 + $0x8] sm:$0xf]
      %v4994 = vld [vmem:[%s4990 + $0xc] sm:$0xf]
      %v4995 = vld [vmem:[%s4990 + $0x10] sm:$0xf]
      %v4996 = vld [vmem:[%s4990 + $0x14] sm:$0xf]
      %v4997 = vld [vmem:[%s4990 + $0x18] sm:$0xf]
      %v4998 = vld [vmem:[%s4990 + $0x1c] sm:$0xf]
      %v4999 = vld [vmem:[%s4990 + $0x20] sm:$0xf]
      %v5000 = vld [vmem:[%s4990 + $0x24] sm:$0xf]
      %v5001 = vld [vmem:[%s4990 + $0x28] sm:$0xf]
      %v5002 = vld [vmem:[%s4990 + $0x2c] sm:$0xf]
      %v5003 = vld [vmem:[%s4990 + $0x30] sm:$0xf]
      %v5004 = vld [vmem:[%s4990 + $0x34] sm:$0xf]
      %v5005 = vld [vmem:[%s4990 + $0x38] sm:$0xf]
      %v5006 = vld [vmem:[%s4990 + $0x3c] sm:$0xf]
      %v5007 = vunpack.c.l.b16 %v4619
      %v5008 = vunpack.c.l.b16 %v4629
      %v5009 = vunpack.c.l.b16 %v4643
      %v5010 = vunpack.c.l.b16 %v4653
      %v5011 = vunpack.c.l.b16 %v4667
      %v5012 = vunpack.c.l.b16 %v4677
      %v5013 = vunpack.c.l.b16 %v4691
      %v5014 = vunpack.c.l.b16 %v4701
      %v5015 = vunpack.c.l.b16 %v4715
      %v5016 = vunpack.c.l.b16 %v4725
      %v5017 = vunpack.c.l.b16 %v4739
      %v5018 = vunpack.c.l.b16 %v4749
      %v5019 = vunpack.c.l.b16 %v4763
      %v5020 = vunpack.c.l.b16 %v4773
      %v5021 = vunpack.c.l.b16 %v4787
      %v5022 = vunpack.c.l.b16 %v4797
      %v5023 = vunpack.c.l.b16 %v4811
      %v5024 = vunpack.c.l.b16 %v4821
      %v5025 = vunpack.c.l.b16 %v4835
      %v5026 = vunpack.c.l.b16 %v4845
      %v5027 = vunpack.c.l.b16 %v4859
      %v5028 = vunpack.c.l.b16 %v4869
      %v5029 = vunpack.c.l.b16 %v4883
      %v5030 = vunpack.c.l.b16 %v4893
      %v5031 = vunpack.c.l.b16 %v4907
      %v5032 = vunpack.c.l.b16 %v4917
      %v5033 = vunpack.c.l.b16 %v4931
      %v5034 = vunpack.c.l.b16 %v4941
      %v5035 = vunpack.c.l.b16 %v4955
      %v5036 = vunpack.c.l.b16 %v4965
      %v5037 = vunpack.c.l.b16 %v4979
      %v5038 = vunpack.c.l.b16 %v4989
      %v5039 = vpack.c.b16 %v5008, %v5007
      %v5040 = vpack.c.b16 %v5010, %v5009
      %v5041 = vpack.c.b16 %v5012, %v5011
      %v5042 = vpack.c.b16 %v5014, %v5013
      %v5043 = vpack.c.b16 %v5016, %v5015
      %v5044 = vpack.c.b16 %v5018, %v5017
      %v5045 = vpack.c.b16 %v5020, %v5019
      %v5046 = vpack.c.b16 %v5022, %v5021
      %v5047 = vpack.c.b16 %v5024, %v5023
      %v5048 = vpack.c.b16 %v5026, %v5025
      %v5049 = vpack.c.b16 %v5028, %v5027
      %v5050 = vpack.c.b16 %v5030, %v5029
      %v5051 = vpack.c.b16 %v5032, %v5031
      %v5052 = vpack.c.b16 %v5034, %v5033
      %v5053 = vpack.c.b16 %v5036, %v5035
      %v5054 = vpack.c.b16 %v5038, %v5037
      %v5087 = vunpack.c.l.b16 %v4991
      %v5088 = vunpack.c.l.b16 %v4992
      %v5089 = vunpack.c.l.b16 %v4993
      %v5090 = vunpack.c.l.b16 %v4994
      %v5091 = vunpack.c.l.b16 %v4995
      %v5092 = vunpack.c.l.b16 %v4996
      %v5093 = vunpack.c.l.b16 %v4997
      %v5094 = vunpack.c.l.b16 %v4998
      %v5095 = vunpack.c.l.b16 %v4999
      %v5096 = vunpack.c.l.b16 %v5000
      %v5097 = vunpack.c.l.b16 %v5001
      %v5098 = vunpack.c.l.b16 %v5002
      %v5099 = vunpack.c.l.b16 %v5003
      %v5100 = vunpack.c.l.b16 %v5004
      %v5101 = vunpack.c.l.b16 %v5005
      %v5102 = vunpack.c.l.b16 %v5006
      %v5103 = vpack.c.b16 %v5088, %v5087
      %v5104 = vpack.c.b16 %v5090, %v5089
      %v5105 = vpack.c.b16 %v5092, %v5091
      %v5106 = vpack.c.b16 %v5094, %v5093
      %v5107 = vpack.c.b16 %v5096, %v5095
      %v5108 = vpack.c.b16 %v5098, %v5097
      %v5109 = vpack.c.b16 %v5100, %v5099
      %v5110 = vpack.c.b16 %v5102, %v5101
      %5119 = vmatprep.subr.bf16.mxu0 0
      %5120 = vmatpush1.bf16.msra.mxu0 %v5103
      %5121 = vmatprep.subr.bf16.mxu0 0
      %5122 = vmatpush1.bf16.msra.mxu0 %v5104
      %5123 = vmatprep.subr.bf16.mxu0 0
      %5124 = vmatpush1.bf16.msra.mxu0 %v5105
      %5125 = vmatprep.subr.bf16.mxu0 0
      %5126 = vmatpush1.bf16.msra.mxu0 %v5106
      %5127 = vmatprep.subr.bf16.mxu0 0
      %5128 = vmatpush1.bf16.msra.mxu0 %v5107
      %5129 = vmatprep.subr.bf16.mxu0 0
      %5130 = vmatpush1.bf16.msra.mxu0 %v5108
      %5131 = vmatprep.subr.bf16.mxu0 0
      %5132 = vmatpush1.bf16.msra.mxu0 %v5109
      %5133 = vmatprep.subr.bf16.mxu0 0
      %5134 = vmatpush1.bf16.msra.mxu0 %v5110
      %5135 = vmatprep.subr.bf16.mxu0 0
      %5136 = vmatpush1.bf16.msra.mxu0 0
      %5137 = vmatprep.subr.bf16.mxu0 0
      %5138 = vmatpush1.bf16.msra.mxu0 0
      %5139 = vmatprep.subr.bf16.mxu0 0
      %5140 = vmatpush1.bf16.msra.mxu0 0
      %5141 = vmatprep.subr.bf16.mxu0 0
      %5142 = vmatpush1.bf16.msra.mxu0 0
      %5143 = vmatprep.subr.bf16.mxu0 0
      %5144 = vmatpush1.bf16.msra.mxu0 0
      %5145 = vmatprep.subr.bf16.mxu0 0
      %5146 = vmatpush1.bf16.msra.mxu0 0
      %5147 = vmatprep.subr.bf16.mxu0 0
      %5148 = vmatpush1.bf16.msra.mxu0 0
      %5149 = vmatprep.subr.bf16.mxu0 0
      %5150 = vmatpush1.bf16.msra.mxu0 0
      %5151 = vmatprep.mubr.bf16.mxu0 0
      %5152 = vmatmul.mubr.bf16.gmra.mrb[0].mxu0 %v5039
      %v5153 = vpop.f32.mrb[0].mxu0
      %v5154 = vadd.f32 0.0, %v5153
      %v5155 = vpop.f32.mrb[0].mxu0
      %v5156 = vpop.f32.mrb[0].mxu0
      %v5157 = vadd.f32 0.0, %v5156
      %v5158 = vpop.f32.mrb[0].mxu0
      %5159 = vmatprep.mubr.bf16.mxu0 0
      %5160 = vmatmul.mubr.bf16.gmra.mrb[0].mxu0 %v5040
      %v5161 = vpop.f32.mrb[0].mxu0
      %v5162 = vadd.f32 0.0, %v5161
      %v5163 = vpop.f32.mrb[0].mxu0
      %v5164 = vpop.f32.mrb[0].mxu0
      %v5165 = vadd.f32 0.0, %v5164
      %v5166 = vpop.f32.mrb[0].mxu0
      %5167 = vmatprep.mubr.bf16.mxu0 0
      %5168 = vmatmul.mubr.bf16.gmra.mrb[0].mxu0 %v5041
      %v5169 = vpop.f32.mrb[0].mxu0
      %v5170 = vadd.f32 0.0, %v5169
      %v5171 = vpop.f32.mrb[0].mxu0
      %v5172 = vpop.f32.mrb[0].mxu0
      %v5173 = vadd.f32 0.0, %v5172
      %v5174 = vpop.f32.mrb[0].mxu0
      %5175 = vmatprep.mubr.bf16.mxu0 0
      %5176 = vmatmul.mubr.bf16.gmra.mrb[0].mxu0 %v5042
      %v5177 = vpop.f32.mrb[0].mxu0
      %v5178 = vadd.f32 0.0, %v5177
      %v5179 = vpop.f32.mrb[0].mxu0
      %v5180 = vpop.f32.mrb[0].mxu0
      %v5181 = vadd.f32 0.0, %v5180
      %v5182 = vpop.f32.mrb[0].mxu0
      %5183 = vmatprep.mubr.bf16.mxu0 0
      %5184 = vmatmul.mubr.bf16.gmra.mrb[0].mxu0 %v5043
      %v5185 = vpop.f32.mrb[0].mxu0
      %v5186 = vadd.f32 0.0, %v5185
      %v5187 = vpop.f32.mrb[0].mxu0
      %v5188 = vpop.f32.mrb[0].mxu0
      %v5189 = vadd.f32 0.0, %v5188
      %v5190 = vpop.f32.mrb[0].mxu0
      %5191 = vmatprep.mubr.bf16.mxu0 0
      %5192 = vmatmul.mubr.bf16.gmra.mrb[0].mxu0 %v5044
      %v5193 = vpop.f32.mrb[0].mxu0
      %v5194 = vadd.f32 0.0, %v5193
      %v5195 = vpop.f32.mrb[0].mxu0
      %v5196 = vpop.f32.mrb[0].mxu0
      %v5197 = vadd.f32 0.0, %v5196
      %v5198 = vpop.f32.mrb[0].mxu0
      %5199 = vmatprep.mubr.bf16.mxu0 0
      %5200 = vmatmul.mubr.bf16.gmra.mrb[0].mxu0 %v5045
      %v5201 = vpop.f32.mrb[0].mxu0
      %v5202 = vadd.f32 0.0, %v5201
      %v5203 = vpop.f32.mrb[0].mxu0
      %v5204 = vpop.f32.mrb[0].mxu0
      %v5205 = vadd.f32 0.0, %v5204
      %v5206 = vpop.f32.mrb[0].mxu0
      %5207 = vmatprep.mubr.bf16.mxu0 0
      %5208 = vmatmul.mubr.bf16.gmra.mrb[0].mxu0 %v5046
      %v5209 = vpop.f32.mrb[0].mxu0
      %v5210 = vadd.f32 0.0, %v5209
      %v5211 = vpop.f32.mrb[0].mxu0
      %v5212 = vpop.f32.mrb[0].mxu0
      %v5213 = vadd.f32 0.0, %v5212
      %v5214 = vpop.f32.mrb[0].mxu0
      %5215 = vmatprep.mubr.bf16.mxu0 0
      %5216 = vmatmul.mubr.bf16.gmra.mrb[0].mxu0 %v5047
      %v5217 = vpop.f32.mrb[0].mxu0
      %v5218 = vadd.f32 0.0, %v5217
      %v5219 = vpop.f32.mrb[0].mxu0
      %v5220 = vpop.f32.mrb[0].mxu0
      %v5221 = vadd.f32 0.0, %v5220
      %v5222 = vpop.f32.mrb[0].mxu0
      %5223 = vmatprep.mubr.bf16.mxu0 0
      %5224 = vmatmul.mubr.bf16.gmra.mrb[0].mxu0 %v5048
      %v5225 = vpop.f32.mrb[0].mxu0
      %v5226 = vadd.f32 0.0, %v5225
      %v5227 = vpop.f32.mrb[0].mxu0
      %v5228 = vpop.f32.mrb[0].mxu0
      %v5229 = vadd.f32 0.0, %v5228
      %v5230 = vpop.f32.mrb[0].mxu0
      %5231 = vmatprep.mubr.bf16.mxu0 0
      %5232 = vmatmul.mubr.bf16.gmra.mrb[0].mxu0 %v5049
      %v5233 = vpop.f32.mrb[0].mxu0
      %v5234 = vadd.f32 0.0, %v5233
      %v5235 = vpop.f32.mrb[0].mxu0
      %v5236 = vpop.f32.mrb[0].mxu0
      %v5237 = vadd.f32 0.0, %v5236
      %v5238 = vpop.f32.mrb[0].mxu0
      %5239 = vmatprep.mubr.bf16.mxu0 0
      %5240 = vmatmul.mubr.bf16.gmra.mrb[0].mxu0 %v5050
      %v5241 = vpop.f32.mrb[0].mxu0
      %v5242 = vadd.f32 0.0, %v5241
      %v5243 = vpop.f32.mrb[0].mxu0
      %v5244 = vpop.f32.mrb[0].mxu0
      %v5245 = vadd.f32 0.0, %v5244
      %v5246 = vpop.f32.mrb[0].mxu0
      %5247 = vmatprep.mubr.bf16.mxu0 0
      %5248 = vmatmul.mubr.bf16.gmra.mrb[0].mxu0 %v5051
      %v5249 = vpop.f32.mrb[0].mxu0
      %v5250 = vadd.f32 0.0, %v5249
      %v5251 = vpop.f32.mrb[0].mxu0
      %v5252 = vpop.f32.mrb[0].mxu0
      %v5253 = vadd.f32 0.0, %v5252
      %v5254 = vpop.f32.mrb[0].mxu0
      %5255 = vmatprep.mubr.bf16.mxu0 0
      %5256 = vmatmul.mubr.bf16.gmra.mrb[0].mxu0 %v5052
      %v5257 = vpop.f32.mrb[0].mxu0
      %v5258 = vadd.f32 0.0, %v5257
      %v5259 = vpop.f32.mrb[0].mxu0
      %v5260 = vpop.f32.mrb[0].mxu0
      %v5261 = vadd.f32 0.0, %v5260
      %v5262 = vpop.f32.mrb[0].mxu0
      %5263 = vmatprep.mubr.bf16.mxu0 0
      %5264 = vmatmul.mubr.bf16.gmra.mrb[0].mxu0 %v5053
      %v5265 = vpop.f32.mrb[0].mxu0
      %v5266 = vadd.f32 0.0, %v5265
      %v5267 = vpop.f32.mrb[0].mxu0
      %v5268 = vpop.f32.mrb[0].mxu0
      %v5269 = vadd.f32 0.0, %v5268
      %v5270 = vpop.f32.mrb[0].mxu0
      %5271 = vmatprep.mubr.bf16.mxu0 0
      %5272 = vmatmul.mubr.bf16.gmra.mrb[0].mxu0 %v5054
      %v5273 = vpop.f32.mrb[0].mxu0
      %v5274 = vadd.f32 0.0, %v5273
      %v5275 = vpop.f32.mrb[0].mxu0
      %v5276 = vpop.f32.mrb[0].mxu0
      %v5277 = vadd.f32 0.0, %v5276
      %v5278 = vpop.f32.mrb[0].mxu0
      %5279 = vdwg.mxu0
      %v5280 = vadd.f32 %v4526, %v5154
      %v5281 = vadd.f32 %v4527, %v5157
      %v5282 = vadd.f32 %v4528, %v5162
      %v5283 = vadd.f32 %v4529, %v5165
      %v5284 = vadd.f32 %v4530, %v5170
      %v5285 = vadd.f32 %v4531, %v5173
      %v5286 = vadd.f32 %v4532, %v5178
      %v5287 = vadd.f32 %v4533, %v5181
      %v5288 = vadd.f32 %v4534, %v5186
      %v5289 = vadd.f32 %v4535, %v5189
      %v5290 = vadd.f32 %v4536, %v5194
      %v5291 = vadd.f32 %v4537, %v5197
      %v5292 = vadd.f32 %v4538, %v5202
      %v5293 = vadd.f32 %v4539, %v5205
      %v5294 = vadd.f32 %v4540, %v5210
      %v5295 = vadd.f32 %v4541, %v5213
      %v5296 = vadd.f32 %v4542, %v5218
      %v5297 = vadd.f32 %v4543, %v5221
      %v5298 = vadd.f32 %v4544, %v5226
      %v5299 = vadd.f32 %v4545, %v5229
      %v5300 = vadd.f32 %v4546, %v5234
      %v5301 = vadd.f32 %v4547, %v5237
      %v5302 = vadd.f32 %v4548, %v5242
      %v5303 = vadd.f32 %v4549, %v5245
      %v5304 = vadd.f32 %v4550, %v5250
      %v5305 = vadd.f32 %v4551, %v5253
      %v5306 = vadd.f32 %v4552, %v5258
      %v5307 = vadd.f32 %v4553, %v5261
      %v5308 = vadd.f32 %v4554, %v5266
      %v5309 = vadd.f32 %v4555, %v5269
      %v5310 = vadd.f32 %v4556, %v5274
      %v5311 = vadd.f32 %v4557, %v5277
      %v5312 = vld [vmem:[%s4171] sm:$0xe]
      %v5313 = vld [vmem:[%s4171 + $0xc] sm:$0xe]
      %v5314 = vld [vmem:[%s4171 + $0x18] sm:$0xe]
      %v5315 = vld [vmem:[%s4171 + $0x24] sm:$0xe]
      %v5316 = vld [vmem:[%s4171 + $0x30] sm:$0xe]
      %v5317 = vld [vmem:[%s4171 + $0x3c] sm:$0xe]
      %v5318 = vld [vmem:[%s4171 + $0x48] sm:$0xe]
      %v5319 = vld [vmem:[%s4171 + $0x54] sm:$0xe]
      %v5320 = vld [vmem:[%s4171 + $0x60] sm:$0xe]
      %v5321 = vld [vmem:[%s4171 + $0x6c] sm:$0xe]
      %v5322 = vld [vmem:[%s4171 + $0x78] sm:$0xe]
      %v5323 = vld [vmem:[%s4171 + $0x84] sm:$0xe]
      %v5324 = vld [vmem:[%s4171 + $0x90] sm:$0xe]
      %v5325 = vld [vmem:[%s4171 + $0x9c] sm:$0xe]
      %v5326 = vld [vmem:[%s4171 + $0xa8] sm:$0xe]
      %v5327 = vld [vmem:[%s4171 + $0xb4] sm:$0xe]
      %v5376 = vrot.slane %v5312, 5
      %v5377 = vrot.slane %v5376, 4
      %v5378 = vrot.slane %v4559, 5
      %v5379 = vsel %vm2098, %v5377, %v5378
      %v5380 = vrot.slane %v5378, 4
      %v5381 = vrot.slane %v4560, 5
      %v5382 = vsel %vm2098, %v5380, %v5381
      %v5383 = vrot.slane %v5313, 5
      %v5384 = vrot.slane %v5383, 4
      %v5385 = vrot.slane %v4562, 5
      %v5386 = vsel %vm2098, %v5384, %v5385
      %v5387 = vrot.slane %v5385, 4
      %v5388 = vrot.slane %v4563, 5
      %v5389 = vsel %vm2098, %v5387, %v5388
      %v5390 = vrot.slane %v5314, 5
      %v5391 = vrot.slane %v5390, 4
      %v5392 = vrot.slane %v4565, 5
      %v5393 = vsel %vm2098, %v5391, %v5392
      %v5394 = vrot.slane %v5392, 4
      %v5395 = vrot.slane %v4566, 5
      %v5396 = vsel %vm2098, %v5394, %v5395
      %v5397 = vrot.slane %v5315, 5
      %v5398 = vrot.slane %v5397, 4
      %v5399 = vrot.slane %v4568, 5
      %v5400 = vsel %vm2098, %v5398, %v5399
      %v5401 = vrot.slane %v5399, 4
      %v5402 = vrot.slane %v4569, 5
      %v5403 = vsel %vm2098, %v5401, %v5402
      %v5404 = vrot.slane %v5316, 5
      %v5405 = vrot.slane %v5404, 4
      %v5406 = vrot.slane %v4571, 5
      %v5407 = vsel %vm2098, %v5405, %v5406
      %v5408 = vrot.slane %v5406, 4
      %v5409 = vrot.slane %v4572, 5
      %v5410 = vsel %vm2098, %v5408, %v5409
      %v5411 = vrot.slane %v5317, 5
      %v5412 = vrot.slane %v5411, 4
      %v5413 = vrot.slane %v4574, 5
      %v5414 = vsel %vm2098, %v5412, %v5413
      %v5415 = vrot.slane %v5413, 4
      %v5416 = vrot.slane %v4575, 5
      %v5417 = vsel %vm2098, %v5415, %v5416
      %v5418 = vrot.slane %v5318, 5
      %v5419 = vrot.slane %v5418, 4
      %v5420 = vrot.slane %v4577, 5
      %v5421 = vsel %vm2098, %v5419, %v5420
      %v5422 = vrot.slane %v5420, 4
      %v5423 = vrot.slane %v4578, 5
      %v5424 = vsel %vm2098, %v5422, %v5423
      %v5425 = vrot.slane %v5319, 5
      %v5426 = vrot.slane %v5425, 4
      %v5427 = vrot.slane %v4580, 5
      %v5428 = vsel %vm2098, %v5426, %v5427
      %v5429 = vrot.slane %v5427, 4
      %v5430 = vrot.slane %v4581, 5
      %v5431 = vsel %vm2098, %v5429, %v5430
      %v5432 = vrot.slane %v5320, 5
      %v5433 = vrot.slane %v5432, 4
      %v5434 = vrot.slane %v4583, 5
      %v5435 = vsel %vm2098, %v5433, %v5434
      %v5436 = vrot.slane %v5434, 4
      %v5437 = vrot.slane %v4584, 5
      %v5438 = vsel %vm2098, %v5436, %v5437
      %v5439 = vrot.slane %v5321, 5
      %v5440 = vrot.slane %v5439, 4
      %v5441 = vrot.slane %v4586, 5
      %v5442 = vsel %vm2098, %v5440, %v5441
      %v5443 = vrot.slane %v5441, 4
      %v5444 = vrot.slane %v4587, 5
      %v5445 = vsel %vm2098, %v5443, %v5444
      %v5446 = vrot.slane %v5322, 5
      %v5447 = vrot.slane %v5446, 4
      %v5448 = vrot.slane %v4589, 5
      %v5449 = vsel %vm2098, %v5447, %v5448
      %v5450 = vrot.slane %v5448, 4
      %v5451 = vrot.slane %v4590, 5
      %v5452 = vsel %vm2098, %v5450, %v5451
      %v5453 = vrot.slane %v5323, 5
      %v5454 = vrot.slane %v5453, 4
      %v5455 = vrot.slane %v4592, 5
      %v5456 = vsel %vm2098, %v5454, %v5455
      %v5457 = vrot.slane %v5455, 4
      %v5458 = vrot.slane %v4593, 5
      %v5459 = vsel %vm2098, %v5457, %v5458
      %v5460 = vrot.slane %v5324, 5
      %v5461 = vrot.slane %v5460, 4
      %v5462 = vrot.slane %v4595, 5
      %v5463 = vsel %vm2098, %v5461, %v5462
      %v5464 = vrot.slane %v5462, 4
      %v5465 = vrot.slane %v4596, 5
      %v5466 = vsel %vm2098, %v5464, %v5465
      %v5467 = vrot.slane %v5325, 5
      %v5468 = vrot.slane %v5467, 4
      %v5469 = vrot.slane %v4598, 5
      %v5470 = vsel %vm2098, %v5468, %v5469
      %v5471 = vrot.slane %v5469, 4
      %v5472 = vrot.slane %v4599, 5
      %v5473 = vsel %vm2098, %v5471, %v5472
      %v5474 = vrot.slane %v5326, 5
      %v5475 = vrot.slane %v5474, 4
      %v5476 = vrot.slane %v4601, 5
      %v5477 = vsel %vm2098, %v5475, %v5476
      %v5478 = vrot.slane %v5476, 4
      %v5479 = vrot.slane %v4602, 5
      %v5480 = vsel %vm2098, %v5478, %v5479
      %v5481 = vrot.slane %v5327, 5
      %v5482 = vrot.slane %v5481, 4
      %v5483 = vrot.slane %v4604, 5
      %v5484 = vsel %vm2098, %v5482, %v5483
      %v5485 = vrot.slane %v5483, 4
      %v5486 = vrot.slane %v4605, 5
      %v5487 = vsel %vm2098, %v5485, %v5486
      %s5488 = scalar_lea.vmem %s3, 512
      %v5489 = vld [vmem:[%s5488] sm:$0xf]
      %v5490 = vld [vmem:[%s5488 + $0x4] sm:$0xf]
      %v5491 = vld [vmem:[%s5488 + $0x8] sm:$0xf]
      %v5492 = vld [vmem:[%s5488 + $0xc] sm:$0xf]
      %v5493 = vld [vmem:[%s5488 + $0x10] sm:$0xf]
      %v5494 = vld [vmem:[%s5488 + $0x14] sm:$0xf]
      %v5495 = vld [vmem:[%s5488 + $0x18] sm:$0xf]
      %v5496 = vld [vmem:[%s5488 + $0x1c] sm:$0xf]
      %v5497 = vld [vmem:[%s5488 + $0x20] sm:$0xf]
      %v5498 = vld [vmem:[%s5488 + $0x24] sm:$0xf]
      %v5499 = vld [vmem:[%s5488 + $0x28] sm:$0xf]
      %v5500 = vld [vmem:[%s5488 + $0x2c] sm:$0xf]
      %v5501 = vld [vmem:[%s5488 + $0x30] sm:$0xf]
      %v5502 = vld [vmem:[%s5488 + $0x34] sm:$0xf]
      %v5503 = vld [vmem:[%s5488 + $0x38] sm:$0xf]
      %v5504 = vld [vmem:[%s5488 + $0x3c] sm:$0xf]
      %v5505 = vunpack.c.l.b16 %v5379
      %v5506 = vunpack.c.l.b16 %v5382
      %v5507 = vunpack.c.l.b16 %v5386
      %v5508 = vunpack.c.l.b16 %v5389
      %v5509 = vunpack.c.l.b16 %v5393
      %v5510 = vunpack.c.l.b16 %v5396
      %v5511 = vunpack.c.l.b16 %v5400
      %v5512 = vunpack.c.l.b16 %v5403
      %v5513 = vunpack.c.l.b16 %v5407
      %v5514 = vunpack.c.l.b16 %v5410
      %v5515 = vunpack.c.l.b16 %v5414
      %v5516 = vunpack.c.l.b16 %v5417
      %v5517 = vunpack.c.l.b16 %v5421
      %v5518 = vunpack.c.l.b16 %v5424
      %v5519 = vunpack.c.l.b16 %v5428
      %v5520 = vunpack.c.l.b16 %v5431
      %v5521 = vunpack.c.l.b16 %v5435
      %v5522 = vunpack.c.l.b16 %v5438
      %v5523 = vunpack.c.l.b16 %v5442
      %v5524 = vunpack.c.l.b16 %v5445
      %v5525 = vunpack.c.l.b16 %v5449
      %v5526 = vunpack.c.l.b16 %v5452
      %v5527 = vunpack.c.l.b16 %v5456
      %v5528 = vunpack.c.l.b16 %v5459
      %v5529 = vunpack.c.l.b16 %v5463
      %v5530 = vunpack.c.l.b16 %v5466
      %v5531 = vunpack.c.l.b16 %v5470
      %v5532 = vunpack.c.l.b16 %v5473
      %v5533 = vunpack.c.l.b16 %v5477
      %v5534 = vunpack.c.l.b16 %v5480
      %v5535 = vunpack.c.l.b16 %v5484
      %v5536 = vunpack.c.l.b16 %v5487
      %v5537 = vpack.c.b16 %v5506, %v5505
      %v5538 = vpack.c.b16 %v5508, %v5507
      %v5539 = vpack.c.b16 %v5510, %v5509
      %v5540 = vpack.c.b16 %v5512, %v5511
      %v5541 = vpack.c.b16 %v5514, %v5513
      %v5542 = vpack.c.b16 %v5516, %v5515
      %v5543 = vpack.c.b16 %v5518, %v5517
      %v5544 = vpack.c.b16 %v5520, %v5519
      %v5545 = vpack.c.b16 %v5522, %v5521
      %v5546 = vpack.c.b16 %v5524, %v5523
      %v5547 = vpack.c.b16 %v5526, %v5525
      %v5548 = vpack.c.b16 %v5528, %v5527
      %v5549 = vpack.c.b16 %v5530, %v5529
      %v5550 = vpack.c.b16 %v5532, %v5531
      %v5551 = vpack.c.b16 %v5534, %v5533
      %v5552 = vpack.c.b16 %v5536, %v5535
      %v5585 = vunpack.c.l.b16 %v5489
      %v5586 = vunpack.c.l.b16 %v5490
      %v5587 = vunpack.c.l.b16 %v5491
      %v5588 = vunpack.c.l.b16 %v5492
      %v5589 = vunpack.c.l.b16 %v5493
      %v5590 = vunpack.c.l.b16 %v5494
      %v5591 = vunpack.c.l.b16 %v5495
      %v5592 = vunpack.c.l.b16 %v5496
      %v5593 = vunpack.c.l.b16 %v5497
      %v5594 = vunpack.c.l.b16 %v5498
      %v5595 = vunpack.c.l.b16 %v5499
      %v5596 = vunpack.c.l.b16 %v5500
      %v5597 = vunpack.c.l.b16 %v5501
      %v5598 = vunpack.c.l.b16 %v5502
      %v5599 = vunpack.c.l.b16 %v5503
      %v5600 = vunpack.c.l.b16 %v5504
      %v5601 = vpack.c.b16 %v5586, %v5585
      %v5602 = vpack.c.b16 %v5588, %v5587
      %v5603 = vpack.c.b16 %v5590, %v5589
      %v5604 = vpack.c.b16 %v5592, %v5591
      %v5605 = vpack.c.b16 %v5594, %v5593
      %v5606 = vpack.c.b16 %v5596, %v5595
      %v5607 = vpack.c.b16 %v5598, %v5597
      %v5608 = vpack.c.b16 %v5600, %v5599
      %5617 = vmatprep.subr.bf16.mxu0 0
      %5618 = vmatpush1.bf16.msra.mxu0 %v5601
      %5619 = vmatprep.subr.bf16.mxu0 0
      %5620 = vmatpush1.bf16.msra.mxu0 %v5602
      %5621 = vmatprep.subr.bf16.mxu0 0
      %5622 = vmatpush1.bf16.msra.mxu0 %v5603
      %5623 = vmatprep.subr.bf16.mxu0 0
      %5624 = vmatpush1.bf16.msra.mxu0 %v5604
      %5625 = vmatprep.subr.bf16.mxu0 0
      %5626 = vmatpush1.bf16.msra.mxu0 %v5605
      %5627 = vmatprep.subr.bf16.mxu0 0
      %5628 = vmatpush1.bf16.msra.mxu0 %v5606
      %5629 = vmatprep.subr.bf16.mxu0 0
      %5630 = vmatpush1.bf16.msra.mxu0 %v5607
      %5631 = vmatprep.subr.bf16.mxu0 0
      %5632 = vmatpush1.bf16.msra.mxu0 %v5608
      %5633 = vmatprep.subr.bf16.mxu0 0
      %5634 = vmatpush1.bf16.msra.mxu0 0
      %5635 = vmatprep.subr.bf16.mxu0 0
      %5636 = vmatpush1.bf16.msra.mxu0 0
      %5637 = vmatprep.subr.bf16.mxu0 0
      %5638 = vmatpush1.bf16.msra.mxu0 0
      %5639 = vmatprep.subr.bf16.mxu0 0
      %5640 = vmatpush1.bf16.msra.mxu0 0
      %5641 = vmatprep.subr.bf16.mxu0 0
      %5642 = vmatpush1.bf16.msra.mxu0 0
      %5643 = vmatprep.subr.bf16.mxu0 0
      %5644 = vmatpush1.bf16.msra.mxu0 0
      %5645 = vmatprep.subr.bf16.mxu0 0
      %5646 = vmatpush1.bf16.msra.mxu0 0
      %5647 = vmatprep.subr.bf16.mxu0 0
      %5648 = vmatpush1.bf16.msra.mxu0 0
      %5649 = vmatprep.mubr.bf16.mxu0 0
      %5650 = vmatmul.mubr.bf16.gmra.mrb[0].mxu0 %v5537
      %v5651 = vpop.f32.mrb[0].mxu0
      %v5652 = vadd.f32 0.0, %v5651
      %v5653 = vpop.f32.mrb[0].mxu0
      %v5654 = vpop.f32.mrb[0].mxu0
      %v5655 = vadd.f32 0.0, %v5654
      %v5656 = vpop.f32.mrb[0].mxu0
      %5657 = vmatprep.mubr.bf16.mxu0 0
      %5658 = vmatmul.mubr.bf16.gmra.mrb[0].mxu0 %v5538
      %v5659 = vpop.f32.mrb[0].mxu0
      %v5660 = vadd.f32 0.0, %v5659
      %v5661 = vpop.f32.mrb[0].mxu0
      %v5662 = vpop.f32.mrb[0].mxu0
      %v5663 = vadd.f32 0.0, %v5662
      %v5664 = vpop.f32.mrb[0].mxu0
      %5665 = vmatprep.mubr.bf16.mxu0 0
      %5666 = vmatmul.mubr.bf16.gmra.mrb[0].mxu0 %v5539
      %v5667 = vpop.f32.mrb[0].mxu0
      %v5668 = vadd.f32 0.0, %v5667
      %v5669 = vpop.f32.mrb[0].mxu0
      %v5670 = vpop.f32.mrb[0].mxu0
      %v5671 = vadd.f32 0.0, %v5670
      %v5672 = vpop.f32.mrb[0].mxu0
      %5673 = vmatprep.mubr.bf16.mxu0 0
      %5674 = vmatmul.mubr.bf16.gmra.mrb[0].mxu0 %v5540
      %v5675 = vpop.f32.mrb[0].mxu0
      %v5676 = vadd.f32 0.0, %v5675
      %v5677 = vpop.f32.mrb[0].mxu0
      %v5678 = vpop.f32.mrb[0].mxu0
      %v5679 = vadd.f32 0.0, %v5678
      %v5680 = vpop.f32.mrb[0].mxu0
      %5681 = vmatprep.mubr.bf16.mxu0 0
      %5682 = vmatmul.mubr.bf16.gmra.mrb[0].mxu0 %v5541
      %v5683 = vpop.f32.mrb[0].mxu0
      %v5684 = vadd.f32 0.0, %v5683
      %v5685 = vpop.f32.mrb[0].mxu0
      %v5686 = vpop.f32.mrb[0].mxu0
      %v5687 = vadd.f32 0.0, %v5686
      %v5688 = vpop.f32.mrb[0].mxu0
      %5689 = vmatprep.mubr.bf16.mxu0 0
      %5690 = vmatmul.mubr.bf16.gmra.mrb[0].mxu0 %v5542
      %v5691 = vpop.f32.mrb[0].mxu0
      %v5692 = vadd.f32 0.0, %v5691
      %v5693 = vpop.f32.mrb[0].mxu0
      %v5694 = vpop.f32.mrb[0].mxu0
      %v5695 = vadd.f32 0.0, %v5694
      %v5696 = vpop.f32.mrb[0].mxu0
      %5697 = vmatprep.mubr.bf16.mxu0 0
      %5698 = vmatmul.mubr.bf16.gmra.mrb[0].mxu0 %v5543
      %v5699 = vpop.f32.mrb[0].mxu0
      %v5700 = vadd.f32 0.0, %v5699
      %v5701 = vpop.f32.mrb[0].mxu0
      %v5702 = vpop.f32.mrb[0].mxu0
      %v5703 = vadd.f32 0.0, %v5702
      %v5704 = vpop.f32.mrb[0].mxu0
      %5705 = vmatprep.mubr.bf16.mxu0 0
      %5706 = vmatmul.mubr.bf16.gmra.mrb[0].mxu0 %v5544
      %v5707 = vpop.f32.mrb[0].mxu0
      %v5708 = vadd.f32 0.0, %v5707
      %v5709 = vpop.f32.mrb[0].mxu0
      %v5710 = vpop.f32.mrb[0].mxu0
      %v5711 = vadd.f32 0.0, %v5710
      %v5712 = vpop.f32.mrb[0].mxu0
      %5713 = vmatprep.mubr.bf16.mxu0 0
      %5714 = vmatmul.mubr.bf16.gmra.mrb[0].mxu0 %v5545
      %v5715 = vpop.f32.mrb[0].mxu0
      %v5716 = vadd.f32 0.0, %v5715
      %v5717 = vpop.f32.mrb[0].mxu0
      %v5718 = vpop.f32.mrb[0].mxu0
      %v5719 = vadd.f32 0.0, %v5718
      %v5720 = vpop.f32.mrb[0].mxu0
      %5721 = vmatprep.mubr.bf16.mxu0 0
      %5722 = vmatmul.mubr.bf16.gmra.mrb[0].mxu0 %v5546
      %v5723 = vpop.f32.mrb[0].mxu0
      %v5724 = vadd.f32 0.0, %v5723
      %v5725 = vpop.f32.mrb[0].mxu0
      %v5726 = vpop.f32.mrb[0].mxu0
      %v5727 = vadd.f32 0.0, %v5726
      %v5728 = vpop.f32.mrb[0].mxu0
      %5729 = vmatprep.mubr.bf16.mxu0 0
      %5730 = vmatmul.mubr.bf16.gmra.mrb[0].mxu0 %v5547
      %v5731 = vpop.f32.mrb[0].mxu0
      %v5732 = vadd.f32 0.0, %v5731
      %v5733 = vpop.f32.mrb[0].mxu0
      %v5734 = vpop.f32.mrb[0].mxu0
      %v5735 = vadd.f32 0.0, %v5734
      %v5736 = vpop.f32.mrb[0].mxu0
      %5737 = vmatprep.mubr.bf16.mxu0 0
      %5738 = vmatmul.mubr.bf16.gmra.mrb[0].mxu0 %v5548
      %v5739 = vpop.f32.mrb[0].mxu0
      %v5740 = vadd.f32 0.0, %v5739
      %v5741 = vpop.f32.mrb[0].mxu0
      %v5742 = vpop.f32.mrb[0].mxu0
      %v5743 = vadd.f32 0.0, %v5742
      %v5744 = vpop.f32.mrb[0].mxu0
      %5745 = vmatprep.mubr.bf16.mxu0 0
      %5746 = vmatmul.mubr.bf16.gmra.mrb[0].mxu0 %v5549
      %v5747 = vpop.f32.mrb[0].mxu0
      %v5748 = vadd.f32 0.0, %v5747
      %v5749 = vpop.f32.mrb[0].mxu0
      %v5750 = vpop.f32.mrb[0].mxu0
      %v5751 = vadd.f32 0.0, %v5750
      %v5752 = vpop.f32.mrb[0].mxu0
      %5753 = vmatprep.mubr.bf16.mxu0 0
      %5754 = vmatmul.mubr.bf16.gmra.mrb[0].mxu0 %v5550
      %v5755 = vpop.f32.mrb[0].mxu0
      %v5756 = vadd.f32 0.0, %v5755
      %v5757 = vpop.f32.mrb[0].mxu0
      %v5758 = vpop.f32.mrb[0].mxu0
      %v5759 = vadd.f32 0.0, %v5758
      %v5760 = vpop.f32.mrb[0].mxu0
      %5761 = vmatprep.mubr.bf16.mxu0 0
      %5762 = vmatmul.mubr.bf16.gmra.mrb[0].mxu0 %v5551
      %v5763 = vpop.f32.mrb[0].mxu0
      %v5764 = vadd.f32 0.0, %v5763
      %v5765 = vpop.f32.mrb[0].mxu0
      %v5766 = vpop.f32.mrb[0].mxu0
      %v5767 = vadd.f32 0.0, %v5766
      %v5768 = vpop.f32.mrb[0].mxu0
      %5769 = vmatprep.mubr.bf16.mxu0 0
      %5770 = vmatmul.mubr.bf16.gmra.mrb[0].mxu0 %v5552
      %v5771 = vpop.f32.mrb[0].mxu0
      %v5772 = vadd.f32 0.0, %v5771
      %v5773 = vpop.f32.mrb[0].mxu0
      %v5774 = vpop.f32.mrb[0].mxu0
      %v5775 = vadd.f32 0.0, %v5774
      %v5776 = vpop.f32.mrb[0].mxu0
      %5777 = vdwg.mxu0
      %v5778 = vadd.f32 %v5280, %v5652
      %v5779 = vadd.f32 %v5281, %v5655
      %v5780 = vadd.f32 %v5282, %v5660
      %v5781 = vadd.f32 %v5283, %v5663
      %v5782 = vadd.f32 %v5284, %v5668
      %v5783 = vadd.f32 %v5285, %v5671
      %v5784 = vadd.f32 %v5286, %v5676
      %v5785 = vadd.f32 %v5287, %v5679
      %v5786 = vadd.f32 %v5288, %v5684
      %v5787 = vadd.f32 %v5289, %v5687
      %v5788 = vadd.f32 %v5290, %v5692
      %v5789 = vadd.f32 %v5291, %v5695
      %v5790 = vadd.f32 %v5292, %v5700
      %v5791 = vadd.f32 %v5293, %v5703
      %v5792 = vadd.f32 %v5294, %v5708
      %v5793 = vadd.f32 %v5295, %v5711
      %v5794 = vadd.f32 %v5296, %v5716
      %v5795 = vadd.f32 %v5297, %v5719
      %v5796 = vadd.f32 %v5298, %v5724
      %v5797 = vadd.f32 %v5299, %v5727
      %v5798 = vadd.f32 %v5300, %v5732
      %v5799 = vadd.f32 %v5301, %v5735
      %v5800 = vadd.f32 %v5302, %v5740
      %v5801 = vadd.f32 %v5303, %v5743
      %v5802 = vadd.f32 %v5304, %v5748
      %v5803 = vadd.f32 %v5305, %v5751
      %v5804 = vadd.f32 %v5306, %v5756
      %v5805 = vadd.f32 %v5307, %v5759
      %v5806 = vadd.f32 %v5308, %v5764
      %v5807 = vadd.f32 %v5309, %v5767
      %v5808 = vadd.f32 %v5310, %v5772
      %v5809 = vadd.f32 %v5311, %v5775
      %v5810 = vpack.c.bf16 %v5779, %v5778
      %v5811 = vpack.c.bf16 %v5781, %v5780
      %v5812 = vpack.c.bf16 %v5783, %v5782
      %v5813 = vpack.c.bf16 %v5785, %v5784
      %v5814 = vpack.c.bf16 %v5787, %v5786
      %v5815 = vpack.c.bf16 %v5789, %v5788
      %v5816 = vpack.c.bf16 %v5791, %v5790
      %v5817 = vpack.c.bf16 %v5793, %v5792
      %v5818 = vpack.c.bf16 %v5795, %v5794
      %v5819 = vpack.c.bf16 %v5797, %v5796
      %v5820 = vpack.c.bf16 %v5799, %v5798
      %v5821 = vpack.c.bf16 %v5801, %v5800
      %v5822 = vpack.c.bf16 %v5803, %v5802
      %v5823 = vpack.c.bf16 %v5805, %v5804
      %v5824 = vpack.c.bf16 %v5807, %v5806
      %v5825 = vpack.c.bf16 %v5809, %v5808
      %v5842 = vunpack.c.l.b16 %v5810
      %v5843 = vunpack.c.h.b16 %v5810
      %v5844 = vunpack.c.l.b16 %v5811
      %v5845 = vunpack.c.h.b16 %v5811
      %v5846 = vunpack.c.l.b16 %v5812
      %v5847 = vunpack.c.h.b16 %v5812
      %v5848 = vunpack.c.l.b16 %v5813
      %v5849 = vunpack.c.h.b16 %v5813
      %v5850 = vunpack.c.l.b16 %v5814
      %v5851 = vunpack.c.h.b16 %v5814
      %v5852 = vunpack.c.l.b16 %v5815
      %v5853 = vunpack.c.h.b16 %v5815
      %v5854 = vunpack.c.l.b16 %v5816
      %v5855 = vunpack.c.h.b16 %v5816
      %v5856 = vunpack.c.l.b16 %v5817
      %v5857 = vunpack.c.h.b16 %v5817
      %v5858 = vunpack.c.l.b16 %v5818
      %v5859 = vunpack.c.h.b16 %v5818
      %v5860 = vunpack.c.l.b16 %v5819
      %v5861 = vunpack.c.h.b16 %v5819
      %v5862 = vunpack.c.l.b16 %v5820
      %v5863 = vunpack.c.h.b16 %v5820
      %v5864 = vunpack.c.l.b16 %v5821
      %v5865 = vunpack.c.h.b16 %v5821
      %v5866 = vunpack.c.l.b16 %v5822
      %v5867 = vunpack.c.h.b16 %v5822
      %v5868 = vunpack.c.l.b16 %v5823
      %v5869 = vunpack.c.h.b16 %v5823
      %v5870 = vunpack.c.l.b16 %v5824
      %v5871 = vunpack.c.h.b16 %v5824
      %v5872 = vunpack.c.l.b16 %v5825
      %v5873 = vunpack.c.h.b16 %v5825
      %v5874 = vpack.c.b16 %v5842, %v5842
      %v5875 = vpack.c.b16 %v5843, %v5843
      %v5876 = vpack.c.b16 %v5844, %v5844
      %v5877 = vpack.c.b16 %v5845, %v5845
      %v5878 = vpack.c.b16 %v5846, %v5846
      %v5879 = vpack.c.b16 %v5847, %v5847
      %v5880 = vpack.c.b16 %v5848, %v5848
      %v5881 = vpack.c.b16 %v5849, %v5849
      %v5882 = vpack.c.b16 %v5850, %v5850
      %v5883 = vpack.c.b16 %v5851, %v5851
      %v5884 = vpack.c.b16 %v5852, %v5852
      %v5885 = vpack.c.b16 %v5853, %v5853
      %v5886 = vpack.c.b16 %v5854, %v5854
      %v5887 = vpack.c.b16 %v5855, %v5855
      %v5888 = vpack.c.b16 %v5856, %v5856
      %v5889 = vpack.c.b16 %v5857, %v5857
      %v5890 = vpack.c.b16 %v5858, %v5858
      %v5891 = vpack.c.b16 %v5859, %v5859
      %v5892 = vpack.c.b16 %v5860, %v5860
      %v5893 = vpack.c.b16 %v5861, %v5861
      %v5894 = vpack.c.b16 %v5862, %v5862
      %v5895 = vpack.c.b16 %v5863, %v5863
      %v5896 = vpack.c.b16 %v5864, %v5864
      %v5897 = vpack.c.b16 %v5865, %v5865
      %v5898 = vpack.c.b16 %v5866, %v5866
      %v5899 = vpack.c.b16 %v5867, %v5867
      %v5900 = vpack.c.b16 %v5868, %v5868
      %v5901 = vpack.c.b16 %v5869, %v5869
      %v5902 = vpack.c.b16 %v5870, %v5870
      %v5903 = vpack.c.b16 %v5871, %v5871
      %v5904 = vpack.c.b16 %v5872, %v5872
      %v5905 = vpack.c.b16 %v5873, %v5873
      %5938 = vst [vmem:[%s231] sm:$0xf] %v5874
      %5939 = vst [vmem:[%s231 + $0x4] sm:$0xf] %v5875
      %5940 = vst [vmem:[%s231 + $0x8] sm:$0xf] %v5876
      %5941 = vst [vmem:[%s231 + $0xc] sm:$0xf] %v5877
      %5942 = vst [vmem:[%s231 + $0x10] sm:$0xf] %v5878
      %5943 = vst [vmem:[%s231 + $0x14] sm:$0xf] %v5879
      %5944 = vst [vmem:[%s231 + $0x18] sm:$0xf] %v5880
      %5945 = vst [vmem:[%s231 + $0x1c] sm:$0xf] %v5881
      %5946 = vst [vmem:[%s231 + $0x20] sm:$0xf] %v5882
      %5947 = vst [vmem:[%s231 + $0x24] sm:$0xf] %v5883
      %5948 = vst [vmem:[%s231 + $0x28] sm:$0xf] %v5884
      %5949 = vst [vmem:[%s231 + $0x2c] sm:$0xf] %v5885
      %5950 = vst [vmem:[%s231 + $0x30] sm:$0xf] %v5886
      %5951 = vst [vmem:[%s231 + $0x34] sm:$0xf] %v5887
      %5952 = vst [vmem:[%s231 + $0x38] sm:$0xf] %v5888
      %5953 = vst [vmem:[%s231 + $0x3c] sm:$0xf] %v5889
      %5954 = vst [vmem:[%s231 + $0x40] sm:$0xf] %v5890
      %5955 = vst [vmem:[%s231 + $0x44] sm:$0xf] %v5891
      %5956 = vst [vmem:[%s231 + $0x48] sm:$0xf] %v5892
      %5957 = vst [vmem:[%s231 + $0x4c] sm:$0xf] %v5893
      %5958 = vst [vmem:[%s231 + $0x50] sm:$0xf] %v5894
      %5959 = vst [vmem:[%s231 + $0x54] sm:$0xf] %v5895
      %5960 = vst [vmem:[%s231 + $0x58] sm:$0xf] %v5896
      %5961 = vst [vmem:[%s231 + $0x5c] sm:$0xf] %v5897
      %5962 = vst [vmem:[%s231 + $0x60] sm:$0xf] %v5898
      %5963 = vst [vmem:[%s231 + $0x64] sm:$0xf] %v5899
      %5964 = vst [vmem:[%s231 + $0x68] sm:$0xf] %v5900
      %5965 = vst [vmem:[%s231 + $0x6c] sm:$0xf] %v5901
      %5966 = vst [vmem:[%s231 + $0x70] sm:$0xf] %v5902
      %5967 = vst [vmem:[%s231 + $0x74] sm:$0xf] %v5903
      %5968 = vst [vmem:[%s231 + $0x78] sm:$0xf] %v5904
      %5969 = vst [vmem:[%s231 + $0x7c] sm:$0xf] %v5905
      %v5970 = vadd.f32 %v5778, %v5779
      %v5971 = vadd.f32 %v5970, %v5780
      %v5972 = vadd.f32 %v5971, %v5781
      %v5973 = vadd.f32 %v5972, %v5782
      %v5974 = vadd.f32 %v5973, %v5783
      %v5975 = vadd.f32 %v5974, %v5784
      %v5976 = vadd.f32 %v5975, %v5785
      %v5977 = vadd.f32 %v5976, %v5786
      %v5978 = vadd.f32 %v5977, %v5787
      %v5979 = vadd.f32 %v5978, %v5788
      %v5980 = vadd.f32 %v5979, %v5789
      %v5981 = vadd.f32 %v5980, %v5790
      %v5982 = vadd.f32 %v5981, %v5791
      %v5983 = vadd.f32 %v5982, %v5792
      %v5984 = vadd.f32 %v5983, %v5793
      %v5985 = vadd.f32 %v5984, %v5794
      %v5986 = vadd.f32 %v5985, %v5795
      %v5987 = vadd.f32 %v5986, %v5796
      %v5988 = vadd.f32 %v5987, %v5797
      %v5989 = vadd.f32 %v5988, %v5798
      %v5990 = vadd.f32 %v5989, %v5799
      %v5991 = vadd.f32 %v5990, %v5800
      %v5992 = vadd.f32 %v5991, %v5801
      %v5993 = vadd.f32 %v5992, %v5802
      %v5994 = vadd.f32 %v5993, %v5803
      %v5995 = vadd.f32 %v5994, %v5804
      %v5996 = vadd.f32 %v5995, %v5805
      %v5997 = vadd.f32 %v5996, %v5806
      %v5998 = vadd.f32 %v5997, %v5807
      %v5999 = vadd.f32 %v5998, %v5808
      %v6000 = vadd.f32 %v5999, %v5809
      %v6001 = vrot.slane %v6000, 4
      %v6002 = vadd.f32 %v6000, %v6001
      %v6003 = vrot.slane %v6002, 2
      %v6004 = vadd.f32 %v6002, %v6003
      %v6005 = vrot.slane %v6004, 1
      %v6006 = vadd.f32 %v6004, %v6005
      %v6007 = vmul.f32 %v5778, %v5778
      %v6008 = vmul.f32 %v5779, %v5779
      %v6009 = vmul.f32 %v5780, %v5780
      %v6010 = vmul.f32 %v5781, %v5781
      %v6011 = vmul.f32 %v5782, %v5782
      %v6012 = vmul.f32 %v5783, %v5783
      %v6013 = vmul.f32 %v5784, %v5784
      %v6014 = vmul.f32 %v5785, %v5785
      %v6015 = vmul.f32 %v5786, %v5786
      %v6016 = vmul.f32 %v5787, %v5787
      %v6017 = vmul.f32 %v5788, %v5788
      %v6018 = vmul.f32 %v5789, %v5789
      %v6019 = vmul.f32 %v5790, %v5790
      %v6020 = vmul.f32 %v5791, %v5791
      %v6021 = vmul.f32 %v5792, %v5792
      %v6022 = vmul.f32 %v5793, %v5793
      %v6023 = vmul.f32 %v5794, %v5794
      %v6024 = vmul.f32 %v5795, %v5795
      %v6025 = vmul.f32 %v5796, %v5796
      %v6026 = vmul.f32 %v5797, %v5797
      %v6027 = vmul.f32 %v5798, %v5798
      %v6028 = vmul.f32 %v5799, %v5799
      %v6029 = vmul.f32 %v5800, %v5800
      %v6030 = vmul.f32 %v5801, %v5801
      %v6031 = vmul.f32 %v5802, %v5802
      %v6032 = vmul.f32 %v5803, %v5803
      %v6033 = vmul.f32 %v5804, %v5804
      %v6034 = vmul.f32 %v5805, %v5805
      %v6035 = vmul.f32 %v5806, %v5806
      %v6036 = vmul.f32 %v5807, %v5807
      %v6037 = vmul.f32 %v5808, %v5808
      %v6038 = vmul.f32 %v5809, %v5809
      %v6039 = vadd.f32 %v6007, %v6008
      %v6040 = vadd.f32 %v6039, %v6009
      %v6041 = vadd.f32 %v6040, %v6010
      %v6042 = vadd.f32 %v6041, %v6011
      %v6043 = vadd.f32 %v6042, %v6012
      %v6044 = vadd.f32 %v6043, %v6013
      %v6045 = vadd.f32 %v6044, %v6014
      %v6046 = vadd.f32 %v6045, %v6015
      %v6047 = vadd.f32 %v6046, %v6016
      %v6048 = vadd.f32 %v6047, %v6017
      %v6049 = vadd.f32 %v6048, %v6018
      %v6050 = vadd.f32 %v6049, %v6019
      %v6051 = vadd.f32 %v6050, %v6020
      %v6052 = vadd.f32 %v6051, %v6021
      %v6053 = vadd.f32 %v6052, %v6022
      %v6054 = vadd.f32 %v6053, %v6023
      %v6055 = vadd.f32 %v6054, %v6024
      %v6056 = vadd.f32 %v6055, %v6025
      %v6057 = vadd.f32 %v6056, %v6026
      %v6058 = vadd.f32 %v6057, %v6027
      %v6059 = vadd.f32 %v6058, %v6028
      %v6060 = vadd.f32 %v6059, %v6029
      %v6061 = vadd.f32 %v6060, %v6030
      %v6062 = vadd.f32 %v6061, %v6031
      %v6063 = vadd.f32 %v6062, %v6032
      %v6064 = vadd.f32 %v6063, %v6033
      %v6065 = vadd.f32 %v6064, %v6034
      %v6066 = vadd.f32 %v6065, %v6035
      %v6067 = vadd.f32 %v6066, %v6036
      %v6068 = vadd.f32 %v6067, %v6037
      %v6069 = vadd.f32 %v6068, %v6038
      %v6070 = vrot.slane %v6069, 4
      %v6071 = vadd.f32 %v6069, %v6070
      %v6072 = vrot.slane %v6071, 2
      %v6073 = vadd.f32 %v6071, %v6072
      %v6074 = vrot.slane %v6073, 1
      %v6075 = vadd.f32 %v6073, %v6074
      %vm6076 = vcmask 1040384
      %v6077 = vsel %vm6076, %v6006, %v6075
      %6078 = vst [vmem:[%s235] sm:$0x3] %v6077
      %p6079 = scmp.lt.s32.totalorder %s17, 1
      %s6080 = scalar_select %p6079, %s17, 1
      %s6081 = smul.addr %s6080, 32
      %s6082 = smul.addr %s6081, 4
      %s6083 = scalar_lea.vmem %s4, %s6082
      %p6084 = scmp.lt.s32.totalorder %s17, 1
      %s6085 = scalar_select %p6084, %s17, 1
      %s6086 = smul.addr %s6085, 2
      %s6087 = scalar_lea.vmem %s5, %s6086
      // Predicated region
      $region37: #{residual_block.4} parent=35 // pred_check
        %p6088 = pneg %p124
      $region38: #{residual_block.4} parent=35 // pred_check_branch
        %6090 = sbr.rel (%p6088) target = $region40
      $region39: #{residual_block.4} parent=35 // pred_region
        _
      $region40: #{residual_block.4} parent=35 // pred_fallthru
        _
      // Predicated region
      $region41: #{residual_block.4} parent=35 // pred_check
        %p6091 = pneg %p150
      $region42: #{residual_block.4} parent=35 // pred_check_branch
        %6093 = sbr.rel (%p6091) target = $region44
      $region43: #{residual_block.4} parent=35 // pred_region
        _
      $region44: #{residual_block.4} parent=35 // pred_fallthru
        _
    $region36: #{residual_block.4} parent=5 // pred_fallthru
      _
    %p6094 = scmp.le.s32.totalorder 2, %s12
    // Predicated region
    $region45: #{residual_block.4} parent=5 // pred_check
      %p6095 = pneg %p6094
    $region46: #{residual_block.4} parent=5 // pred_check_branch
      %6097 = sbr.rel (%p6095) target = $region48
    $region47: #{residual_block.4} parent=5 // pred_region
      %s6098 = ssub.s32 %s12, 2
      // Predicated region
      $region49: #{residual_block.4} parent=47 // pred_check
        %p6099 = pneg %p130
      $region50: #{residual_block.4} parent=47 // pred_check_branch
        %6101 = sbr.rel (%p6099) target = $region52
      $region51: #{residual_block.4} parent=47 // pred_region
        %p6102 = scmp.lt.s32.totalorder %s18, 1
        %s6103 = scalar_select %p6102, %s18, 1
        %s6104 = smul.addr %s6103, 32
        %s6105 = smul.addr %s6104, 4
        %s6106 = scalar_lea.vmem %s4, %s6105
      $region52: #{residual_block.4} parent=47 // pred_fallthru
        _
      // Predicated region
      $region53: #{residual_block.4} parent=47 // pred_check
        %p6107 = pneg %p156
      $region54: #{residual_block.4} parent=47 // pred_check_branch
        %6109 = sbr.rel (%p6107) target = $region56
      $region55: #{residual_block.4} parent=47 // pred_region
        %p6110 = scmp.lt.s32.totalorder %s18, 1
        %s6111 = scalar_select %p6110, %s18, 1
        %s6112 = smul.addr %s6111, 2
        %s6113 = scalar_lea.vmem %s5, %s6112
      $region56: #{residual_block.4} parent=47 // pred_fallthru
        _
    $region48: #{residual_block.4} parent=5 // pred_fallthru
      _
  $region6: #{residual_block.4} parent=0 // loop_footer
    %s16 = sadd.s32 1, %s12
  $region7: #{residual_block.4} parent=0 // loop_footer_branch
    %11 = sbr.rel target = $region3
  $region8: #{residual_block.4} parent=0 // loop_exit
    _

</llo_original>
